<compile_context>
chip_gen: v7x
topology: tpu7x:2x2x1
jax: 0.10.0
libtpu: 0.0.40
codegen_flags: <defaults>
</compile_context>

<pallas_src>
import functools

import jax
import jax.numpy as jnp
from jax.experimental import pallas as pl
from jax.experimental.pallas import tpu as pltpu

EMBED_DIM = 192
NUM_HEADS = 3
HEAD_DIM = EMBED_DIM // NUM_HEADS
DEPTH = 12
MLP_DIM = 4 * EMBED_DIM
PATCH = 16
LN_EPS = 1e-6
D_BLK = 3                         # transformer blocks per grid step (12/3 = 4 steps)

# Rows of the packed small-parameter slab (DEPTH, 8, MLP_DIM).
(ROW_LN1_G, ROW_LN1_B, ROW_B_QKV, ROW_B_PROJ,
 ROW_LN2_G, ROW_LN2_B, ROW_B_FC1, ROW_B_FC2) = range(8)
N_SMALL_ROWS = 8


# ----------------------------- in-kernel helpers -----------------------------

def _layernorm(x, g, b):
    # x: (M, D), g/b: (1, D)
    mu = jnp.mean(x, axis=-1, keepdims=True)
    xc = x - mu
    var = jnp.mean(xc * xc, axis=-1, keepdims=True)
    return xc * jax.lax.rsqrt(var + LN_EPS) * g + b


# ------------------------------ fused ViT kernel ------------------------------

def _vit_kernel(patches_ref, pw_ref, pb_ref, cls0_ref, posp_ref,
                wqkv_ref, wproj_ref, wfc1_ref, wfc2_ref, small_ref,
                ng_ref, nb_ref, hw_ref, hb_ref,
                logits_ref, res_ref, *, n_real, n_patch):
    g = pl.program_id(0)
    B, NP, D = res_ref.shape
    M = B * NP

    # ---- prologue (first step): patch embed + cls token + pos embed + pad ----
    @pl.when(g == 0)
    def _():
        pe = jnp.dot(patches_ref[...], pw_ref[...],
                     preferred_element_type=jnp.float32) + pb_ref[...]
        pe3 = pe.reshape(B, n_patch, D) + posp_ref[...]
        cls = jnp.broadcast_to(cls0_ref[...], (B, 1, D))
        parts = [cls, pe3]
        n_fill = NP - 1 - n_patch
        if n_fill > 0:
            parts.append(jnp.zeros((B, n_fill, D), jnp.float32))
        res_ref[...] = jnp.concatenate(parts, axis=1)

    x = res_ref[...].reshape(M, D)

    scale = HEAD_DIM ** -0.5
    key_valid = jax.lax.broadcasted_iota(jnp.int32, (B, NP, NP), 2) < n_real

    # ---------------- D_BLK transformer blocks per grid step ----------------
    for j in range(D_BLK):
        ln1g = small_ref[j, ROW_LN1_G:ROW_LN1_G + 1, 0:D]
        ln1b = small_ref[j, ROW_LN1_B:ROW_LN1_B + 1, 0:D]
        bqkv = small_ref[j, ROW_B_QKV:ROW_B_QKV + 1, 0:3 * D]
        bproj = small_ref[j, ROW_B_PROJ:ROW_B_PROJ + 1, 0:D]
        ln2g = small_ref[j, ROW_LN2_G:ROW_LN2_G + 1, 0:D]
        ln2b = small_ref[j, ROW_LN2_B:ROW_LN2_B + 1, 0:D]
        bfc1 = small_ref[j, ROW_B_FC1:ROW_B_FC1 + 1, :]
        bfc2 = small_ref[j, ROW_B_FC2:ROW_B_FC2 + 1, 0:D]

        # -------- attention (pre-norm), single fused QKV projection --------
        h = _layernorm(x, ln1g, ln1b).astype(jnp.bfloat16)
        qkv = jnp.dot(h, wqkv_ref[j], preferred_element_type=jnp.float32) + bqkv
        q3 = qkv[:, 0:D].astype(jnp.bfloat16).reshape(B, NP, D)
        k3 = qkv[:, D:2 * D].astype(jnp.bfloat16).reshape(B, NP, D)
        v3 = qkv[:, 2 * D:3 * D].astype(jnp.bfloat16).reshape(B, NP, D)

        heads = []
        for hd in range(NUM_HEADS):
            sl = slice(hd * HEAD_DIM, (hd + 1) * HEAD_DIM)
            s = jnp.einsum('bnd,bmd->bnm', q3[:, :, sl], k3[:, :, sl],
                           preferred_element_type=jnp.float32) * scale
            s = jnp.where(key_valid, s, -1e30)          # mask padded key columns
            s = s - jnp.max(s, axis=-1, keepdims=True)
            p = jnp.exp(s)
            p = p * pl.reciprocal(jnp.sum(p, axis=-1, keepdims=True), approx=True)
            heads.append(jnp.einsum('bnm,bmd->bnd', p.astype(jnp.bfloat16),
                                    v3[:, :, sl],
                                    preferred_element_type=jnp.float32))
        # one full-K output projection instead of 3 K=64 slices
        attn = jnp.concatenate(heads, axis=-1).reshape(M, D).astype(jnp.bfloat16)
        x = x + jnp.dot(attn, wproj_ref[j],
                        preferred_element_type=jnp.float32) + bproj

        # ------------------------------ MLP (pre-norm) -----------------------
        h2 = _layernorm(x, ln2g, ln2b).astype(jnp.bfloat16)
        h2 = jnp.dot(h2, wfc1_ref[j], preferred_element_type=jnp.float32) + bfc1
        # TODO(synk): timm ViT uses exact erf-GELU; tanh-approximate GELU is used
        # to stay within guaranteed Mosaic elementwise lowerings.
        h2 = jax.nn.gelu(h2, approximate=True).astype(jnp.bfloat16)
        x = x + jnp.dot(h2, wfc2_ref[j], preferred_element_type=jnp.float32) + bfc2

    res_ref[...] = x.reshape(B, NP, D)

    # ------ epilogue (last step): final LayerNorm + cls pooling + head ------
    @pl.when(g == pl.num_programs(0) - 1)
    def _():
        cls_tok = x.reshape(B, NP, D)[:, 0:1, :].reshape(B, D)   # cls-token pooling
        hc = _layernorm(cls_tok, ng_ref[...], nb_ref[...])
        logits_ref[...] = jnp.dot(hc, hw_ref[...],
                                  preferred_element_type=jnp.float32) + hb_ref[...]


# ------------------------------ pallas_call glue ------------------------------

def vit_forward(x, p, num_classes):
    B, C, H, W = x.shape
    gh, gw = H // PATCH, W // PATCH
    n_patch = gh * gw
    n_tok = n_patch + 1
    n_pad = ((n_tok + 7) // 8) * 8

    # Patch extraction (pure data movement) stays as a tiny XLA transpose; the
    # patch-embed matmul itself runs inside the fused kernel's first step.
    patches = x.reshape(B, C, gh, PATCH, gw, PATCH).transpose(0, 2, 4, 1, 3, 5)
    patches = patches.reshape(B * n_patch, C * PATCH * PATCH)

    blk = p['blocks']
    big = (blk['w_qkv'], blk['w_proj'], blk['w_fc1'], blk['w_fc2'], blk['small'])
    consts_pre = (patches, p['patch_w2d'], p['patch_b'], p['cls0'], p['pos_patch'])
    consts_post = (p['norm_g'], p['norm_b'], p['head_w'], p['head_b'])

    def const_spec(a):
        nd = a.ndim
        return pl.BlockSpec(a.shape, lambda g, _n=nd: (0,) * _n)

    def depth_spec(a):
        nd = a.ndim
        return pl.BlockSpec((D_BLK,) + a.shape[1:],
                            lambda g, _n=nd: (g,) + (0,) * (_n - 1))

    in_specs = ([const_spec(a) for a in consts_pre] +
                [depth_spec(a) for a in big] +
                [const_spec(a) for a in consts_post])

    kernel = functools.partial(_vit_kernel, n_real=n_tok, n_patch=n_patch)

    return pl.pallas_call(
        kernel,
        out_shape=jax.ShapeDtypeStruct((B, num_classes), jnp.float32),
        grid_spec=pltpu.PrefetchScalarGridSpec(
            num_scalar_prefetch=0,
            grid=(DEPTH // D_BLK,),
            in_specs=in_specs,
            out_specs=pl.BlockSpec((B, num_classes), lambda g: (0, 0)),
            scratch_shapes=[pltpu.VMEM((B, n_pad, EMBED_DIM), jnp.float32)],
        ),
        compiler_params=pltpu.CompilerParams(
            dimension_semantics=("arbitrary",)),
    )(*consts_pre, *big, *consts_post)


# --------------------------- deterministic parameters --------------------------

def init_params(key, num_classes, H, W):
    n_patch = (H // PATCH) * (W // PATCH)
    n_tok = n_patch + 1
    keys = iter(jax.random.split(key, 12))

    def nrm(shape, scale=0.02, dtype=jnp.float32):
        return (scale * jax.random.normal(next(keys), shape, jnp.float32)).astype(dtype)

    bf16 = jnp.bfloat16
    D, Mlp = EMBED_DIM, MLP_DIM

    patch_w = nrm((D, 3, PATCH, PATCH))
    patch_w2d = patch_w.reshape(D, -1).T          # conv->matmul weight, hoisted to init

    cls_token = nrm((1, 1, D))
    pos_embed = nrm((1, n_tok, D))

    # Fused QKV weight: (DEPTH, D, 3D) bf16 -> one matmul / one DMA per block.
    w_q = nrm((DEPTH, D, D))
    w_k = nrm((DEPTH, D, D))
    w_v = nrm((DEPTH, D, D))
    w_qkv = jnp.concatenate([w_q, w_k, w_v], axis=-1).astype(bf16)

    # Packed small per-block params: one (8, MLP_DIM) f32 slab per block.
    small = jnp.zeros((DEPTH, N_SMALL_ROWS, Mlp), jnp.float32)
    small = small.at[:, ROW_LN1_G, :D].set(1.0)   # LN1 gamma
    small = small.at[:, ROW_LN2_G, :D].set(1.0)   # LN2 gamma
    # LN betas and all linear biases are zero-initialized (timm defaults).

    return {
        'patch_w2d': patch_w2d,
        'patch_b': jnp.zeros((1, D), jnp.float32),
        'cls0': cls_token + pos_embed[:, 0:1, :],   # cls token + its pos embedding
        'pos_patch': pos_embed[:, 1:, :],           # pos embeddings of patch tokens
        'norm_g': jnp.ones((1, D), jnp.float32),
        'norm_b': jnp.zeros((1, D), jnp.float32),
        'head_w': nrm((D, num_classes)),
        'head_b': jnp.zeros((1, num_classes), jnp.float32),
        'blocks': {
            'w_qkv': w_qkv,
            'w_proj': nrm((DEPTH, D, D), dtype=bf16),
            'w_fc1': nrm((DEPTH, D, Mlp), dtype=bf16),
            'w_fc2': nrm((DEPTH, Mlp, D), dtype=bf16),
            'small': small,
        },
    }


if __name__ == "__main__":
    num_classes = 5
    B, H, W = 2, 32, 32            # 2x2 patches + cls = 5 tokens (padded to 8)

    key = jax.random.PRNGKey(0)
    k_img, k_param = jax.random.split(key)
    x = jax.random.normal(k_img, (B, 3, H, W), jnp.float32)
    params = init_params(k_param, num_classes, H, W)

    fwd = jax.jit(functools.partial(vit_forward, num_classes=num_classes))
    logits = jax.block_until_ready(fwd(x, params))
    assert logits.shape == (B, num_classes)
    assert bool(jnp.all(jnp.isfinite(logits)))
    print("KERNEL_OK")
</pallas_src>

<mosaic_0001>
module attributes {stable_mosaic.version = 11 : i64} {
  func.func @_vit_kernel(%arg0: i32, %arg1: memref<8x768xf32, #tpu.memory_space<vmem>>, %arg2: memref<768x192xf32, #tpu.memory_space<vmem>>, %arg3: memref<1x192xf32, #tpu.memory_space<vmem>>, %arg4: memref<1x1x192xf32, #tpu.memory_space<vmem>>, %arg5: memref<1x4x192xf32, #tpu.memory_space<vmem>>, %arg6: memref<3x192x576xbf16, #tpu.memory_space<vmem>>, %arg7: memref<3x192x192xbf16, #tpu.memory_space<vmem>>, %arg8: memref<3x192x768xbf16, #tpu.memory_space<vmem>>, %arg9: memref<3x768x192xbf16, #tpu.memory_space<vmem>>, %arg10: memref<3x8x768xf32, #tpu.memory_space<vmem>>, %arg11: memref<1x192xf32, #tpu.memory_space<vmem>>, %arg12: memref<1x192xf32, #tpu.memory_space<vmem>>, %arg13: memref<192x5xf32, #tpu.memory_space<vmem>>, %arg14: memref<1x5xf32, #tpu.memory_space<vmem>>, %arg15: memref<2x5xf32, #tpu.memory_space<vmem>>, %arg16: memref<2x8x192xf32, #tpu.memory_space<vmem>>) attributes {dimension_semantics = [#tpu.dimension_semantics<arbitrary>], iteration_bounds = array<i64: 4>, scalar_prefetch = 0 : i64, scratch_operands = 1 : i64, tpu.core_type = #tpu.core_type<tc>, window_params = [{pipeline_mode = #tpu.pipeline_mode<synchronous>, transform_indices = @transform_0, window_bounds = array<i64: 8, 768>}, {pipeline_mode = #tpu.pipeline_mode<synchronous>, transform_indices = @transform_1, window_bounds = array<i64: 768, 192>}, {pipeline_mode = #tpu.pipeline_mode<synchronous>, transform_indices = @transform_2, window_bounds = array<i64: 1, 192>}, {pipeline_mode = #tpu.pipeline_mode<synchronous>, transform_indices = @transform_3, window_bounds = array<i64: 1, 1, 192>}, {pipeline_mode = #tpu.pipeline_mode<synchronous>, transform_indices = @transform_4, window_bounds = array<i64: 1, 4, 192>}, {transform_indices = @transform_5, window_bounds = array<i64: 3, 192, 576>}, {transform_indices = @transform_6, window_bounds = array<i64: 3, 192, 192>}, {transform_indices = @transform_7, window_bounds = array<i64: 3, 192, 768>}, {transform_indices = @transform_8, window_bounds = array<i64: 3, 768, 192>}, {transform_indices = @transform_9, window_bounds = array<i64: 3, 8, 768>}, {pipeline_mode = #tpu.pipeline_mode<synchronous>, transform_indices = @transform_10, window_bounds = array<i64: 1, 192>}, {pipeline_mode = #tpu.pipeline_mode<synchronous>, transform_indices = @transform_11, window_bounds = array<i64: 1, 192>}, {pipeline_mode = #tpu.pipeline_mode<synchronous>, transform_indices = @transform_12, window_bounds = array<i64: 192, 5>}, {pipeline_mode = #tpu.pipeline_mode<synchronous>, transform_indices = @transform_13, window_bounds = array<i64: 1, 5>}, {pipeline_mode = #tpu.pipeline_mode<synchronous>, transform_indices = @transform_14, window_bounds = array<i64: 2, 5>}]} {
    %c0_i32 = arith.constant 0 : i32
    %0 = arith.cmpi eq, %arg0, %c0_i32 : i32
    %1 = arith.extui %0 : i1 to i32
    %c0_i32_0 = arith.constant 0 : i32
    %2 = arith.cmpi ne, %1, %c0_i32_0 : i32
    scf.if %2 {
      %c0_215 = arith.constant 0 : index
      %c0_216 = arith.constant 0 : index
      %511 = vector.load %arg1[%c0_215, %c0_216] : memref<8x768xf32, #tpu.memory_space<vmem>>, vector<8x768xf32>
      %c0_217 = arith.constant 0 : index
      %c0_218 = arith.constant 0 : index
      %512 = vector.load %arg2[%c0_217, %c0_218] : memref<768x192xf32, #tpu.memory_space<vmem>>, vector<768x192xf32>
      %cst_219 = arith.constant dense<0.000000e+00> : vector<8x192xf32>
      %513 = tpu.matmul %511, %512, %cst_219 {dimension_numbers = #tpu.dot_dimension_numbers<[1], [0], [0], [1], [0, 0, 1, 1], [], []>} : vector<8x768xf32>, vector<768x192xf32>, vector<8x192xf32> -> vector<8x192xf32>
      %c0_220 = arith.constant 0 : index
      %c0_221 = arith.constant 0 : index
      %514 = vector.load %arg3[%c0_220, %c0_221] : memref<1x192xf32, #tpu.memory_space<vmem>>, vector<1x192xf32>
      %515 = vector.broadcast %514 : vector<1x192xf32> to vector<8x192xf32>
      %516 = arith.addf %513, %515 : vector<8x192xf32>
      %517 = vector.shape_cast %516 : vector<8x192xf32> to vector<2x4x192xf32>
      %c0_222 = arith.constant 0 : index
      %c0_223 = arith.constant 0 : index
      %c0_224 = arith.constant 0 : index
      %518 = vector.load %arg5[%c0_222, %c0_223, %c0_224] : memref<1x4x192xf32, #tpu.memory_space<vmem>>, vector<1x4x192xf32>
      %519 = vector.broadcast %518 : vector<1x4x192xf32> to vector<2x4x192xf32>
      %520 = arith.addf %517, %519 : vector<2x4x192xf32>
      %c0_225 = arith.constant 0 : index
      %c0_226 = arith.constant 0 : index
      %c0_227 = arith.constant 0 : index
      %521 = vector.load %arg4[%c0_225, %c0_226, %c0_227] : memref<1x1x192xf32, #tpu.memory_space<vmem>>, vector<1x1x192xf32>
      %522 = vector.shape_cast %521 : vector<1x1x192xf32> to vector<1x1x192xf32>
      %523 = vector.broadcast %522 : vector<1x1x192xf32> to vector<2x1x192xf32>
      %cst_228 = arith.constant 0.000000e+00 : f32
      %524 = vector.broadcast %cst_228 : f32 to vector<2x3x192xf32>
      %525 = tpu.concatenate %523, %520, %524 in 1 : vector<2x1x192xf32>, vector<2x4x192xf32>, vector<2x3x192xf32> -> vector<2x8x192xf32>
      %c0_229 = arith.constant 0 : index
      %c0_230 = arith.constant 0 : index
      %c0_231 = arith.constant 0 : index
      %526 = vector.load %arg16[%c0_229, %c0_230, %c0_231] : memref<2x8x192xf32, #tpu.memory_space<vmem>>, vector<2x8x192xf32>
      tpu.vector_store %arg16[%c0_229, %c0_230, %c0_231], %525 {strides = array<i32>} : memref<2x8x192xf32, #tpu.memory_space<vmem>>, vector<2x8x192xf32>,
    } else {
    }
    %c0 = arith.constant 0 : index
    %c0_1 = arith.constant 0 : index
    %c0_2 = arith.constant 0 : index
    %3 = vector.load %arg16[%c0, %c0_1, %c0_2] : memref<2x8x192xf32, #tpu.memory_space<vmem>>, vector<2x8x192xf32>
    %4 = vector.shape_cast %3 : vector<2x8x192xf32> to vector<16x192xf32>
    %5 = tpu.iota {dimensions = array<i32: 2>} : vector<2x8x8xi32>
    %c5_i32 = arith.constant 5 : i32
    %6 = vector.broadcast %c5_i32 : i32 to vector<2x8x8xi32>
    %7 = arith.cmpi slt, %5, %6 : vector<2x8x8xi32>
    %c0_3 = arith.constant 0 : index
    %c0_4 = arith.constant 0 : index
    %c0_5 = arith.constant 0 : index
    %8 = vector.load %arg10[%c0_3, %c0_4, %c0_5] : memref<3x8x768xf32, #tpu.memory_space<vmem>>, vector<1x1x192xf32>
    %9 = vector.shape_cast %8 : vector<1x1x192xf32> to vector<1x192xf32>
    %c0_6 = arith.constant 0 : index
    %c1 = arith.constant 1 : index
    %c0_7 = arith.constant 0 : index
    %10 = vector.load %arg10[%c0_6, %c1, %c0_7] : memref<3x8x768xf32, #tpu.memory_space<vmem>>, vector<1x1x192xf32>
    %11 = vector.shape_cast %10 : vector<1x1x192xf32> to vector<1x192xf32>
    %c0_8 = arith.constant 0 : index
    %c2 = arith.constant 2 : index
    %c0_9 = arith.constant 0 : index
    %12 = vector.load %arg10[%c0_8, %c2, %c0_9] : memref<3x8x768xf32, #tpu.memory_space<vmem>>, vector<1x1x576xf32>
    %13 = vector.shape_cast %12 : vector<1x1x576xf32> to vector<1x576xf32>
    %c0_10 = arith.constant 0 : index
    %c3 = arith.constant 3 : index
    %c0_11 = arith.constant 0 : index
    %14 = vector.load %arg10[%c0_10, %c3, %c0_11] : memref<3x8x768xf32, #tpu.memory_space<vmem>>, vector<1x1x192xf32>
    %15 = vector.shape_cast %14 : vector<1x1x192xf32> to vector<1x192xf32>
    %c0_12 = arith.constant 0 : index
    %c4 = arith.constant 4 : index
    %c0_13 = arith.constant 0 : index
    %16 = vector.load %arg10[%c0_12, %c4, %c0_13] : memref<3x8x768xf32, #tpu.memory_space<vmem>>, vector<1x1x192xf32>
    %17 = vector.shape_cast %16 : vector<1x1x192xf32> to vector<1x192xf32>
    %c0_14 = arith.constant 0 : index
    %c5 = arith.constant 5 : index
    %c0_15 = arith.constant 0 : index
    %18 = vector.load %arg10[%c0_14, %c5, %c0_15] : memref<3x8x768xf32, #tpu.memory_space<vmem>>, vector<1x1x192xf32>
    %19 = vector.shape_cast %18 : vector<1x1x192xf32> to vector<1x192xf32>
    %c0_16 = arith.constant 0 : index
    %c6 = arith.constant 6 : index
    %c0_17 = arith.constant 0 : index
    %20 = vector.load %arg10[%c0_16, %c6, %c0_17] : memref<3x8x768xf32, #tpu.memory_space<vmem>>, vector<1x1x768xf32>
    %21 = vector.shape_cast %20 : vector<1x1x768xf32> to vector<1x768xf32>
    %c0_18 = arith.constant 0 : index
    %c7 = arith.constant 7 : index
    %c0_19 = arith.constant 0 : index
    %22 = vector.load %arg10[%c0_18, %c7, %c0_19] : memref<3x8x768xf32, #tpu.memory_space<vmem>>, vector<1x1x192xf32>
    %23 = vector.shape_cast %22 : vector<1x1x192xf32> to vector<1x192xf32>
    %cst = arith.constant dense<0.000000e+00> : vector<16xf32>
    %24 = vector.multi_reduction <add>, %4, %cst [1] : vector<16x192xf32> to vector<16xf32>
    %25 = vector.shape_cast %24 : vector<16xf32> to vector<16x1xf32>
    %cst_20 = arith.constant 1.920000e+02 : f32
    %26 = vector.broadcast %cst_20 : f32 to vector<16x1xf32>
    %27 = arith.divf %25, %26 : vector<16x1xf32>
    %28 = vector.broadcast %27 : vector<16x1xf32> to vector<16x192xf32>
    %29 = arith.subf %4, %28 : vector<16x192xf32>
    %30 = arith.mulf %29, %29 : vector<16x192xf32>
    %cst_21 = arith.constant dense<0.000000e+00> : vector<16xf32>
    %31 = vector.multi_reduction <add>, %30, %cst_21 [1] : vector<16x192xf32> to vector<16xf32>
    %32 = vector.shape_cast %31 : vector<16xf32> to vector<16x1xf32>
    %cst_22 = arith.constant 1.920000e+02 : f32
    %33 = vector.broadcast %cst_22 : f32 to vector<16x1xf32>
    %34 = arith.divf %32, %33 : vector<16x1xf32>
    %cst_23 = arith.constant 9.99999997E-7 : f32
    %35 = vector.broadcast %cst_23 : f32 to vector<16x1xf32>
    %36 = arith.addf %34, %35 : vector<16x1xf32>
    %37 = math.rsqrt %36 : vector<16x1xf32>
    %38 = vector.broadcast %37 : vector<16x1xf32> to vector<16x192xf32>
    %39 = arith.mulf %29, %38 : vector<16x192xf32>
    %40 = vector.broadcast %9 : vector<1x192xf32> to vector<16x192xf32>
    %41 = arith.mulf %39, %40 : vector<16x192xf32>
    %42 = vector.broadcast %11 : vector<1x192xf32> to vector<16x192xf32>
    %43 = arith.addf %41, %42 : vector<16x192xf32>
    %44 = arith.truncf %43 : vector<16x192xf32> to vector<16x192xbf16>
    %c0_24 = arith.constant 0 : index
    %c0_25 = arith.constant 0 : index
    %c0_26 = arith.constant 0 : index
    %45 = vector.load %arg6[%c0_24, %c0_25, %c0_26] : memref<3x192x576xbf16, #tpu.memory_space<vmem>>, vector<1x192x576xbf16>
    %46 = vector.shape_cast %45 : vector<1x192x576xbf16> to vector<192x576xbf16>
    %cst_27 = arith.constant dense<0.000000e+00> : vector<16x576xf32>
    %47 = tpu.matmul %44, %46, %cst_27 {dimension_numbers = #tpu.dot_dimension_numbers<[1], [0], [0], [1], [0, 0, 1, 1], [], []>} : vector<16x192xbf16>, vector<192x576xbf16>, vector<16x576xf32> -> vector<16x576xf32>
    %48 = vector.broadcast %13 : vector<1x576xf32> to vector<16x576xf32>
    %49 = arith.addf %47, %48 : vector<16x576xf32>
    %50 = vector.extract_strided_slice %49 {offsets = [0, 0], sizes = [16, 192], strides = [1, 1]} : vector<16x576xf32> to vector<16x192xf32>
    %51 = arith.truncf %50 : vector<16x192xf32> to vector<16x192xbf16>
    %52 = vector.shape_cast %51 : vector<16x192xbf16> to vector<2x8x192xbf16>
    %53 = vector.extract_strided_slice %49 {offsets = [0, 192], sizes = [16, 192], strides = [1, 1]} : vector<16x576xf32> to vector<16x192xf32>
    %54 = arith.truncf %53 : vector<16x192xf32> to vector<16x192xbf16>
    %55 = vector.shape_cast %54 : vector<16x192xbf16> to vector<2x8x192xbf16>
    %56 = vector.extract_strided_slice %49 {offsets = [0, 384], sizes = [16, 192], strides = [1, 1]} : vector<16x576xf32> to vector<16x192xf32>
    %57 = arith.truncf %56 : vector<16x192xf32> to vector<16x192xbf16>
    %58 = vector.shape_cast %57 : vector<16x192xbf16> to vector<2x8x192xbf16>
    %59 = vector.extract_strided_slice %52 {offsets = [0, 0, 0], sizes = [2, 8, 64], strides = [1, 1, 1]} : vector<2x8x192xbf16> to vector<2x8x64xbf16>
    %60 = vector.extract_strided_slice %55 {offsets = [0, 0, 0], sizes = [2, 8, 64], strides = [1, 1, 1]} : vector<2x8x192xbf16> to vector<2x8x64xbf16>
    "tpu.trace_start"() <{level = 10 : i32, message = "bnd,bmd->bnm"}> : () -> ()
    %cst_28 = arith.constant dense<0.000000e+00> : vector<2x8x8xf32>
    %61 = tpu.matmul %59, %60, %cst_28 {dimension_numbers = #tpu.dot_dimension_numbers<[2], [2], [1], [1], [0, 0, 0, 1, 1, 1], [0], [0]>} : vector<2x8x64xbf16>, vector<2x8x64xbf16>, vector<2x8x8xf32> -> vector<2x8x8xf32>
    "tpu.trace_stop"() : () -> ()
    %cst_29 = arith.constant 1.250000e-01 : f32
    %62 = vector.broadcast %cst_29 : f32 to vector<2x8x8xf32>
    %63 = arith.mulf %61, %62 : vector<2x8x8xf32>
    %cst_30 = arith.constant -1.000000e+30 : f32
    %64 = vector.broadcast %cst_30 : f32 to vector<2x8x8xf32>
    %65 = arith.select %7, %63, %64 : vector<2x8x8xi1>, vector<2x8x8xf32>
    %cst_31 = arith.constant dense<0xFF800000> : vector<2x8xf32>
    %66 = vector.multi_reduction <maximumf>, %65, %cst_31 [2] : vector<2x8x8xf32> to vector<2x8xf32>
    %67 = vector.shape_cast %66 : vector<2x8xf32> to vector<2x8x1xf32>
    %68 = vector.broadcast %67 : vector<2x8x1xf32> to vector<2x8x8xf32>
    %69 = arith.subf %65, %68 : vector<2x8x8xf32>
    %70 = math.exp %69 : vector<2x8x8xf32>
    %cst_32 = arith.constant dense<0.000000e+00> : vector<2x8xf32>
    %71 = vector.multi_reduction <add>, %70, %cst_32 [2] : vector<2x8x8xf32> to vector<2x8xf32>
    %72 = vector.shape_cast %71 : vector<2x8xf32> to vector<2x8x1xf32>
    %73 = tpu.reciprocal %72 {approx = true} : vector<2x8x1xf32> -> vector<2x8x1xf32>
    %74 = vector.broadcast %73 : vector<2x8x1xf32> to vector<2x8x8xf32>
    %75 = arith.mulf %70, %74 : vector<2x8x8xf32>
    %76 = arith.truncf %75 : vector<2x8x8xf32> to vector<2x8x8xbf16>
    %77 = vector.extract_strided_slice %58 {offsets = [0, 0, 0], sizes = [2, 8, 64], strides = [1, 1, 1]} : vector<2x8x192xbf16> to vector<2x8x64xbf16>
    "tpu.trace_start"() <{level = 10 : i32, message = "bnm,bmd->bnd"}> : () -> ()
    %cst_33 = arith.constant dense<0.000000e+00> : vector<2x8x64xf32>
    %78 = tpu.matmul %76, %77, %cst_33 {dimension_numbers = #tpu.dot_dimension_numbers<[2], [1], [1], [2], [0, 0, 0, 1, 1, 2], [0], [0]>} : vector<2x8x8xbf16>, vector<2x8x64xbf16>, vector<2x8x64xf32> -> vector<2x8x64xf32>
    "tpu.trace_stop"() : () -> ()
    %79 = vector.extract_strided_slice %52 {offsets = [0, 0, 64], sizes = [2, 8, 64], strides = [1, 1, 1]} : vector<2x8x192xbf16> to vector<2x8x64xbf16>
    %80 = vector.extract_strided_slice %55 {offsets = [0, 0, 64], sizes = [2, 8, 64], strides = [1, 1, 1]} : vector<2x8x192xbf16> to vector<2x8x64xbf16>
    "tpu.trace_start"() <{level = 10 : i32, message = "bnd,bmd->bnm"}> : () -> ()
    %cst_34 = arith.constant dense<0.000000e+00> : vector<2x8x8xf32>
    %81 = tpu.matmul %79, %80, %cst_34 {dimension_numbers = #tpu.dot_dimension_numbers<[2], [2], [1], [1], [0, 0, 0, 1, 1, 1], [0], [0]>} : vector<2x8x64xbf16>, vector<2x8x64xbf16>, vector<2x8x8xf32> -> vector<2x8x8xf32>
    "tpu.trace_stop"() : () -> ()
    %cst_35 = arith.constant 1.250000e-01 : f32
    %82 = vector.broadcast %cst_35 : f32 to vector<2x8x8xf32>
    %83 = arith.mulf %81, %82 : vector<2x8x8xf32>
    %cst_36 = arith.constant -1.000000e+30 : f32
    %84 = vector.broadcast %cst_36 : f32 to vector<2x8x8xf32>
    %85 = arith.select %7, %83, %84 : vector<2x8x8xi1>, vector<2x8x8xf32>
    %cst_37 = arith.constant dense<0xFF800000> : vector<2x8xf32>
    %86 = vector.multi_reduction <maximumf>, %85, %cst_37 [2] : vector<2x8x8xf32> to vector<2x8xf32>
    %87 = vector.shape_cast %86 : vector<2x8xf32> to vector<2x8x1xf32>
    %88 = vector.broadcast %87 : vector<2x8x1xf32> to vector<2x8x8xf32>
    %89 = arith.subf %85, %88 : vector<2x8x8xf32>
    %90 = math.exp %89 : vector<2x8x8xf32>
    %cst_38 = arith.constant dense<0.000000e+00> : vector<2x8xf32>
    %91 = vector.multi_reduction <add>, %90, %cst_38 [2] : vector<2x8x8xf32> to vector<2x8xf32>
    %92 = vector.shape_cast %91 : vector<2x8xf32> to vector<2x8x1xf32>
    %93 = tpu.reciprocal %92 {approx = true} : vector<2x8x1xf32> -> vector<2x8x1xf32>
    %94 = vector.broadcast %93 : vector<2x8x1xf32> to vector<2x8x8xf32>
    %95 = arith.mulf %90, %94 : vector<2x8x8xf32>
    %96 = arith.truncf %95 : vector<2x8x8xf32> to vector<2x8x8xbf16>
    %97 = vector.extract_strided_slice %58 {offsets = [0, 0, 64], sizes = [2, 8, 64], strides = [1, 1, 1]} : vector<2x8x192xbf16> to vector<2x8x64xbf16>
    "tpu.trace_start"() <{level = 10 : i32, message = "bnm,bmd->bnd"}> : () -> ()
    %cst_39 = arith.constant dense<0.000000e+00> : vector<2x8x64xf32>
    %98 = tpu.matmul %96, %97, %cst_39 {dimension_numbers = #tpu.dot_dimension_numbers<[2], [1], [1], [2], [0, 0, 0, 1, 1, 2], [0], [0]>} : vector<2x8x8xbf16>, vector<2x8x64xbf16>, vector<2x8x64xf32> -> vector<2x8x64xf32>
    "tpu.trace_stop"() : () -> ()
    %99 = vector.extract_strided_slice %52 {offsets = [0, 0, 128], sizes = [2, 8, 64], strides = [1, 1, 1]} : vector<2x8x192xbf16> to vector<2x8x64xbf16>
    %100 = vector.extract_strided_slice %55 {offsets = [0, 0, 128], sizes = [2, 8, 64], strides = [1, 1, 1]} : vector<2x8x192xbf16> to vector<2x8x64xbf16>
    "tpu.trace_start"() <{level = 10 : i32, message = "bnd,bmd->bnm"}> : () -> ()
    %cst_40 = arith.constant dense<0.000000e+00> : vector<2x8x8xf32>
    %101 = tpu.matmul %99, %100, %cst_40 {dimension_numbers = #tpu.dot_dimension_numbers<[2], [2], [1], [1], [0, 0, 0, 1, 1, 1], [0], [0]>} : vector<2x8x64xbf16>, vector<2x8x64xbf16>, vector<2x8x8xf32> -> vector<2x8x8xf32>
    "tpu.trace_stop"() : () -> ()
    %cst_41 = arith.constant 1.250000e-01 : f32
    %102 = vector.broadcast %cst_41 : f32 to vector<2x8x8xf32>
    %103 = arith.mulf %101, %102 : vector<2x8x8xf32>
    %cst_42 = arith.constant -1.000000e+30 : f32
    %104 = vector.broadcast %cst_42 : f32 to vector<2x8x8xf32>
    %105 = arith.select %7, %103, %104 : vector<2x8x8xi1>, vector<2x8x8xf32>
    %cst_43 = arith.constant dense<0xFF800000> : vector<2x8xf32>
    %106 = vector.multi_reduction <maximumf>, %105, %cst_43 [2] : vector<2x8x8xf32> to vector<2x8xf32>
    %107 = vector.shape_cast %106 : vector<2x8xf32> to vector<2x8x1xf32>
    %108 = vector.broadcast %107 : vector<2x8x1xf32> to vector<2x8x8xf32>
    %109 = arith.subf %105, %108 : vector<2x8x8xf32>
    %110 = math.exp %109 : vector<2x8x8xf32>
    %cst_44 = arith.constant dense<0.000000e+00> : vector<2x8xf32>
    %111 = vector.multi_reduction <add>, %110, %cst_44 [2] : vector<2x8x8xf32> to vector<2x8xf32>
    %112 = vector.shape_cast %111 : vector<2x8xf32> to vector<2x8x1xf32>
    %113 = tpu.reciprocal %112 {approx = true} : vector<2x8x1xf32> -> vector<2x8x1xf32>
    %114 = vector.broadcast %113 : vector<2x8x1xf32> to vector<2x8x8xf32>
    %115 = arith.mulf %110, %114 : vector<2x8x8xf32>
    %116 = arith.truncf %115 : vector<2x8x8xf32> to vector<2x8x8xbf16>
    %117 = vector.extract_strided_slice %58 {offsets = [0, 0, 128], sizes = [2, 8, 64], strides = [1, 1, 1]} : vector<2x8x192xbf16> to vector<2x8x64xbf16>
    "tpu.trace_start"() <{level = 10 : i32, message = "bnm,bmd->bnd"}> : () -> ()
    %cst_45 = arith.constant dense<0.000000e+00> : vector<2x8x64xf32>
    %118 = tpu.matmul %116, %117, %cst_45 {dimension_numbers = #tpu.dot_dimension_numbers<[2], [1], [1], [2], [0, 0, 0, 1, 1, 2], [0], [0]>} : vector<2x8x8xbf16>, vector<2x8x64xbf16>, vector<2x8x64xf32> -> vector<2x8x64xf32>
    "tpu.trace_stop"() : () -> ()
    %119 = tpu.concatenate %78, %98, %118 in 2 : vector<2x8x64xf32>, vector<2x8x64xf32>, vector<2x8x64xf32> -> vector<2x8x192xf32>
    %120 = vector.shape_cast %119 : vector<2x8x192xf32> to vector<16x192xf32>
    %121 = arith.truncf %120 : vector<16x192xf32> to vector<16x192xbf16>
    %c0_46 = arith.constant 0 : index
    %c0_47 = arith.constant 0 : index
    %c0_48 = arith.constant 0 : index
    %122 = vector.load %arg7[%c0_46, %c0_47, %c0_48] : memref<3x192x192xbf16, #tpu.memory_space<vmem>>, vector<1x192x192xbf16>
    %123 = vector.shape_cast %122 : vector<1x192x192xbf16> to vector<192x192xbf16>
    %cst_49 = arith.constant dense<0.000000e+00> : vector<16x192xf32>
    %124 = tpu.matmul %121, %123, %cst_49 {dimension_numbers = #tpu.dot_dimension_numbers<[1], [0], [0], [1], [0, 0, 1, 1], [], []>} : vector<16x192xbf16>, vector<192x192xbf16>, vector<16x192xf32> -> vector<16x192xf32>
    %125 = arith.addf %4, %124 : vector<16x192xf32>
    %126 = vector.broadcast %15 : vector<1x192xf32> to vector<16x192xf32>
    %127 = arith.addf %125, %126 : vector<16x192xf32>
    %cst_50 = arith.constant dense<0.000000e+00> : vector<16xf32>
    %128 = vector.multi_reduction <add>, %127, %cst_50 [1] : vector<16x192xf32> to vector<16xf32>
    %129 = vector.shape_cast %128 : vector<16xf32> to vector<16x1xf32>
    %cst_51 = arith.constant 1.920000e+02 : f32
    %130 = vector.broadcast %cst_51 : f32 to vector<16x1xf32>
    %131 = arith.divf %129, %130 : vector<16x1xf32>
    %132 = vector.broadcast %131 : vector<16x1xf32> to vector<16x192xf32>
    %133 = arith.subf %127, %132 : vector<16x192xf32>
    %134 = arith.mulf %133, %133 : vector<16x192xf32>
    %cst_52 = arith.constant dense<0.000000e+00> : vector<16xf32>
    %135 = vector.multi_reduction <add>, %134, %cst_52 [1] : vector<16x192xf32> to vector<16xf32>
    %136 = vector.shape_cast %135 : vector<16xf32> to vector<16x1xf32>
    %cst_53 = arith.constant 1.920000e+02 : f32
    %137 = vector.broadcast %cst_53 : f32 to vector<16x1xf32>
    %138 = arith.divf %136, %137 : vector<16x1xf32>
    %cst_54 = arith.constant 9.99999997E-7 : f32
    %139 = vector.broadcast %cst_54 : f32 to vector<16x1xf32>
    %140 = arith.addf %138, %139 : vector<16x1xf32>
    %141 = math.rsqrt %140 : vector<16x1xf32>
    %142 = vector.broadcast %141 : vector<16x1xf32> to vector<16x192xf32>
    %143 = arith.mulf %133, %142 : vector<16x192xf32>
    %144 = vector.broadcast %17 : vector<1x192xf32> to vector<16x192xf32>
    %145 = arith.mulf %143, %144 : vector<16x192xf32>
    %146 = vector.broadcast %19 : vector<1x192xf32> to vector<16x192xf32>
    %147 = arith.addf %145, %146 : vector<16x192xf32>
    %148 = arith.truncf %147 : vector<16x192xf32> to vector<16x192xbf16>
    %c0_55 = arith.constant 0 : index
    %c0_56 = arith.constant 0 : index
    %c0_57 = arith.constant 0 : index
    %149 = vector.load %arg8[%c0_55, %c0_56, %c0_57] : memref<3x192x768xbf16, #tpu.memory_space<vmem>>, vector<1x192x768xbf16>
    %150 = vector.shape_cast %149 : vector<1x192x768xbf16> to vector<192x768xbf16>
    %cst_58 = arith.constant dense<0.000000e+00> : vector<16x768xf32>
    %151 = tpu.matmul %148, %150, %cst_58 {dimension_numbers = #tpu.dot_dimension_numbers<[1], [0], [0], [1], [0, 0, 1, 1], [], []>} : vector<16x192xbf16>, vector<192x768xbf16>, vector<16x768xf32> -> vector<16x768xf32>
    %152 = vector.broadcast %21 : vector<1x768xf32> to vector<16x768xf32>
    %153 = arith.addf %151, %152 : vector<16x768xf32>
    %154 = arith.mulf %153, %153 : vector<16x768xf32>
    %155 = arith.mulf %153, %154 : vector<16x768xf32>
    %cst_59 = arith.constant 4.471500e-02 : f32
    %156 = vector.broadcast %cst_59 : f32 to vector<16x768xf32>
    %157 = arith.mulf %156, %155 : vector<16x768xf32>
    %158 = arith.addf %153, %157 : vector<16x768xf32>
    %cst_60 = arith.constant 0.797884583 : f32
    %159 = vector.broadcast %cst_60 : f32 to vector<16x768xf32>
    %160 = arith.mulf %159, %158 : vector<16x768xf32>
    %161 = math.tanh %160 : vector<16x768xf32>
    %cst_61 = arith.constant 1.000000e+00 : f32
    %162 = vector.broadcast %cst_61 : f32 to vector<16x768xf32>
    %163 = arith.addf %162, %161 : vector<16x768xf32>
    %cst_62 = arith.constant 5.000000e-01 : f32
    %164 = vector.broadcast %cst_62 : f32 to vector<16x768xf32>
    %165 = arith.mulf %164, %163 : vector<16x768xf32>
    %166 = arith.mulf %153, %165 : vector<16x768xf32>
    %167 = arith.truncf %166 : vector<16x768xf32> to vector<16x768xbf16>
    %c0_63 = arith.constant 0 : index
    %c0_64 = arith.constant 0 : index
    %c0_65 = arith.constant 0 : index
    %168 = vector.load %arg9[%c0_63, %c0_64, %c0_65] : memref<3x768x192xbf16, #tpu.memory_space<vmem>>, vector<1x768x192xbf16>
    %169 = vector.shape_cast %168 : vector<1x768x192xbf16> to vector<768x192xbf16>
    %cst_66 = arith.constant dense<0.000000e+00> : vector<16x192xf32>
    %170 = tpu.matmul %167, %169, %cst_66 {dimension_numbers = #tpu.dot_dimension_numbers<[1], [0], [0], [1], [0, 0, 1, 1], [], []>} : vector<16x768xbf16>, vector<768x192xbf16>, vector<16x192xf32> -> vector<16x192xf32>
    %171 = arith.addf %127, %170 : vector<16x192xf32>
    %172 = vector.broadcast %23 : vector<1x192xf32> to vector<16x192xf32>
    %173 = arith.addf %171, %172 : vector<16x192xf32>
    %c1_67 = arith.constant 1 : index
    %c0_68 = arith.constant 0 : index
    %c0_69 = arith.constant 0 : index
    %174 = vector.load %arg10[%c1_67, %c0_68, %c0_69] : memref<3x8x768xf32, #tpu.memory_space<vmem>>, vector<1x1x192xf32>
    %175 = vector.shape_cast %174 : vector<1x1x192xf32> to vector<1x192xf32>
    %c1_70 = arith.constant 1 : index
    %c1_71 = arith.constant 1 : index
    %c0_72 = arith.constant 0 : index
    %176 = vector.load %arg10[%c1_70, %c1_71, %c0_72] : memref<3x8x768xf32, #tpu.memory_space<vmem>>, vector<1x1x192xf32>
    %177 = vector.shape_cast %176 : vector<1x1x192xf32> to vector<1x192xf32>
    %c1_73 = arith.constant 1 : index
    %c2_74 = arith.constant 2 : index
    %c0_75 = arith.constant 0 : index
    %178 = vector.load %arg10[%c1_73, %c2_74, %c0_75] : memref<3x8x768xf32, #tpu.memory_space<vmem>>, vector<1x1x576xf32>
    %179 = vector.shape_cast %178 : vector<1x1x576xf32> to vector<1x576xf32>
    %c1_76 = arith.constant 1 : index
    %c3_77 = arith.constant 3 : index
    %c0_78 = arith.constant 0 : index
    %180 = vector.load %arg10[%c1_76, %c3_77, %c0_78] : memref<3x8x768xf32, #tpu.memory_space<vmem>>, vector<1x1x192xf32>
    %181 = vector.shape_cast %180 : vector<1x1x192xf32> to vector<1x192xf32>
    %c1_79 = arith.constant 1 : index
    %c4_80 = arith.constant 4 : index
    %c0_81 = arith.constant 0 : index
    %182 = vector.load %arg10[%c1_79, %c4_80, %c0_81] : memref<3x8x768xf32, #tpu.memory_space<vmem>>, vector<1x1x192xf32>
    %183 = vector.shape_cast %182 : vector<1x1x192xf32> to vector<1x192xf32>
    %c1_82 = arith.constant 1 : index
    %c5_83 = arith.constant 5 : index
    %c0_84 = arith.constant 0 : index
    %184 = vector.load %arg10[%c1_82, %c5_83, %c0_84] : memref<3x8x768xf32, #tpu.memory_space<vmem>>, vector<1x1x192xf32>
    %185 = vector.shape_cast %184 : vector<1x1x192xf32> to vector<1x192xf32>
    %c1_85 = arith.constant 1 : index
    %c6_86 = arith.constant 6 : index
    %c0_87 = arith.constant 0 : index
    %186 = vector.load %arg10[%c1_85, %c6_86, %c0_87] : memref<3x8x768xf32, #tpu.memory_space<vmem>>, vector<1x1x768xf32>
    %187 = vector.shape_cast %186 : vector<1x1x768xf32> to vector<1x768xf32>
    %c1_88 = arith.constant 1 : index
    %c7_89 = arith.constant 7 : index
    %c0_90 = arith.constant 0 : index
    %188 = vector.load %arg10[%c1_88, %c7_89, %c0_90] : memref<3x8x768xf32, #tpu.memory_space<vmem>>, vector<1x1x192xf32>
    %189 = vector.shape_cast %188 : vector<1x1x192xf32> to vector<1x192xf32>
    %cst_91 = arith.constant dense<0.000000e+00> : vector<16xf32>
    %190 = vector.multi_reduction <add>, %173, %cst_91 [1] : vector<16x192xf32> to vector<16xf32>
    %191 = vector.shape_cast %190 : vector<16xf32> to vector<16x1xf32>
    %cst_92 = arith.constant 1.920000e+02 : f32
    %192 = vector.broadcast %cst_92 : f32 to vector<16x1xf32>
    %193 = arith.divf %191, %192 : vector<16x1xf32>
    %194 = vector.broadcast %193 : vector<16x1xf32> to vector<16x192xf32>
    %195 = arith.subf %173, %194 : vector<16x192xf32>
    %196 = arith.mulf %195, %195 : vector<16x192xf32>
    %cst_93 = arith.constant dense<0.000000e+00> : vector<16xf32>
    %197 = vector.multi_reduction <add>, %196, %cst_93 [1] : vector<16x192xf32> to vector<16xf32>
    %198 = vector.shape_cast %197 : vector<16xf32> to vector<16x1xf32>
    %cst_94 = arith.constant 1.920000e+02 : f32
    %199 = vector.broadcast %cst_94 : f32 to vector<16x1xf32>
    %200 = arith.divf %198, %199 : vector<16x1xf32>
    %cst_95 = arith.constant 9.99999997E-7 : f32
    %201 = vector.broadcast %cst_95 : f32 to vector<16x1xf32>
    %202 = arith.addf %200, %201 : vector<16x1xf32>
    %203 = math.rsqrt %202 : vector<16x1xf32>
    %204 = vector.broadcast %203 : vector<16x1xf32> to vector<16x192xf32>
    %205 = arith.mulf %195, %204 : vector<16x192xf32>
    %206 = vector.broadcast %175 : vector<1x192xf32> to vector<16x192xf32>
    %207 = arith.mulf %205, %206 : vector<16x192xf32>
    %208 = vector.broadcast %177 : vector<1x192xf32> to vector<16x192xf32>
    %209 = arith.addf %207, %208 : vector<16x192xf32>
    %210 = arith.truncf %209 : vector<16x192xf32> to vector<16x192xbf16>
    %c1_96 = arith.constant 1 : index
    %c0_97 = arith.constant 0 : index
    %c0_98 = arith.constant 0 : index
    %211 = vector.load %arg6[%c1_96, %c0_97, %c0_98] : memref<3x192x576xbf16, #tpu.memory_space<vmem>>, vector<1x192x576xbf16>
    %212 = vector.shape_cast %211 : vector<1x192x576xbf16> to vector<192x576xbf16>
    %cst_99 = arith.constant dense<0.000000e+00> : vector<16x576xf32>
    %213 = tpu.matmul %210, %212, %cst_99 {dimension_numbers = #tpu.dot_dimension_numbers<[1], [0], [0], [1], [0, 0, 1, 1], [], []>} : vector<16x192xbf16>, vector<192x576xbf16>, vector<16x576xf32> -> vector<16x576xf32>
    %214 = vector.broadcast %179 : vector<1x576xf32> to vector<16x576xf32>
    %215 = arith.addf %213, %214 : vector<16x576xf32>
    %216 = vector.extract_strided_slice %215 {offsets = [0, 0], sizes = [16, 192], strides = [1, 1]} : vector<16x576xf32> to vector<16x192xf32>
    %217 = arith.truncf %216 : vector<16x192xf32> to vector<16x192xbf16>
    %218 = vector.shape_cast %217 : vector<16x192xbf16> to vector<2x8x192xbf16>
    %219 = vector.extract_strided_slice %215 {offsets = [0, 192], sizes = [16, 192], strides = [1, 1]} : vector<16x576xf32> to vector<16x192xf32>
    %220 = arith.truncf %219 : vector<16x192xf32> to vector<16x192xbf16>
    %221 = vector.shape_cast %220 : vector<16x192xbf16> to vector<2x8x192xbf16>
    %222 = vector.extract_strided_slice %215 {offsets = [0, 384], sizes = [16, 192], strides = [1, 1]} : vector<16x576xf32> to vector<16x192xf32>
    %223 = arith.truncf %222 : vector<16x192xf32> to vector<16x192xbf16>
    %224 = vector.shape_cast %223 : vector<16x192xbf16> to vector<2x8x192xbf16>
    %225 = vector.extract_strided_slice %218 {offsets = [0, 0, 0], sizes = [2, 8, 64], strides = [1, 1, 1]} : vector<2x8x192xbf16> to vector<2x8x64xbf16>
    %226 = vector.extract_strided_slice %221 {offsets = [0, 0, 0], sizes = [2, 8, 64], strides = [1, 1, 1]} : vector<2x8x192xbf16> to vector<2x8x64xbf16>
    "tpu.trace_start"() <{level = 10 : i32, message = "bnd,bmd->bnm"}> : () -> ()
    %cst_100 = arith.constant dense<0.000000e+00> : vector<2x8x8xf32>
    %227 = tpu.matmul %225, %226, %cst_100 {dimension_numbers = #tpu.dot_dimension_numbers<[2], [2], [1], [1], [0, 0, 0, 1, 1, 1], [0], [0]>} : vector<2x8x64xbf16>, vector<2x8x64xbf16>, vector<2x8x8xf32> -> vector<2x8x8xf32>
    "tpu.trace_stop"() : () -> ()
    %cst_101 = arith.constant 1.250000e-01 : f32
    %228 = vector.broadcast %cst_101 : f32 to vector<2x8x8xf32>
    %229 = arith.mulf %227, %228 : vector<2x8x8xf32>
    %cst_102 = arith.constant -1.000000e+30 : f32
    %230 = vector.broadcast %cst_102 : f32 to vector<2x8x8xf32>
    %231 = arith.select %7, %229, %230 : vector<2x8x8xi1>, vector<2x8x8xf32>
    %cst_103 = arith.constant dense<0xFF800000> : vector<2x8xf32>
    %232 = vector.multi_reduction <maximumf>, %231, %cst_103 [2] : vector<2x8x8xf32> to vector<2x8xf32>
    %233 = vector.shape_cast %232 : vector<2x8xf32> to vector<2x8x1xf32>
    %234 = vector.broadcast %233 : vector<2x8x1xf32> to vector<2x8x8xf32>
    %235 = arith.subf %231, %234 : vector<2x8x8xf32>
    %236 = math.exp %235 : vector<2x8x8xf32>
    %cst_104 = arith.constant dense<0.000000e+00> : vector<2x8xf32>
    %237 = vector.multi_reduction <add>, %236, %cst_104 [2] : vector<2x8x8xf32> to vector<2x8xf32>
    %238 = vector.shape_cast %237 : vector<2x8xf32> to vector<2x8x1xf32>
    %239 = tpu.reciprocal %238 {approx = true} : vector<2x8x1xf32> -> vector<2x8x1xf32>
    %240 = vector.broadcast %239 : vector<2x8x1xf32> to vector<2x8x8xf32>
    %241 = arith.mulf %236, %240 : vector<2x8x8xf32>
    %242 = arith.truncf %241 : vector<2x8x8xf32> to vector<2x8x8xbf16>
    %243 = vector.extract_strided_slice %224 {offsets = [0, 0, 0], sizes = [2, 8, 64], strides = [1, 1, 1]} : vector<2x8x192xbf16> to vector<2x8x64xbf16>
    "tpu.trace_start"() <{level = 10 : i32, message = "bnm,bmd->bnd"}> : () -> ()
    %cst_105 = arith.constant dense<0.000000e+00> : vector<2x8x64xf32>
    %244 = tpu.matmul %242, %243, %cst_105 {dimension_numbers = #tpu.dot_dimension_numbers<[2], [1], [1], [2], [0, 0, 0, 1, 1, 2], [0], [0]>} : vector<2x8x8xbf16>, vector<2x8x64xbf16>, vector<2x8x64xf32> -> vector<2x8x64xf32>
    "tpu.trace_stop"() : () -> ()
    %245 = vector.extract_strided_slice %218 {offsets = [0, 0, 64], sizes = [2, 8, 64], strides = [1, 1, 1]} : vector<2x8x192xbf16> to vector<2x8x64xbf16>
    %246 = vector.extract_strided_slice %221 {offsets = [0, 0, 64], sizes = [2, 8, 64], strides = [1, 1, 1]} : vector<2x8x192xbf16> to vector<2x8x64xbf16>
    "tpu.trace_start"() <{level = 10 : i32, message = "bnd,bmd->bnm"}> : () -> ()
    %cst_106 = arith.constant dense<0.000000e+00> : vector<2x8x8xf32>
    %247 = tpu.matmul %245, %246, %cst_106 {dimension_numbers = #tpu.dot_dimension_numbers<[2], [2], [1], [1], [0, 0, 0, 1, 1, 1], [0], [0]>} : vector<2x8x64xbf16>, vector<2x8x64xbf16>, vector<2x8x8xf32> -> vector<2x8x8xf32>
    "tpu.trace_stop"() : () -> ()
    %cst_107 = arith.constant 1.250000e-01 : f32
    %248 = vector.broadcast %cst_107 : f32 to vector<2x8x8xf32>
    %249 = arith.mulf %247, %248 : vector<2x8x8xf32>
    %cst_108 = arith.constant -1.000000e+30 : f32
    %250 = vector.broadcast %cst_108 : f32 to vector<2x8x8xf32>
    %251 = arith.select %7, %249, %250 : vector<2x8x8xi1>, vector<2x8x8xf32>
    %cst_109 = arith.constant dense<0xFF800000> : vector<2x8xf32>
    %252 = vector.multi_reduction <maximumf>, %251, %cst_109 [2] : vector<2x8x8xf32> to vector<2x8xf32>
    %253 = vector.shape_cast %252 : vector<2x8xf32> to vector<2x8x1xf32>
    %254 = vector.broadcast %253 : vector<2x8x1xf32> to vector<2x8x8xf32>
    %255 = arith.subf %251, %254 : vector<2x8x8xf32>
    %256 = math.exp %255 : vector<2x8x8xf32>
    %cst_110 = arith.constant dense<0.000000e+00> : vector<2x8xf32>
    %257 = vector.multi_reduction <add>, %256, %cst_110 [2] : vector<2x8x8xf32> to vector<2x8xf32>
    %258 = vector.shape_cast %257 : vector<2x8xf32> to vector<2x8x1xf32>
    %259 = tpu.reciprocal %258 {approx = true} : vector<2x8x1xf32> -> vector<2x8x1xf32>
    %260 = vector.broadcast %259 : vector<2x8x1xf32> to vector<2x8x8xf32>
    %261 = arith.mulf %256, %260 : vector<2x8x8xf32>
    %262 = arith.truncf %261 : vector<2x8x8xf32> to vector<2x8x8xbf16>
    %263 = vector.extract_strided_slice %224 {offsets = [0, 0, 64], sizes = [2, 8, 64], strides = [1, 1, 1]} : vector<2x8x192xbf16> to vector<2x8x64xbf16>
    "tpu.trace_start"() <{level = 10 : i32, message = "bnm,bmd->bnd"}> : () -> ()
    %cst_111 = arith.constant dense<0.000000e+00> : vector<2x8x64xf32>
    %264 = tpu.matmul %262, %263, %cst_111 {dimension_numbers = #tpu.dot_dimension_numbers<[2], [1], [1], [2], [0, 0, 0, 1, 1, 2], [0], [0]>} : vector<2x8x8xbf16>, vector<2x8x64xbf16>, vector<2x8x64xf32> -> vector<2x8x64xf32>
    "tpu.trace_stop"() : () -> ()
    %265 = vector.extract_strided_slice %218 {offsets = [0, 0, 128], sizes = [2, 8, 64], strides = [1, 1, 1]} : vector<2x8x192xbf16> to vector<2x8x64xbf16>
    %266 = vector.extract_strided_slice %221 {offsets = [0, 0, 128], sizes = [2, 8, 64], strides = [1, 1, 1]} : vector<2x8x192xbf16> to vector<2x8x64xbf16>
    "tpu.trace_start"() <{level = 10 : i32, message = "bnd,bmd->bnm"}> : () -> ()
    %cst_112 = arith.constant dense<0.000000e+00> : vector<2x8x8xf32>
    %267 = tpu.matmul %265, %266, %cst_112 {dimension_numbers = #tpu.dot_dimension_numbers<[2], [2], [1], [1], [0, 0, 0, 1, 1, 1], [0], [0]>} : vector<2x8x64xbf16>, vector<2x8x64xbf16>, vector<2x8x8xf32> -> vector<2x8x8xf32>
    "tpu.trace_stop"() : () -> ()
    %cst_113 = arith.constant 1.250000e-01 : f32
    %268 = vector.broadcast %cst_113 : f32 to vector<2x8x8xf32>
    %269 = arith.mulf %267, %268 : vector<2x8x8xf32>
    %cst_114 = arith.constant -1.000000e+30 : f32
    %270 = vector.broadcast %cst_114 : f32 to vector<2x8x8xf32>
    %271 = arith.select %7, %269, %270 : vector<2x8x8xi1>, vector<2x8x8xf32>
    %cst_115 = arith.constant dense<0xFF800000> : vector<2x8xf32>
    %272 = vector.multi_reduction <maximumf>, %271, %cst_115 [2] : vector<2x8x8xf32> to vector<2x8xf32>
    %273 = vector.shape_cast %272 : vector<2x8xf32> to vector<2x8x1xf32>
    %274 = vector.broadcast %273 : vector<2x8x1xf32> to vector<2x8x8xf32>
    %275 = arith.subf %271, %274 : vector<2x8x8xf32>
    %276 = math.exp %275 : vector<2x8x8xf32>
    %cst_116 = arith.constant dense<0.000000e+00> : vector<2x8xf32>
    %277 = vector.multi_reduction <add>, %276, %cst_116 [2] : vector<2x8x8xf32> to vector<2x8xf32>
    %278 = vector.shape_cast %277 : vector<2x8xf32> to vector<2x8x1xf32>
    %279 = tpu.reciprocal %278 {approx = true} : vector<2x8x1xf32> -> vector<2x8x1xf32>
    %280 = vector.broadcast %279 : vector<2x8x1xf32> to vector<2x8x8xf32>
    %281 = arith.mulf %276, %280 : vector<2x8x8xf32>
    %282 = arith.truncf %281 : vector<2x8x8xf32> to vector<2x8x8xbf16>
    %283 = vector.extract_strided_slice %224 {offsets = [0, 0, 128], sizes = [2, 8, 64], strides = [1, 1, 1]} : vector<2x8x192xbf16> to vector<2x8x64xbf16>
    "tpu.trace_start"() <{level = 10 : i32, message = "bnm,bmd->bnd"}> : () -> ()
    %cst_117 = arith.constant dense<0.000000e+00> : vector<2x8x64xf32>
    %284 = tpu.matmul %282, %283, %cst_117 {dimension_numbers = #tpu.dot_dimension_numbers<[2], [1], [1], [2], [0, 0, 0, 1, 1, 2], [0], [0]>} : vector<2x8x8xbf16>, vector<2x8x64xbf16>, vector<2x8x64xf32> -> vector<2x8x64xf32>
    "tpu.trace_stop"() : () -> ()
    %285 = tpu.concatenate %244, %264, %284 in 2 : vector<2x8x64xf32>, vector<2x8x64xf32>, vector<2x8x64xf32> -> vector<2x8x192xf32>
    %286 = vector.shape_cast %285 : vector<2x8x192xf32> to vector<16x192xf32>
    %287 = arith.truncf %286 : vector<16x192xf32> to vector<16x192xbf16>
    %c1_118 = arith.constant 1 : index
    %c0_119 = arith.constant 0 : index
    %c0_120 = arith.constant 0 : index
    %288 = vector.load %arg7[%c1_118, %c0_119, %c0_120] : memref<3x192x192xbf16, #tpu.memory_space<vmem>>, vector<1x192x192xbf16>
    %289 = vector.shape_cast %288 : vector<1x192x192xbf16> to vector<192x192xbf16>
    %cst_121 = arith.constant dense<0.000000e+00> : vector<16x192xf32>
    %290 = tpu.matmul %287, %289, %cst_121 {dimension_numbers = #tpu.dot_dimension_numbers<[1], [0], [0], [1], [0, 0, 1, 1], [], []>} : vector<16x192xbf16>, vector<192x192xbf16>, vector<16x192xf32> -> vector<16x192xf32>
    %291 = arith.addf %173, %290 : vector<16x192xf32>
    %292 = vector.broadcast %181 : vector<1x192xf32> to vector<16x192xf32>
    %293 = arith.addf %291, %292 : vector<16x192xf32>
    %cst_122 = arith.constant dense<0.000000e+00> : vector<16xf32>
    %294 = vector.multi_reduction <add>, %293, %cst_122 [1] : vector<16x192xf32> to vector<16xf32>
    %295 = vector.shape_cast %294 : vector<16xf32> to vector<16x1xf32>
    %cst_123 = arith.constant 1.920000e+02 : f32
    %296 = vector.broadcast %cst_123 : f32 to vector<16x1xf32>
    %297 = arith.divf %295, %296 : vector<16x1xf32>
    %298 = vector.broadcast %297 : vector<16x1xf32> to vector<16x192xf32>
    %299 = arith.subf %293, %298 : vector<16x192xf32>
    %300 = arith.mulf %299, %299 : vector<16x192xf32>
    %cst_124 = arith.constant dense<0.000000e+00> : vector<16xf32>
    %301 = vector.multi_reduction <add>, %300, %cst_124 [1] : vector<16x192xf32> to vector<16xf32>
    %302 = vector.shape_cast %301 : vector<16xf32> to vector<16x1xf32>
    %cst_125 = arith.constant 1.920000e+02 : f32
    %303 = vector.broadcast %cst_125 : f32 to vector<16x1xf32>
    %304 = arith.divf %302, %303 : vector<16x1xf32>
    %cst_126 = arith.constant 9.99999997E-7 : f32
    %305 = vector.broadcast %cst_126 : f32 to vector<16x1xf32>
    %306 = arith.addf %304, %305 : vector<16x1xf32>
    %307 = math.rsqrt %306 : vector<16x1xf32>
    %308 = vector.broadcast %307 : vector<16x1xf32> to vector<16x192xf32>
    %309 = arith.mulf %299, %308 : vector<16x192xf32>
    %310 = vector.broadcast %183 : vector<1x192xf32> to vector<16x192xf32>
    %311 = arith.mulf %309, %310 : vector<16x192xf32>
    %312 = vector.broadcast %185 : vector<1x192xf32> to vector<16x192xf32>
    %313 = arith.addf %311, %312 : vector<16x192xf32>
    %314 = arith.truncf %313 : vector<16x192xf32> to vector<16x192xbf16>
    %c1_127 = arith.constant 1 : index
    %c0_128 = arith.constant 0 : index
    %c0_129 = arith.constant 0 : index
    %315 = vector.load %arg8[%c1_127, %c0_128, %c0_129] : memref<3x192x768xbf16, #tpu.memory_space<vmem>>, vector<1x192x768xbf16>
    %316 = vector.shape_cast %315 : vector<1x192x768xbf16> to vector<192x768xbf16>
    %cst_130 = arith.constant dense<0.000000e+00> : vector<16x768xf32>
    %317 = tpu.matmul %314, %316, %cst_130 {dimension_numbers = #tpu.dot_dimension_numbers<[1], [0], [0], [1], [0, 0, 1, 1], [], []>} : vector<16x192xbf16>, vector<192x768xbf16>, vector<16x768xf32> -> vector<16x768xf32>
    %318 = vector.broadcast %187 : vector<1x768xf32> to vector<16x768xf32>
    %319 = arith.addf %317, %318 : vector<16x768xf32>
    %320 = arith.mulf %319, %319 : vector<16x768xf32>
    %321 = arith.mulf %319, %320 : vector<16x768xf32>
    %cst_131 = arith.constant 4.471500e-02 : f32
    %322 = vector.broadcast %cst_131 : f32 to vector<16x768xf32>
    %323 = arith.mulf %322, %321 : vector<16x768xf32>
    %324 = arith.addf %319, %323 : vector<16x768xf32>
    %cst_132 = arith.constant 0.797884583 : f32
    %325 = vector.broadcast %cst_132 : f32 to vector<16x768xf32>
    %326 = arith.mulf %325, %324 : vector<16x768xf32>
    %327 = math.tanh %326 : vector<16x768xf32>
    %cst_133 = arith.constant 1.000000e+00 : f32
    %328 = vector.broadcast %cst_133 : f32 to vector<16x768xf32>
    %329 = arith.addf %328, %327 : vector<16x768xf32>
    %cst_134 = arith.constant 5.000000e-01 : f32
    %330 = vector.broadcast %cst_134 : f32 to vector<16x768xf32>
    %331 = arith.mulf %330, %329 : vector<16x768xf32>
    %332 = arith.mulf %319, %331 : vector<16x768xf32>
    %333 = arith.truncf %332 : vector<16x768xf32> to vector<16x768xbf16>
    %c1_135 = arith.constant 1 : index
    %c0_136 = arith.constant 0 : index
    %c0_137 = arith.constant 0 : index
    %334 = vector.load %arg9[%c1_135, %c0_136, %c0_137] : memref<3x768x192xbf16, #tpu.memory_space<vmem>>, vector<1x768x192xbf16>
    %335 = vector.shape_cast %334 : vector<1x768x192xbf16> to vector<768x192xbf16>
    %cst_138 = arith.constant dense<0.000000e+00> : vector<16x192xf32>
    %336 = tpu.matmul %333, %335, %cst_138 {dimension_numbers = #tpu.dot_dimension_numbers<[1], [0], [0], [1], [0, 0, 1, 1], [], []>} : vector<16x768xbf16>, vector<768x192xbf16>, vector<16x192xf32> -> vector<16x192xf32>
    %337 = arith.addf %293, %336 : vector<16x192xf32>
    %338 = vector.broadcast %189 : vector<1x192xf32> to vector<16x192xf32>
    %339 = arith.addf %337, %338 : vector<16x192xf32>
    %c2_139 = arith.constant 2 : index
    %c0_140 = arith.constant 0 : index
    %c0_141 = arith.constant 0 : index
    %340 = vector.load %arg10[%c2_139, %c0_140, %c0_141] : memref<3x8x768xf32, #tpu.memory_space<vmem>>, vector<1x1x192xf32>
    %341 = vector.shape_cast %340 : vector<1x1x192xf32> to vector<1x192xf32>
    %c2_142 = arith.constant 2 : index
    %c1_143 = arith.constant 1 : index
    %c0_144 = arith.constant 0 : index
    %342 = vector.load %arg10[%c2_142, %c1_143, %c0_144] : memref<3x8x768xf32, #tpu.memory_space<vmem>>, vector<1x1x192xf32>
    %343 = vector.shape_cast %342 : vector<1x1x192xf32> to vector<1x192xf32>
    %c2_145 = arith.constant 2 : index
    %c2_146 = arith.constant 2 : index
    %c0_147 = arith.constant 0 : index
    %344 = vector.load %arg10[%c2_145, %c2_146, %c0_147] : memref<3x8x768xf32, #tpu.memory_space<vmem>>, vector<1x1x576xf32>
    %345 = vector.shape_cast %344 : vector<1x1x576xf32> to vector<1x576xf32>
    %c2_148 = arith.constant 2 : index
    %c3_149 = arith.constant 3 : index
    %c0_150 = arith.constant 0 : index
    %346 = vector.load %arg10[%c2_148, %c3_149, %c0_150] : memref<3x8x768xf32, #tpu.memory_space<vmem>>, vector<1x1x192xf32>
    %347 = vector.shape_cast %346 : vector<1x1x192xf32> to vector<1x192xf32>
    %c2_151 = arith.constant 2 : index
    %c4_152 = arith.constant 4 : index
    %c0_153 = arith.constant 0 : index
    %348 = vector.load %arg10[%c2_151, %c4_152, %c0_153] : memref<3x8x768xf32, #tpu.memory_space<vmem>>, vector<1x1x192xf32>
    %349 = vector.shape_cast %348 : vector<1x1x192xf32> to vector<1x192xf32>
    %c2_154 = arith.constant 2 : index
    %c5_155 = arith.constant 5 : index
    %c0_156 = arith.constant 0 : index
    %350 = vector.load %arg10[%c2_154, %c5_155, %c0_156] : memref<3x8x768xf32, #tpu.memory_space<vmem>>, vector<1x1x192xf32>
    %351 = vector.shape_cast %350 : vector<1x1x192xf32> to vector<1x192xf32>
    %c2_157 = arith.constant 2 : index
    %c6_158 = arith.constant 6 : index
    %c0_159 = arith.constant 0 : index
    %352 = vector.load %arg10[%c2_157, %c6_158, %c0_159] : memref<3x8x768xf32, #tpu.memory_space<vmem>>, vector<1x1x768xf32>
    %353 = vector.shape_cast %352 : vector<1x1x768xf32> to vector<1x768xf32>
    %c2_160 = arith.constant 2 : index
    %c7_161 = arith.constant 7 : index
    %c0_162 = arith.constant 0 : index
    %354 = vector.load %arg10[%c2_160, %c7_161, %c0_162] : memref<3x8x768xf32, #tpu.memory_space<vmem>>, vector<1x1x192xf32>
    %355 = vector.shape_cast %354 : vector<1x1x192xf32> to vector<1x192xf32>
    %cst_163 = arith.constant dense<0.000000e+00> : vector<16xf32>
    %356 = vector.multi_reduction <add>, %339, %cst_163 [1] : vector<16x192xf32> to vector<16xf32>
    %357 = vector.shape_cast %356 : vector<16xf32> to vector<16x1xf32>
    %cst_164 = arith.constant 1.920000e+02 : f32
    %358 = vector.broadcast %cst_164 : f32 to vector<16x1xf32>
    %359 = arith.divf %357, %358 : vector<16x1xf32>
    %360 = vector.broadcast %359 : vector<16x1xf32> to vector<16x192xf32>
    %361 = arith.subf %339, %360 : vector<16x192xf32>
    %362 = arith.mulf %361, %361 : vector<16x192xf32>
    %cst_165 = arith.constant dense<0.000000e+00> : vector<16xf32>
    %363 = vector.multi_reduction <add>, %362, %cst_165 [1] : vector<16x192xf32> to vector<16xf32>
    %364 = vector.shape_cast %363 : vector<16xf32> to vector<16x1xf32>
    %cst_166 = arith.constant 1.920000e+02 : f32
    %365 = vector.broadcast %cst_166 : f32 to vector<16x1xf32>
    %366 = arith.divf %364, %365 : vector<16x1xf32>
    %cst_167 = arith.constant 9.99999997E-7 : f32
    %367 = vector.broadcast %cst_167 : f32 to vector<16x1xf32>
    %368 = arith.addf %366, %367 : vector<16x1xf32>
    %369 = math.rsqrt %368 : vector<16x1xf32>
    %370 = vector.broadcast %369 : vector<16x1xf32> to vector<16x192xf32>
    %371 = arith.mulf %361, %370 : vector<16x192xf32>
    %372 = vector.broadcast %341 : vector<1x192xf32> to vector<16x192xf32>
    %373 = arith.mulf %371, %372 : vector<16x192xf32>
    %374 = vector.broadcast %343 : vector<1x192xf32> to vector<16x192xf32>
    %375 = arith.addf %373, %374 : vector<16x192xf32>
    %376 = arith.truncf %375 : vector<16x192xf32> to vector<16x192xbf16>
    %c2_168 = arith.constant 2 : index
    %c0_169 = arith.constant 0 : index
    %c0_170 = arith.constant 0 : index
    %377 = vector.load %arg6[%c2_168, %c0_169, %c0_170] : memref<3x192x576xbf16, #tpu.memory_space<vmem>>, vector<1x192x576xbf16>
    %378 = vector.shape_cast %377 : vector<1x192x576xbf16> to vector<192x576xbf16>
    %cst_171 = arith.constant dense<0.000000e+00> : vector<16x576xf32>
    %379 = tpu.matmul %376, %378, %cst_171 {dimension_numbers = #tpu.dot_dimension_numbers<[1], [0], [0], [1], [0, 0, 1, 1], [], []>} : vector<16x192xbf16>, vector<192x576xbf16>, vector<16x576xf32> -> vector<16x576xf32>
    %380 = vector.broadcast %345 : vector<1x576xf32> to vector<16x576xf32>
    %381 = arith.addf %379, %380 : vector<16x576xf32>
    %382 = vector.extract_strided_slice %381 {offsets = [0, 0], sizes = [16, 192], strides = [1, 1]} : vector<16x576xf32> to vector<16x192xf32>
    %383 = arith.truncf %382 : vector<16x192xf32> to vector<16x192xbf16>
    %384 = vector.shape_cast %383 : vector<16x192xbf16> to vector<2x8x192xbf16>
    %385 = vector.extract_strided_slice %381 {offsets = [0, 192], sizes = [16, 192], strides = [1, 1]} : vector<16x576xf32> to vector<16x192xf32>
    %386 = arith.truncf %385 : vector<16x192xf32> to vector<16x192xbf16>
    %387 = vector.shape_cast %386 : vector<16x192xbf16> to vector<2x8x192xbf16>
    %388 = vector.extract_strided_slice %381 {offsets = [0, 384], sizes = [16, 192], strides = [1, 1]} : vector<16x576xf32> to vector<16x192xf32>
    %389 = arith.truncf %388 : vector<16x192xf32> to vector<16x192xbf16>
    %390 = vector.shape_cast %389 : vector<16x192xbf16> to vector<2x8x192xbf16>
    %391 = vector.extract_strided_slice %384 {offsets = [0, 0, 0], sizes = [2, 8, 64], strides = [1, 1, 1]} : vector<2x8x192xbf16> to vector<2x8x64xbf16>
    %392 = vector.extract_strided_slice %387 {offsets = [0, 0, 0], sizes = [2, 8, 64], strides = [1, 1, 1]} : vector<2x8x192xbf16> to vector<2x8x64xbf16>
    "tpu.trace_start"() <{level = 10 : i32, message = "bnd,bmd->bnm"}> : () -> ()
    %cst_172 = arith.constant dense<0.000000e+00> : vector<2x8x8xf32>
    %393 = tpu.matmul %391, %392, %cst_172 {dimension_numbers = #tpu.dot_dimension_numbers<[2], [2], [1], [1], [0, 0, 0, 1, 1, 1], [0], [0]>} : vector<2x8x64xbf16>, vector<2x8x64xbf16>, vector<2x8x8xf32> -> vector<2x8x8xf32>
    "tpu.trace_stop"() : () -> ()
    %cst_173 = arith.constant 1.250000e-01 : f32
    %394 = vector.broadcast %cst_173 : f32 to vector<2x8x8xf32>
    %395 = arith.mulf %393, %394 : vector<2x8x8xf32>
    %cst_174 = arith.constant -1.000000e+30 : f32
    %396 = vector.broadcast %cst_174 : f32 to vector<2x8x8xf32>
    %397 = arith.select %7, %395, %396 : vector<2x8x8xi1>, vector<2x8x8xf32>
    %cst_175 = arith.constant dense<0xFF800000> : vector<2x8xf32>
    %398 = vector.multi_reduction <maximumf>, %397, %cst_175 [2] : vector<2x8x8xf32> to vector<2x8xf32>
    %399 = vector.shape_cast %398 : vector<2x8xf32> to vector<2x8x1xf32>
    %400 = vector.broadcast %399 : vector<2x8x1xf32> to vector<2x8x8xf32>
    %401 = arith.subf %397, %400 : vector<2x8x8xf32>
    %402 = math.exp %401 : vector<2x8x8xf32>
    %cst_176 = arith.constant dense<0.000000e+00> : vector<2x8xf32>
    %403 = vector.multi_reduction <add>, %402, %cst_176 [2] : vector<2x8x8xf32> to vector<2x8xf32>
    %404 = vector.shape_cast %403 : vector<2x8xf32> to vector<2x8x1xf32>
    %405 = tpu.reciprocal %404 {approx = true} : vector<2x8x1xf32> -> vector<2x8x1xf32>
    %406 = vector.broadcast %405 : vector<2x8x1xf32> to vector<2x8x8xf32>
    %407 = arith.mulf %402, %406 : vector<2x8x8xf32>
    %408 = arith.truncf %407 : vector<2x8x8xf32> to vector<2x8x8xbf16>
    %409 = vector.extract_strided_slice %390 {offsets = [0, 0, 0], sizes = [2, 8, 64], strides = [1, 1, 1]} : vector<2x8x192xbf16> to vector<2x8x64xbf16>
    "tpu.trace_start"() <{level = 10 : i32, message = "bnm,bmd->bnd"}> : () -> ()
    %cst_177 = arith.constant dense<0.000000e+00> : vector<2x8x64xf32>
    %410 = tpu.matmul %408, %409, %cst_177 {dimension_numbers = #tpu.dot_dimension_numbers<[2], [1], [1], [2], [0, 0, 0, 1, 1, 2], [0], [0]>} : vector<2x8x8xbf16>, vector<2x8x64xbf16>, vector<2x8x64xf32> -> vector<2x8x64xf32>
    "tpu.trace_stop"() : () -> ()
    %411 = vector.extract_strided_slice %384 {offsets = [0, 0, 64], sizes = [2, 8, 64], strides = [1, 1, 1]} : vector<2x8x192xbf16> to vector<2x8x64xbf16>
    %412 = vector.extract_strided_slice %387 {offsets = [0, 0, 64], sizes = [2, 8, 64], strides = [1, 1, 1]} : vector<2x8x192xbf16> to vector<2x8x64xbf16>
    "tpu.trace_start"() <{level = 10 : i32, message = "bnd,bmd->bnm"}> : () -> ()
    %cst_178 = arith.constant dense<0.000000e+00> : vector<2x8x8xf32>
    %413 = tpu.matmul %411, %412, %cst_178 {dimension_numbers = #tpu.dot_dimension_numbers<[2], [2], [1], [1], [0, 0, 0, 1, 1, 1], [0], [0]>} : vector<2x8x64xbf16>, vector<2x8x64xbf16>, vector<2x8x8xf32> -> vector<2x8x8xf32>
    "tpu.trace_stop"() : () -> ()
    %cst_179 = arith.constant 1.250000e-01 : f32
    %414 = vector.broadcast %cst_179 : f32 to vector<2x8x8xf32>
    %415 = arith.mulf %413, %414 : vector<2x8x8xf32>
    %cst_180 = arith.constant -1.000000e+30 : f32
    %416 = vector.broadcast %cst_180 : f32 to vector<2x8x8xf32>
    %417 = arith.select %7, %415, %416 : vector<2x8x8xi1>, vector<2x8x8xf32>
    %cst_181 = arith.constant dense<0xFF800000> : vector<2x8xf32>
    %418 = vector.multi_reduction <maximumf>, %417, %cst_181 [2] : vector<2x8x8xf32> to vector<2x8xf32>
    %419 = vector.shape_cast %418 : vector<2x8xf32> to vector<2x8x1xf32>
    %420 = vector.broadcast %419 : vector<2x8x1xf32> to vector<2x8x8xf32>
    %421 = arith.subf %417, %420 : vector<2x8x8xf32>
    %422 = math.exp %421 : vector<2x8x8xf32>
    %cst_182 = arith.constant dense<0.000000e+00> : vector<2x8xf32>
    %423 = vector.multi_reduction <add>, %422, %cst_182 [2] : vector<2x8x8xf32> to vector<2x8xf32>
    %424 = vector.shape_cast %423 : vector<2x8xf32> to vector<2x8x1xf32>
    %425 = tpu.reciprocal %424 {approx = true} : vector<2x8x1xf32> -> vector<2x8x1xf32>
    %426 = vector.broadcast %425 : vector<2x8x1xf32> to vector<2x8x8xf32>
    %427 = arith.mulf %422, %426 : vector<2x8x8xf32>
    %428 = arith.truncf %427 : vector<2x8x8xf32> to vector<2x8x8xbf16>
    %429 = vector.extract_strided_slice %390 {offsets = [0, 0, 64], sizes = [2, 8, 64], strides = [1, 1, 1]} : vector<2x8x192xbf16> to vector<2x8x64xbf16>
    "tpu.trace_start"() <{level = 10 : i32, message = "bnm,bmd->bnd"}> : () -> ()
    %cst_183 = arith.constant dense<0.000000e+00> : vector<2x8x64xf32>
    %430 = tpu.matmul %428, %429, %cst_183 {dimension_numbers = #tpu.dot_dimension_numbers<[2], [1], [1], [2], [0, 0, 0, 1, 1, 2], [0], [0]>} : vector<2x8x8xbf16>, vector<2x8x64xbf16>, vector<2x8x64xf32> -> vector<2x8x64xf32>
    "tpu.trace_stop"() : () -> ()
    %431 = vector.extract_strided_slice %384 {offsets = [0, 0, 128], sizes = [2, 8, 64], strides = [1, 1, 1]} : vector<2x8x192xbf16> to vector<2x8x64xbf16>
    %432 = vector.extract_strided_slice %387 {offsets = [0, 0, 128], sizes = [2, 8, 64], strides = [1, 1, 1]} : vector<2x8x192xbf16> to vector<2x8x64xbf16>
    "tpu.trace_start"() <{level = 10 : i32, message = "bnd,bmd->bnm"}> : () -> ()
    %cst_184 = arith.constant dense<0.000000e+00> : vector<2x8x8xf32>
    %433 = tpu.matmul %431, %432, %cst_184 {dimension_numbers = #tpu.dot_dimension_numbers<[2], [2], [1], [1], [0, 0, 0, 1, 1, 1], [0], [0]>} : vector<2x8x64xbf16>, vector<2x8x64xbf16>, vector<2x8x8xf32> -> vector<2x8x8xf32>
    "tpu.trace_stop"() : () -> ()
    %cst_185 = arith.constant 1.250000e-01 : f32
    %434 = vector.broadcast %cst_185 : f32 to vector<2x8x8xf32>
    %435 = arith.mulf %433, %434 : vector<2x8x8xf32>
    %cst_186 = arith.constant -1.000000e+30 : f32
    %436 = vector.broadcast %cst_186 : f32 to vector<2x8x8xf32>
    %437 = arith.select %7, %435, %436 : vector<2x8x8xi1>, vector<2x8x8xf32>
    %cst_187 = arith.constant dense<0xFF800000> : vector<2x8xf32>
    %438 = vector.multi_reduction <maximumf>, %437, %cst_187 [2] : vector<2x8x8xf32> to vector<2x8xf32>
    %439 = vector.shape_cast %438 : vector<2x8xf32> to vector<2x8x1xf32>
    %440 = vector.broadcast %439 : vector<2x8x1xf32> to vector<2x8x8xf32>
    %441 = arith.subf %437, %440 : vector<2x8x8xf32>
    %442 = math.exp %441 : vector<2x8x8xf32>
    %cst_188 = arith.constant dense<0.000000e+00> : vector<2x8xf32>
    %443 = vector.multi_reduction <add>, %442, %cst_188 [2] : vector<2x8x8xf32> to vector<2x8xf32>
    %444 = vector.shape_cast %443 : vector<2x8xf32> to vector<2x8x1xf32>
    %445 = tpu.reciprocal %444 {approx = true} : vector<2x8x1xf32> -> vector<2x8x1xf32>
    %446 = vector.broadcast %445 : vector<2x8x1xf32> to vector<2x8x8xf32>
    %447 = arith.mulf %442, %446 : vector<2x8x8xf32>
    %448 = arith.truncf %447 : vector<2x8x8xf32> to vector<2x8x8xbf16>
    %449 = vector.extract_strided_slice %390 {offsets = [0, 0, 128], sizes = [2, 8, 64], strides = [1, 1, 1]} : vector<2x8x192xbf16> to vector<2x8x64xbf16>
    "tpu.trace_start"() <{level = 10 : i32, message = "bnm,bmd->bnd"}> : () -> ()
    %cst_189 = arith.constant dense<0.000000e+00> : vector<2x8x64xf32>
    %450 = tpu.matmul %448, %449, %cst_189 {dimension_numbers = #tpu.dot_dimension_numbers<[2], [1], [1], [2], [0, 0, 0, 1, 1, 2], [0], [0]>} : vector<2x8x8xbf16>, vector<2x8x64xbf16>, vector<2x8x64xf32> -> vector<2x8x64xf32>
    "tpu.trace_stop"() : () -> ()
    %451 = tpu.concatenate %410, %430, %450 in 2 : vector<2x8x64xf32>, vector<2x8x64xf32>, vector<2x8x64xf32> -> vector<2x8x192xf32>
    %452 = vector.shape_cast %451 : vector<2x8x192xf32> to vector<16x192xf32>
    %453 = arith.truncf %452 : vector<16x192xf32> to vector<16x192xbf16>
    %c2_190 = arith.constant 2 : index
    %c0_191 = arith.constant 0 : index
    %c0_192 = arith.constant 0 : index
    %454 = vector.load %arg7[%c2_190, %c0_191, %c0_192] : memref<3x192x192xbf16, #tpu.memory_space<vmem>>, vector<1x192x192xbf16>
    %455 = vector.shape_cast %454 : vector<1x192x192xbf16> to vector<192x192xbf16>
    %cst_193 = arith.constant dense<0.000000e+00> : vector<16x192xf32>
    %456 = tpu.matmul %453, %455, %cst_193 {dimension_numbers = #tpu.dot_dimension_numbers<[1], [0], [0], [1], [0, 0, 1, 1], [], []>} : vector<16x192xbf16>, vector<192x192xbf16>, vector<16x192xf32> -> vector<16x192xf32>
    %457 = arith.addf %339, %456 : vector<16x192xf32>
    %458 = vector.broadcast %347 : vector<1x192xf32> to vector<16x192xf32>
    %459 = arith.addf %457, %458 : vector<16x192xf32>
    %cst_194 = arith.constant dense<0.000000e+00> : vector<16xf32>
    %460 = vector.multi_reduction <add>, %459, %cst_194 [1] : vector<16x192xf32> to vector<16xf32>
    %461 = vector.shape_cast %460 : vector<16xf32> to vector<16x1xf32>
    %cst_195 = arith.constant 1.920000e+02 : f32
    %462 = vector.broadcast %cst_195 : f32 to vector<16x1xf32>
    %463 = arith.divf %461, %462 : vector<16x1xf32>
    %464 = vector.broadcast %463 : vector<16x1xf32> to vector<16x192xf32>
    %465 = arith.subf %459, %464 : vector<16x192xf32>
    %466 = arith.mulf %465, %465 : vector<16x192xf32>
    %cst_196 = arith.constant dense<0.000000e+00> : vector<16xf32>
    %467 = vector.multi_reduction <add>, %466, %cst_196 [1] : vector<16x192xf32> to vector<16xf32>
    %468 = vector.shape_cast %467 : vector<16xf32> to vector<16x1xf32>
    %cst_197 = arith.constant 1.920000e+02 : f32
    %469 = vector.broadcast %cst_197 : f32 to vector<16x1xf32>
    %470 = arith.divf %468, %469 : vector<16x1xf32>
    %cst_198 = arith.constant 9.99999997E-7 : f32
    %471 = vector.broadcast %cst_198 : f32 to vector<16x1xf32>
    %472 = arith.addf %470, %471 : vector<16x1xf32>
    %473 = math.rsqrt %472 : vector<16x1xf32>
    %474 = vector.broadcast %473 : vector<16x1xf32> to vector<16x192xf32>
    %475 = arith.mulf %465, %474 : vector<16x192xf32>
    %476 = vector.broadcast %349 : vector<1x192xf32> to vector<16x192xf32>
    %477 = arith.mulf %475, %476 : vector<16x192xf32>
    %478 = vector.broadcast %351 : vector<1x192xf32> to vector<16x192xf32>
    %479 = arith.addf %477, %478 : vector<16x192xf32>
    %480 = arith.truncf %479 : vector<16x192xf32> to vector<16x192xbf16>
    %c2_199 = arith.constant 2 : index
    %c0_200 = arith.constant 0 : index
    %c0_201 = arith.constant 0 : index
    %481 = vector.load %arg8[%c2_199, %c0_200, %c0_201] : memref<3x192x768xbf16, #tpu.memory_space<vmem>>, vector<1x192x768xbf16>
    %482 = vector.shape_cast %481 : vector<1x192x768xbf16> to vector<192x768xbf16>
    %cst_202 = arith.constant dense<0.000000e+00> : vector<16x768xf32>
    %483 = tpu.matmul %480, %482, %cst_202 {dimension_numbers = #tpu.dot_dimension_numbers<[1], [0], [0], [1], [0, 0, 1, 1], [], []>} : vector<16x192xbf16>, vector<192x768xbf16>, vector<16x768xf32> -> vector<16x768xf32>
    %484 = vector.broadcast %353 : vector<1x768xf32> to vector<16x768xf32>
    %485 = arith.addf %483, %484 : vector<16x768xf32>
    %486 = arith.mulf %485, %485 : vector<16x768xf32>
    %487 = arith.mulf %485, %486 : vector<16x768xf32>
    %cst_203 = arith.constant 4.471500e-02 : f32
    %488 = vector.broadcast %cst_203 : f32 to vector<16x768xf32>
    %489 = arith.mulf %488, %487 : vector<16x768xf32>
    %490 = arith.addf %485, %489 : vector<16x768xf32>
    %cst_204 = arith.constant 0.797884583 : f32
    %491 = vector.broadcast %cst_204 : f32 to vector<16x768xf32>
    %492 = arith.mulf %491, %490 : vector<16x768xf32>
    %493 = math.tanh %492 : vector<16x768xf32>
    %cst_205 = arith.constant 1.000000e+00 : f32
    %494 = vector.broadcast %cst_205 : f32 to vector<16x768xf32>
    %495 = arith.addf %494, %493 : vector<16x768xf32>
    %cst_206 = arith.constant 5.000000e-01 : f32
    %496 = vector.broadcast %cst_206 : f32 to vector<16x768xf32>
    %497 = arith.mulf %496, %495 : vector<16x768xf32>
    %498 = arith.mulf %485, %497 : vector<16x768xf32>
    %499 = arith.truncf %498 : vector<16x768xf32> to vector<16x768xbf16>
    %c2_207 = arith.constant 2 : index
    %c0_208 = arith.constant 0 : index
    %c0_209 = arith.constant 0 : index
    %500 = vector.load %arg9[%c2_207, %c0_208, %c0_209] : memref<3x768x192xbf16, #tpu.memory_space<vmem>>, vector<1x768x192xbf16>
    %501 = vector.shape_cast %500 : vector<1x768x192xbf16> to vector<768x192xbf16>
    %cst_210 = arith.constant dense<0.000000e+00> : vector<16x192xf32>
    %502 = tpu.matmul %499, %501, %cst_210 {dimension_numbers = #tpu.dot_dimension_numbers<[1], [0], [0], [1], [0, 0, 1, 1], [], []>} : vector<16x768xbf16>, vector<768x192xbf16>, vector<16x192xf32> -> vector<16x192xf32>
    %503 = arith.addf %459, %502 : vector<16x192xf32>
    %504 = vector.broadcast %355 : vector<1x192xf32> to vector<16x192xf32>
    %505 = arith.addf %503, %504 : vector<16x192xf32>
    %506 = vector.shape_cast %505 : vector<16x192xf32> to vector<2x8x192xf32>
    %c0_211 = arith.constant 0 : index
    %c0_212 = arith.constant 0 : index
    %c0_213 = arith.constant 0 : index
    %507 = vector.load %arg16[%c0_211, %c0_212, %c0_213] : memref<2x8x192xf32, #tpu.memory_space<vmem>>, vector<2x8x192xf32>
    tpu.vector_store %arg16[%c0_211, %c0_212, %c0_213], %506 {strides = array<i32>} : memref<2x8x192xf32, #tpu.memory_space<vmem>>, vector<2x8x192xf32>,
    %c3_i32 = arith.constant 3 : i32
    %508 = arith.cmpi eq, %arg0, %c3_i32 : i32
    %509 = arith.extui %508 : i1 to i32
    %c0_i32_214 = arith.constant 0 : i32
    %510 = arith.cmpi ne, %509, %c0_i32_214 : i32
    scf.if %510 {
      %511 = vector.shape_cast %505 : vector<16x192xf32> to vector<2x8x192xf32>
      %512 = vector.extract_strided_slice %511 {offsets = [0, 0, 0], sizes = [2, 1, 192], strides = [1, 1, 1]} : vector<2x8x192xf32> to vector<2x1x192xf32>
      %513 = vector.shape_cast %512 : vector<2x1x192xf32> to vector<2x192xf32>
      %c0_215 = arith.constant 0 : index
      %c0_216 = arith.constant 0 : index
      %514 = vector.load %arg11[%c0_215, %c0_216] : memref<1x192xf32, #tpu.memory_space<vmem>>, vector<1x192xf32>
      %c0_217 = arith.constant 0 : index
      %c0_218 = arith.constant 0 : index
      %515 = vector.load %arg12[%c0_217, %c0_218] : memref<1x192xf32, #tpu.memory_space<vmem>>, vector<1x192xf32>
      %cst_219 = arith.constant dense<0.000000e+00> : vector<2xf32>
      %516 = vector.multi_reduction <add>, %513, %cst_219 [1] : vector<2x192xf32> to vector<2xf32>
      %517 = vector.shape_cast %516 : vector<2xf32> to vector<2x1xf32>
      %cst_220 = arith.constant 1.920000e+02 : f32
      %518 = vector.broadcast %cst_220 : f32 to vector<2x1xf32>
      %519 = arith.divf %517, %518 : vector<2x1xf32>
      %520 = vector.broadcast %519 : vector<2x1xf32> to vector<2x192xf32>
      %521 = arith.subf %513, %520 : vector<2x192xf32>
      %522 = arith.mulf %521, %521 : vector<2x192xf32>
      %cst_221 = arith.constant dense<0.000000e+00> : vector<2xf32>
      %523 = vector.multi_reduction <add>, %522, %cst_221 [1] : vector<2x192xf32> to vector<2xf32>
      %524 = vector.shape_cast %523 : vector<2xf32> to vector<2x1xf32>
      %cst_222 = arith.constant 1.920000e+02 : f32
      %525 = vector.broadcast %cst_222 : f32 to vector<2x1xf32>
      %526 = arith.divf %524, %525 : vector<2x1xf32>
      %cst_223 = arith.constant 9.99999997E-7 : f32
      %527 = vector.broadcast %cst_223 : f32 to vector<2x1xf32>
      %528 = arith.addf %526, %527 : vector<2x1xf32>
      %529 = math.rsqrt %528 : vector<2x1xf32>
      %530 = vector.broadcast %529 : vector<2x1xf32> to vector<2x192xf32>
      %531 = arith.mulf %521, %530 : vector<2x192xf32>
      %532 = vector.broadcast %514 : vector<1x192xf32> to vector<2x192xf32>
      %533 = arith.mulf %531, %532 : vector<2x192xf32>
      %534 = vector.broadcast %515 : vector<1x192xf32> to vector<2x192xf32>
      %535 = arith.addf %533, %534 : vector<2x192xf32>
      %c0_224 = arith.constant 0 : index
      %c0_225 = arith.constant 0 : index
      %536 = vector.load %arg13[%c0_224, %c0_225] : memref<192x5xf32, #tpu.memory_space<vmem>>, vector<192x5xf32>
      %cst_226 = arith.constant dense<0.000000e+00> : vector<2x5xf32>
      %537 = tpu.matmul %535, %536, %cst_226 {dimension_numbers = #tpu.dot_dimension_numbers<[1], [0], [0], [1], [0, 0, 1, 1], [], []>} : vector<2x192xf32>, vector<192x5xf32>, vector<2x5xf32> -> vector<2x5xf32>
      %c0_227 = arith.constant 0 : index
      %c0_228 = arith.constant 0 : index
      %538 = vector.load %arg14[%c0_227, %c0_228] : memref<1x5xf32, #tpu.memory_space<vmem>>, vector<1x5xf32>
      %539 = vector.broadcast %538 : vector<1x5xf32> to vector<2x5xf32>
      %540 = arith.addf %537, %539 : vector<2x5xf32>
      %c0_229 = arith.constant 0 : index
      %c0_230 = arith.constant 0 : index
      %541 = vector.load %arg15[%c0_229, %c0_230] : memref<2x5xf32, #tpu.memory_space<vmem>>, vector<2x5xf32>
      tpu.vector_store %arg15[%c0_229, %c0_230], %540 {strides = array<i32>} : memref<2x5xf32, #tpu.memory_space<vmem>>, vector<2x5xf32>,
    } else {
    }
    return
  }
  func.func @transform_0(%arg0: i32) -> (i32, i32) {
    %c0_i32 = arith.constant 0 : i32
    %c0_i32_0 = arith.constant 0 : i32
    %c0_i32_1 = arith.constant 0 : i32
    return %c0_i32, %c0_i32_0 : i32, i32
  }
  func.func @transform_1(%arg0: i32) -> (i32, i32) {
    %c0_i32 = arith.constant 0 : i32
    %c0_i32_0 = arith.constant 0 : i32
    %c0_i32_1 = arith.constant 0 : i32
    return %c0_i32, %c0_i32_0 : i32, i32
  }
  func.func @transform_2(%arg0: i32) -> (i32, i32) {
    %c0_i32 = arith.constant 0 : i32
    %c0_i32_0 = arith.constant 0 : i32
    %c0_i32_1 = arith.constant 0 : i32
    return %c0_i32, %c0_i32_0 : i32, i32
  }
  func.func @transform_3(%arg0: i32) -> (i32, i32, i32) {
    %c0_i32 = arith.constant 0 : i32
    %c0_i32_0 = arith.constant 0 : i32
    %c0_i32_1 = arith.constant 0 : i32
    %c0_i32_2 = arith.constant 0 : i32
    return %c0_i32, %c0_i32_0, %c0_i32_1 : i32, i32, i32
  }
  func.func @transform_4(%arg0: i32) -> (i32, i32, i32) {
    %c0_i32 = arith.constant 0 : i32
    %c0_i32_0 = arith.constant 0 : i32
    %c0_i32_1 = arith.constant 0 : i32
    %c0_i32_2 = arith.constant 0 : i32
    return %c0_i32, %c0_i32_0, %c0_i32_1 : i32, i32, i32
  }
  func.func @transform_5(%arg0: i32) -> (i32, i32, i32) {
    %c0_i32 = arith.constant 0 : i32
    %c0_i32_0 = arith.constant 0 : i32
    %c0_i32_1 = arith.constant 0 : i32
    return %arg0, %c0_i32, %c0_i32_0 : i32, i32, i32
  }
  func.func @transform_6(%arg0: i32) -> (i32, i32, i32) {
    %c0_i32 = arith.constant 0 : i32
    %c0_i32_0 = arith.constant 0 : i32
    %c0_i32_1 = arith.constant 0 : i32
    return %arg0, %c0_i32, %c0_i32_0 : i32, i32, i32
  }
  func.func @transform_7(%arg0: i32) -> (i32, i32, i32) {
    %c0_i32 = arith.constant 0 : i32
    %c0_i32_0 = arith.constant 0 : i32
    %c0_i32_1 = arith.constant 0 : i32
    return %arg0, %c0_i32, %c0_i32_0 : i32, i32, i32
  }
  func.func @transform_8(%arg0: i32) -> (i32, i32, i32) {
    %c0_i32 = arith.constant 0 : i32
    %c0_i32_0 = arith.constant 0 : i32
    %c0_i32_1 = arith.constant 0 : i32
    return %arg0, %c0_i32, %c0_i32_0 : i32, i32, i32
  }
  func.func @transform_9(%arg0: i32) -> (i32, i32, i32) {
    %c0_i32 = arith.constant 0 : i32
    %c0_i32_0 = arith.constant 0 : i32
    %c0_i32_1 = arith.constant 0 : i32
    return %arg0, %c0_i32, %c0_i32_0 : i32, i32, i32
  }
  func.func @transform_10(%arg0: i32) -> (i32, i32) {
    %c0_i32 = arith.constant 0 : i32
    %c0_i32_0 = arith.constant 0 : i32
    %c0_i32_1 = arith.constant 0 : i32
    return %c0_i32, %c0_i32_0 : i32, i32
  }
  func.func @transform_11(%arg0: i32) -> (i32, i32) {
    %c0_i32 = arith.constant 0 : i32
    %c0_i32_0 = arith.constant 0 : i32
    %c0_i32_1 = arith.constant 0 : i32
    return %c0_i32, %c0_i32_0 : i32, i32
  }
  func.func @transform_12(%arg0: i32) -> (i32, i32) {
    %c0_i32 = arith.constant 0 : i32
    %c0_i32_0 = arith.constant 0 : i32
    %c0_i32_1 = arith.constant 0 : i32
    return %c0_i32, %c0_i32_0 : i32, i32
  }
  func.func @transform_13(%arg0: i32) -> (i32, i32) {
    %c0_i32 = arith.constant 0 : i32
    %c0_i32_0 = arith.constant 0 : i32
    %c0_i32_1 = arith.constant 0 : i32
    return %c0_i32, %c0_i32_0 : i32, i32
  }
  func.func @transform_14(%arg0: i32) -> (i32, i32) {
    %c0_i32 = arith.constant 0 : i32
    %c0_i32_0 = arith.constant 0 : i32
    %c0_i32_1 = arith.constant 0 : i32
    return %c0_i32, %c0_i32_0 : i32, i32
  }
}

</mosaic_0001>

<llo_original>
// kernel: vit_forward.1
$region0: #{vit_forward.1}
  #allocation0 [shape = 'u32[]', space=smem, size = 0x4, offset = 0x4, fixed_abs, tag = 'smem constant byte address 0x4 - core index']
  #allocation1 [shape = 'u32[144,128]{1,0:T(1,128)}', space=vmem, size = 0x12000, scoped, tag = 'internal scratch']
  #allocation2 [shape = 'f32[2,8,192]{2,1,0:T(8,128)}', space=vmem, size = 0x4000, scoped, tag = 'scratch operand']
  %s0 = inlined_call_operand.vmem [shape: f32[8,768], index: 0, kind: input, shape index: {}]
  %s1 = inlined_call_operand.vmem [shape: f32[768,192], index: 1, kind: input, shape index: {}]
  %s2 = inlined_call_operand.vmem [shape: f32[1,192], index: 2, kind: input, shape index: {}]
  %s3 = inlined_call_operand.vmem [shape: f32[1,1,192], index: 3, kind: input, shape index: {}]
  %s4 = inlined_call_operand.vmem [shape: f32[1,4,192], index: 4, kind: input, shape index: {}]
  %s5 = inlined_call_operand.vmem [shape: bf16[12,192,576], index: 5, kind: input, shape index: {}]
  %s6 = inlined_call_operand.vmem [shape: bf16[12,192,192], index: 6, kind: input, shape index: {}]
  %s7 = inlined_call_operand.vmem [shape: bf16[12,192,768], index: 7, kind: input, shape index: {}]
  %s8 = inlined_call_operand.vmem [shape: bf16[12,768,192], index: 8, kind: input, shape index: {}]
  %s9 = inlined_call_operand.vmem [shape: f32[12,8,768], index: 9, kind: input, shape index: {}]
  %s10 = inlined_call_operand.vmem [shape: f32[1,192], index: 10, kind: input, shape index: {}]
  %s11 = inlined_call_operand.vmem [shape: f32[1,192], index: 11, kind: input, shape index: {}]
  %s12 = inlined_call_operand.vmem [shape: f32[192,5], index: 12, kind: input, shape index: {}]
  %s13 = inlined_call_operand.vmem [shape: f32[1,5], index: 13, kind: input, shape index: {}]
  %s14 = inlined_call_operand.hbm [shape: f32[2,5], index: 14, kind: output, shape index: {}]
  %s15 = sld [smem:[#allocation0]]
  $region97: #{vit_forward.1} parent=0
    _
  %s17 = ssub.s32 1, %s15
  %s18 = scalar_select 0, %s17, %s15
  $region1: #{vit_forward.1} parent=0
    #allocation3 [shape = 'u8[1024]{0}', space=vmem, size = 0x400, scoped, tag = 'output window, operand 0, single buffered']
    #allocation4 [shape = 's32[2]{0}', space=sflag, size = 0x8, scoped, tag = 'scoped memory for vit_forward.1']
    %19 = vsyncpa [#allocation4], 0
    loop: start=0, step=1, limit=6
    $region2: #{vit_forward.1} parent=1 // loop_pre_header
      _
    $region3: #{vit_forward.1} parent=1 // loop_header
      %s21 = sphi 0, %s25
      %p22 = scmp.ge.s32.totalorder %s21, 6
      %s29 = sphi 0, %s29
      %s31 = sphi 0, %s29
      %s32 = sphi 0, %s31
      %s46 = sphi 0, %s32
      %s50 = sphi 0, %s50
      %s52 = sphi 0, %s50
      %s53 = sphi 0, %s52
      %s67 = sphi 0, %s53
      %s71 = sphi 0, %s71
      %s73 = sphi 0, %s71
      %s74 = sphi 0, %s73
      %s88 = sphi 0, %s74
      %s92 = sphi 0, %s92
      %s94 = sphi 0, %s92
      %s95 = sphi 0, %s94
      %s109 = sphi 0, %s95
      %s113 = sphi 0, %s113
      %s115 = sphi 0, %s113
      %s116 = sphi 0, %s115
      %s130 = sphi 0, %s116
      %s136 = sphi 0, %s138
      %s139 = sphi 0, %s136
      %s140 = sphi 0, %s139
      %s156 = sphi 0, %s140
      %s162 = sphi 0, %s164
      %s165 = sphi 0, %s162
      %s166 = sphi 0, %s165
      %s182 = sphi 0, %s166
      %s188 = sphi 0, %s190
      %s191 = sphi 0, %s188
      %s192 = sphi 0, %s191
      %s208 = sphi 0, %s192
      %s214 = sphi 0, %s216
      %s217 = sphi 0, %s214
      %s218 = sphi 0, %s217
      %s234 = sphi 0, %s218
      %s240 = sphi 0, %s242
      %s243 = sphi 0, %s240
      %s244 = sphi 0, %s243
      %s260 = sphi 0, %s244
      %s264 = sphi 0, %s264
      %s266 = sphi 0, %s264
      %s267 = sphi 0, %s266
      %s281 = sphi 0, %s267
      %s285 = sphi 0, %s285
      %s287 = sphi 0, %s285
      %s288 = sphi 0, %s287
      %s302 = sphi 0, %s288
      %s306 = sphi 0, %s306
      %s308 = sphi 0, %s306
      %s309 = sphi 0, %s308
      %s323 = sphi 0, %s309
      %s327 = sphi 0, %s327
      %s329 = sphi 0, %s327
      %s330 = sphi 0, %s329
      %s344 = sphi 0, %s330
      %s348 = sphi 0, %s348
      %s350 = sphi 0, %s348
      %s351 = sphi 0, %s350
      %s365 = sphi 0, %s351
    $region4: #{vit_forward.1} parent=1 // loop_header_branch
      %24 = sbr.rel (%p22) target = $region8
    $region5: #{vit_forward.1} parent=1 // loop_body
      %s26 = ssub.s32 %s21, 1
      %s27 = ssub.s32 %s21, 2
      %s28 = sadd.s32 %s21, 1
      %s30 = sadd.s32 %s29, 1
      %p33 = scmp.eq.s32.totalorder %s21, 3
      %p34 = scmp.ne.s32.totalorder %s29, %s31
      %p35 = scmp.eq.s32.totalorder %s21, 0
      %p36 = por %p34, %p35
      %p37 = scmp.ne.s32.totalorder %s29, %s31
      %p38 = scmp.eq.s32.totalorder %s26, 3
      %p39 = por %p37, %p38
      %p40 = scmp.ne.s32.totalorder %s31, %s32
      %p41 = scmp.eq.s32.totalorder %s26, 0
      %p42 = por %p40, %p41
      %p43 = scmp.ne.s32.totalorder %s31, %s32
      %p44 = scmp.eq.s32.totalorder %s27, 3
      %p45 = por %p43, %p44
      %p47 = scmp.ne.s32.totalorder %s32, %s46
      %p48 = scmp.eq.s32.totalorder %s27, 0
      %p49 = por %p47, %p48
      %s51 = sadd.s32 %s50, 1
      %p54 = scmp.eq.s32.totalorder %s21, 3
      %p55 = scmp.ne.s32.totalorder %s50, %s52
      %p56 = scmp.eq.s32.totalorder %s21, 0
      %p57 = por %p55, %p56
      %p58 = scmp.ne.s32.totalorder %s50, %s52
      %p59 = scmp.eq.s32.totalorder %s26, 3
      %p60 = por %p58, %p59
      %p61 = scmp.ne.s32.totalorder %s52, %s53
      %p62 = scmp.eq.s32.totalorder %s26, 0
      %p63 = por %p61, %p62
      %p64 = scmp.ne.s32.totalorder %s52, %s53
      %p65 = scmp.eq.s32.totalorder %s27, 3
      %p66 = por %p64, %p65
      %p68 = scmp.ne.s32.totalorder %s53, %s67
      %p69 = scmp.eq.s32.totalorder %s27, 0
      %p70 = por %p68, %p69
      %s72 = sadd.s32 %s71, 1
      %p75 = scmp.eq.s32.totalorder %s21, 3
      %p76 = scmp.ne.s32.totalorder %s71, %s73
      %p77 = scmp.eq.s32.totalorder %s21, 0
      %p78 = por %p76, %p77
      %p79 = scmp.ne.s32.totalorder %s71, %s73
      %p80 = scmp.eq.s32.totalorder %s26, 3
      %p81 = por %p79, %p80
      %p82 = scmp.ne.s32.totalorder %s73, %s74
      %p83 = scmp.eq.s32.totalorder %s26, 0
      %p84 = por %p82, %p83
      %p85 = scmp.ne.s32.totalorder %s73, %s74
      %p86 = scmp.eq.s32.totalorder %s27, 3
      %p87 = por %p85, %p86
      %p89 = scmp.ne.s32.totalorder %s74, %s88
      %p90 = scmp.eq.s32.totalorder %s27, 0
      %p91 = por %p89, %p90
      %s93 = sadd.s32 %s92, 1
      %p96 = scmp.eq.s32.totalorder %s21, 3
      %p97 = scmp.ne.s32.totalorder %s92, %s94
      %p98 = scmp.eq.s32.totalorder %s21, 0
      %p99 = por %p97, %p98
      %p100 = scmp.ne.s32.totalorder %s92, %s94
      %p101 = scmp.eq.s32.totalorder %s26, 3
      %p102 = por %p100, %p101
      %p103 = scmp.ne.s32.totalorder %s94, %s95
      %p104 = scmp.eq.s32.totalorder %s26, 0
      %p105 = por %p103, %p104
      %p106 = scmp.ne.s32.totalorder %s94, %s95
      %p107 = scmp.eq.s32.totalorder %s27, 3
      %p108 = por %p106, %p107
      %p110 = scmp.ne.s32.totalorder %s95, %s109
      %p111 = scmp.eq.s32.totalorder %s27, 0
      %p112 = por %p110, %p111
      %s114 = sadd.s32 %s113, 1
      %p117 = scmp.eq.s32.totalorder %s21, 3
      %p118 = scmp.ne.s32.totalorder %s113, %s115
      %p119 = scmp.eq.s32.totalorder %s21, 0
      %p120 = por %p118, %p119
      %p121 = scmp.ne.s32.totalorder %s113, %s115
      %p122 = scmp.eq.s32.totalorder %s26, 3
      %p123 = por %p121, %p122
      %p124 = scmp.ne.s32.totalorder %s115, %s116
      %p125 = scmp.eq.s32.totalorder %s26, 0
      %p126 = por %p124, %p125
      %p127 = scmp.ne.s32.totalorder %s115, %s116
      %p128 = scmp.eq.s32.totalorder %s27, 3
      %p129 = por %p127, %p128
      %p131 = scmp.ne.s32.totalorder %s116, %s130
      %p132 = scmp.eq.s32.totalorder %s27, 0
      %p133 = por %p131, %p132
      %s134 = ssub.s32 %s21, %s28
      %p135 = scmp.eq.s32.totalorder %s134, 0
      %s137 = sadd.s32 %s136, 1
      %s138 = scalar_select %p135, %s136, %s137
      %p141 = pneg %p135
      %p142 = scmp.eq.s32.totalorder %s21, 3
      %p143 = por %p141, %p142
      %p144 = scmp.ne.s32.totalorder %s136, %s139
      %p145 = scmp.eq.s32.totalorder %s21, 0
      %p146 = por %p144, %p145
      %p147 = scmp.ne.s32.totalorder %s136, %s139
      %p148 = scmp.eq.s32.totalorder %s26, 3
      %p149 = por %p147, %p148
      %p150 = scmp.ne.s32.totalorder %s139, %s140
      %p151 = scmp.eq.s32.totalorder %s26, 0
      %p152 = por %p150, %p151
      %p153 = scmp.ne.s32.totalorder %s139, %s140
      %p154 = scmp.eq.s32.totalorder %s27, 3
      %p155 = por %p153, %p154
      %p157 = scmp.ne.s32.totalorder %s140, %s156
      %p158 = scmp.eq.s32.totalorder %s27, 0
      %p159 = por %p157, %p158
      %s160 = ssub.s32 %s21, %s28
      %p161 = scmp.eq.s32.totalorder %s160, 0
      %s163 = sadd.s32 %s162, 1
      %s164 = scalar_select %p161, %s162, %s163
      %p167 = pneg %p161
      %p168 = scmp.eq.s32.totalorder %s21, 3
      %p169 = por %p167, %p168
      %p170 = scmp.ne.s32.totalorder %s162, %s165
      %p171 = scmp.eq.s32.totalorder %s21, 0
      %p172 = por %p170, %p171
      %p173 = scmp.ne.s32.totalorder %s162, %s165
      %p174 = scmp.eq.s32.totalorder %s26, 3
      %p175 = por %p173, %p174
      %p176 = scmp.ne.s32.totalorder %s165, %s166
      %p177 = scmp.eq.s32.totalorder %s26, 0
      %p178 = por %p176, %p177
      %p179 = scmp.ne.s32.totalorder %s165, %s166
      %p180 = scmp.eq.s32.totalorder %s27, 3
      %p181 = por %p179, %p180
      %p183 = scmp.ne.s32.totalorder %s166, %s182
      %p184 = scmp.eq.s32.totalorder %s27, 0
      %p185 = por %p183, %p184
      %s186 = ssub.s32 %s21, %s28
      %p187 = scmp.eq.s32.totalorder %s186, 0
      %s189 = sadd.s32 %s188, 1
      %s190 = scalar_select %p187, %s188, %s189
      %p193 = pneg %p187
      %p194 = scmp.eq.s32.totalorder %s21, 3
      %p195 = por %p193, %p194
      %p196 = scmp.ne.s32.totalorder %s188, %s191
      %p197 = scmp.eq.s32.totalorder %s21, 0
      %p198 = por %p196, %p197
      %p199 = scmp.ne.s32.totalorder %s188, %s191
      %p200 = scmp.eq.s32.totalorder %s26, 3
      %p201 = por %p199, %p200
      %p202 = scmp.ne.s32.totalorder %s191, %s192
      %p203 = scmp.eq.s32.totalorder %s26, 0
      %p204 = por %p202, %p203
      %p205 = scmp.ne.s32.totalorder %s191, %s192
      %p206 = scmp.eq.s32.totalorder %s27, 3
      %p207 = por %p205, %p206
      %p209 = scmp.ne.s32.totalorder %s192, %s208
      %p210 = scmp.eq.s32.totalorder %s27, 0
      %p211 = por %p209, %p210
      %s212 = ssub.s32 %s21, %s28
      %p213 = scmp.eq.s32.totalorder %s212, 0
      %s215 = sadd.s32 %s214, 1
      %s216 = scalar_select %p213, %s214, %s215
      %p219 = pneg %p213
      %p220 = scmp.eq.s32.totalorder %s21, 3
      %p221 = por %p219, %p220
      %p222 = scmp.ne.s32.totalorder %s214, %s217
      %p223 = scmp.eq.s32.totalorder %s21, 0
      %p224 = por %p222, %p223
      %p225 = scmp.ne.s32.totalorder %s214, %s217
      %p226 = scmp.eq.s32.totalorder %s26, 3
      %p227 = por %p225, %p226
      %p228 = scmp.ne.s32.totalorder %s217, %s218
      %p229 = scmp.eq.s32.totalorder %s26, 0
      %p230 = por %p228, %p229
      %p231 = scmp.ne.s32.totalorder %s217, %s218
      %p232 = scmp.eq.s32.totalorder %s27, 3
      %p233 = por %p231, %p232
      %p235 = scmp.ne.s32.totalorder %s218, %s234
      %p236 = scmp.eq.s32.totalorder %s27, 0
      %p237 = por %p235, %p236
      %s238 = ssub.s32 %s21, %s28
      %p239 = scmp.eq.s32.totalorder %s238, 0
      %s241 = sadd.s32 %s240, 1
      %s242 = scalar_select %p239, %s240, %s241
      %p245 = pneg %p239
      %p246 = scmp.eq.s32.totalorder %s21, 3
      %p247 = por %p245, %p246
      %p248 = scmp.ne.s32.totalorder %s240, %s243
      %p249 = scmp.eq.s32.totalorder %s21, 0
      %p250 = por %p248, %p249
      %p251 = scmp.ne.s32.totalorder %s240, %s243
      %p252 = scmp.eq.s32.totalorder %s26, 3
      %p253 = por %p251, %p252
      %p254 = scmp.ne.s32.totalorder %s243, %s244
      %p255 = scmp.eq.s32.totalorder %s26, 0
      %p256 = por %p254, %p255
      %p257 = scmp.ne.s32.totalorder %s243, %s244
      %p258 = scmp.eq.s32.totalorder %s27, 3
      %p259 = por %p257, %p258
      %p261 = scmp.ne.s32.totalorder %s244, %s260
      %p262 = scmp.eq.s32.totalorder %s27, 0
      %p263 = por %p261, %p262
      %s265 = sadd.s32 %s264, 1
      %p268 = scmp.eq.s32.totalorder %s21, 3
      %p269 = scmp.ne.s32.totalorder %s264, %s266
      %p270 = scmp.eq.s32.totalorder %s21, 0
      %p271 = por %p269, %p270
      %p272 = scmp.ne.s32.totalorder %s264, %s266
      %p273 = scmp.eq.s32.totalorder %s26, 3
      %p274 = por %p272, %p273
      %p275 = scmp.ne.s32.totalorder %s266, %s267
      %p276 = scmp.eq.s32.totalorder %s26, 0
      %p277 = por %p275, %p276
      %p278 = scmp.ne.s32.totalorder %s266, %s267
      %p279 = scmp.eq.s32.totalorder %s27, 3
      %p280 = por %p278, %p279
      %p282 = scmp.ne.s32.totalorder %s267, %s281
      %p283 = scmp.eq.s32.totalorder %s27, 0
      %p284 = por %p282, %p283
      %s286 = sadd.s32 %s285, 1
      %p289 = scmp.eq.s32.totalorder %s21, 3
      %p290 = scmp.ne.s32.totalorder %s285, %s287
      %p291 = scmp.eq.s32.totalorder %s21, 0
      %p292 = por %p290, %p291
      %p293 = scmp.ne.s32.totalorder %s285, %s287
      %p294 = scmp.eq.s32.totalorder %s26, 3
      %p295 = por %p293, %p294
      %p296 = scmp.ne.s32.totalorder %s287, %s288
      %p297 = scmp.eq.s32.totalorder %s26, 0
      %p298 = por %p296, %p297
      %p299 = scmp.ne.s32.totalorder %s287, %s288
      %p300 = scmp.eq.s32.totalorder %s27, 3
      %p301 = por %p299, %p300
      %p303 = scmp.ne.s32.totalorder %s288, %s302
      %p304 = scmp.eq.s32.totalorder %s27, 0
      %p305 = por %p303, %p304
      %s307 = sadd.s32 %s306, 1
      %p310 = scmp.eq.s32.totalorder %s21, 3
      %p311 = scmp.ne.s32.totalorder %s306, %s308
      %p312 = scmp.eq.s32.totalorder %s21, 0
      %p313 = por %p311, %p312
      %p314 = scmp.ne.s32.totalorder %s306, %s308
      %p315 = scmp.eq.s32.totalorder %s26, 3
      %p316 = por %p314, %p315
      %p317 = scmp.ne.s32.totalorder %s308, %s309
      %p318 = scmp.eq.s32.totalorder %s26, 0
      %p319 = por %p317, %p318
      %p320 = scmp.ne.s32.totalorder %s308, %s309
      %p321 = scmp.eq.s32.totalorder %s27, 3
      %p322 = por %p320, %p321
      %p324 = scmp.ne.s32.totalorder %s309, %s323
      %p325 = scmp.eq.s32.totalorder %s27, 0
      %p326 = por %p324, %p325
      %s328 = sadd.s32 %s327, 1
      %p331 = scmp.eq.s32.totalorder %s21, 3
      %p332 = scmp.ne.s32.totalorder %s327, %s329
      %p333 = scmp.eq.s32.totalorder %s21, 0
      %p334 = por %p332, %p333
      %p335 = scmp.ne.s32.totalorder %s327, %s329
      %p336 = scmp.eq.s32.totalorder %s26, 3
      %p337 = por %p335, %p336
      %p338 = scmp.ne.s32.totalorder %s329, %s330
      %p339 = scmp.eq.s32.totalorder %s26, 0
      %p340 = por %p338, %p339
      %p341 = scmp.ne.s32.totalorder %s329, %s330
      %p342 = scmp.eq.s32.totalorder %s27, 3
      %p343 = por %p341, %p342
      %p345 = scmp.ne.s32.totalorder %s330, %s344
      %p346 = scmp.eq.s32.totalorder %s27, 0
      %p347 = por %p345, %p346
      %s349 = sadd.s32 %s348, 1
      %p352 = scmp.eq.s32.totalorder %s21, 3
      %p353 = scmp.ne.s32.totalorder %s348, %s350
      %p354 = scmp.eq.s32.totalorder %s21, 0
      %p355 = por %p353, %p354
      %p356 = scmp.ne.s32.totalorder %s348, %s350
      %p357 = scmp.eq.s32.totalorder %s26, 3
      %p358 = por %p356, %p357
      %p359 = scmp.ne.s32.totalorder %s350, %s351
      %p360 = scmp.eq.s32.totalorder %s26, 0
      %p361 = por %p359, %p360
      %p362 = scmp.ne.s32.totalorder %s350, %s351
      %p363 = scmp.eq.s32.totalorder %s27, 3
      %p364 = por %p362, %p363
      %p366 = scmp.ne.s32.totalorder %s351, %s365
      %p367 = scmp.eq.s32.totalorder %s27, 0
      %p368 = por %p366, %p367
      %p369 = scmp.le.s32.totalorder 1, %s21
      %p370 = scmp.lt.s32.totalorder %s21, 5
      %p371 = pnand %p369, %p370
      %p372 = pneg %p371
      // Predicated region
      $region9: #{vit_forward.1} parent=5 // pred_check
        _
      $region10: #{vit_forward.1} parent=5 // pred_check_branch
        %374 = sbr.rel (%p371) target = $region12
      $region11: #{vit_forward.1} parent=5 // pred_region
        %s375 = ssub.s32 %s21, 1
        // Predicated region
        $region13: #{vit_forward.1} parent=11 // pred_check
          %p376 = pneg %p42
        $region14: #{vit_forward.1} parent=11 // pred_check_branch
          %378 = sbr.rel (%p376) target = $region16
        $region15: #{vit_forward.1} parent=11 // pred_region
          _
        $region16: #{vit_forward.1} parent=11 // pred_fallthru
          _
        // Predicated region
        $region17: #{vit_forward.1} parent=11 // pred_check
          %p379 = pneg %p63
        $region18: #{vit_forward.1} parent=11 // pred_check_branch
          %381 = sbr.rel (%p379) target = $region20
        $region19: #{vit_forward.1} parent=11 // pred_region
          _
        $region20: #{vit_forward.1} parent=11 // pred_fallthru
          _
        // Predicated region
        $region21: #{vit_forward.1} parent=11 // pred_check
          %p382 = pneg %p84
        $region22: #{vit_forward.1} parent=11 // pred_check_branch
          %384 = sbr.rel (%p382) target = $region24
        $region23: #{vit_forward.1} parent=11 // pred_region
          _
        $region24: #{vit_forward.1} parent=11 // pred_fallthru
          _
        // Predicated region
        $region25: #{vit_forward.1} parent=11 // pred_check
          %p385 = pneg %p105
        $region26: #{vit_forward.1} parent=11 // pred_check_branch
          %387 = sbr.rel (%p385) target = $region28
        $region27: #{vit_forward.1} parent=11 // pred_region
          _
        $region28: #{vit_forward.1} parent=11 // pred_fallthru
          _
        // Predicated region
        $region29: #{vit_forward.1} parent=11 // pred_check
          %p388 = pneg %p126
        $region30: #{vit_forward.1} parent=11 // pred_check_branch
          %390 = sbr.rel (%p388) target = $region32
        $region31: #{vit_forward.1} parent=11 // pred_region
          _
        $region32: #{vit_forward.1} parent=11 // pred_fallthru
          _
        // Predicated region
        $region33: #{vit_forward.1} parent=11 // pred_check
          %p391 = pneg %p277
        $region34: #{vit_forward.1} parent=11 // pred_check_branch
          %393 = sbr.rel (%p391) target = $region36
        $region35: #{vit_forward.1} parent=11 // pred_region
          _
        $region36: #{vit_forward.1} parent=11 // pred_fallthru
          _
        // Predicated region
        $region37: #{vit_forward.1} parent=11 // pred_check
          %p394 = pneg %p298
        $region38: #{vit_forward.1} parent=11 // pred_check_branch
          %396 = sbr.rel (%p394) target = $region40
        $region39: #{vit_forward.1} parent=11 // pred_region
          _
        $region40: #{vit_forward.1} parent=11 // pred_fallthru
          _
        // Predicated region
        $region41: #{vit_forward.1} parent=11 // pred_check
          %p397 = pneg %p319
        $region42: #{vit_forward.1} parent=11 // pred_check_branch
          %399 = sbr.rel (%p397) target = $region44
        $region43: #{vit_forward.1} parent=11 // pred_region
          _
        $region44: #{vit_forward.1} parent=11 // pred_fallthru
          _
        // Predicated region
        $region45: #{vit_forward.1} parent=11 // pred_check
          %p400 = pneg %p340
        $region46: #{vit_forward.1} parent=11 // pred_check_branch
          %402 = sbr.rel (%p400) target = $region48
        $region47: #{vit_forward.1} parent=11 // pred_region
          _
        $region48: #{vit_forward.1} parent=11 // pred_fallthru
          _
      $region12: #{vit_forward.1} parent=5 // pred_fallthru
        _
      %p403 = scmp.lt.s32.totalorder %s21, 4
      // Predicated region
      $region49: #{vit_forward.1} parent=5 // pred_check
        %p404 = pneg %p403
      $region50: #{vit_forward.1} parent=5 // pred_check_branch
        %406 = sbr.rel (%p404) target = $region52
      $region51: #{vit_forward.1} parent=5 // pred_region
        // Predicated region
        $region53: #{vit_forward.1} parent=51 // pred_check
          %p407 = pneg %p146
        $region54: #{vit_forward.1} parent=51 // pred_check_branch
          %409 = sbr.rel (%p407) target = $region56
        $region55: #{vit_forward.1} parent=51 // pred_region
          %s410 = smul.u32 3, %s21
          %p411 = scmp.lt.s32.totalorder %s410, 11
          %s412 = scalar_select %p411, %s410, 11
          %s413 = smul.addr %s412, 120
          %s414 = smul.addr %s413, 4
          %s415 = scalar_lea.vmem %s5, %s414
          %s416 = smul.u32 3, %s21
        $region56: #{vit_forward.1} parent=51 // pred_fallthru
          _
        // Predicated region
        $region57: #{vit_forward.1} parent=51 // pred_check
          %p417 = pneg %p172
        $region58: #{vit_forward.1} parent=51 // pred_check_branch
          %419 = sbr.rel (%p417) target = $region60
        $region59: #{vit_forward.1} parent=51 // pred_region
          %s420 = smul.u32 3, %s21
          %p421 = scmp.lt.s32.totalorder %s420, 11
          %s422 = scalar_select %p421, %s420, 11
          %s423 = smul.addr %s422, 48
          %s424 = smul.addr %s423, 4
          %s425 = scalar_lea.vmem %s6, %s424
          %s426 = smul.u32 3, %s21
        $region60: #{vit_forward.1} parent=51 // pred_fallthru
          _
        // Predicated region
        $region61: #{vit_forward.1} parent=51 // pred_check
          %p427 = pneg %p198
        $region62: #{vit_forward.1} parent=51 // pred_check_branch
          %429 = sbr.rel (%p427) target = $region64
        $region63: #{vit_forward.1} parent=51 // pred_region
          %s430 = smul.u32 3, %s21
          %p431 = scmp.lt.s32.totalorder %s430, 11
          %s432 = scalar_select %p431, %s430, 11
          %s433 = smul.addr %s432, 144
          %s434 = smul.addr %s433, 4
          %s435 = scalar_lea.vmem %s7, %s434
          %s436 = smul.u32 3, %s21
        $region64: #{vit_forward.1} parent=51 // pred_fallthru
          _
        // Predicated region
        $region65: #{vit_forward.1} parent=51 // pred_check
          %p437 = pneg %p224
        $region66: #{vit_forward.1} parent=51 // pred_check_branch
          %439 = sbr.rel (%p437) target = $region68
        $region67: #{vit_forward.1} parent=51 // pred_region
          %s440 = smul.u32 3, %s21
          %p441 = scmp.lt.s32.totalorder %s440, 11
          %s442 = scalar_select %p441, %s440, 11
          %s443 = smul.addr %s442, 192
          %s444 = smul.addr %s443, 4
          %s445 = scalar_lea.vmem %s8, %s444
          %s446 = smul.u32 3, %s21
        $region68: #{vit_forward.1} parent=51 // pred_fallthru
          _
        // Predicated region
        $region69: #{vit_forward.1} parent=51 // pred_check
          %p447 = pneg %p250
        $region70: #{vit_forward.1} parent=51 // pred_check_branch
          %449 = sbr.rel (%p447) target = $region72
        $region71: #{vit_forward.1} parent=51 // pred_region
          %s450 = smul.u32 3, %s21
          %p451 = scmp.lt.s32.totalorder %s450, 11
          %s452 = scalar_select %p451, %s450, 11
          %s453 = smul.addr %s452, 6
          %s454 = smul.addr %s453, 8
          %s455 = scalar_lea.vmem %s9, %s454
          %s456 = smul.u32 3, %s21
        $region72: #{vit_forward.1} parent=51 // pred_fallthru
          _
      $region52: #{vit_forward.1} parent=5 // pred_fallthru
        _
      %p457 = scmp.le.s32.totalorder 1, %s21
      %p458 = scmp.lt.s32.totalorder %s21, 5
      %p459 = pnand %p457, %p458
      %p460 = pneg %p459
      // Predicated region
      $region73: #{vit_forward.1} parent=5 // pred_check
        _
      $region74: #{vit_forward.1} parent=5 // pred_check_branch
        %462 = sbr.rel (%p459) target = $region76
      $region75: #{vit_forward.1} parent=5 // pred_region
        %s463 = ssub.s32 %s21, 1
        %p464 = pneg %p42
        %p465 = pneg %p39
        %p466 = pneg %p63
        %p467 = pneg %p60
        %p468 = pneg %p84
        %p469 = pneg %p81
        %p470 = pneg %p105
        %p471 = pneg %p102
        %p472 = pneg %p126
        %p473 = pneg %p123
        %s474 = smul.u32 3, %s26
        %p475 = scmp.lt.s32.totalorder %s474, 11
        %s476 = scalar_select %p475, %s474, 11
        %s477 = smul.addr %s476, 120
        %s478 = smul.addr %s477, 4
        %s479 = scalar_lea.vmem %s5, %s478
        %p480 = pneg %p152
        %p481 = pneg %p149
        %s482 = smul.u32 3, %s26
        %p483 = scmp.lt.s32.totalorder %s482, 11
        %s484 = scalar_select %p483, %s482, 11
        %s485 = smul.addr %s484, 48
        %s486 = smul.addr %s485, 4
        %s487 = scalar_lea.vmem %s6, %s486
        %p488 = pneg %p178
        %p489 = pneg %p175
        %s490 = smul.u32 3, %s26
        %p491 = scmp.lt.s32.totalorder %s490, 11
        %s492 = scalar_select %p491, %s490, 11
        %s493 = smul.addr %s492, 144
        %s494 = smul.addr %s493, 4
        %s495 = scalar_lea.vmem %s7, %s494
        %p496 = pneg %p204
        %p497 = pneg %p201
        %s498 = smul.u32 3, %s26
        %p499 = scmp.lt.s32.totalorder %s498, 11
        %s500 = scalar_select %p499, %s498, 11
        %s501 = smul.addr %s500, 192
        %s502 = smul.addr %s501, 4
        %s503 = scalar_lea.vmem %s8, %s502
        %p504 = pneg %p230
        %p505 = pneg %p227
        %s506 = smul.u32 3, %s26
        %p507 = scmp.lt.s32.totalorder %s506, 11
        %s508 = scalar_select %p507, %s506, 11
        %s509 = smul.addr %s508, 6
        %s510 = smul.addr %s509, 8
        %s511 = scalar_lea.vmem %s9, %s510
        %p512 = pneg %p256
        %p513 = pneg %p253
        %p514 = pneg %p277
        %p515 = pneg %p274
        %p516 = pneg %p298
        %p517 = pneg %p295
        %p518 = pneg %p319
        %p519 = pneg %p316
        %p520 = pneg %p340
        %p521 = pneg %p337
        %p522 = pneg %p361
        %p523 = pneg %p358
        %s524 = smul.u32 3, %s26
        %p525 = scmp.lt.s32.totalorder %s524, 11
        %s526 = scalar_select %p525, %s524, 11
        %s527 = smul.addr %s526, 120
        %s528 = smul.addr %s527, 4
        %s529 = scalar_lea.vmem %s5, %s528
        %s530 = smul.u32 3, %s26
        %s531 = smul.u32 3, %s26
        %p532 = scmp.lt.s32.totalorder %s531, 11
        %s533 = scalar_select %p532, %s531, 11
        %s534 = smul.addr %s533, 48
        %s535 = smul.addr %s534, 4
        %s536 = scalar_lea.vmem %s6, %s535
        %s537 = smul.u32 3, %s26
        %s538 = smul.u32 3, %s26
        %p539 = scmp.lt.s32.totalorder %s538, 11
        %s540 = scalar_select %p539, %s538, 11
        %s541 = smul.addr %s540, 144
        %s542 = smul.addr %s541, 4
        %s543 = scalar_lea.vmem %s7, %s542
        %s544 = smul.u32 3, %s26
        %s545 = smul.u32 3, %s26
        %p546 = scmp.lt.s32.totalorder %s545, 11
        %s547 = scalar_select %p546, %s545, 11
        %s548 = smul.addr %s547, 192
        %s549 = smul.addr %s548, 4
        %s550 = scalar_lea.vmem %s8, %s549
        %s551 = smul.u32 3, %s26
        %s552 = smul.u32 3, %s26
        %p553 = scmp.lt.s32.totalorder %s552, 11
        %s554 = scalar_select %p553, %s552, 11
        %s555 = smul.addr %s554, 6
        %s556 = smul.addr %s555, 8
        %s557 = scalar_lea.vmem %s9, %s556
        %s558 = smul.u32 3, %s26
        %p560 = scmp.eq.s32.totalorder %s26, 0
        // Predicated region
        $region77: #{vit_forward.1} parent=75 // pred_check
          %p561 = pneg %p560
        $region78: #{vit_forward.1} parent=75 // pred_check_branch
          %563 = sbr.rel (%p561) target = $region80
        $region79: #{vit_forward.1} parent=75 // pred_region
          %v564 = vld [vmem:[%s0] sm:$0xff]
          %v565 = vld [vmem:[%s0 + $0x8] sm:$0xff]
          %v566 = vld [vmem:[%s0 + $0x10] sm:$0xff]
          %v567 = vld [vmem:[%s0 + $0x18] sm:$0xff]
          %v568 = vld [vmem:[%s0 + $0x20] sm:$0xff]
          %v569 = vld [vmem:[%s0 + $0x28] sm:$0xff]
          %v570 = vld [vmem:[%s1] sm:$0xff]
          %v571 = vld [vmem:[%s1 + $0x8] sm:$0xff]
          %v572 = vld [vmem:[%s1 + $0x10] sm:$0xff]
          %v573 = vld [vmem:[%s1 + $0x18] sm:$0xff]
          %v574 = vld [vmem:[%s1 + $0x20] sm:$0xff]
          %v575 = vld [vmem:[%s1 + $0x28] sm:$0xff]
          %v576 = vld [vmem:[%s1 + $0x30] sm:$0xff]
          %v577 = vld [vmem:[%s1 + $0x38] sm:$0xff]
          %v578 = vld [vmem:[%s1 + $0x40] sm:$0xff]
          %v579 = vld [vmem:[%s1 + $0x48] sm:$0xff]
          %v580 = vld [vmem:[%s1 + $0x50] sm:$0xff]
          %v581 = vld [vmem:[%s1 + $0x58] sm:$0xff]
          %v582 = vld [vmem:[%s1 + $0x60] sm:$0xff]
          %v583 = vld [vmem:[%s1 + $0x68] sm:$0xff]
          %v584 = vld [vmem:[%s1 + $0x70] sm:$0xff]
          %v585 = vld [vmem:[%s1 + $0x78] sm:$0xff]
          %v586 = vld [vmem:[%s1 + $0x80] sm:$0xff]
          %v587 = vld [vmem:[%s1 + $0x88] sm:$0xff]
          %v588 = vld [vmem:[%s1 + $0x90] sm:$0xff]
          %v589 = vld [vmem:[%s1 + $0x98] sm:$0xff]
          %v590 = vld [vmem:[%s1 + $0xa0] sm:$0xff]
          %v591 = vld [vmem:[%s1 + $0xa8] sm:$0xff]
          %v592 = vld [vmem:[%s1 + $0xb0] sm:$0xff]
          %v593 = vld [vmem:[%s1 + $0xb8] sm:$0xff]
          %v594 = vld [vmem:[%s1 + $0xc0] sm:$0xff]
          %v595 = vld [vmem:[%s1 + $0xc8] sm:$0xff]
          %v596 = vld [vmem:[%s1 + $0xd0] sm:$0xff]
          %v597 = vld [vmem:[%s1 + $0xd8] sm:$0xff]
          %v598 = vld [vmem:[%s1 + $0xe0] sm:$0xff]
          %v599 = vld [vmem:[%s1 + $0xe8] sm:$0xff]
          %v600 = vld [vmem:[%s1 + $0xf0] sm:$0xff]
          %v601 = vld [vmem:[%s1 + $0xf8] sm:$0xff]
          %v602 = vld [vmem:[%s1 + $0x100] sm:$0xff]
          %v603 = vld [vmem:[%s1 + $0x108] sm:$0xff]
          %v604 = vld [vmem:[%s1 + $0x110] sm:$0xff]
          %v605 = vld [vmem:[%s1 + $0x118] sm:$0xff]
          %v606 = vld [vmem:[%s1 + $0x120] sm:$0xff]
          %v607 = vld [vmem:[%s1 + $0x128] sm:$0xff]
          %v608 = vld [vmem:[%s1 + $0x130] sm:$0xff]
          %v609 = vld [vmem:[%s1 + $0x138] sm:$0xff]
          %v610 = vld [vmem:[%s1 + $0x140] sm:$0xff]
          %v611 = vld [vmem:[%s1 + $0x148] sm:$0xff]
          %v612 = vld [vmem:[%s1 + $0x150] sm:$0xff]
          %v613 = vld [vmem:[%s1 + $0x158] sm:$0xff]
          %v614 = vld [vmem:[%s1 + $0x160] sm:$0xff]
          %v615 = vld [vmem:[%s1 + $0x168] sm:$0xff]
          %v616 = vld [vmem:[%s1 + $0x170] sm:$0xff]
          %v617 = vld [vmem:[%s1 + $0x178] sm:$0xff]
          %v618 = vld [vmem:[%s1 + $0x180] sm:$0xff]
          %v619 = vld [vmem:[%s1 + $0x188] sm:$0xff]
          %v620 = vld [vmem:[%s1 + $0x190] sm:$0xff]
          %v621 = vld [vmem:[%s1 + $0x198] sm:$0xff]
          %v622 = vld [vmem:[%s1 + $0x1a0] sm:$0xff]
          %v623 = vld [vmem:[%s1 + $0x1a8] sm:$0xff]
          %v624 = vld [vmem:[%s1 + $0x1b0] sm:$0xff]
          %v625 = vld [vmem:[%s1 + $0x1b8] sm:$0xff]
          %v626 = vld [vmem:[%s1 + $0x1c0] sm:$0xff]
          %v627 = vld [vmem:[%s1 + $0x1c8] sm:$0xff]
          %v628 = vld [vmem:[%s1 + $0x1d0] sm:$0xff]
          %v629 = vld [vmem:[%s1 + $0x1d8] sm:$0xff]
          %v630 = vld [vmem:[%s1 + $0x1e0] sm:$0xff]
          %v631 = vld [vmem:[%s1 + $0x1e8] sm:$0xff]
          %v632 = vld [vmem:[%s1 + $0x1f0] sm:$0xff]
          %v633 = vld [vmem:[%s1 + $0x1f8] sm:$0xff]
          %v634 = vld [vmem:[%s1 + $0x200] sm:$0xff]
          %v635 = vld [vmem:[%s1 + $0x208] sm:$0xff]
          %v636 = vld [vmem:[%s1 + $0x210] sm:$0xff]
          %v637 = vld [vmem:[%s1 + $0x218] sm:$0xff]
          %v638 = vld [vmem:[%s1 + $0x220] sm:$0xff]
          %v639 = vld [vmem:[%s1 + $0x228] sm:$0xff]
          %v640 = vld [vmem:[%s1 + $0x230] sm:$0xff]
          %v641 = vld [vmem:[%s1 + $0x238] sm:$0xff]
          %v642 = vld [vmem:[%s1 + $0x240] sm:$0xff]
          %v643 = vld [vmem:[%s1 + $0x248] sm:$0xff]
          %v644 = vld [vmem:[%s1 + $0x250] sm:$0xff]
          %v645 = vld [vmem:[%s1 + $0x258] sm:$0xff]
          %v646 = vld [vmem:[%s1 + $0x260] sm:$0xff]
          %v647 = vld [vmem:[%s1 + $0x268] sm:$0xff]
          %v648 = vld [vmem:[%s1 + $0x270] sm:$0xff]
          %v649 = vld [vmem:[%s1 + $0x278] sm:$0xff]
          %v650 = vld [vmem:[%s1 + $0x280] sm:$0xff]
          %v651 = vld [vmem:[%s1 + $0x288] sm:$0xff]
          %v652 = vld [vmem:[%s1 + $0x290] sm:$0xff]
          %v653 = vld [vmem:[%s1 + $0x298] sm:$0xff]
          %v654 = vld [vmem:[%s1 + $0x2a0] sm:$0xff]
          %v655 = vld [vmem:[%s1 + $0x2a8] sm:$0xff]
          %v656 = vld [vmem:[%s1 + $0x2b0] sm:$0xff]
          %v657 = vld [vmem:[%s1 + $0x2b8] sm:$0xff]
          %v658 = vld [vmem:[%s1 + $0x2c0] sm:$0xff]
          %v659 = vld [vmem:[%s1 + $0x2c8] sm:$0xff]
          %v660 = vld [vmem:[%s1 + $0x2d0] sm:$0xff]
          %v661 = vld [vmem:[%s1 + $0x2d8] sm:$0xff]
          %v662 = vld [vmem:[%s1 + $0x2e0] sm:$0xff]
          %v663 = vld [vmem:[%s1 + $0x2e8] sm:$0xff]
          %v664 = vld [vmem:[%s1 + $0x2f0] sm:$0xff]
          %v665 = vld [vmem:[%s1 + $0x2f8] sm:$0xff]
          %v666 = vld [vmem:[%s1 + $0x300] sm:$0xff]
          %v667 = vld [vmem:[%s1 + $0x308] sm:$0xff]
          %v668 = vld [vmem:[%s1 + $0x310] sm:$0xff]
          %v669 = vld [vmem:[%s1 + $0x318] sm:$0xff]
          %v670 = vld [vmem:[%s1 + $0x320] sm:$0xff]
          %v671 = vld [vmem:[%s1 + $0x328] sm:$0xff]
          %v672 = vld [vmem:[%s1 + $0x330] sm:$0xff]
          %v673 = vld [vmem:[%s1 + $0x338] sm:$0xff]
          %v674 = vld [vmem:[%s1 + $0x340] sm:$0xff]
          %v675 = vld [vmem:[%s1 + $0x348] sm:$0xff]
          %v676 = vld [vmem:[%s1 + $0x350] sm:$0xff]
          %v677 = vld [vmem:[%s1 + $0x358] sm:$0xff]
          %v678 = vld [vmem:[%s1 + $0x360] sm:$0xff]
          %v679 = vld [vmem:[%s1 + $0x368] sm:$0xff]
          %v680 = vld [vmem:[%s1 + $0x370] sm:$0xff]
          %v681 = vld [vmem:[%s1 + $0x378] sm:$0xff]
          %v682 = vld [vmem:[%s1 + $0x380] sm:$0xff]
          %v683 = vld [vmem:[%s1 + $0x388] sm:$0xff]
          %v684 = vld [vmem:[%s1 + $0x390] sm:$0xff]
          %v685 = vld [vmem:[%s1 + $0x398] sm:$0xff]
          %v686 = vld [vmem:[%s1 + $0x3a0] sm:$0xff]
          %v687 = vld [vmem:[%s1 + $0x3a8] sm:$0xff]
          %v688 = vld [vmem:[%s1 + $0x3b0] sm:$0xff]
          %v689 = vld [vmem:[%s1 + $0x3b8] sm:$0xff]
          %v690 = vld [vmem:[%s1 + $0x3c0] sm:$0xff]
          %v691 = vld [vmem:[%s1 + $0x3c8] sm:$0xff]
          %v692 = vld [vmem:[%s1 + $0x3d0] sm:$0xff]
          %v693 = vld [vmem:[%s1 + $0x3d8] sm:$0xff]
          %v694 = vld [vmem:[%s1 + $0x3e0] sm:$0xff]
          %v695 = vld [vmem:[%s1 + $0x3e8] sm:$0xff]
          %v696 = vld [vmem:[%s1 + $0x3f0] sm:$0xff]
          %v697 = vld [vmem:[%s1 + $0x3f8] sm:$0xff]
          %v698 = vld [vmem:[%s1 + $0x400] sm:$0xff]
          %v699 = vld [vmem:[%s1 + $0x408] sm:$0xff]
          %v700 = vld [vmem:[%s1 + $0x410] sm:$0xff]
          %v701 = vld [vmem:[%s1 + $0x418] sm:$0xff]
          %v702 = vld [vmem:[%s1 + $0x420] sm:$0xff]
          %v703 = vld [vmem:[%s1 + $0x428] sm:$0xff]
          %v704 = vld [vmem:[%s1 + $0x430] sm:$0xff]
          %v705 = vld [vmem:[%s1 + $0x438] sm:$0xff]
          %v706 = vld [vmem:[%s1 + $0x440] sm:$0xff]
          %v707 = vld [vmem:[%s1 + $0x448] sm:$0xff]
          %v708 = vld [vmem:[%s1 + $0x450] sm:$0xff]
          %v709 = vld [vmem:[%s1 + $0x458] sm:$0xff]
          %v710 = vld [vmem:[%s1 + $0x460] sm:$0xff]
          %v711 = vld [vmem:[%s1 + $0x468] sm:$0xff]
          %v712 = vld [vmem:[%s1 + $0x470] sm:$0xff]
          %v713 = vld [vmem:[%s1 + $0x478] sm:$0xff]
          %v714 = vld [vmem:[%s1 + $0x480] sm:$0xff]
          %v715 = vld [vmem:[%s1 + $0x488] sm:$0xff]
          %v716 = vld [vmem:[%s1 + $0x490] sm:$0xff]
          %v717 = vld [vmem:[%s1 + $0x498] sm:$0xff]
          %v718 = vld [vmem:[%s1 + $0x4a0] sm:$0xff]
          %v719 = vld [vmem:[%s1 + $0x4a8] sm:$0xff]
          %v720 = vld [vmem:[%s1 + $0x4b0] sm:$0xff]
          %v721 = vld [vmem:[%s1 + $0x4b8] sm:$0xff]
          %v722 = vld [vmem:[%s1 + $0x4c0] sm:$0xff]
          %v723 = vld [vmem:[%s1 + $0x4c8] sm:$0xff]
          %v724 = vld [vmem:[%s1 + $0x4d0] sm:$0xff]
          %v725 = vld [vmem:[%s1 + $0x4d8] sm:$0xff]
          %v726 = vld [vmem:[%s1 + $0x4e0] sm:$0xff]
          %v727 = vld [vmem:[%s1 + $0x4e8] sm:$0xff]
          %v728 = vld [vmem:[%s1 + $0x4f0] sm:$0xff]
          %v729 = vld [vmem:[%s1 + $0x4f8] sm:$0xff]
          %v730 = vld [vmem:[%s1 + $0x500] sm:$0xff]
          %v731 = vld [vmem:[%s1 + $0x508] sm:$0xff]
          %v732 = vld [vmem:[%s1 + $0x510] sm:$0xff]
          %v733 = vld [vmem:[%s1 + $0x518] sm:$0xff]
          %v734 = vld [vmem:[%s1 + $0x520] sm:$0xff]
          %v735 = vld [vmem:[%s1 + $0x528] sm:$0xff]
          %v736 = vld [vmem:[%s1 + $0x530] sm:$0xff]
          %v737 = vld [vmem:[%s1 + $0x538] sm:$0xff]
          %v738 = vld [vmem:[%s1 + $0x540] sm:$0xff]
          %v739 = vld [vmem:[%s1 + $0x548] sm:$0xff]
          %v740 = vld [vmem:[%s1 + $0x550] sm:$0xff]
          %v741 = vld [vmem:[%s1 + $0x558] sm:$0xff]
          %v742 = vld [vmem:[%s1 + $0x560] sm:$0xff]
          %v743 = vld [vmem:[%s1 + $0x568] sm:$0xff]
          %v744 = vld [vmem:[%s1 + $0x570] sm:$0xff]
          %v745 = vld [vmem:[%s1 + $0x578] sm:$0xff]
          %v746 = vld [vmem:[%s1 + $0x580] sm:$0xff]
          %v747 = vld [vmem:[%s1 + $0x588] sm:$0xff]
          %v748 = vld [vmem:[%s1 + $0x590] sm:$0xff]
          %v749 = vld [vmem:[%s1 + $0x598] sm:$0xff]
          %v750 = vld [vmem:[%s1 + $0x5a0] sm:$0xff]
          %v751 = vld [vmem:[%s1 + $0x5a8] sm:$0xff]
          %v752 = vld [vmem:[%s1 + $0x5b0] sm:$0xff]
          %v753 = vld [vmem:[%s1 + $0x5b8] sm:$0xff]
          %v754 = vld [vmem:[%s1 + $0x5c0] sm:$0xff]
          %v755 = vld [vmem:[%s1 + $0x5c8] sm:$0xff]
          %v756 = vld [vmem:[%s1 + $0x5d0] sm:$0xff]
          %v757 = vld [vmem:[%s1 + $0x5d8] sm:$0xff]
          %v758 = vld [vmem:[%s1 + $0x5e0] sm:$0xff]
          %v759 = vld [vmem:[%s1 + $0x5e8] sm:$0xff]
          %v760 = vld [vmem:[%s1 + $0x5f0] sm:$0xff]
          %v761 = vld [vmem:[%s1 + $0x5f8] sm:$0xff]
          %v762 = vld [vmem:[%s2] sm:$0x3]
          %v764 = vlaneseq
          %v765 = vshrl.u32 %v764, 7
          %v766 = vsub.s32 0, %v765
          %v767 = vrot.slane %v762, %v766
          %v768 = vlaneseq
          %v769 = vshrl.u32 %v768, 7
          %v770 = vsub.s32 1, %v769
          %v771 = vrot.slane %v762, %v770
          %774 = vmatprep.subr.mxu0 %v571
          %775 = vmatpush1.msra.mxu0 %v570
          %776 = vmatprep.subr.mxu0 %v573
          %777 = vmatpush1.msra.mxu0 %v572
          %778 = vmatprep.subr.mxu0 %v575
          %779 = vmatpush1.msra.mxu0 %v574
          %780 = vmatprep.subr.mxu0 %v577
          %781 = vmatpush1.msra.mxu0 %v576
          %782 = vmatprep.subr.mxu0 %v579
          %783 = vmatpush1.msra.mxu0 %v578
          %784 = vmatprep.subr.mxu0 %v581
          %785 = vmatpush1.msra.mxu0 %v580
          %786 = vmatprep.subr.mxu0 %v583
          %787 = vmatpush1.msra.mxu0 %v582
          %788 = vmatprep.subr.mxu0 %v585
          %789 = vmatpush1.msra.mxu0 %v584
          %790 = vmatprep.subr.mxu0 %v587
          %791 = vmatpush1.msra.mxu0 %v586
          %792 = vmatprep.subr.mxu0 %v589
          %793 = vmatpush1.msra.mxu0 %v588
          %794 = vmatprep.subr.mxu0 %v591
          %795 = vmatpush1.msra.mxu0 %v590
          %796 = vmatprep.subr.mxu0 %v593
          %797 = vmatpush1.msra.mxu0 %v592
          %798 = vmatprep.subr.mxu0 %v595
          %799 = vmatpush1.msra.mxu0 %v594
          %800 = vmatprep.subr.mxu0 %v597
          %801 = vmatpush1.msra.mxu0 %v596
          %802 = vmatprep.subr.mxu0 %v599
          %803 = vmatpush1.msra.mxu0 %v598
          %804 = vmatprep.subr.mxu0 %v601
          %805 = vmatpush1.msra.mxu0 %v600
          %806 = vmatprep.subr.mxu0 %v603
          %807 = vmatpush1.msra.mxu0 %v602
          %808 = vmatprep.subr.mxu0 %v605
          %809 = vmatpush1.msra.mxu0 %v604
          %810 = vmatprep.subr.mxu0 %v607
          %811 = vmatpush1.msra.mxu0 %v606
          %812 = vmatprep.subr.mxu0 %v609
          %813 = vmatpush1.msra.mxu0 %v608
          %814 = vmatprep.subr.mxu0 %v611
          %815 = vmatpush1.msra.mxu0 %v610
          %816 = vmatprep.subr.mxu0 %v613
          %817 = vmatpush1.msra.mxu0 %v612
          %818 = vmatprep.subr.mxu0 %v615
          %819 = vmatpush1.msra.mxu0 %v614
          %820 = vmatprep.subr.mxu0 %v617
          %821 = vmatpush1.msra.mxu0 %v616
          %822 = vmatprep.subr.mxu0 %v619
          %823 = vmatpush1.msra.mxu0 %v618
          %824 = vmatprep.subr.mxu0 %v621
          %825 = vmatpush1.msra.mxu0 %v620
          %826 = vmatprep.subr.mxu0 %v623
          %827 = vmatpush1.msra.mxu0 %v622
          %828 = vmatprep.subr.mxu0 %v625
          %829 = vmatpush1.msra.mxu0 %v624
          %830 = vmatprep.subr.mxu0 %v627
          %831 = vmatpush1.msra.mxu0 %v626
          %832 = vmatprep.subr.mxu0 %v629
          %833 = vmatpush1.msra.mxu0 %v628
          %834 = vmatprep.subr.mxu0 %v631
          %835 = vmatpush1.msra.mxu0 %v630
          %836 = vmatprep.subr.mxu0 %v633
          %837 = vmatpush1.msra.mxu0 %v632
          %838 = vmatprep.mubr.f32.mxu0 %v565
          %839 = vmatmul.mubr.f32.gmra.mrb[0].mxu0 %v564
          %v840 = vpop.f32.mrb[0].mxu0
          %v841 = vadd.f32 %v767, %v840
          %v842 = vpop.f32.mrb[0].mxu0
          %v843 = vadd.f32 %v771, %v842
          %844 = vdwg.mxu0
          %845 = vmatprep.subr.mxu0 %v635
          %846 = vmatpush1.msra.mxu0 %v634
          %847 = vmatprep.subr.mxu0 %v637
          %848 = vmatpush1.msra.mxu0 %v636
          %849 = vmatprep.subr.mxu0 %v639
          %850 = vmatpush1.msra.mxu0 %v638
          %851 = vmatprep.subr.mxu0 %v641
          %852 = vmatpush1.msra.mxu0 %v640
          %853 = vmatprep.subr.mxu0 %v643
          %854 = vmatpush1.msra.mxu0 %v642
          %855 = vmatprep.subr.mxu0 %v645
          %856 = vmatpush1.msra.mxu0 %v644
          %857 = vmatprep.subr.mxu0 %v647
          %858 = vmatpush1.msra.mxu0 %v646
          %859 = vmatprep.subr.mxu0 %v649
          %860 = vmatpush1.msra.mxu0 %v648
          %861 = vmatprep.subr.mxu0 %v651
          %862 = vmatpush1.msra.mxu0 %v650
          %863 = vmatprep.subr.mxu0 %v653
          %864 = vmatpush1.msra.mxu0 %v652
          %865 = vmatprep.subr.mxu0 %v655
          %866 = vmatpush1.msra.mxu0 %v654
          %867 = vmatprep.subr.mxu0 %v657
          %868 = vmatpush1.msra.mxu0 %v656
          %869 = vmatprep.subr.mxu0 %v659
          %870 = vmatpush1.msra.mxu0 %v658
          %871 = vmatprep.subr.mxu0 %v661
          %872 = vmatpush1.msra.mxu0 %v660
          %873 = vmatprep.subr.mxu0 %v663
          %874 = vmatpush1.msra.mxu0 %v662
          %875 = vmatprep.subr.mxu0 %v665
          %876 = vmatpush1.msra.mxu0 %v664
          %877 = vmatprep.subr.mxu0 %v667
          %878 = vmatpush1.msra.mxu0 %v666
          %879 = vmatprep.subr.mxu0 %v669
          %880 = vmatpush1.msra.mxu0 %v668
          %881 = vmatprep.subr.mxu0 %v671
          %882 = vmatpush1.msra.mxu0 %v670
          %883 = vmatprep.subr.mxu0 %v673
          %884 = vmatpush1.msra.mxu0 %v672
          %885 = vmatprep.subr.mxu0 %v675
          %886 = vmatpush1.msra.mxu0 %v674
          %887 = vmatprep.subr.mxu0 %v677
          %888 = vmatpush1.msra.mxu0 %v676
          %889 = vmatprep.subr.mxu0 %v679
          %890 = vmatpush1.msra.mxu0 %v678
          %891 = vmatprep.subr.mxu0 %v681
          %892 = vmatpush1.msra.mxu0 %v680
          %893 = vmatprep.subr.mxu0 %v683
          %894 = vmatpush1.msra.mxu0 %v682
          %895 = vmatprep.subr.mxu0 %v685
          %896 = vmatpush1.msra.mxu0 %v684
          %897 = vmatprep.subr.mxu0 %v687
          %898 = vmatpush1.msra.mxu0 %v686
          %899 = vmatprep.subr.mxu0 %v689
          %900 = vmatpush1.msra.mxu0 %v688
          %901 = vmatprep.subr.mxu0 %v691
          %902 = vmatpush1.msra.mxu0 %v690
          %903 = vmatprep.subr.mxu0 %v693
          %904 = vmatpush1.msra.mxu0 %v692
          %905 = vmatprep.subr.mxu0 %v695
          %906 = vmatpush1.msra.mxu0 %v694
          %907 = vmatprep.subr.mxu0 %v697
          %908 = vmatpush1.msra.mxu0 %v696
          %909 = vmatprep.mubr.f32.mxu0 %v567
          %910 = vmatmul.mubr.f32.gmra.mrb[0].mxu0 %v566
          %v911 = vpop.f32.mrb[0].mxu0
          %v912 = vadd.f32 %v841, %v911
          %v913 = vpop.f32.mrb[0].mxu0
          %v914 = vadd.f32 %v843, %v913
          %915 = vdwg.mxu0
          %916 = vmatprep.subr.mxu0 %v699
          %917 = vmatpush1.msra.mxu0 %v698
          %918 = vmatprep.subr.mxu0 %v701
          %919 = vmatpush1.msra.mxu0 %v700
          %920 = vmatprep.subr.mxu0 %v703
          %921 = vmatpush1.msra.mxu0 %v702
          %922 = vmatprep.subr.mxu0 %v705
          %923 = vmatpush1.msra.mxu0 %v704
          %924 = vmatprep.subr.mxu0 %v707
          %925 = vmatpush1.msra.mxu0 %v706
          %926 = vmatprep.subr.mxu0 %v709
          %927 = vmatpush1.msra.mxu0 %v708
          %928 = vmatprep.subr.mxu0 %v711
          %929 = vmatpush1.msra.mxu0 %v710
          %930 = vmatprep.subr.mxu0 %v713
          %931 = vmatpush1.msra.mxu0 %v712
          %932 = vmatprep.subr.mxu0 %v715
          %933 = vmatpush1.msra.mxu0 %v714
          %934 = vmatprep.subr.mxu0 %v717
          %935 = vmatpush1.msra.mxu0 %v716
          %936 = vmatprep.subr.mxu0 %v719
          %937 = vmatpush1.msra.mxu0 %v718
          %938 = vmatprep.subr.mxu0 %v721
          %939 = vmatpush1.msra.mxu0 %v720
          %940 = vmatprep.subr.mxu0 %v723
          %941 = vmatpush1.msra.mxu0 %v722
          %942 = vmatprep.subr.mxu0 %v725
          %943 = vmatpush1.msra.mxu0 %v724
          %944 = vmatprep.subr.mxu0 %v727
          %945 = vmatpush1.msra.mxu0 %v726
          %946 = vmatprep.subr.mxu0 %v729
          %947 = vmatpush1.msra.mxu0 %v728
          %948 = vmatprep.subr.mxu0 %v731
          %949 = vmatpush1.msra.mxu0 %v730
          %950 = vmatprep.subr.mxu0 %v733
          %951 = vmatpush1.msra.mxu0 %v732
          %952 = vmatprep.subr.mxu0 %v735
          %953 = vmatpush1.msra.mxu0 %v734
          %954 = vmatprep.subr.mxu0 %v737
          %955 = vmatpush1.msra.mxu0 %v736
          %956 = vmatprep.subr.mxu0 %v739
          %957 = vmatpush1.msra.mxu0 %v738
          %958 = vmatprep.subr.mxu0 %v741
          %959 = vmatpush1.msra.mxu0 %v740
          %960 = vmatprep.subr.mxu0 %v743
          %961 = vmatpush1.msra.mxu0 %v742
          %962 = vmatprep.subr.mxu0 %v745
          %963 = vmatpush1.msra.mxu0 %v744
          %964 = vmatprep.subr.mxu0 %v747
          %965 = vmatpush1.msra.mxu0 %v746
          %966 = vmatprep.subr.mxu0 %v749
          %967 = vmatpush1.msra.mxu0 %v748
          %968 = vmatprep.subr.mxu0 %v751
          %969 = vmatpush1.msra.mxu0 %v750
          %970 = vmatprep.subr.mxu0 %v753
          %971 = vmatpush1.msra.mxu0 %v752
          %972 = vmatprep.subr.mxu0 %v755
          %973 = vmatpush1.msra.mxu0 %v754
          %974 = vmatprep.subr.mxu0 %v757
          %975 = vmatpush1.msra.mxu0 %v756
          %976 = vmatprep.subr.mxu0 %v759
          %977 = vmatpush1.msra.mxu0 %v758
          %978 = vmatprep.subr.mxu0 %v761
          %979 = vmatpush1.msra.mxu0 %v760
          %980 = vmatprep.mubr.f32.mxu0 %v569
          %981 = vmatmul.mubr.f32.gmra.mrb[0].mxu0 %v568
          %v982 = vpop.f32.mrb[0].mxu0
          %v983 = vadd.f32 %v912, %v982
          %v984 = vpop.f32.mrb[0].mxu0
          %v985 = vadd.f32 %v914, %v984
          %986 = vdwg.mxu0
          %v989 = vcombine.low %v983, %v985
          %v990 = vcombine.high %v983, %v985
          %v993 = vld [vmem:[%s4] sm:$0xff]
          %v994 = vadd.f32 %v989, %v993
          %v995 = vadd.f32 %v990, %v993
          %v996 = vld [vmem:[%s3] sm:$0x3]
          %v998 = vlaneseq
          %v999 = vshrl.u32 %v998, 7
          %v1000 = vsub.s32 0, %v999
          %v1001 = vrot.slane %v996, %v1000
          %v1002 = vlaneseq
          %v1003 = vshrl.u32 %v1002, 7
          %v1004 = vsub.s32 1, %v1003
          %v1005 = vrot.slane %v996, %v1004
          %v1010 = vcombine.high %v994, %v994
          %v1011 = vcombine.high %v995, %v995
          %v1012 = vrot.slane %v994, 7
          %v1013 = vrot.slane %v1010, 7
          %v1014 = vrot.slane %v995, 7
          %v1015 = vrot.slane %v1011, 7
          %vm1020 = vcmask 1040384
          %v1021 = vsel %vm1020, %v1001, %v1012
          %v1022 = vsel %vm1020, %v1005, %v1013
          %v1023 = vsel %vm1020, %v1001, %v1014
          %v1024 = vsel %vm1020, %v1005, %v1015
          %vm1025 = vcmask 1044480
          %v1026 = vsel %vm1025, %v1021, 0.0
          %v1027 = vsel %vm1025, %v1022, 0.0
          %v1028 = vsel %vm1025, %v1023, 0.0
          %v1029 = vsel %vm1025, %v1024, 0.0
          %1030 = vst [vmem:[#allocation2] sm:$0xff] %v1026
          %vm1031 = vcmask 523264
          %1032 = vst.msk [vmem:[#allocation2 + $0x8] sm:$0xff] %vm1031, %v1027
          %1033 = vst [vmem:[#allocation2 + $0x10] sm:$0xff] %v1028
          %1034 = vst.msk [vmem:[#allocation2 + $0x18] sm:$0xff] %vm1031, %v1029
        $region80: #{vit_forward.1} parent=75 // pred_fallthru
          _
        %v1035 = vld [vmem:[#allocation2] sm:$0xff]
        %v1036 = vld [vmem:[#allocation2 + $0x8] sm:$0xff]
        %v1037 = vld [vmem:[#allocation2 + $0x10] sm:$0xff]
        %v1038 = vld [vmem:[#allocation2 + $0x18] sm:$0xff]
        %v1039 = vlaneseq
        %v1040 = vand.u32 %v1039, 127
        %vm1041 = vcmp.lt.s32.totalorder %v1040, 5
        %v1042 = vld [vmem:[%s557] ss:$8 sm:$0x3]
        %s1043 = scalar_lea.vmem %s557, 1
        %v1044 = vld [vmem:[%s1043] ss:$8 sm:$0x3]
        %s1045 = scalar_lea.vmem %s557, 2
        %v1046 = vld [vmem:[%s1045] ss:$8 sm:$0xf]
        %v1047 = vld [vmem:[%s1045] ss:$8 sm:$0x10]
        %v1048 = vor.u32 %v1046, %v1047
        %s1049 = scalar_lea.vmem %s557, 3
        %v1050 = vld [vmem:[%s1049] ss:$8 sm:$0x3]
        %s1051 = scalar_lea.vmem %s557, 4
        %v1052 = vld [vmem:[%s1051] ss:$8 sm:$0x3]
        %s1053 = scalar_lea.vmem %s557, 5
        %v1054 = vld [vmem:[%s1053] ss:$8 sm:$0x3]
        %s1055 = scalar_lea.vmem %s557, 6
        %v1056 = vld [vmem:[%s1055] ss:$8 sm:$0xf]
        %v1057 = vld [vmem:[%s1055] ss:$8 sm:$0x30]
        %v1058 = vor.u32 %v1056, %v1057
        %s1059 = scalar_lea.vmem %s557, 7
        %v1060 = vld [vmem:[%s1059] ss:$8 sm:$0x3]
        %vm1061 = vcmask 523264
        %v1062 = vsel %vm1061, %v1036, 0.0
        %v1063 = vadd.f32 %v1035, %v1062
        %1064 = vadd.xlane.f32.xlu0 %v1063
        %v1065 = vpop.xlane.xlu0 %1064
        %v1066 = vsel %vm1061, %v1038, 0.0
        %v1067 = vadd.f32 %v1037, %v1066
        %1068 = vadd.xlane.f32.xlu0 %v1067
        %v1069 = vpop.xlane.xlu0 %1068
        %v1070 = vrcp.pop 192.0
        %v1071 = vmul.f32 %v1065, %v1070
        %v1072 = vmul.f32 %v1069, %v1070
        %v1073 = vsub.f32 %v1035, %v1071
        %v1074 = vsub.f32 %v1036, %v1071
        %v1075 = vsub.f32 %v1037, %v1072
        %v1076 = vsub.f32 %v1038, %v1072
        %v1077 = vmul.f32 %v1073, %v1073
        %v1078 = vmul.f32 %v1074, %v1074
        %v1079 = vmul.f32 %v1075, %v1075
        %v1080 = vmul.f32 %v1076, %v1076
        %v1081 = vsel %vm1061, %v1078, 0.0
        %v1082 = vadd.f32 %v1077, %v1081
        %1083 = vadd.xlane.f32.xlu0 %v1082
        %v1084 = vpop.xlane.xlu0 %1083
        %v1085 = vsel %vm1061, %v1080, 0.0
        %v1086 = vadd.f32 %v1079, %v1085
        %1087 = vadd.xlane.f32.xlu0 %v1086
        %v1088 = vpop.xlane.xlu0 %1087
        %v1089 = vmul.f32 %v1084, %v1070
        %v1090 = vmul.f32 %v1088, %v1070
        %v1091 = vadd.f32 %v1089, 1e-06
        %v1092 = vadd.f32 %v1090, 1e-06
        %v1093 = vrsqrt.pop %v1091
        %v1094 = vrsqrt.pop %v1092
        %v1095 = vmul.f32 %v1073, %v1093
        %v1096 = vmul.f32 %v1074, %v1093
        %v1097 = vmul.f32 %v1075, %v1094
        %v1098 = vmul.f32 %v1076, %v1094
        %v1100 = vlaneseq
        %v1101 = vshrl.u32 %v1100, 7
        %v1102 = vsub.s32 0, %v1101
        %v1103 = vrot.slane %v1042, %v1102
        %v1104 = vlaneseq
        %v1105 = vshrl.u32 %v1104, 7
        %v1106 = vsub.s32 1, %v1105
        %v1107 = vrot.slane %v1042, %v1106
        %v1110 = vmul.f32 %v1095, %v1103
        %v1111 = vmul.f32 %v1096, %v1107
        %v1112 = vmul.f32 %v1097, %v1103
        %v1113 = vmul.f32 %v1098, %v1107
        %v1115 = vlaneseq
        %v1116 = vshrl.u32 %v1115, 7
        %v1117 = vsub.s32 0, %v1116
        %v1118 = vrot.slane %v1044, %v1117
        %v1119 = vlaneseq
        %v1120 = vshrl.u32 %v1119, 7
        %v1121 = vsub.s32 1, %v1120
        %v1122 = vrot.slane %v1044, %v1121
        %v1125 = vadd.f32 %v1110, %v1118
        %v1126 = vadd.f32 %v1111, %v1122
        %v1127 = vadd.f32 %v1112, %v1118
        %v1128 = vadd.f32 %v1113, %v1122
        %v1129 = vpack.c.bf16 %v1127, %v1125
        %v1130 = vpack.c.bf16 %v1128, %v1126
        %v1131 = vld [vmem:[%s529] sm:$0xff]
        %v1132 = vld [vmem:[%s529 + $0x8] sm:$0xff]
        %v1133 = vld [vmem:[%s529 + $0x10] sm:$0xf]
        %v1134 = vld [vmem:[%s529 + $0x14] sm:$0xff]
        %v1135 = vld [vmem:[%s529 + $0x1c] sm:$0xff]
        %v1136 = vld [vmem:[%s529 + $0x24] sm:$0xf]
        %v1137 = vld [vmem:[%s529 + $0x28] sm:$0xff]
        %v1138 = vld [vmem:[%s529 + $0x30] sm:$0xff]
        %v1139 = vld [vmem:[%s529 + $0x38] sm:$0xf]
        %v1140 = vld [vmem:[%s529 + $0x3c] sm:$0xff]
        %v1141 = vld [vmem:[%s529 + $0x44] sm:$0xff]
        %v1142 = vld [vmem:[%s529 + $0x4c] sm:$0xf]
        %v1143 = vld [vmem:[%s529 + $0x50] sm:$0xff]
        %v1144 = vld [vmem:[%s529 + $0x58] sm:$0xff]
        %v1145 = vld [vmem:[%s529 + $0x60] sm:$0xf]
        %v1146 = vld [vmem:[%s529 + $0x64] sm:$0xff]
        %v1147 = vld [vmem:[%s529 + $0x6c] sm:$0xff]
        %v1148 = vld [vmem:[%s529 + $0x74] sm:$0xf]
        %v1149 = vld [vmem:[%s529 + $0x78] sm:$0xff]
        %v1150 = vld [vmem:[%s529 + $0x80] sm:$0xff]
        %v1151 = vld [vmem:[%s529 + $0x88] sm:$0xf]
        %v1152 = vld [vmem:[%s529 + $0x8c] sm:$0xff]
        %v1153 = vld [vmem:[%s529 + $0x94] sm:$0xff]
        %v1154 = vld [vmem:[%s529 + $0x9c] sm:$0xf]
        %v1155 = vld [vmem:[%s529 + $0xa0] sm:$0xff]
        %v1156 = vld [vmem:[%s529 + $0xa8] sm:$0xff]
        %v1157 = vld [vmem:[%s529 + $0xb0] sm:$0xf]
        %v1158 = vld [vmem:[%s529 + $0xb4] sm:$0xff]
        %v1159 = vld [vmem:[%s529 + $0xbc] sm:$0xff]
        %v1160 = vld [vmem:[%s529 + $0xc4] sm:$0xf]
        %v1161 = vld [vmem:[%s529 + $0xc8] sm:$0xff]
        %v1162 = vld [vmem:[%s529 + $0xd0] sm:$0xff]
        %v1163 = vld [vmem:[%s529 + $0xd8] sm:$0xf]
        %v1164 = vld [vmem:[%s529 + $0xdc] sm:$0xff]
        %v1165 = vld [vmem:[%s529 + $0xe4] sm:$0xff]
        %v1166 = vld [vmem:[%s529 + $0xec] sm:$0xf]
        %v1167 = vld [vmem:[%s529 + $0xf0] sm:$0xff]
        %v1168 = vld [vmem:[%s529 + $0xf8] sm:$0xff]
        %v1169 = vld [vmem:[%s529 + $0x100] sm:$0xf]
        %v1170 = vld [vmem:[%s529 + $0x104] sm:$0xff]
        %v1171 = vld [vmem:[%s529 + $0x10c] sm:$0xff]
        %v1172 = vld [vmem:[%s529 + $0x114] sm:$0xf]
        %v1173 = vld [vmem:[%s529 + $0x118] sm:$0xff]
        %v1174 = vld [vmem:[%s529 + $0x120] sm:$0xff]
        %v1175 = vld [vmem:[%s529 + $0x128] sm:$0xf]
        %v1176 = vld [vmem:[%s529 + $0x12c] sm:$0xff]
        %v1177 = vld [vmem:[%s529 + $0x134] sm:$0xff]
        %v1178 = vld [vmem:[%s529 + $0x13c] sm:$0xf]
        %v1179 = vld [vmem:[%s529 + $0x140] sm:$0xff]
        %v1180 = vld [vmem:[%s529 + $0x148] sm:$0xff]
        %v1181 = vld [vmem:[%s529 + $0x150] sm:$0xf]
        %v1182 = vld [vmem:[%s529 + $0x154] sm:$0xff]
        %v1183 = vld [vmem:[%s529 + $0x15c] sm:$0xff]
        %v1184 = vld [vmem:[%s529 + $0x164] sm:$0xf]
        %v1185 = vld [vmem:[%s529 + $0x168] sm:$0xff]
        %v1186 = vld [vmem:[%s529 + $0x170] sm:$0xff]
        %v1187 = vld [vmem:[%s529 + $0x178] sm:$0xf]
        %v1188 = vld [vmem:[%s529 + $0x17c] sm:$0xff]
        %v1189 = vld [vmem:[%s529 + $0x184] sm:$0xff]
        %v1190 = vld [vmem:[%s529 + $0x18c] sm:$0xf]
        %v1191 = vld [vmem:[%s529 + $0x190] sm:$0xff]
        %v1192 = vld [vmem:[%s529 + $0x198] sm:$0xff]
        %v1193 = vld [vmem:[%s529 + $0x1a0] sm:$0xf]
        %v1194 = vld [vmem:[%s529 + $0x1a4] sm:$0xff]
        %v1195 = vld [vmem:[%s529 + $0x1ac] sm:$0xff]
        %v1196 = vld [vmem:[%s529 + $0x1b4] sm:$0xf]
        %v1197 = vld [vmem:[%s529 + $0x1b8] sm:$0xff]
        %v1198 = vld [vmem:[%s529 + $0x1c0] sm:$0xff]
        %v1199 = vld [vmem:[%s529 + $0x1c8] sm:$0xf]
        %v1200 = vld [vmem:[%s529 + $0x1cc] sm:$0xff]
        %v1201 = vld [vmem:[%s529 + $0x1d4] sm:$0xff]
        %v1202 = vld [vmem:[%s529 + $0x1dc] sm:$0xf]
        %v1204 = vlaneseq
        %v1205 = vshrl.u32 %v1204, 7
        %v1206 = vsub.s32 0, %v1205
        %v1207 = vrot.slane %v1048, %v1206
        %v1208 = vlaneseq
        %v1209 = vshrl.u32 %v1208, 7
        %v1210 = vsub.s32 1, %v1209
        %v1211 = vrot.slane %v1048, %v1210
        %v1212 = vlaneseq
        %v1213 = vshrl.u32 %v1212, 7
        %v1214 = vsub.s32 2, %v1213
        %v1215 = vrot.slane %v1048, %v1214
        %v1216 = vlaneseq
        %v1217 = vshrl.u32 %v1216, 7
        %v1218 = vsub.s32 3, %v1217
        %v1219 = vrot.slane %v1048, %v1218
        %v1220 = vlaneseq
        %v1221 = vshrl.u32 %v1220, 7
        %v1222 = vsub.s32 4, %v1221
        %v1223 = vrot.slane %v1048, %v1222
        %v1301 = vunpack.c.l.b16 %v1131
        %v1302 = vunpack.c.h.b16 %v1131
        %v1303 = vunpack.c.l.b16 %v1132
        %v1304 = vunpack.c.h.b16 %v1132
        %v1305 = vunpack.c.l.b16 %v1133
        %v1306 = vunpack.c.l.b16 %v1134
        %v1307 = vunpack.c.h.b16 %v1134
        %v1308 = vunpack.c.l.b16 %v1135
        %v1309 = vunpack.c.h.b16 %v1135
        %v1310 = vunpack.c.l.b16 %v1136
        %v1311 = vunpack.c.l.b16 %v1137
        %v1312 = vunpack.c.h.b16 %v1137
        %v1313 = vunpack.c.l.b16 %v1138
        %v1314 = vunpack.c.h.b16 %v1138
        %v1315 = vunpack.c.l.b16 %v1139
        %v1316 = vunpack.c.l.b16 %v1140
        %v1317 = vunpack.c.h.b16 %v1140
        %v1318 = vunpack.c.l.b16 %v1141
        %v1319 = vunpack.c.h.b16 %v1141
        %v1320 = vunpack.c.l.b16 %v1142
        %v1321 = vunpack.c.l.b16 %v1143
        %v1322 = vunpack.c.h.b16 %v1143
        %v1323 = vunpack.c.l.b16 %v1144
        %v1324 = vunpack.c.h.b16 %v1144
        %v1325 = vunpack.c.l.b16 %v1145
        %v1326 = vunpack.c.l.b16 %v1146
        %v1327 = vunpack.c.h.b16 %v1146
        %v1328 = vunpack.c.l.b16 %v1147
        %v1329 = vunpack.c.h.b16 %v1147
        %v1330 = vunpack.c.l.b16 %v1148
        %v1331 = vunpack.c.l.b16 %v1149
        %v1332 = vunpack.c.h.b16 %v1149
        %v1333 = vunpack.c.l.b16 %v1150
        %v1334 = vunpack.c.h.b16 %v1150
        %v1335 = vunpack.c.l.b16 %v1151
        %v1336 = vunpack.c.l.b16 %v1152
        %v1337 = vunpack.c.h.b16 %v1152
        %v1338 = vunpack.c.l.b16 %v1153
        %v1339 = vunpack.c.h.b16 %v1153
        %v1340 = vunpack.c.l.b16 %v1154
        %v1341 = vunpack.c.l.b16 %v1155
        %v1342 = vunpack.c.h.b16 %v1155
        %v1343 = vunpack.c.l.b16 %v1156
        %v1344 = vunpack.c.h.b16 %v1156
        %v1345 = vunpack.c.l.b16 %v1157
        %v1346 = vunpack.c.l.b16 %v1158
        %v1347 = vunpack.c.h.b16 %v1158
        %v1348 = vunpack.c.l.b16 %v1159
        %v1349 = vunpack.c.h.b16 %v1159
        %v1350 = vunpack.c.l.b16 %v1160
        %v1351 = vunpack.c.l.b16 %v1161
        %v1352 = vunpack.c.h.b16 %v1161
        %v1353 = vunpack.c.l.b16 %v1162
        %v1354 = vunpack.c.h.b16 %v1162
        %v1355 = vunpack.c.l.b16 %v1163
        %v1356 = vunpack.c.l.b16 %v1164
        %v1357 = vunpack.c.h.b16 %v1164
        %v1358 = vunpack.c.l.b16 %v1165
        %v1359 = vunpack.c.h.b16 %v1165
        %v1360 = vunpack.c.l.b16 %v1166
        %v1361 = vunpack.c.l.b16 %v1167
        %v1362 = vunpack.c.h.b16 %v1167
        %v1363 = vunpack.c.l.b16 %v1168
        %v1364 = vunpack.c.h.b16 %v1168
        %v1365 = vunpack.c.l.b16 %v1169
        %v1366 = vunpack.c.l.b16 %v1170
        %v1367 = vunpack.c.h.b16 %v1170
        %v1368 = vunpack.c.l.b16 %v1171
        %v1369 = vunpack.c.h.b16 %v1171
        %v1370 = vunpack.c.l.b16 %v1172
        %v1371 = vunpack.c.l.b16 %v1173
        %v1372 = vunpack.c.h.b16 %v1173
        %v1373 = vunpack.c.l.b16 %v1174
        %v1374 = vunpack.c.h.b16 %v1174
        %v1375 = vunpack.c.l.b16 %v1175
        %v1376 = vunpack.c.l.b16 %v1176
        %v1377 = vunpack.c.h.b16 %v1176
        %v1378 = vunpack.c.l.b16 %v1177
        %v1379 = vunpack.c.h.b16 %v1177
        %v1380 = vunpack.c.l.b16 %v1178
        %v1381 = vunpack.c.l.b16 %v1179
        %v1382 = vunpack.c.h.b16 %v1179
        %v1383 = vunpack.c.l.b16 %v1180
        %v1384 = vunpack.c.h.b16 %v1180
        %v1385 = vunpack.c.l.b16 %v1181
        %v1386 = vunpack.c.l.b16 %v1182
        %v1387 = vunpack.c.h.b16 %v1182
        %v1388 = vunpack.c.l.b16 %v1183
        %v1389 = vunpack.c.h.b16 %v1183
        %v1390 = vunpack.c.l.b16 %v1184
        %v1391 = vunpack.c.l.b16 %v1185
        %v1392 = vunpack.c.h.b16 %v1185
        %v1393 = vunpack.c.l.b16 %v1186
        %v1394 = vunpack.c.h.b16 %v1186
        %v1395 = vunpack.c.l.b16 %v1187
        %v1396 = vunpack.c.l.b16 %v1188
        %v1397 = vunpack.c.h.b16 %v1188
        %v1398 = vunpack.c.l.b16 %v1189
        %v1399 = vunpack.c.h.b16 %v1189
        %v1400 = vunpack.c.l.b16 %v1190
        %v1401 = vunpack.c.l.b16 %v1191
        %v1402 = vunpack.c.h.b16 %v1191
        %v1403 = vunpack.c.l.b16 %v1192
        %v1404 = vunpack.c.h.b16 %v1192
        %v1405 = vunpack.c.l.b16 %v1193
        %v1406 = vunpack.c.l.b16 %v1194
        %v1407 = vunpack.c.h.b16 %v1194
        %v1408 = vunpack.c.l.b16 %v1195
        %v1409 = vunpack.c.h.b16 %v1195
        %v1410 = vunpack.c.l.b16 %v1196
        %v1411 = vunpack.c.l.b16 %v1197
        %v1412 = vunpack.c.h.b16 %v1197
        %v1413 = vunpack.c.l.b16 %v1198
        %v1414 = vunpack.c.h.b16 %v1198
        %v1415 = vunpack.c.l.b16 %v1199
        %v1416 = vunpack.c.l.b16 %v1200
        %v1417 = vunpack.c.h.b16 %v1200
        %v1418 = vunpack.c.l.b16 %v1201
        %v1419 = vunpack.c.h.b16 %v1201
        %v1420 = vunpack.c.l.b16 %v1202
        %v1421 = vpack.c.b16 %v1306, %v1301
        %v1422 = vpack.c.b16 %v1307, %v1302
        %v1423 = vpack.c.b16 %v1308, %v1303
        %v1424 = vpack.c.b16 %v1309, %v1304
        %v1425 = vpack.c.b16 %v1310, %v1305
        %v1426 = vpack.c.b16 %v1316, %v1311
        %v1427 = vpack.c.b16 %v1317, %v1312
        %v1428 = vpack.c.b16 %v1318, %v1313
        %v1429 = vpack.c.b16 %v1319, %v1314
        %v1430 = vpack.c.b16 %v1320, %v1315
        %v1431 = vpack.c.b16 %v1326, %v1321
        %v1432 = vpack.c.b16 %v1327, %v1322
        %v1433 = vpack.c.b16 %v1328, %v1323
        %v1434 = vpack.c.b16 %v1329, %v1324
        %v1435 = vpack.c.b16 %v1330, %v1325
        %v1436 = vpack.c.b16 %v1336, %v1331
        %v1437 = vpack.c.b16 %v1337, %v1332
        %v1438 = vpack.c.b16 %v1338, %v1333
        %v1439 = vpack.c.b16 %v1339, %v1334
        %v1440 = vpack.c.b16 %v1340, %v1335
        %v1441 = vpack.c.b16 %v1346, %v1341
        %v1442 = vpack.c.b16 %v1347, %v1342
        %v1443 = vpack.c.b16 %v1348, %v1343
        %v1444 = vpack.c.b16 %v1349, %v1344
        %v1445 = vpack.c.b16 %v1350, %v1345
        %v1446 = vpack.c.b16 %v1356, %v1351
        %v1447 = vpack.c.b16 %v1357, %v1352
        %v1448 = vpack.c.b16 %v1358, %v1353
        %v1449 = vpack.c.b16 %v1359, %v1354
        %v1450 = vpack.c.b16 %v1360, %v1355
        %v1451 = vpack.c.b16 %v1366, %v1361
        %v1452 = vpack.c.b16 %v1367, %v1362
        %v1453 = vpack.c.b16 %v1368, %v1363
        %v1454 = vpack.c.b16 %v1369, %v1364
        %v1455 = vpack.c.b16 %v1370, %v1365
        %v1456 = vpack.c.b16 %v1376, %v1371
        %v1457 = vpack.c.b16 %v1377, %v1372
        %v1458 = vpack.c.b16 %v1378, %v1373
        %v1459 = vpack.c.b16 %v1379, %v1374
        %v1460 = vpack.c.b16 %v1380, %v1375
        %v1461 = vpack.c.b16 %v1386, %v1381
        %v1462 = vpack.c.b16 %v1387, %v1382
        %v1463 = vpack.c.b16 %v1388, %v1383
        %v1464 = vpack.c.b16 %v1389, %v1384
        %v1465 = vpack.c.b16 %v1390, %v1385
        %v1466 = vpack.c.b16 %v1396, %v1391
        %v1467 = vpack.c.b16 %v1397, %v1392
        %v1468 = vpack.c.b16 %v1398, %v1393
        %v1469 = vpack.c.b16 %v1399, %v1394
        %v1470 = vpack.c.b16 %v1400, %v1395
        %v1471 = vpack.c.b16 %v1406, %v1401
        %v1472 = vpack.c.b16 %v1407, %v1402
        %v1473 = vpack.c.b16 %v1408, %v1403
        %v1474 = vpack.c.b16 %v1409, %v1404
        %v1475 = vpack.c.b16 %v1410, %v1405
        %v1476 = vpack.c.b16 %v1416, %v1411
        %v1477 = vpack.c.b16 %v1417, %v1412
        %v1478 = vpack.c.b16 %v1418, %v1413
        %v1479 = vpack.c.b16 %v1419, %v1414
        %v1480 = vpack.c.b16 %v1420, %v1415
        %v1542 = vsel %vm1061, %v1130, 0
        %1544 = vmatprep.subr.bf16.mxu0 %v1422
        %1545 = vmatpush1.bf16.msra.mxu0 %v1421
        %1546 = vmatprep.subr.bf16.mxu0 %v1427
        %1547 = vmatpush1.bf16.msra.mxu0 %v1426
        %1548 = vmatprep.subr.bf16.mxu0 %v1432
        %1549 = vmatpush1.bf16.msra.mxu0 %v1431
        %1550 = vmatprep.subr.bf16.mxu0 %v1437
        %1551 = vmatpush1.bf16.msra.mxu0 %v1436
        %1552 = vmatprep.subr.bf16.mxu0 %v1442
        %1553 = vmatpush1.bf16.msra.mxu0 %v1441
        %1554 = vmatprep.subr.bf16.mxu0 %v1447
        %1555 = vmatpush1.bf16.msra.mxu0 %v1446
        %1556 = vmatprep.subr.bf16.mxu0 %v1452
        %1557 = vmatpush1.bf16.msra.mxu0 %v1451
        %1558 = vmatprep.subr.bf16.mxu0 %v1457
        %1559 = vmatpush1.bf16.msra.mxu0 %v1456
        %1560 = vmatprep.subr.bf16.mxu0 %v1462
        %1561 = vmatpush1.bf16.msra.mxu0 %v1461
        %1562 = vmatprep.subr.bf16.mxu0 %v1467
        %1563 = vmatpush1.bf16.msra.mxu0 %v1466
        %1564 = vmatprep.subr.bf16.mxu0 %v1472
        %1565 = vmatpush1.bf16.msra.mxu0 %v1471
        %1566 = vmatprep.subr.bf16.mxu0 %v1477
        %1567 = vmatpush1.bf16.msra.mxu0 %v1476
        %1568 = vmatprep.subr.bf16.mxu0 0
        %1569 = vmatpush1.bf16.msra.mxu0 0
        %1570 = vmatprep.subr.bf16.mxu0 0
        %1571 = vmatpush1.bf16.msra.mxu0 0
        %1572 = vmatprep.subr.bf16.mxu0 0
        %1573 = vmatpush1.bf16.msra.mxu0 0
        %1574 = vmatprep.subr.bf16.mxu0 0
        %1575 = vmatpush1.bf16.msra.mxu0 0
        %1576 = vmatprep.mubr.bf16.mxu0 %v1542
        %1577 = vmatmul.mubr.bf16.gmra.mrb[0].mxu0 %v1129
        %v1578 = vpop.f32.mrb[0].mxu0
        %v1579 = vadd.f32 %v1207, %v1578
        %v1580 = vpop.f32.mrb[0].mxu0
        %v1581 = vadd.f32 %v1211, %v1580
        %v1582 = vpop.f32.mrb[0].mxu0
        %v1583 = vadd.f32 %v1207, %v1582
        %v1584 = vpop.f32.mrb[0].mxu0
        %v1585 = vadd.f32 %v1211, %v1584
        %1586 = vdwg.mxu0
        %1587 = vmatprep.subr.bf16.mxu0 %v1424
        %1588 = vmatpush1.bf16.msra.mxu0 %v1423
        %1589 = vmatprep.subr.bf16.mxu0 %v1429
        %1590 = vmatpush1.bf16.msra.mxu0 %v1428
        %1591 = vmatprep.subr.bf16.mxu0 %v1434
        %1592 = vmatpush1.bf16.msra.mxu0 %v1433
        %1593 = vmatprep.subr.bf16.mxu0 %v1439
        %1594 = vmatpush1.bf16.msra.mxu0 %v1438
        %1595 = vmatprep.subr.bf16.mxu0 %v1444
        %1596 = vmatpush1.bf16.msra.mxu0 %v1443
        %1597 = vmatprep.subr.bf16.mxu0 %v1449
        %1598 = vmatpush1.bf16.msra.mxu0 %v1448
        %1599 = vmatprep.subr.bf16.mxu0 %v1454
        %1600 = vmatpush1.bf16.msra.mxu0 %v1453
        %1601 = vmatprep.subr.bf16.mxu0 %v1459
        %1602 = vmatpush1.bf16.msra.mxu0 %v1458
        %1603 = vmatprep.subr.bf16.mxu0 %v1464
        %1604 = vmatpush1.bf16.msra.mxu0 %v1463
        %1605 = vmatprep.subr.bf16.mxu0 %v1469
        %1606 = vmatpush1.bf16.msra.mxu0 %v1468
        %1607 = vmatprep.subr.bf16.mxu0 %v1474
        %1608 = vmatpush1.bf16.msra.mxu0 %v1473
        %1609 = vmatprep.subr.bf16.mxu0 %v1479
        %1610 = vmatpush1.bf16.msra.mxu0 %v1478
        %1611 = vmatprep.subr.bf16.mxu0 0
        %1612 = vmatpush1.bf16.msra.mxu0 0
        %1613 = vmatprep.subr.bf16.mxu0 0
        %1614 = vmatpush1.bf16.msra.mxu0 0
        %1615 = vmatprep.subr.bf16.mxu0 0
        %1616 = vmatpush1.bf16.msra.mxu0 0
        %1617 = vmatprep.subr.bf16.mxu0 0
        %1618 = vmatpush1.bf16.msra.mxu0 0
        %1619 = vmatprep.mubr.bf16.mxu0 %v1542
        %1620 = vmatmul.mubr.bf16.gmra.mrb[0].mxu0 %v1129
        %v1621 = vpop.f32.mrb[0].mxu0
        %v1622 = vadd.f32 %v1215, %v1621
        %v1623 = vpop.f32.mrb[0].mxu0
        %v1624 = vadd.f32 %v1219, %v1623
        %v1625 = vpop.f32.mrb[0].mxu0
        %v1626 = vadd.f32 %v1215, %v1625
        %v1627 = vpop.f32.mrb[0].mxu0
        %v1628 = vadd.f32 %v1219, %v1627
        %1629 = vdwg.mxu0
        %1630 = vmatprep.subr.bf16.mxu0 0
        %1631 = vmatpush1.bf16.msra.mxu0 %v1425
        %1632 = vmatprep.subr.bf16.mxu0 0
        %1633 = vmatpush1.bf16.msra.mxu0 %v1430
        %1634 = vmatprep.subr.bf16.mxu0 0
        %1635 = vmatpush1.bf16.msra.mxu0 %v1435
        %1636 = vmatprep.subr.bf16.mxu0 0
        %1637 = vmatpush1.bf16.msra.mxu0 %v1440
        %1638 = vmatprep.subr.bf16.mxu0 0
        %1639 = vmatpush1.bf16.msra.mxu0 %v1445
        %1640 = vmatprep.subr.bf16.mxu0 0
        %1641 = vmatpush1.bf16.msra.mxu0 %v1450
        %1642 = vmatprep.subr.bf16.mxu0 0
        %1643 = vmatpush1.bf16.msra.mxu0 %v1455
        %1644 = vmatprep.subr.bf16.mxu0 0
        %1645 = vmatpush1.bf16.msra.mxu0 %v1460
        %1646 = vmatprep.subr.bf16.mxu0 0
        %1647 = vmatpush1.bf16.msra.mxu0 %v1465
        %1648 = vmatprep.subr.bf16.mxu0 0
        %1649 = vmatpush1.bf16.msra.mxu0 %v1470
        %1650 = vmatprep.subr.bf16.mxu0 0
        %1651 = vmatpush1.bf16.msra.mxu0 %v1475
        %1652 = vmatprep.subr.bf16.mxu0 0
        %1653 = vmatpush1.bf16.msra.mxu0 %v1480
        %1654 = vmatprep.subr.bf16.mxu0 0
        %1655 = vmatpush1.bf16.msra.mxu0 0
        %1656 = vmatprep.subr.bf16.mxu0 0
        %1657 = vmatpush1.bf16.msra.mxu0 0
        %1658 = vmatprep.subr.bf16.mxu0 0
        %1659 = vmatpush1.bf16.msra.mxu0 0
        %1660 = vmatprep.subr.bf16.mxu0 0
        %1661 = vmatpush1.bf16.msra.mxu0 0
        %1662 = vmatprep.mubr.bf16.mxu0 %v1542
        %1663 = vmatmul.mubr.bf16.gmra.mrb[0].mxu0 %v1129
        %v1664 = vpop.f32.mrb[0].mxu0
        %v1665 = vadd.f32 %v1223, %v1664
        %v1666 = vpop.f32.mrb[0].mxu0
        %v1667 = vpop.f32.mrb[0].mxu0
        %v1668 = vadd.f32 %v1223, %v1667
        %v1669 = vpop.f32.mrb[0].mxu0
        %1670 = vdwg.mxu0
        %v1671 = vpack.c.bf16 %v1583, %v1579
        %v1672 = vpack.c.bf16 %v1585, %v1581
        %v1675 = vunpack.c.l.b16 %v1671
        %v1676 = vunpack.c.l.b16 %v1672
        %v1677 = vunpack.c.h.b16 %v1671
        %v1678 = vunpack.c.h.b16 %v1672
        %v1679 = vpack.c.b16 %v1676, %v1675
        %v1680 = vpack.c.b16 %v1678, %v1677
        %v1681 = vpack.c.bf16 %v1626, %v1622
        %v1683 = vunpack.c.l.b16 %v1681
        %v1684 = vunpack.c.h.b16 %v1681
        %v1685 = vpack.c.b16 %v1683, %v1676
        %v1686 = vpack.c.b16 %v1684, %v1678
        %v1687 = vpack.c.bf16 %v1628, %v1624
        %v1688 = vpack.c.bf16 %v1668, %v1665
        %v1691 = vunpack.c.l.b16 %v1687
        %v1692 = vunpack.c.l.b16 %v1688
        %v1693 = vunpack.c.h.b16 %v1687
        %v1694 = vunpack.c.h.b16 %v1688
        %v1695 = vpack.c.b16 %v1692, %v1691
        %v1696 = vpack.c.b16 %v1694, %v1693
        %v1697 = vpack.c.b16 %v1676, %v1676
        %1698 = vrot.lane.b32.xlu0 %v1697, 64
        %v1699 = vpop.permute.xlu0 %1698
        %v1701 = vsel %vm1061, %v1679, 0
        %v1704 = vsel %vm1061, %v1699, 0
        %1706 = vmatprep.subr.bf16.mxu0 0
        %1707 = vmatpush1.bf16.xpose.msra.mxu0 %v1704
        %1708 = vmatprep.subr.bf16.mxu0 0
        %1709 = vmatpush1.bf16.xpose.msra.mxu0 0
        %1710 = vmatprep.subr.bf16.mxu0 0
        %1711 = vmatpush1.bf16.xpose.msra.mxu0 0
        %1712 = vmatprep.subr.bf16.mxu0 0
        %1713 = vmatpush1.bf16.xpose.msra.mxu0 0
        %1714 = vmatprep.subr.bf16.mxu0 0
        %1715 = vmatpush1.bf16.xpose.msra.mxu0 0
        %1716 = vmatprep.subr.bf16.mxu0 0
        %1717 = vmatpush1.bf16.xpose.msra.mxu0 0
        %1718 = vmatprep.subr.bf16.mxu0 0
        %1719 = vmatpush1.bf16.xpose.msra.mxu0 0
        %1720 = vmatprep.subr.bf16.mxu0 0
        %1721 = vmatpush1.bf16.xpose.msra.mxu0 0
        %1722 = vmatprep.subr.bf16.mxu0 0
        %1723 = vmatpush1.bf16.xpose.msra.mxu0 0
        %1724 = vmatprep.subr.bf16.mxu0 0
        %1725 = vmatpush1.bf16.xpose.msra.mxu0 0
        %1726 = vmatprep.subr.bf16.mxu0 0
        %1727 = vmatpush1.bf16.xpose.msra.mxu0 0
        %1728 = vmatprep.subr.bf16.mxu0 0
        %1729 = vmatpush1.bf16.xpose.msra.mxu0 0
        %1730 = vmatprep.subr.bf16.mxu0 0
        %1731 = vmatpush1.bf16.xpose.msra.mxu0 0
        %1732 = vmatprep.subr.bf16.mxu0 0
        %1733 = vmatpush1.bf16.xpose.msra.mxu0 0
        %1734 = vmatprep.subr.bf16.mxu0 0
        %1735 = vmatpush1.bf16.xpose.msra.mxu0 0
        %1736 = vmatprep.subr.bf16.mxu0 0
        %1737 = vmatpush1.bf16.xpose.msra.mxu0 0
        %1738 = vmatprep.mubr.bf16.mxu0 0
        %1739 = vmatmul.mubr.bf16.gmra.mrb[0].mxu0 %v1701
        %v1740 = vpop.f32.mrb[0].mxu0
        %v1741 = vadd.f32 0.0, %v1740
        %v1742 = vpop.f32.mrb[0].mxu0
        %v1743 = vpop.f32.mrb[0].mxu0
        %v1744 = vpop.f32.mrb[0].mxu0
        %1745 = vdwg.mxu0
        %v1746 = vpack.c.b16 %v1678, %v1678
        %1747 = vrot.lane.b32.xlu0 %v1746, 64
        %v1748 = vpop.permute.xlu0 %1747
        %v1750 = vsel %vm1061, %v1680, 0
        %v1753 = vsel %vm1061, %v1748, 0
        %1755 = vmatprep.subr.bf16.mxu0 0
        %1756 = vmatpush1.bf16.xpose.msra.mxu0 %v1753
        %1757 = vmatprep.subr.bf16.mxu0 0
        %1758 = vmatpush1.bf16.xpose.msra.mxu0 0
        %1759 = vmatprep.subr.bf16.mxu0 0
        %1760 = vmatpush1.bf16.xpose.msra.mxu0 0
        %1761 = vmatprep.subr.bf16.mxu0 0
        %1762 = vmatpush1.bf16.xpose.msra.mxu0 0
        %1763 = vmatprep.subr.bf16.mxu0 0
        %1764 = vmatpush1.bf16.xpose.msra.mxu0 0
        %1765 = vmatprep.subr.bf16.mxu0 0
        %1766 = vmatpush1.bf16.xpose.msra.mxu0 0
        %1767 = vmatprep.subr.bf16.mxu0 0
        %1768 = vmatpush1.bf16.xpose.msra.mxu0 0
        %1769 = vmatprep.subr.bf16.mxu0 0
        %1770 = vmatpush1.bf16.xpose.msra.mxu0 0
        %1771 = vmatprep.subr.bf16.mxu0 0
        %1772 = vmatpush1.bf16.xpose.msra.mxu0 0
        %1773 = vmatprep.subr.bf16.mxu0 0
        %1774 = vmatpush1.bf16.xpose.msra.mxu0 0
        %1775 = vmatprep.subr.bf16.mxu0 0
        %1776 = vmatpush1.bf16.xpose.msra.mxu0 0
        %1777 = vmatprep.subr.bf16.mxu0 0
        %1778 = vmatpush1.bf16.xpose.msra.mxu0 0
        %1779 = vmatprep.subr.bf16.mxu0 0
        %1780 = vmatpush1.bf16.xpose.msra.mxu0 0
        %1781 = vmatprep.subr.bf16.mxu0 0
        %1782 = vmatpush1.bf16.xpose.msra.mxu0 0
        %1783 = vmatprep.subr.bf16.mxu0 0
        %1784 = vmatpush1.bf16.xpose.msra.mxu0 0
        %1785 = vmatprep.subr.bf16.mxu0 0
        %1786 = vmatpush1.bf16.xpose.msra.mxu0 0
        %1787 = vmatprep.mubr.bf16.mxu0 0
        %1788 = vmatmul.mubr.bf16.gmra.mrb[0].mxu0 %v1750
        %v1789 = vpop.f32.mrb[0].mxu0
        %v1790 = vadd.f32 0.0, %v1789
        %v1791 = vpop.f32.mrb[0].mxu0
        %v1792 = vpop.f32.mrb[0].mxu0
        %v1793 = vpop.f32.mrb[0].mxu0
        %1794 = vdwg.mxu0
        %v1795 = vmul.f32 %v1741, 0.125
        %v1796 = vmul.f32 %v1790, 0.125
        %v1797 = vsel %vm1041, %v1795, -1e+30
        %v1798 = vsel %vm1041, %v1796, -1e+30
        %vm1799 = vcmask 64512
        %v1800 = vsel %vm1799, %v1797, -inf
        %1801 = vmax.xlane.f32.xlu0 %v1800
        %v1802 = vpop.xlane.xlu0 %1801
        %v1803 = vsel %vm1799, %v1798, -inf
        %1804 = vmax.xlane.f32.xlu0 %v1803
        %v1805 = vpop.xlane.xlu0 %1804
        %v1806 = vsub.f32 %v1797, %v1802
        %v1807 = vsub.f32 %v1798, %v1805
        %v1808 = vmul.f32 %v1806, 1.442695
        %v1809 = vpow.pop %v1808
        %v1810 = vmul.f32 %v1807, 1.442695
        %v1811 = vpow.pop %v1810
        %v1812 = vsel %vm1799, %v1809, 0.0
        %1813 = vadd.xlane.f32.xlu0 %v1812
        %v1814 = vpop.xlane.xlu0 %1813
        %v1815 = vsel %vm1799, %v1811, 0.0
        %1816 = vadd.xlane.f32.xlu0 %v1815
        %v1817 = vpop.xlane.xlu0 %1816
        %v1818 = vrcp.pop %v1814
        %v1819 = vrcp.pop %v1817
        %v1820 = vmul.f32 %v1809, %v1818
        %v1821 = vmul.f32 %v1811, %v1819
        %v1822 = vpack.c.bf16 %v1820, %v1820
        %v1823 = vpack.c.bf16 %v1821, %v1821
        %v1825 = vsel %vm1799, %v1822, 0
        %vm1827 = vcmask 1043456
        %v1829 = vsel %vm1827, %v1695, 0
        %1831 = vmatprep.subr.bf16.mxu0 0
        %1832 = vmatpush1.bf16.msra.mxu0 %v1829
        %1833 = vmatprep.subr.bf16.mxu0 0
        %1834 = vmatpush1.bf16.msra.mxu0 0
        %1835 = vmatprep.subr.bf16.mxu0 0
        %1836 = vmatpush1.bf16.msra.mxu0 0
        %1837 = vmatprep.subr.bf16.mxu0 0
        %1838 = vmatpush1.bf16.msra.mxu0 0
        %1839 = vmatprep.subr.bf16.mxu0 0
        %1840 = vmatpush1.bf16.msra.mxu0 0
        %1841 = vmatprep.subr.bf16.mxu0 0
        %1842 = vmatpush1.bf16.msra.mxu0 0
        %1843 = vmatprep.subr.bf16.mxu0 0
        %1844 = vmatpush1.bf16.msra.mxu0 0
        %1845 = vmatprep.subr.bf16.mxu0 0
        %1846 = vmatpush1.bf16.msra.mxu0 0
        %1847 = vmatprep.subr.bf16.mxu0 0
        %1848 = vmatpush1.bf16.msra.mxu0 0
        %1849 = vmatprep.subr.bf16.mxu0 0
        %1850 = vmatpush1.bf16.msra.mxu0 0
        %1851 = vmatprep.subr.bf16.mxu0 0
        %1852 = vmatpush1.bf16.msra.mxu0 0
        %1853 = vmatprep.subr.bf16.mxu0 0
        %1854 = vmatpush1.bf16.msra.mxu0 0
        %1855 = vmatprep.subr.bf16.mxu0 0
        %1856 = vmatpush1.bf16.msra.mxu0 0
        %1857 = vmatprep.subr.bf16.mxu0 0
        %1858 = vmatpush1.bf16.msra.mxu0 0
        %1859 = vmatprep.subr.bf16.mxu0 0
        %1860 = vmatpush1.bf16.msra.mxu0 0
        %1861 = vmatprep.subr.bf16.mxu0 0
        %1862 = vmatpush1.bf16.msra.mxu0 0
        %1863 = vmatprep.mubr.bf16.mxu0 0
        %1864 = vmatmul.mubr.bf16.gmra.mrb[0].mxu0 %v1825
        %v1865 = vpop.f32.mrb[0].mxu0
        %v1866 = vadd.f32 0.0, %v1865
        %v1867 = vpop.f32.mrb[0].mxu0
        %v1868 = vpop.f32.mrb[0].mxu0
        %v1869 = vpop.f32.mrb[0].mxu0
        %1870 = vdwg.mxu0
        %v1872 = vsel %vm1799, %v1823, 0
        %v1875 = vsel %vm1827, %v1696, 0
        %1877 = vmatprep.subr.bf16.mxu0 0
        %1878 = vmatpush1.bf16.msra.mxu0 %v1875
        %1879 = vmatprep.subr.bf16.mxu0 0
        %1880 = vmatpush1.bf16.msra.mxu0 0
        %1881 = vmatprep.subr.bf16.mxu0 0
        %1882 = vmatpush1.bf16.msra.mxu0 0
        %1883 = vmatprep.subr.bf16.mxu0 0
        %1884 = vmatpush1.bf16.msra.mxu0 0
        %1885 = vmatprep.subr.bf16.mxu0 0
        %1886 = vmatpush1.bf16.msra.mxu0 0
        %1887 = vmatprep.subr.bf16.mxu0 0
        %1888 = vmatpush1.bf16.msra.mxu0 0
        %1889 = vmatprep.subr.bf16.mxu0 0
        %1890 = vmatpush1.bf16.msra.mxu0 0
        %1891 = vmatprep.subr.bf16.mxu0 0
        %1892 = vmatpush1.bf16.msra.mxu0 0
        %1893 = vmatprep.subr.bf16.mxu0 0
        %1894 = vmatpush1.bf16.msra.mxu0 0
        %1895 = vmatprep.subr.bf16.mxu0 0
        %1896 = vmatpush1.bf16.msra.mxu0 0
        %1897 = vmatprep.subr.bf16.mxu0 0
        %1898 = vmatpush1.bf16.msra.mxu0 0
        %1899 = vmatprep.subr.bf16.mxu0 0
        %1900 = vmatpush1.bf16.msra.mxu0 0
        %1901 = vmatprep.subr.bf16.mxu0 0
        %1902 = vmatpush1.bf16.msra.mxu0 0
        %1903 = vmatprep.subr.bf16.mxu0 0
        %1904 = vmatpush1.bf16.msra.mxu0 0
        %1905 = vmatprep.subr.bf16.mxu0 0
        %1906 = vmatpush1.bf16.msra.mxu0 0
        %1907 = vmatprep.subr.bf16.mxu0 0
        %1908 = vmatpush1.bf16.msra.mxu0 0
        %1909 = vmatprep.mubr.bf16.mxu0 0
        %1910 = vmatmul.mubr.bf16.gmra.mrb[0].mxu0 %v1872
        %v1911 = vpop.f32.mrb[0].mxu0
        %v1912 = vadd.f32 0.0, %v1911
        %v1913 = vpop.f32.mrb[0].mxu0
        %v1914 = vpop.f32.mrb[0].mxu0
        %v1915 = vpop.f32.mrb[0].mxu0
        %1916 = vdwg.mxu0
        %v1917 = vrot.slane %v1685, 4
        %v1918 = vpack.c.b16 %v1675, %v1675
        %1919 = vrot.lane.b32.xlu0 %v1918, 64
        %v1920 = vpop.permute.xlu0 %1919
        %v1922 = vsel %vm1061, %v1920, 0
        %v1925 = vsel %vm1061, %v1917, 0
        %1927 = vmatprep.subr.bf16.mxu0 0
        %1928 = vmatpush1.bf16.xpose.msra.mxu0 %v1925
        %1929 = vmatprep.subr.bf16.mxu0 0
        %1930 = vmatpush1.bf16.xpose.msra.mxu0 0
        %1931 = vmatprep.subr.bf16.mxu0 0
        %1932 = vmatpush1.bf16.xpose.msra.mxu0 0
        %1933 = vmatprep.subr.bf16.mxu0 0
        %1934 = vmatpush1.bf16.xpose.msra.mxu0 0
        %1935 = vmatprep.subr.bf16.mxu0 0
        %1936 = vmatpush1.bf16.xpose.msra.mxu0 0
        %1937 = vmatprep.subr.bf16.mxu0 0
        %1938 = vmatpush1.bf16.xpose.msra.mxu0 0
        %1939 = vmatprep.subr.bf16.mxu0 0
        %1940 = vmatpush1.bf16.xpose.msra.mxu0 0
        %1941 = vmatprep.subr.bf16.mxu0 0
        %1942 = vmatpush1.bf16.xpose.msra.mxu0 0
        %1943 = vmatprep.subr.bf16.mxu0 0
        %1944 = vmatpush1.bf16.xpose.msra.mxu0 0
        %1945 = vmatprep.subr.bf16.mxu0 0
        %1946 = vmatpush1.bf16.xpose.msra.mxu0 0
        %1947 = vmatprep.subr.bf16.mxu0 0
        %1948 = vmatpush1.bf16.xpose.msra.mxu0 0
        %1949 = vmatprep.subr.bf16.mxu0 0
        %1950 = vmatpush1.bf16.xpose.msra.mxu0 0
        %1951 = vmatprep.subr.bf16.mxu0 0
        %1952 = vmatpush1.bf16.xpose.msra.mxu0 0
        %1953 = vmatprep.subr.bf16.mxu0 0
        %1954 = vmatpush1.bf16.xpose.msra.mxu0 0
        %1955 = vmatprep.subr.bf16.mxu0 0
        %1956 = vmatpush1.bf16.xpose.msra.mxu0 0
        %1957 = vmatprep.subr.bf16.mxu0 0
        %1958 = vmatpush1.bf16.xpose.msra.mxu0 0
        %1959 = vmatprep.mubr.bf16.mxu0 0
        %1960 = vmatmul.mubr.bf16.gmra.mrb[0].mxu0 %v1922
        %v1961 = vpop.f32.mrb[0].mxu0
        %v1962 = vadd.f32 0.0, %v1961
        %v1963 = vpop.f32.mrb[0].mxu0
        %v1964 = vpop.f32.mrb[0].mxu0
        %v1965 = vpop.f32.mrb[0].mxu0
        %1966 = vdwg.mxu0
        %v1967 = vrot.slane %v1686, 4
        %v1968 = vpack.c.b16 %v1677, %v1677
        %1969 = vrot.lane.b32.xlu0 %v1968, 64
        %v1970 = vpop.permute.xlu0 %1969
        %v1972 = vsel %vm1061, %v1970, 0
        %v1975 = vsel %vm1061, %v1967, 0
        %1977 = vmatprep.subr.bf16.mxu0 0
        %1978 = vmatpush1.bf16.xpose.msra.mxu0 %v1975
        %1979 = vmatprep.subr.bf16.mxu0 0
        %1980 = vmatpush1.bf16.xpose.msra.mxu0 0
        %1981 = vmatprep.subr.bf16.mxu0 0
        %1982 = vmatpush1.bf16.xpose.msra.mxu0 0
        %1983 = vmatprep.subr.bf16.mxu0 0
        %1984 = vmatpush1.bf16.xpose.msra.mxu0 0
        %1985 = vmatprep.subr.bf16.mxu0 0
        %1986 = vmatpush1.bf16.xpose.msra.mxu0 0
        %1987 = vmatprep.subr.bf16.mxu0 0
        %1988 = vmatpush1.bf16.xpose.msra.mxu0 0
        %1989 = vmatprep.subr.bf16.mxu0 0
        %1990 = vmatpush1.bf16.xpose.msra.mxu0 0
        %1991 = vmatprep.subr.bf16.mxu0 0
        %1992 = vmatpush1.bf16.xpose.msra.mxu0 0
        %1993 = vmatprep.subr.bf16.mxu0 0
        %1994 = vmatpush1.bf16.xpose.msra.mxu0 0
        %1995 = vmatprep.subr.bf16.mxu0 0
        %1996 = vmatpush1.bf16.xpose.msra.mxu0 0
        %1997 = vmatprep.subr.bf16.mxu0 0
        %1998 = vmatpush1.bf16.xpose.msra.mxu0 0
        %1999 = vmatprep.subr.bf16.mxu0 0
        %2000 = vmatpush1.bf16.xpose.msra.mxu0 0
        %2001 = vmatprep.subr.bf16.mxu0 0
        %2002 = vmatpush1.bf16.xpose.msra.mxu0 0
        %2003 = vmatprep.subr.bf16.mxu0 0
        %2004 = vmatpush1.bf16.xpose.msra.mxu0 0
        %2005 = vmatprep.subr.bf16.mxu0 0
        %2006 = vmatpush1.bf16.xpose.msra.mxu0 0
        %2007 = vmatprep.subr.bf16.mxu0 0
        %2008 = vmatpush1.bf16.xpose.msra.mxu0 0
        %2009 = vmatprep.mubr.bf16.mxu0 0
        %2010 = vmatmul.mubr.bf16.gmra.mrb[0].mxu0 %v1972
        %v2011 = vpop.f32.mrb[0].mxu0
        %v2012 = vadd.f32 0.0, %v2011
        %v2013 = vpop.f32.mrb[0].mxu0
        %v2014 = vpop.f32.mrb[0].mxu0
        %v2015 = vpop.f32.mrb[0].mxu0
        %2016 = vdwg.mxu0
        %v2017 = vmul.f32 %v1962, 0.125
        %v2018 = vmul.f32 %v2012, 0.125
        %v2019 = vsel %vm1041, %v2017, -1e+30
        %v2020 = vsel %vm1041, %v2018, -1e+30
        %v2021 = vsel %vm1799, %v2019, -inf
        %2022 = vmax.xlane.f32.xlu0 %v2021
        %v2023 = vpop.xlane.xlu0 %2022
        %v2024 = vsel %vm1799, %v2020, -inf
        %2025 = vmax.xlane.f32.xlu0 %v2024
        %v2026 = vpop.xlane.xlu0 %2025
        %v2027 = vsub.f32 %v2019, %v2023
        %v2028 = vsub.f32 %v2020, %v2026
        %v2029 = vmul.f32 %v2027, 1.442695
        %v2030 = vpow.pop %v2029
        %v2031 = vmul.f32 %v2028, 1.442695
        %v2032 = vpow.pop %v2031
        %v2033 = vsel %vm1799, %v2030, 0.0
        %2034 = vadd.xlane.f32.xlu0 %v2033
        %v2035 = vpop.xlane.xlu0 %2034
        %v2036 = vsel %vm1799, %v2032, 0.0
        %2037 = vadd.xlane.f32.xlu0 %v2036
        %v2038 = vpop.xlane.xlu0 %2037
        %v2039 = vrcp.pop %v2035
        %v2040 = vrcp.pop %v2038
        %v2041 = vmul.f32 %v2030, %v2039
        %v2042 = vmul.f32 %v2032, %v2040
        %v2043 = vpack.c.bf16 %v2041, %v2041
        %v2044 = vpack.c.bf16 %v2042, %v2042
        %v2045 = vpack.c.b16 %v1691, %v1691
        %2046 = vrot.lane.b32.xlu0 %v2045, 64
        %v2047 = vpop.permute.xlu0 %2046
        %v2049 = vsel %vm1799, %v2043, 0
        %v2052 = vsel %vm1827, %v2047, 0
        %2054 = vmatprep.subr.bf16.mxu0 0
        %2055 = vmatpush1.bf16.msra.mxu0 %v2052
        %2056 = vmatprep.subr.bf16.mxu0 0
        %2057 = vmatpush1.bf16.msra.mxu0 0
        %2058 = vmatprep.subr.bf16.mxu0 0
        %2059 = vmatpush1.bf16.msra.mxu0 0
        %2060 = vmatprep.subr.bf16.mxu0 0
        %2061 = vmatpush1.bf16.msra.mxu0 0
        %2062 = vmatprep.subr.bf16.mxu0 0
        %2063 = vmatpush1.bf16.msra.mxu0 0
        %2064 = vmatprep.subr.bf16.mxu0 0
        %2065 = vmatpush1.bf16.msra.mxu0 0
        %2066 = vmatprep.subr.bf16.mxu0 0
        %2067 = vmatpush1.bf16.msra.mxu0 0
        %2068 = vmatprep.subr.bf16.mxu0 0
        %2069 = vmatpush1.bf16.msra.mxu0 0
        %2070 = vmatprep.subr.bf16.mxu0 0
        %2071 = vmatpush1.bf16.msra.mxu0 0
        %2072 = vmatprep.subr.bf16.mxu0 0
        %2073 = vmatpush1.bf16.msra.mxu0 0
        %2074 = vmatprep.subr.bf16.mxu0 0
        %2075 = vmatpush1.bf16.msra.mxu0 0
        %2076 = vmatprep.subr.bf16.mxu0 0
        %2077 = vmatpush1.bf16.msra.mxu0 0
        %2078 = vmatprep.subr.bf16.mxu0 0
        %2079 = vmatpush1.bf16.msra.mxu0 0
        %2080 = vmatprep.subr.bf16.mxu0 0
        %2081 = vmatpush1.bf16.msra.mxu0 0
        %2082 = vmatprep.subr.bf16.mxu0 0
        %2083 = vmatpush1.bf16.msra.mxu0 0
        %2084 = vmatprep.subr.bf16.mxu0 0
        %2085 = vmatpush1.bf16.msra.mxu0 0
        %2086 = vmatprep.mubr.bf16.mxu0 0
        %2087 = vmatmul.mubr.bf16.gmra.mrb[0].mxu0 %v2049
        %v2088 = vpop.f32.mrb[0].mxu0
        %v2089 = vadd.f32 0.0, %v2088
        %v2090 = vpop.f32.mrb[0].mxu0
        %v2091 = vpop.f32.mrb[0].mxu0
        %v2092 = vpop.f32.mrb[0].mxu0
        %2093 = vdwg.mxu0
        %v2094 = vpack.c.b16 %v1693, %v1693
        %2095 = vrot.lane.b32.xlu0 %v2094, 64
        %v2096 = vpop.permute.xlu0 %2095
        %v2098 = vsel %vm1799, %v2044, 0
        %v2101 = vsel %vm1827, %v2096, 0
        %2103 = vmatprep.subr.bf16.mxu0 0
        %2104 = vmatpush1.bf16.msra.mxu0 %v2101
        %2105 = vmatprep.subr.bf16.mxu0 0
        %2106 = vmatpush1.bf16.msra.mxu0 0
        %2107 = vmatprep.subr.bf16.mxu0 0
        %2108 = vmatpush1.bf16.msra.mxu0 0
        %2109 = vmatprep.subr.bf16.mxu0 0
        %2110 = vmatpush1.bf16.msra.mxu0 0
        %2111 = vmatprep.subr.bf16.mxu0 0
        %2112 = vmatpush1.bf16.msra.mxu0 0
        %2113 = vmatprep.subr.bf16.mxu0 0
        %2114 = vmatpush1.bf16.msra.mxu0 0
        %2115 = vmatprep.subr.bf16.mxu0 0
        %2116 = vmatpush1.bf16.msra.mxu0 0
        %2117 = vmatprep.subr.bf16.mxu0 0
        %2118 = vmatpush1.bf16.msra.mxu0 0
        %2119 = vmatprep.subr.bf16.mxu0 0
        %2120 = vmatpush1.bf16.msra.mxu0 0
        %2121 = vmatprep.subr.bf16.mxu0 0
        %2122 = vmatpush1.bf16.msra.mxu0 0
        %2123 = vmatprep.subr.bf16.mxu0 0
        %2124 = vmatpush1.bf16.msra.mxu0 0
        %2125 = vmatprep.subr.bf16.mxu0 0
        %2126 = vmatpush1.bf16.msra.mxu0 0
        %2127 = vmatprep.subr.bf16.mxu0 0
        %2128 = vmatpush1.bf16.msra.mxu0 0
        %2129 = vmatprep.subr.bf16.mxu0 0
        %2130 = vmatpush1.bf16.msra.mxu0 0
        %2131 = vmatprep.subr.bf16.mxu0 0
        %2132 = vmatpush1.bf16.msra.mxu0 0
        %2133 = vmatprep.subr.bf16.mxu0 0
        %2134 = vmatpush1.bf16.msra.mxu0 0
        %2135 = vmatprep.mubr.bf16.mxu0 0
        %2136 = vmatmul.mubr.bf16.gmra.mrb[0].mxu0 %v2098
        %v2137 = vpop.f32.mrb[0].mxu0
        %v2138 = vadd.f32 0.0, %v2137
        %v2139 = vpop.f32.mrb[0].mxu0
        %v2140 = vpop.f32.mrb[0].mxu0
        %v2141 = vpop.f32.mrb[0].mxu0
        %2142 = vdwg.mxu0
        %v2143 = vrot.slane %v1679, 4
        %2144 = vrot.lane.b32.xlu0 %v1685, 64
        %v2145 = vpop.permute.xlu0 %2144
        %v2146 = vrot.slane %v2145, 4
        %v2148 = vsel %vm1061, %v2143, 0
        %v2151 = vsel %vm1061, %v2146, 0
        %2153 = vmatprep.subr.bf16.mxu0 0
        %2154 = vmatpush1.bf16.xpose.msra.mxu0 %v2151
        %2155 = vmatprep.subr.bf16.mxu0 0
        %2156 = vmatpush1.bf16.xpose.msra.mxu0 0
        %2157 = vmatprep.subr.bf16.mxu0 0
        %2158 = vmatpush1.bf16.xpose.msra.mxu0 0
        %2159 = vmatprep.subr.bf16.mxu0 0
        %2160 = vmatpush1.bf16.xpose.msra.mxu0 0
        %2161 = vmatprep.subr.bf16.mxu0 0
        %2162 = vmatpush1.bf16.xpose.msra.mxu0 0
        %2163 = vmatprep.subr.bf16.mxu0 0
        %2164 = vmatpush1.bf16.xpose.msra.mxu0 0
        %2165 = vmatprep.subr.bf16.mxu0 0
        %2166 = vmatpush1.bf16.xpose.msra.mxu0 0
        %2167 = vmatprep.subr.bf16.mxu0 0
        %2168 = vmatpush1.bf16.xpose.msra.mxu0 0
        %2169 = vmatprep.subr.bf16.mxu0 0
        %2170 = vmatpush1.bf16.xpose.msra.mxu0 0
        %2171 = vmatprep.subr.bf16.mxu0 0
        %2172 = vmatpush1.bf16.xpose.msra.mxu0 0
        %2173 = vmatprep.subr.bf16.mxu0 0
        %2174 = vmatpush1.bf16.xpose.msra.mxu0 0
        %2175 = vmatprep.subr.bf16.mxu0 0
        %2176 = vmatpush1.bf16.xpose.msra.mxu0 0
        %2177 = vmatprep.subr.bf16.mxu0 0
        %2178 = vmatpush1.bf16.xpose.msra.mxu0 0
        %2179 = vmatprep.subr.bf16.mxu0 0
        %2180 = vmatpush1.bf16.xpose.msra.mxu0 0
        %2181 = vmatprep.subr.bf16.mxu0 0
        %2182 = vmatpush1.bf16.xpose.msra.mxu0 0
        %2183 = vmatprep.subr.bf16.mxu0 0
        %2184 = vmatpush1.bf16.xpose.msra.mxu0 0
        %2185 = vmatprep.mubr.bf16.mxu0 0
        %2186 = vmatmul.mubr.bf16.gmra.mrb[0].mxu0 %v2148
        %v2187 = vpop.f32.mrb[0].mxu0
        %v2188 = vadd.f32 0.0, %v2187
        %v2189 = vpop.f32.mrb[0].mxu0
        %v2190 = vpop.f32.mrb[0].mxu0
        %v2191 = vpop.f32.mrb[0].mxu0
        %2192 = vdwg.mxu0
        %v2193 = vrot.slane %v1680, 4
        %2194 = vrot.lane.b32.xlu0 %v1686, 64
        %v2195 = vpop.permute.xlu0 %2194
        %v2196 = vrot.slane %v2195, 4
        %v2198 = vsel %vm1061, %v2193, 0
        %v2201 = vsel %vm1061, %v2196, 0
        %2203 = vmatprep.subr.bf16.mxu0 0
        %2204 = vmatpush1.bf16.xpose.msra.mxu0 %v2201
        %2205 = vmatprep.subr.bf16.mxu0 0
        %2206 = vmatpush1.bf16.xpose.msra.mxu0 0
        %2207 = vmatprep.subr.bf16.mxu0 0
        %2208 = vmatpush1.bf16.xpose.msra.mxu0 0
        %2209 = vmatprep.subr.bf16.mxu0 0
        %2210 = vmatpush1.bf16.xpose.msra.mxu0 0
        %2211 = vmatprep.subr.bf16.mxu0 0
        %2212 = vmatpush1.bf16.xpose.msra.mxu0 0
        %2213 = vmatprep.subr.bf16.mxu0 0
        %2214 = vmatpush1.bf16.xpose.msra.mxu0 0
        %2215 = vmatprep.subr.bf16.mxu0 0
        %2216 = vmatpush1.bf16.xpose.msra.mxu0 0
        %2217 = vmatprep.subr.bf16.mxu0 0
        %2218 = vmatpush1.bf16.xpose.msra.mxu0 0
        %2219 = vmatprep.subr.bf16.mxu0 0
        %2220 = vmatpush1.bf16.xpose.msra.mxu0 0
        %2221 = vmatprep.subr.bf16.mxu0 0
        %2222 = vmatpush1.bf16.xpose.msra.mxu0 0
        %2223 = vmatprep.subr.bf16.mxu0 0
        %2224 = vmatpush1.bf16.xpose.msra.mxu0 0
        %2225 = vmatprep.subr.bf16.mxu0 0
        %2226 = vmatpush1.bf16.xpose.msra.mxu0 0
        %2227 = vmatprep.subr.bf16.mxu0 0
        %2228 = vmatpush1.bf16.xpose.msra.mxu0 0
        %2229 = vmatprep.subr.bf16.mxu0 0
        %2230 = vmatpush1.bf16.xpose.msra.mxu0 0
        %2231 = vmatprep.subr.bf16.mxu0 0
        %2232 = vmatpush1.bf16.xpose.msra.mxu0 0
        %2233 = vmatprep.subr.bf16.mxu0 0
        %2234 = vmatpush1.bf16.xpose.msra.mxu0 0
        %2235 = vmatprep.mubr.bf16.mxu0 0
        %2236 = vmatmul.mubr.bf16.gmra.mrb[0].mxu0 %v2198
        %v2237 = vpop.f32.mrb[0].mxu0
        %v2238 = vadd.f32 0.0, %v2237
        %v2239 = vpop.f32.mrb[0].mxu0
        %v2240 = vpop.f32.mrb[0].mxu0
        %v2241 = vpop.f32.mrb[0].mxu0
        %2242 = vdwg.mxu0
        %v2243 = vmul.f32 %v2188, 0.125
        %v2244 = vmul.f32 %v2238, 0.125
        %v2245 = vsel %vm1041, %v2243, -1e+30
        %v2246 = vsel %vm1041, %v2244, -1e+30
        %v2247 = vsel %vm1799, %v2245, -inf
        %2248 = vmax.xlane.f32.xlu0 %v2247
        %v2249 = vpop.xlane.xlu0 %2248
        %v2250 = vsel %vm1799, %v2246, -inf
        %2251 = vmax.xlane.f32.xlu0 %v2250
        %v2252 = vpop.xlane.xlu0 %2251
        %v2253 = vsub.f32 %v2245, %v2249
        %v2254 = vsub.f32 %v2246, %v2252
        %v2255 = vmul.f32 %v2253, 1.442695
        %v2256 = vpow.pop %v2255
        %v2257 = vmul.f32 %v2254, 1.442695
        %v2258 = vpow.pop %v2257
        %v2259 = vsel %vm1799, %v2256, 0.0
        %2260 = vadd.xlane.f32.xlu0 %v2259
        %v2261 = vpop.xlane.xlu0 %2260
        %v2262 = vsel %vm1799, %v2258, 0.0
        %2263 = vadd.xlane.f32.xlu0 %v2262
        %v2264 = vpop.xlane.xlu0 %2263
        %v2265 = vrcp.pop %v2261
        %v2266 = vrcp.pop %v2264
        %v2267 = vmul.f32 %v2256, %v2265
        %v2268 = vmul.f32 %v2258, %v2266
        %v2269 = vpack.c.bf16 %v2267, %v2267
        %v2270 = vpack.c.bf16 %v2268, %v2268
        %v2271 = vrot.slane %v1695, 4
        %v2273 = vsel %vm1799, %v2269, 0
        %v2276 = vsel %vm1827, %v2271, 0
        %2278 = vmatprep.subr.bf16.mxu0 0
        %2279 = vmatpush1.bf16.msra.mxu0 %v2276
        %2280 = vmatprep.subr.bf16.mxu0 0
        %2281 = vmatpush1.bf16.msra.mxu0 0
        %2282 = vmatprep.subr.bf16.mxu0 0
        %2283 = vmatpush1.bf16.msra.mxu0 0
        %2284 = vmatprep.subr.bf16.mxu0 0
        %2285 = vmatpush1.bf16.msra.mxu0 0
        %2286 = vmatprep.subr.bf16.mxu0 0
        %2287 = vmatpush1.bf16.msra.mxu0 0
        %2288 = vmatprep.subr.bf16.mxu0 0
        %2289 = vmatpush1.bf16.msra.mxu0 0
        %2290 = vmatprep.subr.bf16.mxu0 0
        %2291 = vmatpush1.bf16.msra.mxu0 0
        %2292 = vmatprep.subr.bf16.mxu0 0
        %2293 = vmatpush1.bf16.msra.mxu0 0
        %2294 = vmatprep.subr.bf16.mxu0 0
        %2295 = vmatpush1.bf16.msra.mxu0 0
        %2296 = vmatprep.subr.bf16.mxu0 0
        %2297 = vmatpush1.bf16.msra.mxu0 0
        %2298 = vmatprep.subr.bf16.mxu0 0
        %2299 = vmatpush1.bf16.msra.mxu0 0
        %2300 = vmatprep.subr.bf16.mxu0 0
        %2301 = vmatpush1.bf16.msra.mxu0 0
        %2302 = vmatprep.subr.bf16.mxu0 0
        %2303 = vmatpush1.bf16.msra.mxu0 0
        %2304 = vmatprep.subr.bf16.mxu0 0
        %2305 = vmatpush1.bf16.msra.mxu0 0
        %2306 = vmatprep.subr.bf16.mxu0 0
        %2307 = vmatpush1.bf16.msra.mxu0 0
        %2308 = vmatprep.subr.bf16.mxu0 0
        %2309 = vmatpush1.bf16.msra.mxu0 0
        %2310 = vmatprep.mubr.bf16.mxu0 0
        %2311 = vmatmul.mubr.bf16.gmra.mrb[0].mxu0 %v2273
        %v2312 = vpop.f32.mrb[0].mxu0
        %v2313 = vadd.f32 0.0, %v2312
        %v2314 = vpop.f32.mrb[0].mxu0
        %v2315 = vpop.f32.mrb[0].mxu0
        %v2316 = vpop.f32.mrb[0].mxu0
        %2317 = vdwg.mxu0
        %v2318 = vrot.slane %v1696, 4
        %v2320 = vsel %vm1799, %v2270, 0
        %v2323 = vsel %vm1827, %v2318, 0
        %2325 = vmatprep.subr.bf16.mxu0 0
        %2326 = vmatpush1.bf16.msra.mxu0 %v2323
        %2327 = vmatprep.subr.bf16.mxu0 0
        %2328 = vmatpush1.bf16.msra.mxu0 0
        %2329 = vmatprep.subr.bf16.mxu0 0
        %2330 = vmatpush1.bf16.msra.mxu0 0
        %2331 = vmatprep.subr.bf16.mxu0 0
        %2332 = vmatpush1.bf16.msra.mxu0 0
        %2333 = vmatprep.subr.bf16.mxu0 0
        %2334 = vmatpush1.bf16.msra.mxu0 0
        %2335 = vmatprep.subr.bf16.mxu0 0
        %2336 = vmatpush1.bf16.msra.mxu0 0
        %2337 = vmatprep.subr.bf16.mxu0 0
        %2338 = vmatpush1.bf16.msra.mxu0 0
        %2339 = vmatprep.subr.bf16.mxu0 0
        %2340 = vmatpush1.bf16.msra.mxu0 0
        %2341 = vmatprep.subr.bf16.mxu0 0
        %2342 = vmatpush1.bf16.msra.mxu0 0
        %2343 = vmatprep.subr.bf16.mxu0 0
        %2344 = vmatpush1.bf16.msra.mxu0 0
        %2345 = vmatprep.subr.bf16.mxu0 0
        %2346 = vmatpush1.bf16.msra.mxu0 0
        %2347 = vmatprep.subr.bf16.mxu0 0
        %2348 = vmatpush1.bf16.msra.mxu0 0
        %2349 = vmatprep.subr.bf16.mxu0 0
        %2350 = vmatpush1.bf16.msra.mxu0 0
        %2351 = vmatprep.subr.bf16.mxu0 0
        %2352 = vmatpush1.bf16.msra.mxu0 0
        %2353 = vmatprep.subr.bf16.mxu0 0
        %2354 = vmatpush1.bf16.msra.mxu0 0
        %2355 = vmatprep.subr.bf16.mxu0 0
        %2356 = vmatpush1.bf16.msra.mxu0 0
        %2357 = vmatprep.mubr.bf16.mxu0 0
        %2358 = vmatmul.mubr.bf16.gmra.mrb[0].mxu0 %v2320
        %v2359 = vpop.f32.mrb[0].mxu0
        %v2360 = vadd.f32 0.0, %v2359
        %v2361 = vpop.f32.mrb[0].mxu0
        %v2362 = vpop.f32.mrb[0].mxu0
        %v2363 = vpop.f32.mrb[0].mxu0
        %2364 = vdwg.mxu0
        %2367 = vrot.lane.b32.xlu0 %v2089, 64
        %v2368 = vpop.permute.xlu0 %2367
        %2369 = vrot.lane.b32.xlu0 %v2138, 64
        %v2370 = vpop.permute.xlu0 %2369
        %v2373 = vsel %vm1061, %v1866, %v2368
        %v2374 = vsel %vm1061, %v1912, %v2370
        %v2375 = vpack.c.bf16 %v2374, %v2373
        %v2376 = vpack.c.bf16 %v2360, %v2313
        %v2377 = vld [vmem:[%s536] sm:$0xff]
        %v2378 = vld [vmem:[%s536 + $0x8] sm:$0xff]
        %v2379 = vld [vmem:[%s536 + $0x10] sm:$0xff]
        %v2380 = vld [vmem:[%s536 + $0x18] sm:$0xff]
        %v2381 = vld [vmem:[%s536 + $0x20] sm:$0xff]
        %v2382 = vld [vmem:[%s536 + $0x28] sm:$0xff]
        %v2383 = vld [vmem:[%s536 + $0x30] sm:$0xff]
        %v2384 = vld [vmem:[%s536 + $0x38] sm:$0xff]
        %v2385 = vld [vmem:[%s536 + $0x40] sm:$0xff]
        %v2386 = vld [vmem:[%s536 + $0x48] sm:$0xff]
        %v2387 = vld [vmem:[%s536 + $0x50] sm:$0xff]
        %v2388 = vld [vmem:[%s536 + $0x58] sm:$0xff]
        %v2389 = vld [vmem:[%s536 + $0x60] sm:$0xff]
        %v2390 = vld [vmem:[%s536 + $0x68] sm:$0xff]
        %v2391 = vld [vmem:[%s536 + $0x70] sm:$0xff]
        %v2392 = vld [vmem:[%s536 + $0x78] sm:$0xff]
        %v2393 = vld [vmem:[%s536 + $0x80] sm:$0xff]
        %v2394 = vld [vmem:[%s536 + $0x88] sm:$0xff]
        %v2395 = vld [vmem:[%s536 + $0x90] sm:$0xff]
        %v2396 = vld [vmem:[%s536 + $0x98] sm:$0xff]
        %v2397 = vld [vmem:[%s536 + $0xa0] sm:$0xff]
        %v2398 = vld [vmem:[%s536 + $0xa8] sm:$0xff]
        %v2399 = vld [vmem:[%s536 + $0xb0] sm:$0xff]
        %v2400 = vld [vmem:[%s536 + $0xb8] sm:$0xff]
        %v2425 = vunpack.c.l.b16 %v2377
        %v2426 = vunpack.c.h.b16 %v2377
        %v2427 = vunpack.c.l.b16 %v2378
        %v2428 = vunpack.c.h.b16 %v2378
        %v2429 = vunpack.c.l.b16 %v2379
        %v2430 = vunpack.c.h.b16 %v2379
        %v2431 = vunpack.c.l.b16 %v2380
        %v2432 = vunpack.c.h.b16 %v2380
        %v2433 = vunpack.c.l.b16 %v2381
        %v2434 = vunpack.c.h.b16 %v2381
        %v2435 = vunpack.c.l.b16 %v2382
        %v2436 = vunpack.c.h.b16 %v2382
        %v2437 = vunpack.c.l.b16 %v2383
        %v2438 = vunpack.c.h.b16 %v2383
        %v2439 = vunpack.c.l.b16 %v2384
        %v2440 = vunpack.c.h.b16 %v2384
        %v2441 = vunpack.c.l.b16 %v2385
        %v2442 = vunpack.c.h.b16 %v2385
        %v2443 = vunpack.c.l.b16 %v2386
        %v2444 = vunpack.c.h.b16 %v2386
        %v2445 = vunpack.c.l.b16 %v2387
        %v2446 = vunpack.c.h.b16 %v2387
        %v2447 = vunpack.c.l.b16 %v2388
        %v2448 = vunpack.c.h.b16 %v2388
        %v2449 = vunpack.c.l.b16 %v2389
        %v2450 = vunpack.c.h.b16 %v2389
        %v2451 = vunpack.c.l.b16 %v2390
        %v2452 = vunpack.c.h.b16 %v2390
        %v2453 = vunpack.c.l.b16 %v2391
        %v2454 = vunpack.c.h.b16 %v2391
        %v2455 = vunpack.c.l.b16 %v2392
        %v2456 = vunpack.c.h.b16 %v2392
        %v2457 = vunpack.c.l.b16 %v2393
        %v2458 = vunpack.c.h.b16 %v2393
        %v2459 = vunpack.c.l.b16 %v2394
        %v2460 = vunpack.c.h.b16 %v2394
        %v2461 = vunpack.c.l.b16 %v2395
        %v2462 = vunpack.c.h.b16 %v2395
        %v2463 = vunpack.c.l.b16 %v2396
        %v2464 = vunpack.c.h.b16 %v2396
        %v2465 = vunpack.c.l.b16 %v2397
        %v2466 = vunpack.c.h.b16 %v2397
        %v2467 = vunpack.c.l.b16 %v2398
        %v2468 = vunpack.c.h.b16 %v2398
        %v2469 = vunpack.c.l.b16 %v2399
        %v2470 = vunpack.c.h.b16 %v2399
        %v2471 = vunpack.c.l.b16 %v2400
        %v2472 = vunpack.c.h.b16 %v2400
        %v2473 = vpack.c.b16 %v2427, %v2425
        %v2474 = vpack.c.b16 %v2428, %v2426
        %v2475 = vpack.c.b16 %v2431, %v2429
        %v2476 = vpack.c.b16 %v2432, %v2430
        %v2477 = vpack.c.b16 %v2435, %v2433
        %v2478 = vpack.c.b16 %v2436, %v2434
        %v2479 = vpack.c.b16 %v2439, %v2437
        %v2480 = vpack.c.b16 %v2440, %v2438
        %v2481 = vpack.c.b16 %v2443, %v2441
        %v2482 = vpack.c.b16 %v2444, %v2442
        %v2483 = vpack.c.b16 %v2447, %v2445
        %v2484 = vpack.c.b16 %v2448, %v2446
        %v2485 = vpack.c.b16 %v2451, %v2449
        %v2486 = vpack.c.b16 %v2452, %v2450
        %v2487 = vpack.c.b16 %v2455, %v2453
        %v2488 = vpack.c.b16 %v2456, %v2454
        %v2489 = vpack.c.b16 %v2459, %v2457
        %v2490 = vpack.c.b16 %v2460, %v2458
        %v2491 = vpack.c.b16 %v2463, %v2461
        %v2492 = vpack.c.b16 %v2464, %v2462
        %v2493 = vpack.c.b16 %v2467, %v2465
        %v2494 = vpack.c.b16 %v2468, %v2466
        %v2495 = vpack.c.b16 %v2471, %v2469
        %v2496 = vpack.c.b16 %v2472, %v2470
        %v2522 = vsel %vm1061, %v2376, 0
        %2524 = vmatprep.subr.bf16.mxu0 %v2474
        %2525 = vmatpush1.bf16.msra.mxu0 %v2473
        %2526 = vmatprep.subr.bf16.mxu0 %v2476
        %2527 = vmatpush1.bf16.msra.mxu0 %v2475
        %2528 = vmatprep.subr.bf16.mxu0 %v2478
        %2529 = vmatpush1.bf16.msra.mxu0 %v2477
        %2530 = vmatprep.subr.bf16.mxu0 %v2480
        %2531 = vmatpush1.bf16.msra.mxu0 %v2479
        %2532 = vmatprep.subr.bf16.mxu0 %v2482
        %2533 = vmatpush1.bf16.msra.mxu0 %v2481
        %2534 = vmatprep.subr.bf16.mxu0 %v2484
        %2535 = vmatpush1.bf16.msra.mxu0 %v2483
        %2536 = vmatprep.subr.bf16.mxu0 %v2486
        %2537 = vmatpush1.bf16.msra.mxu0 %v2485
        %2538 = vmatprep.subr.bf16.mxu0 %v2488
        %2539 = vmatpush1.bf16.msra.mxu0 %v2487
        %2540 = vmatprep.subr.bf16.mxu0 %v2490
        %2541 = vmatpush1.bf16.msra.mxu0 %v2489
        %2542 = vmatprep.subr.bf16.mxu0 %v2492
        %2543 = vmatpush1.bf16.msra.mxu0 %v2491
        %2544 = vmatprep.subr.bf16.mxu0 %v2494
        %2545 = vmatpush1.bf16.msra.mxu0 %v2493
        %2546 = vmatprep.subr.bf16.mxu0 %v2496
        %2547 = vmatpush1.bf16.msra.mxu0 %v2495
        %2548 = vmatprep.subr.bf16.mxu0 0
        %2549 = vmatpush1.bf16.msra.mxu0 0
        %2550 = vmatprep.subr.bf16.mxu0 0
        %2551 = vmatpush1.bf16.msra.mxu0 0
        %2552 = vmatprep.subr.bf16.mxu0 0
        %2553 = vmatpush1.bf16.msra.mxu0 0
        %2554 = vmatprep.subr.bf16.mxu0 0
        %2555 = vmatpush1.bf16.msra.mxu0 0
        %2556 = vmatprep.mubr.bf16.mxu0 %v2522
        %2557 = vmatmul.mubr.bf16.gmra.mrb[0].mxu0 %v2375
        %v2558 = vpop.f32.mrb[0].mxu0
        %v2559 = vadd.f32 0.0, %v2558
        %v2560 = vpop.f32.mrb[0].mxu0
        %v2561 = vadd.f32 0.0, %v2560
        %v2562 = vpop.f32.mrb[0].mxu0
        %v2563 = vadd.f32 0.0, %v2562
        %v2564 = vpop.f32.mrb[0].mxu0
        %v2565 = vadd.f32 0.0, %v2564
        %2566 = vdwg.mxu0
        %v2567 = vadd.f32 %v1035, %v2559
        %v2568 = vadd.f32 %v1036, %v2561
        %v2569 = vadd.f32 %v1037, %v2563
        %v2570 = vadd.f32 %v1038, %v2565
        %v2572 = vlaneseq
        %v2573 = vshrl.u32 %v2572, 7
        %v2574 = vsub.s32 0, %v2573
        %v2575 = vrot.slane %v1050, %v2574
        %v2576 = vlaneseq
        %v2577 = vshrl.u32 %v2576, 7
        %v2578 = vsub.s32 1, %v2577
        %v2579 = vrot.slane %v1050, %v2578
        %v2582 = vadd.f32 %v2567, %v2575
        %v2583 = vadd.f32 %v2568, %v2579
        %v2584 = vadd.f32 %v2569, %v2575
        %v2585 = vadd.f32 %v2570, %v2579
        %v2586 = vsel %vm1061, %v2583, 0.0
        %v2587 = vadd.f32 %v2582, %v2586
        %2588 = vadd.xlane.f32.xlu0 %v2587
        %v2589 = vpop.xlane.xlu0 %2588
        %v2590 = vsel %vm1061, %v2585, 0.0
        %v2591 = vadd.f32 %v2584, %v2590
        %2592 = vadd.xlane.f32.xlu0 %v2591
        %v2593 = vpop.xlane.xlu0 %2592
        %v2594 = vmul.f32 %v2589, %v1070
        %v2595 = vmul.f32 %v2593, %v1070
        %v2596 = vsub.f32 %v2582, %v2594
        %v2597 = vsub.f32 %v2583, %v2594
        %v2598 = vsub.f32 %v2584, %v2595
        %v2599 = vsub.f32 %v2585, %v2595
        %v2600 = vmul.f32 %v2596, %v2596
        %v2601 = vmul.f32 %v2597, %v2597
        %v2602 = vmul.f32 %v2598, %v2598
        %v2603 = vmul.f32 %v2599, %v2599
        %v2604 = vsel %vm1061, %v2601, 0.0
        %v2605 = vadd.f32 %v2600, %v2604
        %2606 = vadd.xlane.f32.xlu0 %v2605
        %v2607 = vpop.xlane.xlu0 %2606
        %v2608 = vsel %vm1061, %v2603, 0.0
        %v2609 = vadd.f32 %v2602, %v2608
        %2610 = vadd.xlane.f32.xlu0 %v2609
        %v2611 = vpop.xlane.xlu0 %2610
        %v2612 = vmul.f32 %v2607, %v1070
        %v2613 = vmul.f32 %v2611, %v1070
        %v2614 = vadd.f32 %v2612, 1e-06
        %v2615 = vadd.f32 %v2613, 1e-06
        %v2616 = vrsqrt.pop %v2614
        %v2617 = vrsqrt.pop %v2615
        %v2618 = vmul.f32 %v2596, %v2616
        %v2619 = vmul.f32 %v2597, %v2616
        %v2620 = vmul.f32 %v2598, %v2617
        %v2621 = vmul.f32 %v2599, %v2617
        %v2623 = vlaneseq
        %v2624 = vshrl.u32 %v2623, 7
        %v2625 = vsub.s32 0, %v2624
        %v2626 = vrot.slane %v1052, %v2625
        %v2627 = vlaneseq
        %v2628 = vshrl.u32 %v2627, 7
        %v2629 = vsub.s32 1, %v2628
        %v2630 = vrot.slane %v1052, %v2629
        %v2633 = vmul.f32 %v2618, %v2626
        %v2634 = vmul.f32 %v2619, %v2630
        %v2635 = vmul.f32 %v2620, %v2626
        %v2636 = vmul.f32 %v2621, %v2630
        %v2638 = vlaneseq
        %v2639 = vshrl.u32 %v2638, 7
        %v2640 = vsub.s32 0, %v2639
        %v2641 = vrot.slane %v1054, %v2640
        %v2642 = vlaneseq
        %v2643 = vshrl.u32 %v2642, 7
        %v2644 = vsub.s32 1, %v2643
        %v2645 = vrot.slane %v1054, %v2644
        %v2648 = vadd.f32 %v2633, %v2641
        %v2649 = vadd.f32 %v2634, %v2645
        %v2650 = vadd.f32 %v2635, %v2641
        %v2651 = vadd.f32 %v2636, %v2645
        %v2652 = vpack.c.bf16 %v2650, %v2648
        %v2653 = vpack.c.bf16 %v2651, %v2649
        %v2654 = vld [vmem:[%s543] sm:$0xff]
        %v2655 = vld [vmem:[%s543 + $0x8] sm:$0xff]
        %v2656 = vld [vmem:[%s543 + $0x10] sm:$0xff]
        %v2657 = vld [vmem:[%s543 + $0x18] sm:$0xff]
        %v2658 = vld [vmem:[%s543 + $0x20] sm:$0xff]
        %v2659 = vld [vmem:[%s543 + $0x28] sm:$0xff]
        %v2660 = vld [vmem:[%s543 + $0x30] sm:$0xff]
        %v2661 = vld [vmem:[%s543 + $0x38] sm:$0xff]
        %v2662 = vld [vmem:[%s543 + $0x40] sm:$0xff]
        %v2663 = vld [vmem:[%s543 + $0x48] sm:$0xff]
        %v2664 = vld [vmem:[%s543 + $0x50] sm:$0xff]
        %v2665 = vld [vmem:[%s543 + $0x58] sm:$0xff]
        %v2666 = vld [vmem:[%s543 + $0x60] sm:$0xff]
        %v2667 = vld [vmem:[%s543 + $0x68] sm:$0xff]
        %v2668 = vld [vmem:[%s543 + $0x70] sm:$0xff]
        %v2669 = vld [vmem:[%s543 + $0x78] sm:$0xff]
        %v2670 = vld [vmem:[%s543 + $0x80] sm:$0xff]
        %v2671 = vld [vmem:[%s543 + $0x88] sm:$0xff]
        %v2672 = vld [vmem:[%s543 + $0x90] sm:$0xff]
        %v2673 = vld [vmem:[%s543 + $0x98] sm:$0xff]
        %v2674 = vld [vmem:[%s543 + $0xa0] sm:$0xff]
        %v2675 = vld [vmem:[%s543 + $0xa8] sm:$0xff]
        %v2676 = vld [vmem:[%s543 + $0xb0] sm:$0xff]
        %v2677 = vld [vmem:[%s543 + $0xb8] sm:$0xff]
        %v2678 = vld [vmem:[%s543 + $0xc0] sm:$0xff]
        %v2679 = vld [vmem:[%s543 + $0xc8] sm:$0xff]
        %v2680 = vld [vmem:[%s543 + $0xd0] sm:$0xff]
        %v2681 = vld [vmem:[%s543 + $0xd8] sm:$0xff]
        %v2682 = vld [vmem:[%s543 + $0xe0] sm:$0xff]
        %v2683 = vld [vmem:[%s543 + $0xe8] sm:$0xff]
        %v2684 = vld [vmem:[%s543 + $0xf0] sm:$0xff]
        %v2685 = vld [vmem:[%s543 + $0xf8] sm:$0xff]
        %v2686 = vld [vmem:[%s543 + $0x100] sm:$0xff]
        %v2687 = vld [vmem:[%s543 + $0x108] sm:$0xff]
        %v2688 = vld [vmem:[%s543 + $0x110] sm:$0xff]
        %v2689 = vld [vmem:[%s543 + $0x118] sm:$0xff]
        %v2690 = vld [vmem:[%s543 + $0x120] sm:$0xff]
        %v2691 = vld [vmem:[%s543 + $0x128] sm:$0xff]
        %v2692 = vld [vmem:[%s543 + $0x130] sm:$0xff]
        %v2693 = vld [vmem:[%s543 + $0x138] sm:$0xff]
        %v2694 = vld [vmem:[%s543 + $0x140] sm:$0xff]
        %v2695 = vld [vmem:[%s543 + $0x148] sm:$0xff]
        %v2696 = vld [vmem:[%s543 + $0x150] sm:$0xff]
        %v2697 = vld [vmem:[%s543 + $0x158] sm:$0xff]
        %v2698 = vld [vmem:[%s543 + $0x160] sm:$0xff]
        %v2699 = vld [vmem:[%s543 + $0x168] sm:$0xff]
        %v2700 = vld [vmem:[%s543 + $0x170] sm:$0xff]
        %v2701 = vld [vmem:[%s543 + $0x178] sm:$0xff]
        %v2702 = vld [vmem:[%s543 + $0x180] sm:$0xff]
        %v2703 = vld [vmem:[%s543 + $0x188] sm:$0xff]
        %v2704 = vld [vmem:[%s543 + $0x190] sm:$0xff]
        %v2705 = vld [vmem:[%s543 + $0x198] sm:$0xff]
        %v2706 = vld [vmem:[%s543 + $0x1a0] sm:$0xff]
        %v2707 = vld [vmem:[%s543 + $0x1a8] sm:$0xff]
        %v2708 = vld [vmem:[%s543 + $0x1b0] sm:$0xff]
        %v2709 = vld [vmem:[%s543 + $0x1b8] sm:$0xff]
        %v2710 = vld [vmem:[%s543 + $0x1c0] sm:$0xff]
        %v2711 = vld [vmem:[%s543 + $0x1c8] sm:$0xff]
        %v2712 = vld [vmem:[%s543 + $0x1d0] sm:$0xff]
        %v2713 = vld [vmem:[%s543 + $0x1d8] sm:$0xff]
        %v2714 = vld [vmem:[%s543 + $0x1e0] sm:$0xff]
        %v2715 = vld [vmem:[%s543 + $0x1e8] sm:$0xff]
        %v2716 = vld [vmem:[%s543 + $0x1f0] sm:$0xff]
        %v2717 = vld [vmem:[%s543 + $0x1f8] sm:$0xff]
        %v2718 = vld [vmem:[%s543 + $0x200] sm:$0xff]
        %v2719 = vld [vmem:[%s543 + $0x208] sm:$0xff]
        %v2720 = vld [vmem:[%s543 + $0x210] sm:$0xff]
        %v2721 = vld [vmem:[%s543 + $0x218] sm:$0xff]
        %v2722 = vld [vmem:[%s543 + $0x220] sm:$0xff]
        %v2723 = vld [vmem:[%s543 + $0x228] sm:$0xff]
        %v2724 = vld [vmem:[%s543 + $0x230] sm:$0xff]
        %v2725 = vld [vmem:[%s543 + $0x238] sm:$0xff]
        %v2727 = vlaneseq
        %v2728 = vshrl.u32 %v2727, 7
        %v2729 = vsub.s32 0, %v2728
        %v2730 = vrot.slane %v1058, %v2729
        %v2731 = vlaneseq
        %v2732 = vshrl.u32 %v2731, 7
        %v2733 = vsub.s32 1, %v2732
        %v2734 = vrot.slane %v1058, %v2733
        %v2735 = vlaneseq
        %v2736 = vshrl.u32 %v2735, 7
        %v2737 = vsub.s32 2, %v2736
        %v2738 = vrot.slane %v1058, %v2737
        %v2739 = vlaneseq
        %v2740 = vshrl.u32 %v2739, 7
        %v2741 = vsub.s32 3, %v2740
        %v2742 = vrot.slane %v1058, %v2741
        %v2743 = vlaneseq
        %v2744 = vshrl.u32 %v2743, 7
        %v2745 = vsub.s32 4, %v2744
        %v2746 = vrot.slane %v1058, %v2745
        %v2747 = vlaneseq
        %v2748 = vshrl.u32 %v2747, 7
        %v2749 = vsub.s32 5, %v2748
        %v2750 = vrot.slane %v1058, %v2749
        %v2829 = vunpack.c.l.b16 %v2654
        %v2830 = vunpack.c.h.b16 %v2654
        %v2831 = vunpack.c.l.b16 %v2655
        %v2832 = vunpack.c.h.b16 %v2655
        %v2833 = vunpack.c.l.b16 %v2656
        %v2834 = vunpack.c.h.b16 %v2656
        %v2835 = vunpack.c.l.b16 %v2657
        %v2836 = vunpack.c.h.b16 %v2657
        %v2837 = vunpack.c.l.b16 %v2658
        %v2838 = vunpack.c.h.b16 %v2658
        %v2839 = vunpack.c.l.b16 %v2659
        %v2840 = vunpack.c.h.b16 %v2659
        %v2841 = vunpack.c.l.b16 %v2660
        %v2842 = vunpack.c.h.b16 %v2660
        %v2843 = vunpack.c.l.b16 %v2661
        %v2844 = vunpack.c.h.b16 %v2661
        %v2845 = vunpack.c.l.b16 %v2662
        %v2846 = vunpack.c.h.b16 %v2662
        %v2847 = vunpack.c.l.b16 %v2663
        %v2848 = vunpack.c.h.b16 %v2663
        %v2849 = vunpack.c.l.b16 %v2664
        %v2850 = vunpack.c.h.b16 %v2664
        %v2851 = vunpack.c.l.b16 %v2665
        %v2852 = vunpack.c.h.b16 %v2665
        %v2853 = vunpack.c.l.b16 %v2666
        %v2854 = vunpack.c.h.b16 %v2666
        %v2855 = vunpack.c.l.b16 %v2667
        %v2856 = vunpack.c.h.b16 %v2667
        %v2857 = vunpack.c.l.b16 %v2668
        %v2858 = vunpack.c.h.b16 %v2668
        %v2859 = vunpack.c.l.b16 %v2669
        %v2860 = vunpack.c.h.b16 %v2669
        %v2861 = vunpack.c.l.b16 %v2670
        %v2862 = vunpack.c.h.b16 %v2670
        %v2863 = vunpack.c.l.b16 %v2671
        %v2864 = vunpack.c.h.b16 %v2671
        %v2865 = vunpack.c.l.b16 %v2672
        %v2866 = vunpack.c.h.b16 %v2672
        %v2867 = vunpack.c.l.b16 %v2673
        %v2868 = vunpack.c.h.b16 %v2673
        %v2869 = vunpack.c.l.b16 %v2674
        %v2870 = vunpack.c.h.b16 %v2674
        %v2871 = vunpack.c.l.b16 %v2675
        %v2872 = vunpack.c.h.b16 %v2675
        %v2873 = vunpack.c.l.b16 %v2676
        %v2874 = vunpack.c.h.b16 %v2676
        %v2875 = vunpack.c.l.b16 %v2677
        %v2876 = vunpack.c.h.b16 %v2677
        %v2877 = vunpack.c.l.b16 %v2678
        %v2878 = vunpack.c.h.b16 %v2678
        %v2879 = vunpack.c.l.b16 %v2679
        %v2880 = vunpack.c.h.b16 %v2679
        %v2881 = vunpack.c.l.b16 %v2680
        %v2882 = vunpack.c.h.b16 %v2680
        %v2883 = vunpack.c.l.b16 %v2681
        %v2884 = vunpack.c.h.b16 %v2681
        %v2885 = vunpack.c.l.b16 %v2682
        %v2886 = vunpack.c.h.b16 %v2682
        %v2887 = vunpack.c.l.b16 %v2683
        %v2888 = vunpack.c.h.b16 %v2683
        %v2889 = vunpack.c.l.b16 %v2684
        %v2890 = vunpack.c.h.b16 %v2684
        %v2891 = vunpack.c.l.b16 %v2685
        %v2892 = vunpack.c.h.b16 %v2685
        %v2893 = vunpack.c.l.b16 %v2686
        %v2894 = vunpack.c.h.b16 %v2686
        %v2895 = vunpack.c.l.b16 %v2687
        %v2896 = vunpack.c.h.b16 %v2687
        %v2897 = vunpack.c.l.b16 %v2688
        %v2898 = vunpack.c.h.b16 %v2688
        %v2899 = vunpack.c.l.b16 %v2689
        %v2900 = vunpack.c.h.b16 %v2689
        %v2901 = vunpack.c.l.b16 %v2690
        %v2902 = vunpack.c.h.b16 %v2690
        %v2903 = vunpack.c.l.b16 %v2691
        %v2904 = vunpack.c.h.b16 %v2691
        %v2905 = vunpack.c.l.b16 %v2692
        %v2906 = vunpack.c.h.b16 %v2692
        %v2907 = vunpack.c.l.b16 %v2693
        %v2908 = vunpack.c.h.b16 %v2693
        %v2909 = vunpack.c.l.b16 %v2694
        %v2910 = vunpack.c.h.b16 %v2694
        %v2911 = vunpack.c.l.b16 %v2695
        %v2912 = vunpack.c.h.b16 %v2695
        %v2913 = vunpack.c.l.b16 %v2696
        %v2914 = vunpack.c.h.b16 %v2696
        %v2915 = vunpack.c.l.b16 %v2697
        %v2916 = vunpack.c.h.b16 %v2697
        %v2917 = vunpack.c.l.b16 %v2698
        %v2918 = vunpack.c.h.b16 %v2698
        %v2919 = vunpack.c.l.b16 %v2699
        %v2920 = vunpack.c.h.b16 %v2699
        %v2921 = vunpack.c.l.b16 %v2700
        %v2922 = vunpack.c.h.b16 %v2700
        %v2923 = vunpack.c.l.b16 %v2701
        %v2924 = vunpack.c.h.b16 %v2701
        %v2925 = vunpack.c.l.b16 %v2702
        %v2926 = vunpack.c.h.b16 %v2702
        %v2927 = vunpack.c.l.b16 %v2703
        %v2928 = vunpack.c.h.b16 %v2703
        %v2929 = vunpack.c.l.b16 %v2704
        %v2930 = vunpack.c.h.b16 %v2704
        %v2931 = vunpack.c.l.b16 %v2705
        %v2932 = vunpack.c.h.b16 %v2705
        %v2933 = vunpack.c.l.b16 %v2706
        %v2934 = vunpack.c.h.b16 %v2706
        %v2935 = vunpack.c.l.b16 %v2707
        %v2936 = vunpack.c.h.b16 %v2707
        %v2937 = vunpack.c.l.b16 %v2708
        %v2938 = vunpack.c.h.b16 %v2708
        %v2939 = vunpack.c.l.b16 %v2709
        %v2940 = vunpack.c.h.b16 %v2709
        %v2941 = vunpack.c.l.b16 %v2710
        %v2942 = vunpack.c.h.b16 %v2710
        %v2943 = vunpack.c.l.b16 %v2711
        %v2944 = vunpack.c.h.b16 %v2711
        %v2945 = vunpack.c.l.b16 %v2712
        %v2946 = vunpack.c.h.b16 %v2712
        %v2947 = vunpack.c.l.b16 %v2713
        %v2948 = vunpack.c.h.b16 %v2713
        %v2949 = vunpack.c.l.b16 %v2714
        %v2950 = vunpack.c.h.b16 %v2714
        %v2951 = vunpack.c.l.b16 %v2715
        %v2952 = vunpack.c.h.b16 %v2715
        %v2953 = vunpack.c.l.b16 %v2716
        %v2954 = vunpack.c.h.b16 %v2716
        %v2955 = vunpack.c.l.b16 %v2717
        %v2956 = vunpack.c.h.b16 %v2717
        %v2957 = vunpack.c.l.b16 %v2718
        %v2958 = vunpack.c.h.b16 %v2718
        %v2959 = vunpack.c.l.b16 %v2719
        %v2960 = vunpack.c.h.b16 %v2719
        %v2961 = vunpack.c.l.b16 %v2720
        %v2962 = vunpack.c.h.b16 %v2720
        %v2963 = vunpack.c.l.b16 %v2721
        %v2964 = vunpack.c.h.b16 %v2721
        %v2965 = vunpack.c.l.b16 %v2722
        %v2966 = vunpack.c.h.b16 %v2722
        %v2967 = vunpack.c.l.b16 %v2723
        %v2968 = vunpack.c.h.b16 %v2723
        %v2969 = vunpack.c.l.b16 %v2724
        %v2970 = vunpack.c.h.b16 %v2724
        %v2971 = vunpack.c.l.b16 %v2725
        %v2972 = vunpack.c.h.b16 %v2725
        %v2973 = vpack.c.b16 %v2835, %v2829
        %v2974 = vpack.c.b16 %v2836, %v2830
        %v2975 = vpack.c.b16 %v2837, %v2831
        %v2976 = vpack.c.b16 %v2838, %v2832
        %v2977 = vpack.c.b16 %v2839, %v2833
        %v2978 = vpack.c.b16 %v2840, %v2834
        %v2979 = vpack.c.b16 %v2847, %v2841
        %v2980 = vpack.c.b16 %v2848, %v2842
        %v2981 = vpack.c.b16 %v2849, %v2843
        %v2982 = vpack.c.b16 %v2850, %v2844
        %v2983 = vpack.c.b16 %v2851, %v2845
        %v2984 = vpack.c.b16 %v2852, %v2846
        %v2985 = vpack.c.b16 %v2859, %v2853
        %v2986 = vpack.c.b16 %v2860, %v2854
        %v2987 = vpack.c.b16 %v2861, %v2855
        %v2988 = vpack.c.b16 %v2862, %v2856
        %v2989 = vpack.c.b16 %v2863, %v2857
        %v2990 = vpack.c.b16 %v2864, %v2858
        %v2991 = vpack.c.b16 %v2871, %v2865
        %v2992 = vpack.c.b16 %v2872, %v2866
        %v2993 = vpack.c.b16 %v2873, %v2867
        %v2994 = vpack.c.b16 %v2874, %v2868
        %v2995 = vpack.c.b16 %v2875, %v2869
        %v2996 = vpack.c.b16 %v2876, %v2870
        %v2997 = vpack.c.b16 %v2883, %v2877
        %v2998 = vpack.c.b16 %v2884, %v2878
        %v2999 = vpack.c.b16 %v2885, %v2879
        %v3000 = vpack.c.b16 %v2886, %v2880
        %v3001 = vpack.c.b16 %v2887, %v2881
        %v3002 = vpack.c.b16 %v2888, %v2882
        %v3003 = vpack.c.b16 %v2895, %v2889
        %v3004 = vpack.c.b16 %v2896, %v2890
        %v3005 = vpack.c.b16 %v2897, %v2891
        %v3006 = vpack.c.b16 %v2898, %v2892
        %v3007 = vpack.c.b16 %v2899, %v2893
        %v3008 = vpack.c.b16 %v2900, %v2894
        %v3009 = vpack.c.b16 %v2907, %v2901
        %v3010 = vpack.c.b16 %v2908, %v2902
        %v3011 = vpack.c.b16 %v2909, %v2903
        %v3012 = vpack.c.b16 %v2910, %v2904
        %v3013 = vpack.c.b16 %v2911, %v2905
        %v3014 = vpack.c.b16 %v2912, %v2906
        %v3015 = vpack.c.b16 %v2919, %v2913
        %v3016 = vpack.c.b16 %v2920, %v2914
        %v3017 = vpack.c.b16 %v2921, %v2915
        %v3018 = vpack.c.b16 %v2922, %v2916
        %v3019 = vpack.c.b16 %v2923, %v2917
        %v3020 = vpack.c.b16 %v2924, %v2918
        %v3021 = vpack.c.b16 %v2931, %v2925
        %v3022 = vpack.c.b16 %v2932, %v2926
        %v3023 = vpack.c.b16 %v2933, %v2927
        %v3024 = vpack.c.b16 %v2934, %v2928
        %v3025 = vpack.c.b16 %v2935, %v2929
        %v3026 = vpack.c.b16 %v2936, %v2930
        %v3027 = vpack.c.b16 %v2943, %v2937
        %v3028 = vpack.c.b16 %v2944, %v2938
        %v3029 = vpack.c.b16 %v2945, %v2939
        %v3030 = vpack.c.b16 %v2946, %v2940
        %v3031 = vpack.c.b16 %v2947, %v2941
        %v3032 = vpack.c.b16 %v2948, %v2942
        %v3033 = vpack.c.b16 %v2955, %v2949
        %v3034 = vpack.c.b16 %v2956, %v2950
        %v3035 = vpack.c.b16 %v2957, %v2951
        %v3036 = vpack.c.b16 %v2958, %v2952
        %v3037 = vpack.c.b16 %v2959, %v2953
        %v3038 = vpack.c.b16 %v2960, %v2954
        %v3039 = vpack.c.b16 %v2967, %v2961
        %v3040 = vpack.c.b16 %v2968, %v2962
        %v3041 = vpack.c.b16 %v2969, %v2963
        %v3042 = vpack.c.b16 %v2970, %v2964
        %v3043 = vpack.c.b16 %v2971, %v2965
        %v3044 = vpack.c.b16 %v2972, %v2966
        %v3118 = vsel %vm1061, %v2653, 0
        %3120 = vmatprep.subr.bf16.mxu0 %v2974
        %3121 = vmatpush1.bf16.msra.mxu0 %v2973
        %3122 = vmatprep.subr.bf16.mxu0 %v2980
        %3123 = vmatpush1.bf16.msra.mxu0 %v2979
        %3124 = vmatprep.subr.bf16.mxu0 %v2986
        %3125 = vmatpush1.bf16.msra.mxu0 %v2985
        %3126 = vmatprep.subr.bf16.mxu0 %v2992
        %3127 = vmatpush1.bf16.msra.mxu0 %v2991
        %3128 = vmatprep.subr.bf16.mxu0 %v2998
        %3129 = vmatpush1.bf16.msra.mxu0 %v2997
        %3130 = vmatprep.subr.bf16.mxu0 %v3004
        %3131 = vmatpush1.bf16.msra.mxu0 %v3003
        %3132 = vmatprep.subr.bf16.mxu0 %v3010
        %3133 = vmatpush1.bf16.msra.mxu0 %v3009
        %3134 = vmatprep.subr.bf16.mxu0 %v3016
        %3135 = vmatpush1.bf16.msra.mxu0 %v3015
        %3136 = vmatprep.subr.bf16.mxu0 %v3022
        %3137 = vmatpush1.bf16.msra.mxu0 %v3021
        %3138 = vmatprep.subr.bf16.mxu0 %v3028
        %3139 = vmatpush1.bf16.msra.mxu0 %v3027
        %3140 = vmatprep.subr.bf16.mxu0 %v3034
        %3141 = vmatpush1.bf16.msra.mxu0 %v3033
        %3142 = vmatprep.subr.bf16.mxu0 %v3040
        %3143 = vmatpush1.bf16.msra.mxu0 %v3039
        %3144 = vmatprep.subr.bf16.mxu0 0
        %3145 = vmatpush1.bf16.msra.mxu0 0
        %3146 = vmatprep.subr.bf16.mxu0 0
        %3147 = vmatpush1.bf16.msra.mxu0 0
        %3148 = vmatprep.subr.bf16.mxu0 0
        %3149 = vmatpush1.bf16.msra.mxu0 0
        %3150 = vmatprep.subr.bf16.mxu0 0
        %3151 = vmatpush1.bf16.msra.mxu0 0
        %3152 = vmatprep.mubr.bf16.mxu0 %v3118
        %3153 = vmatmul.mubr.bf16.gmra.mrb[0].mxu0 %v2652
        %v3154 = vpop.f32.mrb[0].mxu0
        %v3155 = vadd.f32 %v2730, %v3154
        %v3156 = vpop.f32.mrb[0].mxu0
        %v3157 = vadd.f32 %v2734, %v3156
        %v3158 = vpop.f32.mrb[0].mxu0
        %v3159 = vadd.f32 %v2730, %v3158
        %v3160 = vpop.f32.mrb[0].mxu0
        %v3161 = vadd.f32 %v2734, %v3160
        %3162 = vdwg.mxu0
        %3163 = vmatprep.subr.bf16.mxu0 %v2976
        %3164 = vmatpush1.bf16.msra.mxu0 %v2975
        %3165 = vmatprep.subr.bf16.mxu0 %v2982
        %3166 = vmatpush1.bf16.msra.mxu0 %v2981
        %3167 = vmatprep.subr.bf16.mxu0 %v2988
        %3168 = vmatpush1.bf16.msra.mxu0 %v2987
        %3169 = vmatprep.subr.bf16.mxu0 %v2994
        %3170 = vmatpush1.bf16.msra.mxu0 %v2993
        %3171 = vmatprep.subr.bf16.mxu0 %v3000
        %3172 = vmatpush1.bf16.msra.mxu0 %v2999
        %3173 = vmatprep.subr.bf16.mxu0 %v3006
        %3174 = vmatpush1.bf16.msra.mxu0 %v3005
        %3175 = vmatprep.subr.bf16.mxu0 %v3012
        %3176 = vmatpush1.bf16.msra.mxu0 %v3011
        %3177 = vmatprep.subr.bf16.mxu0 %v3018
        %3178 = vmatpush1.bf16.msra.mxu0 %v3017
        %3179 = vmatprep.subr.bf16.mxu0 %v3024
        %3180 = vmatpush1.bf16.msra.mxu0 %v3023
        %3181 = vmatprep.subr.bf16.mxu0 %v3030
        %3182 = vmatpush1.bf16.msra.mxu0 %v3029
        %3183 = vmatprep.subr.bf16.mxu0 %v3036
        %3184 = vmatpush1.bf16.msra.mxu0 %v3035
        %3185 = vmatprep.subr.bf16.mxu0 %v3042
        %3186 = vmatpush1.bf16.msra.mxu0 %v3041
        %3187 = vmatprep.subr.bf16.mxu0 0
        %3188 = vmatpush1.bf16.msra.mxu0 0
        %3189 = vmatprep.subr.bf16.mxu0 0
        %3190 = vmatpush1.bf16.msra.mxu0 0
        %3191 = vmatprep.subr.bf16.mxu0 0
        %3192 = vmatpush1.bf16.msra.mxu0 0
        %3193 = vmatprep.subr.bf16.mxu0 0
        %3194 = vmatpush1.bf16.msra.mxu0 0
        %3195 = vmatprep.mubr.bf16.mxu0 %v3118
        %3196 = vmatmul.mubr.bf16.gmra.mrb[0].mxu0 %v2652
        %v3197 = vpop.f32.mrb[0].mxu0
        %v3198 = vadd.f32 %v2738, %v3197
        %v3199 = vpop.f32.mrb[0].mxu0
        %v3200 = vadd.f32 %v2742, %v3199
        %v3201 = vpop.f32.mrb[0].mxu0
        %v3202 = vadd.f32 %v2738, %v3201
        %v3203 = vpop.f32.mrb[0].mxu0
        %v3204 = vadd.f32 %v2742, %v3203
        %3205 = vdwg.mxu0
        %3206 = vmatprep.subr.bf16.mxu0 %v2978
        %3207 = vmatpush1.bf16.msra.mxu0 %v2977
        %3208 = vmatprep.subr.bf16.mxu0 %v2984
        %3209 = vmatpush1.bf16.msra.mxu0 %v2983
        %3210 = vmatprep.subr.bf16.mxu0 %v2990
        %3211 = vmatpush1.bf16.msra.mxu0 %v2989
        %3212 = vmatprep.subr.bf16.mxu0 %v2996
        %3213 = vmatpush1.bf16.msra.mxu0 %v2995
        %3214 = vmatprep.subr.bf16.mxu0 %v3002
        %3215 = vmatpush1.bf16.msra.mxu0 %v3001
        %3216 = vmatprep.subr.bf16.mxu0 %v3008
        %3217 = vmatpush1.bf16.msra.mxu0 %v3007
        %3218 = vmatprep.subr.bf16.mxu0 %v3014
        %3219 = vmatpush1.bf16.msra.mxu0 %v3013
        %3220 = vmatprep.subr.bf16.mxu0 %v3020
        %3221 = vmatpush1.bf16.msra.mxu0 %v3019
        %3222 = vmatprep.subr.bf16.mxu0 %v3026
        %3223 = vmatpush1.bf16.msra.mxu0 %v3025
        %3224 = vmatprep.subr.bf16.mxu0 %v3032
        %3225 = vmatpush1.bf16.msra.mxu0 %v3031
        %3226 = vmatprep.subr.bf16.mxu0 %v3038
        %3227 = vmatpush1.bf16.msra.mxu0 %v3037
        %3228 = vmatprep.subr.bf16.mxu0 %v3044
        %3229 = vmatpush1.bf16.msra.mxu0 %v3043
        %3230 = vmatprep.subr.bf16.mxu0 0
        %3231 = vmatpush1.bf16.msra.mxu0 0
        %3232 = vmatprep.subr.bf16.mxu0 0
        %3233 = vmatpush1.bf16.msra.mxu0 0
        %3234 = vmatprep.subr.bf16.mxu0 0
        %3235 = vmatpush1.bf16.msra.mxu0 0
        %3236 = vmatprep.subr.bf16.mxu0 0
        %3237 = vmatpush1.bf16.msra.mxu0 0
        %3238 = vmatprep.mubr.bf16.mxu0 %v3118
        %3239 = vmatmul.mubr.bf16.gmra.mrb[0].mxu0 %v2652
        %v3240 = vpop.f32.mrb[0].mxu0
        %v3241 = vadd.f32 %v2746, %v3240
        %v3242 = vpop.f32.mrb[0].mxu0
        %v3243 = vadd.f32 %v2750, %v3242
        %v3244 = vpop.f32.mrb[0].mxu0
        %v3245 = vadd.f32 %v2746, %v3244
        %v3246 = vpop.f32.mrb[0].mxu0
        %v3247 = vadd.f32 %v2750, %v3246
        %3248 = vdwg.mxu0
        %v3249 = vmul.f32 %v3155, %v3155
        %v3250 = vmul.f32 %v3157, %v3157
        %v3251 = vmul.f32 %v3198, %v3198
        %v3252 = vmul.f32 %v3200, %v3200
        %v3253 = vmul.f32 %v3241, %v3241
        %v3254 = vmul.f32 %v3243, %v3243
        %v3255 = vmul.f32 %v3159, %v3159
        %v3256 = vmul.f32 %v3161, %v3161
        %v3257 = vmul.f32 %v3202, %v3202
        %v3258 = vmul.f32 %v3204, %v3204
        %v3259 = vmul.f32 %v3245, %v3245
        %v3260 = vmul.f32 %v3247, %v3247
        %v3261 = vmul.f32 %v3155, %v3249
        %v3262 = vmul.f32 %v3157, %v3250
        %v3263 = vmul.f32 %v3198, %v3251
        %v3264 = vmul.f32 %v3200, %v3252
        %v3265 = vmul.f32 %v3241, %v3253
        %v3266 = vmul.f32 %v3243, %v3254
        %v3267 = vmul.f32 %v3159, %v3255
        %v3268 = vmul.f32 %v3161, %v3256
        %v3269 = vmul.f32 %v3202, %v3257
        %v3270 = vmul.f32 %v3204, %v3258
        %v3271 = vmul.f32 %v3245, %v3259
        %v3272 = vmul.f32 %v3247, %v3260
        %v3273 = vmul.f32 %v3261, 0.044715
        %v3274 = vmul.f32 %v3262, 0.044715
        %v3275 = vmul.f32 %v3263, 0.044715
        %v3276 = vmul.f32 %v3264, 0.044715
        %v3277 = vmul.f32 %v3265, 0.044715
        %v3278 = vmul.f32 %v3266, 0.044715
        %v3279 = vmul.f32 %v3267, 0.044715
        %v3280 = vmul.f32 %v3268, 0.044715
        %v3281 = vmul.f32 %v3269, 0.044715
        %v3282 = vmul.f32 %v3270, 0.044715
        %v3283 = vmul.f32 %v3271, 0.044715
        %v3284 = vmul.f32 %v3272, 0.044715
        %v3285 = vadd.f32 %v3155, %v3273
        %v3286 = vadd.f32 %v3157, %v3274
        %v3287 = vadd.f32 %v3198, %v3275
        %v3288 = vadd.f32 %v3200, %v3276
        %v3289 = vadd.f32 %v3241, %v3277
        %v3290 = vadd.f32 %v3243, %v3278
        %v3291 = vadd.f32 %v3159, %v3279
        %v3292 = vadd.f32 %v3161, %v3280
        %v3293 = vadd.f32 %v3202, %v3281
        %v3294 = vadd.f32 %v3204, %v3282
        %v3295 = vadd.f32 %v3245, %v3283
        %v3296 = vadd.f32 %v3247, %v3284
        %v3297 = vmul.f32 %v3285, 0.7978846
        %v3298 = vmul.f32 %v3286, 0.7978846
        %v3299 = vmul.f32 %v3287, 0.7978846
        %v3300 = vmul.f32 %v3288, 0.7978846
        %v3301 = vmul.f32 %v3289, 0.7978846
        %v3302 = vmul.f32 %v3290, 0.7978846
        %v3303 = vmul.f32 %v3291, 0.7978846
        %v3304 = vmul.f32 %v3292, 0.7978846
        %v3305 = vmul.f32 %v3293, 0.7978846
        %v3306 = vmul.f32 %v3294, 0.7978846
        %v3307 = vmul.f32 %v3295, 0.7978846
        %v3308 = vmul.f32 %v3296, 0.7978846
        %v3309 = vtanh.pop %v3297
        %v3310 = vtanh.pop %v3298
        %v3311 = vtanh.pop %v3299
        %v3312 = vtanh.pop %v3300
        %v3313 = vtanh.pop %v3301
        %v3314 = vtanh.pop %v3302
        %v3315 = vtanh.pop %v3303
        %v3316 = vtanh.pop %v3304
        %v3317 = vtanh.pop %v3305
        %v3318 = vtanh.pop %v3306
        %v3319 = vtanh.pop %v3307
        %v3320 = vtanh.pop %v3308
        %v3321 = vadd.f32 %v3309, 1.0
        %v3322 = vadd.f32 %v3310, 1.0
        %v3323 = vadd.f32 %v3311, 1.0
        %v3324 = vadd.f32 %v3312, 1.0
        %v3325 = vadd.f32 %v3313, 1.0
        %v3326 = vadd.f32 %v3314, 1.0
        %v3327 = vadd.f32 %v3315, 1.0
        %v3328 = vadd.f32 %v3316, 1.0
        %v3329 = vadd.f32 %v3317, 1.0
        %v3330 = vadd.f32 %v3318, 1.0
        %v3331 = vadd.f32 %v3319, 1.0
        %v3332 = vadd.f32 %v3320, 1.0
        %v3333 = vmul.f32 %v3321, 0.5
        %v3334 = vmul.f32 %v3322, 0.5
        %v3335 = vmul.f32 %v3323, 0.5
        %v3336 = vmul.f32 %v3324, 0.5
        %v3337 = vmul.f32 %v3325, 0.5
        %v3338 = vmul.f32 %v3326, 0.5
        %v3339 = vmul.f32 %v3327, 0.5
        %v3340 = vmul.f32 %v3328, 0.5
        %v3341 = vmul.f32 %v3329, 0.5
        %v3342 = vmul.f32 %v3330, 0.5
        %v3343 = vmul.f32 %v3331, 0.5
        %v3344 = vmul.f32 %v3332, 0.5
        %v3345 = vmul.f32 %v3155, %v3333
        %v3346 = vmul.f32 %v3157, %v3334
        %v3347 = vmul.f32 %v3198, %v3335
        %v3348 = vmul.f32 %v3200, %v3336
        %v3349 = vmul.f32 %v3241, %v3337
        %v3350 = vmul.f32 %v3243, %v3338
        %v3351 = vmul.f32 %v3159, %v3339
        %v3352 = vmul.f32 %v3161, %v3340
        %v3353 = vmul.f32 %v3202, %v3341
        %v3354 = vmul.f32 %v3204, %v3342
        %v3355 = vmul.f32 %v3245, %v3343
        %v3356 = vmul.f32 %v3247, %v3344
        %v3357 = vpack.c.bf16 %v3351, %v3345
        %v3358 = vpack.c.bf16 %v3352, %v3346
        %v3359 = vpack.c.bf16 %v3353, %v3347
        %v3360 = vpack.c.bf16 %v3354, %v3348
        %v3361 = vpack.c.bf16 %v3355, %v3349
        %v3362 = vpack.c.bf16 %v3356, %v3350
        %v3363 = vld [vmem:[%s550] sm:$0xff]
        %v3364 = vld [vmem:[%s550 + $0x8] sm:$0xff]
        %v3365 = vld [vmem:[%s550 + $0x10] sm:$0xff]
        %v3366 = vld [vmem:[%s550 + $0x18] sm:$0xff]
        %v3367 = vld [vmem:[%s550 + $0x20] sm:$0xff]
        %v3368 = vld [vmem:[%s550 + $0x28] sm:$0xff]
        %v3369 = vld [vmem:[%s550 + $0x30] sm:$0xff]
        %v3370 = vld [vmem:[%s550 + $0x38] sm:$0xff]
        %v3371 = vld [vmem:[%s550 + $0x40] sm:$0xff]
        %v3372 = vld [vmem:[%s550 + $0x48] sm:$0xff]
        %v3373 = vld [vmem:[%s550 + $0x50] sm:$0xff]
        %v3374 = vld [vmem:[%s550 + $0x58] sm:$0xff]
        %v3375 = vld [vmem:[%s550 + $0x60] sm:$0xff]
        %v3376 = vld [vmem:[%s550 + $0x68] sm:$0xff]
        %v3377 = vld [vmem:[%s550 + $0x70] sm:$0xff]
        %v3378 = vld [vmem:[%s550 + $0x78] sm:$0xff]
        %v3379 = vld [vmem:[%s550 + $0x80] sm:$0xff]
        %v3380 = vld [vmem:[%s550 + $0x88] sm:$0xff]
        %v3381 = vld [vmem:[%s550 + $0x90] sm:$0xff]
        %v3382 = vld [vmem:[%s550 + $0x98] sm:$0xff]
        %v3383 = vld [vmem:[%s550 + $0xa0] sm:$0xff]
        %v3384 = vld [vmem:[%s550 + $0xa8] sm:$0xff]
        %v3385 = vld [vmem:[%s550 + $0xb0] sm:$0xff]
        %v3386 = vld [vmem:[%s550 + $0xb8] sm:$0xff]
        %v3387 = vld [vmem:[%s550 + $0xc0] sm:$0xff]
        %v3388 = vld [vmem:[%s550 + $0xc8] sm:$0xff]
        %v3389 = vld [vmem:[%s550 + $0xd0] sm:$0xff]
        %v3390 = vld [vmem:[%s550 + $0xd8] sm:$0xff]
        %v3391 = vld [vmem:[%s550 + $0xe0] sm:$0xff]
        %v3392 = vld [vmem:[%s550 + $0xe8] sm:$0xff]
        %v3393 = vld [vmem:[%s550 + $0xf0] sm:$0xff]
        %v3394 = vld [vmem:[%s550 + $0xf8] sm:$0xff]
        %v3395 = vld [vmem:[%s550 + $0x100] sm:$0xff]
        %v3396 = vld [vmem:[%s550 + $0x108] sm:$0xff]
        %v3397 = vld [vmem:[%s550 + $0x110] sm:$0xff]
        %v3398 = vld [vmem:[%s550 + $0x118] sm:$0xff]
        %v3399 = vld [vmem:[%s550 + $0x120] sm:$0xff]
        %v3400 = vld [vmem:[%s550 + $0x128] sm:$0xff]
        %v3401 = vld [vmem:[%s550 + $0x130] sm:$0xff]
        %v3402 = vld [vmem:[%s550 + $0x138] sm:$0xff]
        %v3403 = vld [vmem:[%s550 + $0x140] sm:$0xff]
        %v3404 = vld [vmem:[%s550 + $0x148] sm:$0xff]
        %v3405 = vld [vmem:[%s550 + $0x150] sm:$0xff]
        %v3406 = vld [vmem:[%s550 + $0x158] sm:$0xff]
        %v3407 = vld [vmem:[%s550 + $0x160] sm:$0xff]
        %v3408 = vld [vmem:[%s550 + $0x168] sm:$0xff]
        %v3409 = vld [vmem:[%s550 + $0x170] sm:$0xff]
        %v3410 = vld [vmem:[%s550 + $0x178] sm:$0xff]
        %v3411 = vld [vmem:[%s550 + $0x180] sm:$0xff]
        %v3412 = vld [vmem:[%s550 + $0x188] sm:$0xff]
        %v3413 = vld [vmem:[%s550 + $0x190] sm:$0xff]
        %v3414 = vld [vmem:[%s550 + $0x198] sm:$0xff]
        %v3415 = vld [vmem:[%s550 + $0x1a0] sm:$0xff]
        %v3416 = vld [vmem:[%s550 + $0x1a8] sm:$0xff]
        %v3417 = vld [vmem:[%s550 + $0x1b0] sm:$0xff]
        %v3418 = vld [vmem:[%s550 + $0x1b8] sm:$0xff]
        %v3419 = vld [vmem:[%s550 + $0x1c0] sm:$0xff]
        %v3420 = vld [vmem:[%s550 + $0x1c8] sm:$0xff]
        %v3421 = vld [vmem:[%s550 + $0x1d0] sm:$0xff]
        %v3422 = vld [vmem:[%s550 + $0x1d8] sm:$0xff]
        %v3423 = vld [vmem:[%s550 + $0x1e0] sm:$0xff]
        %v3424 = vld [vmem:[%s550 + $0x1e8] sm:$0xff]
        %v3425 = vld [vmem:[%s550 + $0x1f0] sm:$0xff]
        %v3426 = vld [vmem:[%s550 + $0x1f8] sm:$0xff]
        %v3427 = vld [vmem:[%s550 + $0x200] sm:$0xff]
        %v3428 = vld [vmem:[%s550 + $0x208] sm:$0xff]
        %v3429 = vld [vmem:[%s550 + $0x210] sm:$0xff]
        %v3430 = vld [vmem:[%s550 + $0x218] sm:$0xff]
        %v3431 = vld [vmem:[%s550 + $0x220] sm:$0xff]
        %v3432 = vld [vmem:[%s550 + $0x228] sm:$0xff]
        %v3433 = vld [vmem:[%s550 + $0x230] sm:$0xff]
        %v3434 = vld [vmem:[%s550 + $0x238] sm:$0xff]
        %v3435 = vld [vmem:[%s550 + $0x240] sm:$0xff]
        %v3436 = vld [vmem:[%s550 + $0x248] sm:$0xff]
        %v3437 = vld [vmem:[%s550 + $0x250] sm:$0xff]
        %v3438 = vld [vmem:[%s550 + $0x258] sm:$0xff]
        %v3439 = vld [vmem:[%s550 + $0x260] sm:$0xff]
        %v3440 = vld [vmem:[%s550 + $0x268] sm:$0xff]
        %v3441 = vld [vmem:[%s550 + $0x270] sm:$0xff]
        %v3442 = vld [vmem:[%s550 + $0x278] sm:$0xff]
        %v3443 = vld [vmem:[%s550 + $0x280] sm:$0xff]
        %v3444 = vld [vmem:[%s550 + $0x288] sm:$0xff]
        %v3445 = vld [vmem:[%s550 + $0x290] sm:$0xff]
        %v3446 = vld [vmem:[%s550 + $0x298] sm:$0xff]
        %v3447 = vld [vmem:[%s550 + $0x2a0] sm:$0xff]
        %v3448 = vld [vmem:[%s550 + $0x2a8] sm:$0xff]
        %v3449 = vld [vmem:[%s550 + $0x2b0] sm:$0xff]
        %v3450 = vld [vmem:[%s550 + $0x2b8] sm:$0xff]
        %v3451 = vld [vmem:[%s550 + $0x2c0] sm:$0xff]
        %v3452 = vld [vmem:[%s550 + $0x2c8] sm:$0xff]
        %v3453 = vld [vmem:[%s550 + $0x2d0] sm:$0xff]
        %v3454 = vld [vmem:[%s550 + $0x2d8] sm:$0xff]
        %v3455 = vld [vmem:[%s550 + $0x2e0] sm:$0xff]
        %v3456 = vld [vmem:[%s550 + $0x2e8] sm:$0xff]
        %v3457 = vld [vmem:[%s550 + $0x2f0] sm:$0xff]
        %v3458 = vld [vmem:[%s550 + $0x2f8] sm:$0xff]
        %v3555 = vunpack.c.l.b16 %v3363
        %v3556 = vunpack.c.h.b16 %v3363
        %v3557 = vunpack.c.l.b16 %v3364
        %v3558 = vunpack.c.h.b16 %v3364
        %v3559 = vunpack.c.l.b16 %v3365
        %v3560 = vunpack.c.h.b16 %v3365
        %v3561 = vunpack.c.l.b16 %v3366
        %v3562 = vunpack.c.h.b16 %v3366
        %v3563 = vunpack.c.l.b16 %v3367
        %v3564 = vunpack.c.h.b16 %v3367
        %v3565 = vunpack.c.l.b16 %v3368
        %v3566 = vunpack.c.h.b16 %v3368
        %v3567 = vunpack.c.l.b16 %v3369
        %v3568 = vunpack.c.h.b16 %v3369
        %v3569 = vunpack.c.l.b16 %v3370
        %v3570 = vunpack.c.h.b16 %v3370
        %v3571 = vunpack.c.l.b16 %v3371
        %v3572 = vunpack.c.h.b16 %v3371
        %v3573 = vunpack.c.l.b16 %v3372
        %v3574 = vunpack.c.h.b16 %v3372
        %v3575 = vunpack.c.l.b16 %v3373
        %v3576 = vunpack.c.h.b16 %v3373
        %v3577 = vunpack.c.l.b16 %v3374
        %v3578 = vunpack.c.h.b16 %v3374
        %v3579 = vunpack.c.l.b16 %v3375
        %v3580 = vunpack.c.h.b16 %v3375
        %v3581 = vunpack.c.l.b16 %v3376
        %v3582 = vunpack.c.h.b16 %v3376
        %v3583 = vunpack.c.l.b16 %v3377
        %v3584 = vunpack.c.h.b16 %v3377
        %v3585 = vunpack.c.l.b16 %v3378
        %v3586 = vunpack.c.h.b16 %v3378
        %v3587 = vunpack.c.l.b16 %v3379
        %v3588 = vunpack.c.h.b16 %v3379
        %v3589 = vunpack.c.l.b16 %v3380
        %v3590 = vunpack.c.h.b16 %v3380
        %v3591 = vunpack.c.l.b16 %v3381
        %v3592 = vunpack.c.h.b16 %v3381
        %v3593 = vunpack.c.l.b16 %v3382
        %v3594 = vunpack.c.h.b16 %v3382
        %v3595 = vunpack.c.l.b16 %v3383
        %v3596 = vunpack.c.h.b16 %v3383
        %v3597 = vunpack.c.l.b16 %v3384
        %v3598 = vunpack.c.h.b16 %v3384
        %v3599 = vunpack.c.l.b16 %v3385
        %v3600 = vunpack.c.h.b16 %v3385
        %v3601 = vunpack.c.l.b16 %v3386
        %v3602 = vunpack.c.h.b16 %v3386
        %v3603 = vunpack.c.l.b16 %v3387
        %v3604 = vunpack.c.h.b16 %v3387
        %v3605 = vunpack.c.l.b16 %v3388
        %v3606 = vunpack.c.h.b16 %v3388
        %v3607 = vunpack.c.l.b16 %v3389
        %v3608 = vunpack.c.h.b16 %v3389
        %v3609 = vunpack.c.l.b16 %v3390
        %v3610 = vunpack.c.h.b16 %v3390
        %v3611 = vunpack.c.l.b16 %v3391
        %v3612 = vunpack.c.h.b16 %v3391
        %v3613 = vunpack.c.l.b16 %v3392
        %v3614 = vunpack.c.h.b16 %v3392
        %v3615 = vunpack.c.l.b16 %v3393
        %v3616 = vunpack.c.h.b16 %v3393
        %v3617 = vunpack.c.l.b16 %v3394
        %v3618 = vunpack.c.h.b16 %v3394
        %v3619 = vunpack.c.l.b16 %v3395
        %v3620 = vunpack.c.h.b16 %v3395
        %v3621 = vunpack.c.l.b16 %v3396
        %v3622 = vunpack.c.h.b16 %v3396
        %v3623 = vunpack.c.l.b16 %v3397
        %v3624 = vunpack.c.h.b16 %v3397
        %v3625 = vunpack.c.l.b16 %v3398
        %v3626 = vunpack.c.h.b16 %v3398
        %v3627 = vunpack.c.l.b16 %v3399
        %v3628 = vunpack.c.h.b16 %v3399
        %v3629 = vunpack.c.l.b16 %v3400
        %v3630 = vunpack.c.h.b16 %v3400
        %v3631 = vunpack.c.l.b16 %v3401
        %v3632 = vunpack.c.h.b16 %v3401
        %v3633 = vunpack.c.l.b16 %v3402
        %v3634 = vunpack.c.h.b16 %v3402
        %v3635 = vunpack.c.l.b16 %v3403
        %v3636 = vunpack.c.h.b16 %v3403
        %v3637 = vunpack.c.l.b16 %v3404
        %v3638 = vunpack.c.h.b16 %v3404
        %v3639 = vunpack.c.l.b16 %v3405
        %v3640 = vunpack.c.h.b16 %v3405
        %v3641 = vunpack.c.l.b16 %v3406
        %v3642 = vunpack.c.h.b16 %v3406
        %v3643 = vunpack.c.l.b16 %v3407
        %v3644 = vunpack.c.h.b16 %v3407
        %v3645 = vunpack.c.l.b16 %v3408
        %v3646 = vunpack.c.h.b16 %v3408
        %v3647 = vunpack.c.l.b16 %v3409
        %v3648 = vunpack.c.h.b16 %v3409
        %v3649 = vunpack.c.l.b16 %v3410
        %v3650 = vunpack.c.h.b16 %v3410
        %v3651 = vunpack.c.l.b16 %v3411
        %v3652 = vunpack.c.h.b16 %v3411
        %v3653 = vunpack.c.l.b16 %v3412
        %v3654 = vunpack.c.h.b16 %v3412
        %v3655 = vunpack.c.l.b16 %v3413
        %v3656 = vunpack.c.h.b16 %v3413
        %v3657 = vunpack.c.l.b16 %v3414
        %v3658 = vunpack.c.h.b16 %v3414
        %v3659 = vunpack.c.l.b16 %v3415
        %v3660 = vunpack.c.h.b16 %v3415
        %v3661 = vunpack.c.l.b16 %v3416
        %v3662 = vunpack.c.h.b16 %v3416
        %v3663 = vunpack.c.l.b16 %v3417
        %v3664 = vunpack.c.h.b16 %v3417
        %v3665 = vunpack.c.l.b16 %v3418
        %v3666 = vunpack.c.h.b16 %v3418
        %v3667 = vunpack.c.l.b16 %v3419
        %v3668 = vunpack.c.h.b16 %v3419
        %v3669 = vunpack.c.l.b16 %v3420
        %v3670 = vunpack.c.h.b16 %v3420
        %v3671 = vunpack.c.l.b16 %v3421
        %v3672 = vunpack.c.h.b16 %v3421
        %v3673 = vunpack.c.l.b16 %v3422
        %v3674 = vunpack.c.h.b16 %v3422
        %v3675 = vunpack.c.l.b16 %v3423
        %v3676 = vunpack.c.h.b16 %v3423
        %v3677 = vunpack.c.l.b16 %v3424
        %v3678 = vunpack.c.h.b16 %v3424
        %v3679 = vunpack.c.l.b16 %v3425
        %v3680 = vunpack.c.h.b16 %v3425
        %v3681 = vunpack.c.l.b16 %v3426
        %v3682 = vunpack.c.h.b16 %v3426
        %v3683 = vunpack.c.l.b16 %v3427
        %v3684 = vunpack.c.h.b16 %v3427
        %v3685 = vunpack.c.l.b16 %v3428
        %v3686 = vunpack.c.h.b16 %v3428
        %v3687 = vunpack.c.l.b16 %v3429
        %v3688 = vunpack.c.h.b16 %v3429
        %v3689 = vunpack.c.l.b16 %v3430
        %v3690 = vunpack.c.h.b16 %v3430
        %v3691 = vunpack.c.l.b16 %v3431
        %v3692 = vunpack.c.h.b16 %v3431
        %v3693 = vunpack.c.l.b16 %v3432
        %v3694 = vunpack.c.h.b16 %v3432
        %v3695 = vunpack.c.l.b16 %v3433
        %v3696 = vunpack.c.h.b16 %v3433
        %v3697 = vunpack.c.l.b16 %v3434
        %v3698 = vunpack.c.h.b16 %v3434
        %v3699 = vunpack.c.l.b16 %v3435
        %v3700 = vunpack.c.h.b16 %v3435
        %v3701 = vunpack.c.l.b16 %v3436
        %v3702 = vunpack.c.h.b16 %v3436
        %v3703 = vunpack.c.l.b16 %v3437
        %v3704 = vunpack.c.h.b16 %v3437
        %v3705 = vunpack.c.l.b16 %v3438
        %v3706 = vunpack.c.h.b16 %v3438
        %v3707 = vunpack.c.l.b16 %v3439
        %v3708 = vunpack.c.h.b16 %v3439
        %v3709 = vunpack.c.l.b16 %v3440
        %v3710 = vunpack.c.h.b16 %v3440
        %v3711 = vunpack.c.l.b16 %v3441
        %v3712 = vunpack.c.h.b16 %v3441
        %v3713 = vunpack.c.l.b16 %v3442
        %v3714 = vunpack.c.h.b16 %v3442
        %v3715 = vunpack.c.l.b16 %v3443
        %v3716 = vunpack.c.h.b16 %v3443
        %v3717 = vunpack.c.l.b16 %v3444
        %v3718 = vunpack.c.h.b16 %v3444
        %v3719 = vunpack.c.l.b16 %v3445
        %v3720 = vunpack.c.h.b16 %v3445
        %v3721 = vunpack.c.l.b16 %v3446
        %v3722 = vunpack.c.h.b16 %v3446
        %v3723 = vunpack.c.l.b16 %v3447
        %v3724 = vunpack.c.h.b16 %v3447
        %v3725 = vunpack.c.l.b16 %v3448
        %v3726 = vunpack.c.h.b16 %v3448
        %v3727 = vunpack.c.l.b16 %v3449
        %v3728 = vunpack.c.h.b16 %v3449
        %v3729 = vunpack.c.l.b16 %v3450
        %v3730 = vunpack.c.h.b16 %v3450
        %v3731 = vunpack.c.l.b16 %v3451
        %v3732 = vunpack.c.h.b16 %v3451
        %v3733 = vunpack.c.l.b16 %v3452
        %v3734 = vunpack.c.h.b16 %v3452
        %v3735 = vunpack.c.l.b16 %v3453
        %v3736 = vunpack.c.h.b16 %v3453
        %v3737 = vunpack.c.l.b16 %v3454
        %v3738 = vunpack.c.h.b16 %v3454
        %v3739 = vunpack.c.l.b16 %v3455
        %v3740 = vunpack.c.h.b16 %v3455
        %v3741 = vunpack.c.l.b16 %v3456
        %v3742 = vunpack.c.h.b16 %v3456
        %v3743 = vunpack.c.l.b16 %v3457
        %v3744 = vunpack.c.h.b16 %v3457
        %v3745 = vunpack.c.l.b16 %v3458
        %v3746 = vunpack.c.h.b16 %v3458
        %v3747 = vpack.c.b16 %v3557, %v3555
        %v3748 = vpack.c.b16 %v3558, %v3556
        %v3749 = vpack.c.b16 %v3561, %v3559
        %v3750 = vpack.c.b16 %v3562, %v3560
        %v3751 = vpack.c.b16 %v3565, %v3563
        %v3752 = vpack.c.b16 %v3566, %v3564
        %v3753 = vpack.c.b16 %v3569, %v3567
        %v3754 = vpack.c.b16 %v3570, %v3568
        %v3755 = vpack.c.b16 %v3573, %v3571
        %v3756 = vpack.c.b16 %v3574, %v3572
        %v3757 = vpack.c.b16 %v3577, %v3575
        %v3758 = vpack.c.b16 %v3578, %v3576
        %v3759 = vpack.c.b16 %v3581, %v3579
        %v3760 = vpack.c.b16 %v3582, %v3580
        %v3761 = vpack.c.b16 %v3585, %v3583
        %v3762 = vpack.c.b16 %v3586, %v3584
        %v3763 = vpack.c.b16 %v3589, %v3587
        %v3764 = vpack.c.b16 %v3590, %v3588
        %v3765 = vpack.c.b16 %v3593, %v3591
        %v3766 = vpack.c.b16 %v3594, %v3592
        %v3767 = vpack.c.b16 %v3597, %v3595
        %v3768 = vpack.c.b16 %v3598, %v3596
        %v3769 = vpack.c.b16 %v3601, %v3599
        %v3770 = vpack.c.b16 %v3602, %v3600
        %v3771 = vpack.c.b16 %v3605, %v3603
        %v3772 = vpack.c.b16 %v3606, %v3604
        %v3773 = vpack.c.b16 %v3609, %v3607
        %v3774 = vpack.c.b16 %v3610, %v3608
        %v3775 = vpack.c.b16 %v3613, %v3611
        %v3776 = vpack.c.b16 %v3614, %v3612
        %v3777 = vpack.c.b16 %v3617, %v3615
        %v3778 = vpack.c.b16 %v3618, %v3616
        %v3779 = vpack.c.b16 %v3621, %v3619
        %v3780 = vpack.c.b16 %v3622, %v3620
        %v3781 = vpack.c.b16 %v3625, %v3623
        %v3782 = vpack.c.b16 %v3626, %v3624
        %v3783 = vpack.c.b16 %v3629, %v3627
        %v3784 = vpack.c.b16 %v3630, %v3628
        %v3785 = vpack.c.b16 %v3633, %v3631
        %v3786 = vpack.c.b16 %v3634, %v3632
        %v3787 = vpack.c.b16 %v3637, %v3635
        %v3788 = vpack.c.b16 %v3638, %v3636
        %v3789 = vpack.c.b16 %v3641, %v3639
        %v3790 = vpack.c.b16 %v3642, %v3640
        %v3791 = vpack.c.b16 %v3645, %v3643
        %v3792 = vpack.c.b16 %v3646, %v3644
        %v3793 = vpack.c.b16 %v3649, %v3647
        %v3794 = vpack.c.b16 %v3650, %v3648
        %v3795 = vpack.c.b16 %v3653, %v3651
        %v3796 = vpack.c.b16 %v3654, %v3652
        %v3797 = vpack.c.b16 %v3657, %v3655
        %v3798 = vpack.c.b16 %v3658, %v3656
        %v3799 = vpack.c.b16 %v3661, %v3659
        %v3800 = vpack.c.b16 %v3662, %v3660
        %v3801 = vpack.c.b16 %v3665, %v3663
        %v3802 = vpack.c.b16 %v3666, %v3664
        %v3803 = vpack.c.b16 %v3669, %v3667
        %v3804 = vpack.c.b16 %v3670, %v3668
        %v3805 = vpack.c.b16 %v3673, %v3671
        %v3806 = vpack.c.b16 %v3674, %v3672
        %v3807 = vpack.c.b16 %v3677, %v3675
        %v3808 = vpack.c.b16 %v3678, %v3676
        %v3809 = vpack.c.b16 %v3681, %v3679
        %v3810 = vpack.c.b16 %v3682, %v3680
        %v3811 = vpack.c.b16 %v3685, %v3683
        %v3812 = vpack.c.b16 %v3686, %v3684
        %v3813 = vpack.c.b16 %v3689, %v3687
        %v3814 = vpack.c.b16 %v3690, %v3688
        %v3815 = vpack.c.b16 %v3693, %v3691
        %v3816 = vpack.c.b16 %v3694, %v3692
        %v3817 = vpack.c.b16 %v3697, %v3695
        %v3818 = vpack.c.b16 %v3698, %v3696
        %v3819 = vpack.c.b16 %v3701, %v3699
        %v3820 = vpack.c.b16 %v3702, %v3700
        %v3821 = vpack.c.b16 %v3705, %v3703
        %v3822 = vpack.c.b16 %v3706, %v3704
        %v3823 = vpack.c.b16 %v3709, %v3707
        %v3824 = vpack.c.b16 %v3710, %v3708
        %v3825 = vpack.c.b16 %v3713, %v3711
        %v3826 = vpack.c.b16 %v3714, %v3712
        %v3827 = vpack.c.b16 %v3717, %v3715
        %v3828 = vpack.c.b16 %v3718, %v3716
        %v3829 = vpack.c.b16 %v3721, %v3719
        %v3830 = vpack.c.b16 %v3722, %v3720
        %v3831 = vpack.c.b16 %v3725, %v3723
        %v3832 = vpack.c.b16 %v3726, %v3724
        %v3833 = vpack.c.b16 %v3729, %v3727
        %v3834 = vpack.c.b16 %v3730, %v3728
        %v3835 = vpack.c.b16 %v3733, %v3731
        %v3836 = vpack.c.b16 %v3734, %v3732
        %v3837 = vpack.c.b16 %v3737, %v3735
        %v3838 = vpack.c.b16 %v3738, %v3736
        %v3839 = vpack.c.b16 %v3741, %v3739
        %v3840 = vpack.c.b16 %v3742, %v3740
        %v3841 = vpack.c.b16 %v3745, %v3743
        %v3842 = vpack.c.b16 %v3746, %v3744
        %3939 = vmatprep.subr.bf16.mxu0 %v3748
        %3940 = vmatpush1.bf16.msra.mxu0 %v3747
        %3941 = vmatprep.subr.bf16.mxu0 %v3750
        %3942 = vmatpush1.bf16.msra.mxu0 %v3749
        %3943 = vmatprep.subr.bf16.mxu0 %v3752
        %3944 = vmatpush1.bf16.msra.mxu0 %v3751
        %3945 = vmatprep.subr.bf16.mxu0 %v3754
        %3946 = vmatpush1.bf16.msra.mxu0 %v3753
        %3947 = vmatprep.subr.bf16.mxu0 %v3756
        %3948 = vmatpush1.bf16.msra.mxu0 %v3755
        %3949 = vmatprep.subr.bf16.mxu0 %v3758
        %3950 = vmatpush1.bf16.msra.mxu0 %v3757
        %3951 = vmatprep.subr.bf16.mxu0 %v3760
        %3952 = vmatpush1.bf16.msra.mxu0 %v3759
        %3953 = vmatprep.subr.bf16.mxu0 %v3762
        %3954 = vmatpush1.bf16.msra.mxu0 %v3761
        %3955 = vmatprep.subr.bf16.mxu0 %v3764
        %3956 = vmatpush1.bf16.msra.mxu0 %v3763
        %3957 = vmatprep.subr.bf16.mxu0 %v3766
        %3958 = vmatpush1.bf16.msra.mxu0 %v3765
        %3959 = vmatprep.subr.bf16.mxu0 %v3768
        %3960 = vmatpush1.bf16.msra.mxu0 %v3767
        %3961 = vmatprep.subr.bf16.mxu0 %v3770
        %3962 = vmatpush1.bf16.msra.mxu0 %v3769
        %3963 = vmatprep.subr.bf16.mxu0 %v3772
        %3964 = vmatpush1.bf16.msra.mxu0 %v3771
        %3965 = vmatprep.subr.bf16.mxu0 %v3774
        %3966 = vmatpush1.bf16.msra.mxu0 %v3773
        %3967 = vmatprep.subr.bf16.mxu0 %v3776
        %3968 = vmatpush1.bf16.msra.mxu0 %v3775
        %3969 = vmatprep.subr.bf16.mxu0 %v3778
        %3970 = vmatpush1.bf16.msra.mxu0 %v3777
        %3971 = vmatprep.mubr.bf16.mxu0 %v3358
        %3972 = vmatmul.mubr.bf16.gmra.mrb[0].mxu0 %v3357
        %v3973 = vpop.f32.mrb[0].mxu0
        %v3974 = vadd.f32 0.0, %v3973
        %v3975 = vpop.f32.mrb[0].mxu0
        %v3976 = vadd.f32 0.0, %v3975
        %v3977 = vpop.f32.mrb[0].mxu0
        %v3978 = vadd.f32 0.0, %v3977
        %v3979 = vpop.f32.mrb[0].mxu0
        %v3980 = vadd.f32 0.0, %v3979
        %3981 = vdwg.mxu0
        %3982 = vmatprep.subr.bf16.mxu0 %v3780
        %3983 = vmatpush1.bf16.msra.mxu0 %v3779
        %3984 = vmatprep.subr.bf16.mxu0 %v3782
        %3985 = vmatpush1.bf16.msra.mxu0 %v3781
        %3986 = vmatprep.subr.bf16.mxu0 %v3784
        %3987 = vmatpush1.bf16.msra.mxu0 %v3783
        %3988 = vmatprep.subr.bf16.mxu0 %v3786
        %3989 = vmatpush1.bf16.msra.mxu0 %v3785
        %3990 = vmatprep.subr.bf16.mxu0 %v3788
        %3991 = vmatpush1.bf16.msra.mxu0 %v3787
        %3992 = vmatprep.subr.bf16.mxu0 %v3790
        %3993 = vmatpush1.bf16.msra.mxu0 %v3789
        %3994 = vmatprep.subr.bf16.mxu0 %v3792
        %3995 = vmatpush1.bf16.msra.mxu0 %v3791
        %3996 = vmatprep.subr.bf16.mxu0 %v3794
        %3997 = vmatpush1.bf16.msra.mxu0 %v3793
        %3998 = vmatprep.subr.bf16.mxu0 %v3796
        %3999 = vmatpush1.bf16.msra.mxu0 %v3795
        %4000 = vmatprep.subr.bf16.mxu0 %v3798
        %4001 = vmatpush1.bf16.msra.mxu0 %v3797
        %4002 = vmatprep.subr.bf16.mxu0 %v3800
        %4003 = vmatpush1.bf16.msra.mxu0 %v3799
        %4004 = vmatprep.subr.bf16.mxu0 %v3802
        %4005 = vmatpush1.bf16.msra.mxu0 %v3801
        %4006 = vmatprep.subr.bf16.mxu0 %v3804
        %4007 = vmatpush1.bf16.msra.mxu0 %v3803
        %4008 = vmatprep.subr.bf16.mxu0 %v3806
        %4009 = vmatpush1.bf16.msra.mxu0 %v3805
        %4010 = vmatprep.subr.bf16.mxu0 %v3808
        %4011 = vmatpush1.bf16.msra.mxu0 %v3807
        %4012 = vmatprep.subr.bf16.mxu0 %v3810
        %4013 = vmatpush1.bf16.msra.mxu0 %v3809
        %4014 = vmatprep.mubr.bf16.mxu0 %v3360
        %4015 = vmatmul.mubr.bf16.gmra.mrb[0].mxu0 %v3359
        %v4016 = vpop.f32.mrb[0].mxu0
        %v4017 = vadd.f32 %v3974, %v4016
        %v4018 = vpop.f32.mrb[0].mxu0
        %v4019 = vadd.f32 %v3976, %v4018
        %v4020 = vpop.f32.mrb[0].mxu0
        %v4021 = vadd.f32 %v3978, %v4020
        %v4022 = vpop.f32.mrb[0].mxu0
        %v4023 = vadd.f32 %v3980, %v4022
        %4024 = vdwg.mxu0
        %4025 = vmatprep.subr.bf16.mxu0 %v3812
        %4026 = vmatpush1.bf16.msra.mxu0 %v3811
        %4027 = vmatprep.subr.bf16.mxu0 %v3814
        %4028 = vmatpush1.bf16.msra.mxu0 %v3813
        %4029 = vmatprep.subr.bf16.mxu0 %v3816
        %4030 = vmatpush1.bf16.msra.mxu0 %v3815
        %4031 = vmatprep.subr.bf16.mxu0 %v3818
        %4032 = vmatpush1.bf16.msra.mxu0 %v3817
        %4033 = vmatprep.subr.bf16.mxu0 %v3820
        %4034 = vmatpush1.bf16.msra.mxu0 %v3819
        %4035 = vmatprep.subr.bf16.mxu0 %v3822
        %4036 = vmatpush1.bf16.msra.mxu0 %v3821
        %4037 = vmatprep.subr.bf16.mxu0 %v3824
        %4038 = vmatpush1.bf16.msra.mxu0 %v3823
        %4039 = vmatprep.subr.bf16.mxu0 %v3826
        %4040 = vmatpush1.bf16.msra.mxu0 %v3825
        %4041 = vmatprep.subr.bf16.mxu0 %v3828
        %4042 = vmatpush1.bf16.msra.mxu0 %v3827
        %4043 = vmatprep.subr.bf16.mxu0 %v3830
        %4044 = vmatpush1.bf16.msra.mxu0 %v3829
        %4045 = vmatprep.subr.bf16.mxu0 %v3832
        %4046 = vmatpush1.bf16.msra.mxu0 %v3831
        %4047 = vmatprep.subr.bf16.mxu0 %v3834
        %4048 = vmatpush1.bf16.msra.mxu0 %v3833
        %4049 = vmatprep.subr.bf16.mxu0 %v3836
        %4050 = vmatpush1.bf16.msra.mxu0 %v3835
        %4051 = vmatprep.subr.bf16.mxu0 %v3838
        %4052 = vmatpush1.bf16.msra.mxu0 %v3837
        %4053 = vmatprep.subr.bf16.mxu0 %v3840
        %4054 = vmatpush1.bf16.msra.mxu0 %v3839
        %4055 = vmatprep.subr.bf16.mxu0 %v3842
        %4056 = vmatpush1.bf16.msra.mxu0 %v3841
        %4057 = vmatprep.mubr.bf16.mxu0 %v3362
        %4058 = vmatmul.mubr.bf16.gmra.mrb[0].mxu0 %v3361
        %v4059 = vpop.f32.mrb[0].mxu0
        %v4060 = vadd.f32 %v4017, %v4059
        %v4061 = vpop.f32.mrb[0].mxu0
        %v4062 = vadd.f32 %v4019, %v4061
        %v4063 = vpop.f32.mrb[0].mxu0
        %v4064 = vadd.f32 %v4021, %v4063
        %v4065 = vpop.f32.mrb[0].mxu0
        %v4066 = vadd.f32 %v4023, %v4065
        %4067 = vdwg.mxu0
        %v4068 = vadd.f32 %v2582, %v4060
        %v4069 = vadd.f32 %v2583, %v4062
        %v4070 = vadd.f32 %v2584, %v4064
        %v4071 = vadd.f32 %v2585, %v4066
        %v4073 = vlaneseq
        %v4074 = vshrl.u32 %v4073, 7
        %v4075 = vsub.s32 0, %v4074
        %v4076 = vrot.slane %v1060, %v4075
        %v4077 = vlaneseq
        %v4078 = vshrl.u32 %v4077, 7
        %v4079 = vsub.s32 1, %v4078
        %v4080 = vrot.slane %v1060, %v4079
        %v4083 = vadd.f32 %v4068, %v4076
        %v4084 = vadd.f32 %v4069, %v4080
        %v4085 = vadd.f32 %v4070, %v4076
        %v4086 = vadd.f32 %v4071, %v4080
        %s4087 = scalar_lea.vmem %s557, 48
        %v4088 = vld [vmem:[%s4087] ss:$8 sm:$0x3]
        %s4089 = scalar_lea.vmem %s4087, 1
        %v4090 = vld [vmem:[%s4089] ss:$8 sm:$0x3]
        %s4091 = scalar_lea.vmem %s4087, 2
        %v4092 = vld [vmem:[%s4091] ss:$8 sm:$0xf]
        %v4093 = vld [vmem:[%s4091] ss:$8 sm:$0x10]
        %v4094 = vor.u32 %v4092, %v4093
        %s4095 = scalar_lea.vmem %s4087, 3
        %v4096 = vld [vmem:[%s4095] ss:$8 sm:$0x3]
        %s4097 = scalar_lea.vmem %s4087, 4
        %v4098 = vld [vmem:[%s4097] ss:$8 sm:$0x3]
        %s4099 = scalar_lea.vmem %s4087, 5
        %v4100 = vld [vmem:[%s4099] ss:$8 sm:$0x3]
        %s4101 = scalar_lea.vmem %s4087, 6
        %v4102 = vld [vmem:[%s4101] ss:$8 sm:$0xf]
        %v4103 = vld [vmem:[%s4101] ss:$8 sm:$0x30]
        %v4104 = vor.u32 %v4102, %v4103
        %s4105 = scalar_lea.vmem %s4087, 7
        %v4106 = vld [vmem:[%s4105] ss:$8 sm:$0x3]
        %v4107 = vsel %vm1061, %v4084, 0.0
        %v4108 = vadd.f32 %v4083, %v4107
        %4109 = vadd.xlane.f32.xlu0 %v4108
        %v4110 = vpop.xlane.xlu0 %4109
        %v4111 = vsel %vm1061, %v4086, 0.0
        %v4112 = vadd.f32 %v4085, %v4111
        %4113 = vadd.xlane.f32.xlu0 %v4112
        %v4114 = vpop.xlane.xlu0 %4113
        %v4115 = vmul.f32 %v4110, %v1070
        %v4116 = vmul.f32 %v4114, %v1070
        %v4117 = vsub.f32 %v4083, %v4115
        %v4118 = vsub.f32 %v4084, %v4115
        %v4119 = vsub.f32 %v4085, %v4116
        %v4120 = vsub.f32 %v4086, %v4116
        %v4121 = vmul.f32 %v4117, %v4117
        %v4122 = vmul.f32 %v4118, %v4118
        %v4123 = vmul.f32 %v4119, %v4119
        %v4124 = vmul.f32 %v4120, %v4120
        %v4125 = vsel %vm1061, %v4122, 0.0
        %v4126 = vadd.f32 %v4121, %v4125
        %4127 = vadd.xlane.f32.xlu0 %v4126
        %v4128 = vpop.xlane.xlu0 %4127
        %v4129 = vsel %vm1061, %v4124, 0.0
        %v4130 = vadd.f32 %v4123, %v4129
        %4131 = vadd.xlane.f32.xlu0 %v4130
        %v4132 = vpop.xlane.xlu0 %4131
        %v4133 = vmul.f32 %v4128, %v1070
        %v4134 = vmul.f32 %v4132, %v1070
        %v4135 = vadd.f32 %v4133, 1e-06
        %v4136 = vadd.f32 %v4134, 1e-06
        %v4137 = vrsqrt.pop %v4135
        %v4138 = vrsqrt.pop %v4136
        %v4139 = vmul.f32 %v4117, %v4137
        %v4140 = vmul.f32 %v4118, %v4137
        %v4141 = vmul.f32 %v4119, %v4138
        %v4142 = vmul.f32 %v4120, %v4138
        %v4144 = vlaneseq
        %v4145 = vshrl.u32 %v4144, 7
        %v4146 = vsub.s32 0, %v4145
        %v4147 = vrot.slane %v4088, %v4146
        %v4148 = vlaneseq
        %v4149 = vshrl.u32 %v4148, 7
        %v4150 = vsub.s32 1, %v4149
        %v4151 = vrot.slane %v4088, %v4150
        %v4154 = vmul.f32 %v4139, %v4147
        %v4155 = vmul.f32 %v4140, %v4151
        %v4156 = vmul.f32 %v4141, %v4147
        %v4157 = vmul.f32 %v4142, %v4151
        %v4159 = vlaneseq
        %v4160 = vshrl.u32 %v4159, 7
        %v4161 = vsub.s32 0, %v4160
        %v4162 = vrot.slane %v4090, %v4161
        %v4163 = vlaneseq
        %v4164 = vshrl.u32 %v4163, 7
        %v4165 = vsub.s32 1, %v4164
        %v4166 = vrot.slane %v4090, %v4165
        %v4169 = vadd.f32 %v4154, %v4162
        %v4170 = vadd.f32 %v4155, %v4166
        %v4171 = vadd.f32 %v4156, %v4162
        %v4172 = vadd.f32 %v4157, %v4166
        %v4173 = vpack.c.bf16 %v4171, %v4169
        %v4174 = vpack.c.bf16 %v4172, %v4170
        %s4175 = scalar_lea.vmem %s529, 480
        %v4176 = vld [vmem:[%s4175] sm:$0xff]
        %v4177 = vld [vmem:[%s4175 + $0x8] sm:$0xff]
        %v4178 = vld [vmem:[%s4175 + $0x10] sm:$0xf]
        %v4179 = vld [vmem:[%s4175 + $0x14] sm:$0xff]
        %v4180 = vld [vmem:[%s4175 + $0x1c] sm:$0xff]
        %v4181 = vld [vmem:[%s4175 + $0x24] sm:$0xf]
        %v4182 = vld [vmem:[%s4175 + $0x28] sm:$0xff]
        %v4183 = vld [vmem:[%s4175 + $0x30] sm:$0xff]
        %v4184 = vld [vmem:[%s4175 + $0x38] sm:$0xf]
        %v4185 = vld [vmem:[%s4175 + $0x3c] sm:$0xff]
        %v4186 = vld [vmem:[%s4175 + $0x44] sm:$0xff]
        %v4187 = vld [vmem:[%s4175 + $0x4c] sm:$0xf]
        %v4188 = vld [vmem:[%s4175 + $0x50] sm:$0xff]
        %v4189 = vld [vmem:[%s4175 + $0x58] sm:$0xff]
        %v4190 = vld [vmem:[%s4175 + $0x60] sm:$0xf]
        %v4191 = vld [vmem:[%s4175 + $0x64] sm:$0xff]
        %v4192 = vld [vmem:[%s4175 + $0x6c] sm:$0xff]
        %v4193 = vld [vmem:[%s4175 + $0x74] sm:$0xf]
        %v4194 = vld [vmem:[%s4175 + $0x78] sm:$0xff]
        %v4195 = vld [vmem:[%s4175 + $0x80] sm:$0xff]
        %v4196 = vld [vmem:[%s4175 + $0x88] sm:$0xf]
        %v4197 = vld [vmem:[%s4175 + $0x8c] sm:$0xff]
        %v4198 = vld [vmem:[%s4175 + $0x94] sm:$0xff]
        %v4199 = vld [vmem:[%s4175 + $0x9c] sm:$0xf]
        %v4200 = vld [vmem:[%s4175 + $0xa0] sm:$0xff]
        %v4201 = vld [vmem:[%s4175 + $0xa8] sm:$0xff]
        %v4202 = vld [vmem:[%s4175 + $0xb0] sm:$0xf]
        %v4203 = vld [vmem:[%s4175 + $0xb4] sm:$0xff]
        %v4204 = vld [vmem:[%s4175 + $0xbc] sm:$0xff]
        %v4205 = vld [vmem:[%s4175 + $0xc4] sm:$0xf]
        %v4206 = vld [vmem:[%s4175 + $0xc8] sm:$0xff]
        %v4207 = vld [vmem:[%s4175 + $0xd0] sm:$0xff]
        %v4208 = vld [vmem:[%s4175 + $0xd8] sm:$0xf]
        %v4209 = vld [vmem:[%s4175 + $0xdc] sm:$0xff]
        %v4210 = vld [vmem:[%s4175 + $0xe4] sm:$0xff]
        %v4211 = vld [vmem:[%s4175 + $0xec] sm:$0xf]
        %v4212 = vld [vmem:[%s4175 + $0xf0] sm:$0xff]
        %v4213 = vld [vmem:[%s4175 + $0xf8] sm:$0xff]
        %v4214 = vld [vmem:[%s4175 + $0x100] sm:$0xf]
        %v4215 = vld [vmem:[%s4175 + $0x104] sm:$0xff]
        %v4216 = vld [vmem:[%s4175 + $0x10c] sm:$0xff]
        %v4217 = vld [vmem:[%s4175 + $0x114] sm:$0xf]
        %v4218 = vld [vmem:[%s4175 + $0x118] sm:$0xff]
        %v4219 = vld [vmem:[%s4175 + $0x120] sm:$0xff]
        %v4220 = vld [vmem:[%s4175 + $0x128] sm:$0xf]
        %v4221 = vld [vmem:[%s4175 + $0x12c] sm:$0xff]
        %v4222 = vld [vmem:[%s4175 + $0x134] sm:$0xff]
        %v4223 = vld [vmem:[%s4175 + $0x13c] sm:$0xf]
        %v4224 = vld [vmem:[%s4175 + $0x140] sm:$0xff]
        %v4225 = vld [vmem:[%s4175 + $0x148] sm:$0xff]
        %v4226 = vld [vmem:[%s4175 + $0x150] sm:$0xf]
        %v4227 = vld [vmem:[%s4175 + $0x154] sm:$0xff]
        %v4228 = vld [vmem:[%s4175 + $0x15c] sm:$0xff]
        %v4229 = vld [vmem:[%s4175 + $0x164] sm:$0xf]
        %v4230 = vld [vmem:[%s4175 + $0x168] sm:$0xff]
        %v4231 = vld [vmem:[%s4175 + $0x170] sm:$0xff]
        %v4232 = vld [vmem:[%s4175 + $0x178] sm:$0xf]
        %v4233 = vld [vmem:[%s4175 + $0x17c] sm:$0xff]
        %v4234 = vld [vmem:[%s4175 + $0x184] sm:$0xff]
        %v4235 = vld [vmem:[%s4175 + $0x18c] sm:$0xf]
        %v4236 = vld [vmem:[%s4175 + $0x190] sm:$0xff]
        %v4237 = vld [vmem:[%s4175 + $0x198] sm:$0xff]
        %v4238 = vld [vmem:[%s4175 + $0x1a0] sm:$0xf]
        %v4239 = vld [vmem:[%s4175 + $0x1a4] sm:$0xff]
        %v4240 = vld [vmem:[%s4175 + $0x1ac] sm:$0xff]
        %v4241 = vld [vmem:[%s4175 + $0x1b4] sm:$0xf]
        %v4242 = vld [vmem:[%s4175 + $0x1b8] sm:$0xff]
        %v4243 = vld [vmem:[%s4175 + $0x1c0] sm:$0xff]
        %v4244 = vld [vmem:[%s4175 + $0x1c8] sm:$0xf]
        %v4245 = vld [vmem:[%s4175 + $0x1cc] sm:$0xff]
        %v4246 = vld [vmem:[%s4175 + $0x1d4] sm:$0xff]
        %v4247 = vld [vmem:[%s4175 + $0x1dc] sm:$0xf]
        %v4249 = vlaneseq
        %v4250 = vshrl.u32 %v4249, 7
        %v4251 = vsub.s32 0, %v4250
        %v4252 = vrot.slane %v4094, %v4251
        %v4253 = vlaneseq
        %v4254 = vshrl.u32 %v4253, 7
        %v4255 = vsub.s32 1, %v4254
        %v4256 = vrot.slane %v4094, %v4255
        %v4257 = vlaneseq
        %v4258 = vshrl.u32 %v4257, 7
        %v4259 = vsub.s32 2, %v4258
        %v4260 = vrot.slane %v4094, %v4259
        %v4261 = vlaneseq
        %v4262 = vshrl.u32 %v4261, 7
        %v4263 = vsub.s32 3, %v4262
        %v4264 = vrot.slane %v4094, %v4263
        %v4265 = vlaneseq
        %v4266 = vshrl.u32 %v4265, 7
        %v4267 = vsub.s32 4, %v4266
        %v4268 = vrot.slane %v4094, %v4267
        %v4346 = vunpack.c.l.b16 %v4176
        %v4347 = vunpack.c.h.b16 %v4176
        %v4348 = vunpack.c.l.b16 %v4177
        %v4349 = vunpack.c.h.b16 %v4177
        %v4350 = vunpack.c.l.b16 %v4178
        %v4351 = vunpack.c.l.b16 %v4179
        %v4352 = vunpack.c.h.b16 %v4179
        %v4353 = vunpack.c.l.b16 %v4180
        %v4354 = vunpack.c.h.b16 %v4180
        %v4355 = vunpack.c.l.b16 %v4181
        %v4356 = vunpack.c.l.b16 %v4182
        %v4357 = vunpack.c.h.b16 %v4182
        %v4358 = vunpack.c.l.b16 %v4183
        %v4359 = vunpack.c.h.b16 %v4183
        %v4360 = vunpack.c.l.b16 %v4184
        %v4361 = vunpack.c.l.b16 %v4185
        %v4362 = vunpack.c.h.b16 %v4185
        %v4363 = vunpack.c.l.b16 %v4186
        %v4364 = vunpack.c.h.b16 %v4186
        %v4365 = vunpack.c.l.b16 %v4187
        %v4366 = vunpack.c.l.b16 %v4188
        %v4367 = vunpack.c.h.b16 %v4188
        %v4368 = vunpack.c.l.b16 %v4189
        %v4369 = vunpack.c.h.b16 %v4189
        %v4370 = vunpack.c.l.b16 %v4190
        %v4371 = vunpack.c.l.b16 %v4191
        %v4372 = vunpack.c.h.b16 %v4191
        %v4373 = vunpack.c.l.b16 %v4192
        %v4374 = vunpack.c.h.b16 %v4192
        %v4375 = vunpack.c.l.b16 %v4193
        %v4376 = vunpack.c.l.b16 %v4194
        %v4377 = vunpack.c.h.b16 %v4194
        %v4378 = vunpack.c.l.b16 %v4195
        %v4379 = vunpack.c.h.b16 %v4195
        %v4380 = vunpack.c.l.b16 %v4196
        %v4381 = vunpack.c.l.b16 %v4197
        %v4382 = vunpack.c.h.b16 %v4197
        %v4383 = vunpack.c.l.b16 %v4198
        %v4384 = vunpack.c.h.b16 %v4198
        %v4385 = vunpack.c.l.b16 %v4199
        %v4386 = vunpack.c.l.b16 %v4200
        %v4387 = vunpack.c.h.b16 %v4200
        %v4388 = vunpack.c.l.b16 %v4201
        %v4389 = vunpack.c.h.b16 %v4201
        %v4390 = vunpack.c.l.b16 %v4202
        %v4391 = vunpack.c.l.b16 %v4203
        %v4392 = vunpack.c.h.b16 %v4203
        %v4393 = vunpack.c.l.b16 %v4204
        %v4394 = vunpack.c.h.b16 %v4204
        %v4395 = vunpack.c.l.b16 %v4205
        %v4396 = vunpack.c.l.b16 %v4206
        %v4397 = vunpack.c.h.b16 %v4206
        %v4398 = vunpack.c.l.b16 %v4207
        %v4399 = vunpack.c.h.b16 %v4207
        %v4400 = vunpack.c.l.b16 %v4208
        %v4401 = vunpack.c.l.b16 %v4209
        %v4402 = vunpack.c.h.b16 %v4209
        %v4403 = vunpack.c.l.b16 %v4210
        %v4404 = vunpack.c.h.b16 %v4210
        %v4405 = vunpack.c.l.b16 %v4211
        %v4406 = vunpack.c.l.b16 %v4212
        %v4407 = vunpack.c.h.b16 %v4212
        %v4408 = vunpack.c.l.b16 %v4213
        %v4409 = vunpack.c.h.b16 %v4213
        %v4410 = vunpack.c.l.b16 %v4214
        %v4411 = vunpack.c.l.b16 %v4215
        %v4412 = vunpack.c.h.b16 %v4215
        %v4413 = vunpack.c.l.b16 %v4216
        %v4414 = vunpack.c.h.b16 %v4216
        %v4415 = vunpack.c.l.b16 %v4217
        %v4416 = vunpack.c.l.b16 %v4218
        %v4417 = vunpack.c.h.b16 %v4218
        %v4418 = vunpack.c.l.b16 %v4219
        %v4419 = vunpack.c.h.b16 %v4219
        %v4420 = vunpack.c.l.b16 %v4220
        %v4421 = vunpack.c.l.b16 %v4221
        %v4422 = vunpack.c.h.b16 %v4221
        %v4423 = vunpack.c.l.b16 %v4222
        %v4424 = vunpack.c.h.b16 %v4222
        %v4425 = vunpack.c.l.b16 %v4223
        %v4426 = vunpack.c.l.b16 %v4224
        %v4427 = vunpack.c.h.b16 %v4224
        %v4428 = vunpack.c.l.b16 %v4225
        %v4429 = vunpack.c.h.b16 %v4225
        %v4430 = vunpack.c.l.b16 %v4226
        %v4431 = vunpack.c.l.b16 %v4227
        %v4432 = vunpack.c.h.b16 %v4227
        %v4433 = vunpack.c.l.b16 %v4228
        %v4434 = vunpack.c.h.b16 %v4228
        %v4435 = vunpack.c.l.b16 %v4229
        %v4436 = vunpack.c.l.b16 %v4230
        %v4437 = vunpack.c.h.b16 %v4230
        %v4438 = vunpack.c.l.b16 %v4231
        %v4439 = vunpack.c.h.b16 %v4231
        %v4440 = vunpack.c.l.b16 %v4232
        %v4441 = vunpack.c.l.b16 %v4233
        %v4442 = vunpack.c.h.b16 %v4233
        %v4443 = vunpack.c.l.b16 %v4234
        %v4444 = vunpack.c.h.b16 %v4234
        %v4445 = vunpack.c.l.b16 %v4235
        %v4446 = vunpack.c.l.b16 %v4236
        %v4447 = vunpack.c.h.b16 %v4236
        %v4448 = vunpack.c.l.b16 %v4237
        %v4449 = vunpack.c.h.b16 %v4237
        %v4450 = vunpack.c.l.b16 %v4238
        %v4451 = vunpack.c.l.b16 %v4239
        %v4452 = vunpack.c.h.b16 %v4239
        %v4453 = vunpack.c.l.b16 %v4240
        %v4454 = vunpack.c.h.b16 %v4240
        %v4455 = vunpack.c.l.b16 %v4241
        %v4456 = vunpack.c.l.b16 %v4242
        %v4457 = vunpack.c.h.b16 %v4242
        %v4458 = vunpack.c.l.b16 %v4243
        %v4459 = vunpack.c.h.b16 %v4243
        %v4460 = vunpack.c.l.b16 %v4244
        %v4461 = vunpack.c.l.b16 %v4245
        %v4462 = vunpack.c.h.b16 %v4245
        %v4463 = vunpack.c.l.b16 %v4246
        %v4464 = vunpack.c.h.b16 %v4246
        %v4465 = vunpack.c.l.b16 %v4247
        %v4466 = vpack.c.b16 %v4351, %v4346
        %v4467 = vpack.c.b16 %v4352, %v4347
        %v4468 = vpack.c.b16 %v4353, %v4348
        %v4469 = vpack.c.b16 %v4354, %v4349
        %v4470 = vpack.c.b16 %v4355, %v4350
        %v4471 = vpack.c.b16 %v4361, %v4356
        %v4472 = vpack.c.b16 %v4362, %v4357
        %v4473 = vpack.c.b16 %v4363, %v4358
        %v4474 = vpack.c.b16 %v4364, %v4359
        %v4475 = vpack.c.b16 %v4365, %v4360
        %v4476 = vpack.c.b16 %v4371, %v4366
        %v4477 = vpack.c.b16 %v4372, %v4367
        %v4478 = vpack.c.b16 %v4373, %v4368
        %v4479 = vpack.c.b16 %v4374, %v4369
        %v4480 = vpack.c.b16 %v4375, %v4370
        %v4481 = vpack.c.b16 %v4381, %v4376
        %v4482 = vpack.c.b16 %v4382, %v4377
        %v4483 = vpack.c.b16 %v4383, %v4378
        %v4484 = vpack.c.b16 %v4384, %v4379
        %v4485 = vpack.c.b16 %v4385, %v4380
        %v4486 = vpack.c.b16 %v4391, %v4386
        %v4487 = vpack.c.b16 %v4392, %v4387
        %v4488 = vpack.c.b16 %v4393, %v4388
        %v4489 = vpack.c.b16 %v4394, %v4389
        %v4490 = vpack.c.b16 %v4395, %v4390
        %v4491 = vpack.c.b16 %v4401, %v4396
        %v4492 = vpack.c.b16 %v4402, %v4397
        %v4493 = vpack.c.b16 %v4403, %v4398
        %v4494 = vpack.c.b16 %v4404, %v4399
        %v4495 = vpack.c.b16 %v4405, %v4400
        %v4496 = vpack.c.b16 %v4411, %v4406
        %v4497 = vpack.c.b16 %v4412, %v4407
        %v4498 = vpack.c.b16 %v4413, %v4408
        %v4499 = vpack.c.b16 %v4414, %v4409
        %v4500 = vpack.c.b16 %v4415, %v4410
        %v4501 = vpack.c.b16 %v4421, %v4416
        %v4502 = vpack.c.b16 %v4422, %v4417
        %v4503 = vpack.c.b16 %v4423, %v4418
        %v4504 = vpack.c.b16 %v4424, %v4419
        %v4505 = vpack.c.b16 %v4425, %v4420
        %v4506 = vpack.c.b16 %v4431, %v4426
        %v4507 = vpack.c.b16 %v4432, %v4427
        %v4508 = vpack.c.b16 %v4433, %v4428
        %v4509 = vpack.c.b16 %v4434, %v4429
        %v4510 = vpack.c.b16 %v4435, %v4430
        %v4511 = vpack.c.b16 %v4441, %v4436
        %v4512 = vpack.c.b16 %v4442, %v4437
        %v4513 = vpack.c.b16 %v4443, %v4438
        %v4514 = vpack.c.b16 %v4444, %v4439
        %v4515 = vpack.c.b16 %v4445, %v4440
        %v4516 = vpack.c.b16 %v4451, %v4446
        %v4517 = vpack.c.b16 %v4452, %v4447
        %v4518 = vpack.c.b16 %v4453, %v4448
        %v4519 = vpack.c.b16 %v4454, %v4449
        %v4520 = vpack.c.b16 %v4455, %v4450
        %v4521 = vpack.c.b16 %v4461, %v4456
        %v4522 = vpack.c.b16 %v4462, %v4457
        %v4523 = vpack.c.b16 %v4463, %v4458
        %v4524 = vpack.c.b16 %v4464, %v4459
        %v4525 = vpack.c.b16 %v4465, %v4460
        %v4587 = vsel %vm1061, %v4174, 0
        %4589 = vmatprep.subr.bf16.mxu0 %v4467
        %4590 = vmatpush1.bf16.msra.mxu0 %v4466
        %4591 = vmatprep.subr.bf16.mxu0 %v4472
        %4592 = vmatpush1.bf16.msra.mxu0 %v4471
        %4593 = vmatprep.subr.bf16.mxu0 %v4477
        %4594 = vmatpush1.bf16.msra.mxu0 %v4476
        %4595 = vmatprep.subr.bf16.mxu0 %v4482
        %4596 = vmatpush1.bf16.msra.mxu0 %v4481
        %4597 = vmatprep.subr.bf16.mxu0 %v4487
        %4598 = vmatpush1.bf16.msra.mxu0 %v4486
        %4599 = vmatprep.subr.bf16.mxu0 %v4492
        %4600 = vmatpush1.bf16.msra.mxu0 %v4491
        %4601 = vmatprep.subr.bf16.mxu0 %v4497
        %4602 = vmatpush1.bf16.msra.mxu0 %v4496
        %4603 = vmatprep.subr.bf16.mxu0 %v4502
        %4604 = vmatpush1.bf16.msra.mxu0 %v4501
        %4605 = vmatprep.subr.bf16.mxu0 %v4507
        %4606 = vmatpush1.bf16.msra.mxu0 %v4506
        %4607 = vmatprep.subr.bf16.mxu0 %v4512
        %4608 = vmatpush1.bf16.msra.mxu0 %v4511
        %4609 = vmatprep.subr.bf16.mxu0 %v4517
        %4610 = vmatpush1.bf16.msra.mxu0 %v4516
        %4611 = vmatprep.subr.bf16.mxu0 %v4522
        %4612 = vmatpush1.bf16.msra.mxu0 %v4521
        %4613 = vmatprep.subr.bf16.mxu0 0
        %4614 = vmatpush1.bf16.msra.mxu0 0
        %4615 = vmatprep.subr.bf16.mxu0 0
        %4616 = vmatpush1.bf16.msra.mxu0 0
        %4617 = vmatprep.subr.bf16.mxu0 0
        %4618 = vmatpush1.bf16.msra.mxu0 0
        %4619 = vmatprep.subr.bf16.mxu0 0
        %4620 = vmatpush1.bf16.msra.mxu0 0
        %4621 = vmatprep.mubr.bf16.mxu0 %v4587
        %4622 = vmatmul.mubr.bf16.gmra.mrb[0].mxu0 %v4173
        %v4623 = vpop.f32.mrb[0].mxu0
        %v4624 = vadd.f32 %v4252, %v4623
        %v4625 = vpop.f32.mrb[0].mxu0
        %v4626 = vadd.f32 %v4256, %v4625
        %v4627 = vpop.f32.mrb[0].mxu0
        %v4628 = vadd.f32 %v4252, %v4627
        %v4629 = vpop.f32.mrb[0].mxu0
        %v4630 = vadd.f32 %v4256, %v4629
        %4631 = vdwg.mxu0
        %4632 = vmatprep.subr.bf16.mxu0 %v4469
        %4633 = vmatpush1.bf16.msra.mxu0 %v4468
        %4634 = vmatprep.subr.bf16.mxu0 %v4474
        %4635 = vmatpush1.bf16.msra.mxu0 %v4473
        %4636 = vmatprep.subr.bf16.mxu0 %v4479
        %4637 = vmatpush1.bf16.msra.mxu0 %v4478
        %4638 = vmatprep.subr.bf16.mxu0 %v4484
        %4639 = vmatpush1.bf16.msra.mxu0 %v4483
        %4640 = vmatprep.subr.bf16.mxu0 %v4489
        %4641 = vmatpush1.bf16.msra.mxu0 %v4488
        %4642 = vmatprep.subr.bf16.mxu0 %v4494
        %4643 = vmatpush1.bf16.msra.mxu0 %v4493
        %4644 = vmatprep.subr.bf16.mxu0 %v4499
        %4645 = vmatpush1.bf16.msra.mxu0 %v4498
        %4646 = vmatprep.subr.bf16.mxu0 %v4504
        %4647 = vmatpush1.bf16.msra.mxu0 %v4503
        %4648 = vmatprep.subr.bf16.mxu0 %v4509
        %4649 = vmatpush1.bf16.msra.mxu0 %v4508
        %4650 = vmatprep.subr.bf16.mxu0 %v4514
        %4651 = vmatpush1.bf16.msra.mxu0 %v4513
        %4652 = vmatprep.subr.bf16.mxu0 %v4519
        %4653 = vmatpush1.bf16.msra.mxu0 %v4518
        %4654 = vmatprep.subr.bf16.mxu0 %v4524
        %4655 = vmatpush1.bf16.msra.mxu0 %v4523
        %4656 = vmatprep.subr.bf16.mxu0 0
        %4657 = vmatpush1.bf16.msra.mxu0 0
        %4658 = vmatprep.subr.bf16.mxu0 0
        %4659 = vmatpush1.bf16.msra.mxu0 0
        %4660 = vmatprep.subr.bf16.mxu0 0
        %4661 = vmatpush1.bf16.msra.mxu0 0
        %4662 = vmatprep.subr.bf16.mxu0 0
        %4663 = vmatpush1.bf16.msra.mxu0 0
        %4664 = vmatprep.mubr.bf16.mxu0 %v4587
        %4665 = vmatmul.mubr.bf16.gmra.mrb[0].mxu0 %v4173
        %v4666 = vpop.f32.mrb[0].mxu0
        %v4667 = vadd.f32 %v4260, %v4666
        %v4668 = vpop.f32.mrb[0].mxu0
        %v4669 = vadd.f32 %v4264, %v4668
        %v4670 = vpop.f32.mrb[0].mxu0
        %v4671 = vadd.f32 %v4260, %v4670
        %v4672 = vpop.f32.mrb[0].mxu0
        %v4673 = vadd.f32 %v4264, %v4672
        %4674 = vdwg.mxu0
        %4675 = vmatprep.subr.bf16.mxu0 0
        %4676 = vmatpush1.bf16.msra.mxu0 %v4470
        %4677 = vmatprep.subr.bf16.mxu0 0
        %4678 = vmatpush1.bf16.msra.mxu0 %v4475
        %4679 = vmatprep.subr.bf16.mxu0 0
        %4680 = vmatpush1.bf16.msra.mxu0 %v4480
        %4681 = vmatprep.subr.bf16.mxu0 0
        %4682 = vmatpush1.bf16.msra.mxu0 %v4485
        %4683 = vmatprep.subr.bf16.mxu0 0
        %4684 = vmatpush1.bf16.msra.mxu0 %v4490
        %4685 = vmatprep.subr.bf16.mxu0 0
        %4686 = vmatpush1.bf16.msra.mxu0 %v4495
        %4687 = vmatprep.subr.bf16.mxu0 0
        %4688 = vmatpush1.bf16.msra.mxu0 %v4500
        %4689 = vmatprep.subr.bf16.mxu0 0
        %4690 = vmatpush1.bf16.msra.mxu0 %v4505
        %4691 = vmatprep.subr.bf16.mxu0 0
        %4692 = vmatpush1.bf16.msra.mxu0 %v4510
        %4693 = vmatprep.subr.bf16.mxu0 0
        %4694 = vmatpush1.bf16.msra.mxu0 %v4515
        %4695 = vmatprep.subr.bf16.mxu0 0
        %4696 = vmatpush1.bf16.msra.mxu0 %v4520
        %4697 = vmatprep.subr.bf16.mxu0 0
        %4698 = vmatpush1.bf16.msra.mxu0 %v4525
        %4699 = vmatprep.subr.bf16.mxu0 0
        %4700 = vmatpush1.bf16.msra.mxu0 0
        %4701 = vmatprep.subr.bf16.mxu0 0
        %4702 = vmatpush1.bf16.msra.mxu0 0
        %4703 = vmatprep.subr.bf16.mxu0 0
        %4704 = vmatpush1.bf16.msra.mxu0 0
        %4705 = vmatprep.subr.bf16.mxu0 0
        %4706 = vmatpush1.bf16.msra.mxu0 0
        %4707 = vmatprep.mubr.bf16.mxu0 %v4587
        %4708 = vmatmul.mubr.bf16.gmra.mrb[0].mxu0 %v4173
        %v4709 = vpop.f32.mrb[0].mxu0
        %v4710 = vadd.f32 %v4268, %v4709
        %v4711 = vpop.f32.mrb[0].mxu0
        %v4712 = vpop.f32.mrb[0].mxu0
        %v4713 = vadd.f32 %v4268, %v4712
        %v4714 = vpop.f32.mrb[0].mxu0
        %4715 = vdwg.mxu0
        %v4716 = vpack.c.bf16 %v4628, %v4624
        %v4717 = vpack.c.bf16 %v4630, %v4626
        %v4720 = vunpack.c.l.b16 %v4716
        %v4721 = vunpack.c.l.b16 %v4717
        %v4722 = vunpack.c.h.b16 %v4716
        %v4723 = vunpack.c.h.b16 %v4717
        %v4724 = vpack.c.b16 %v4721, %v4720
        %v4725 = vpack.c.b16 %v4723, %v4722
        %v4726 = vpack.c.bf16 %v4671, %v4667
        %v4728 = vunpack.c.l.b16 %v4726
        %v4729 = vunpack.c.h.b16 %v4726
        %v4730 = vpack.c.b16 %v4728, %v4721
        %v4731 = vpack.c.b16 %v4729, %v4723
        %v4732 = vpack.c.bf16 %v4673, %v4669
        %v4733 = vpack.c.bf16 %v4713, %v4710
        %v4736 = vunpack.c.l.b16 %v4732
        %v4737 = vunpack.c.l.b16 %v4733
        %v4738 = vunpack.c.h.b16 %v4732
        %v4739 = vunpack.c.h.b16 %v4733
        %v4740 = vpack.c.b16 %v4737, %v4736
        %v4741 = vpack.c.b16 %v4739, %v4738
        %v4742 = vpack.c.b16 %v4721, %v4721
        %4743 = vrot.lane.b32.xlu0 %v4742, 64
        %v4744 = vpop.permute.xlu0 %4743
        %v4746 = vsel %vm1061, %v4724, 0
        %v4749 = vsel %vm1061, %v4744, 0
        %4751 = vmatprep.subr.bf16.mxu0 0
        %4752 = vmatpush1.bf16.xpose.msra.mxu0 %v4749
        %4753 = vmatprep.subr.bf16.mxu0 0
        %4754 = vmatpush1.bf16.xpose.msra.mxu0 0
        %4755 = vmatprep.subr.bf16.mxu0 0
        %4756 = vmatpush1.bf16.xpose.msra.mxu0 0
        %4757 = vmatprep.subr.bf16.mxu0 0
        %4758 = vmatpush1.bf16.xpose.msra.mxu0 0
        %4759 = vmatprep.subr.bf16.mxu0 0
        %4760 = vmatpush1.bf16.xpose.msra.mxu0 0
        %4761 = vmatprep.subr.bf16.mxu0 0
        %4762 = vmatpush1.bf16.xpose.msra.mxu0 0
        %4763 = vmatprep.subr.bf16.mxu0 0
        %4764 = vmatpush1.bf16.xpose.msra.mxu0 0
        %4765 = vmatprep.subr.bf16.mxu0 0
        %4766 = vmatpush1.bf16.xpose.msra.mxu0 0
        %4767 = vmatprep.subr.bf16.mxu0 0
        %4768 = vmatpush1.bf16.xpose.msra.mxu0 0
        %4769 = vmatprep.subr.bf16.mxu0 0
        %4770 = vmatpush1.bf16.xpose.msra.mxu0 0
        %4771 = vmatprep.subr.bf16.mxu0 0
        %4772 = vmatpush1.bf16.xpose.msra.mxu0 0
        %4773 = vmatprep.subr.bf16.mxu0 0
        %4774 = vmatpush1.bf16.xpose.msra.mxu0 0
        %4775 = vmatprep.subr.bf16.mxu0 0
        %4776 = vmatpush1.bf16.xpose.msra.mxu0 0
        %4777 = vmatprep.subr.bf16.mxu0 0
        %4778 = vmatpush1.bf16.xpose.msra.mxu0 0
        %4779 = vmatprep.subr.bf16.mxu0 0
        %4780 = vmatpush1.bf16.xpose.msra.mxu0 0
        %4781 = vmatprep.subr.bf16.mxu0 0
        %4782 = vmatpush1.bf16.xpose.msra.mxu0 0
        %4783 = vmatprep.mubr.bf16.mxu0 0
        %4784 = vmatmul.mubr.bf16.gmra.mrb[0].mxu0 %v4746
        %v4785 = vpop.f32.mrb[0].mxu0
        %v4786 = vadd.f32 0.0, %v4785
        %v4787 = vpop.f32.mrb[0].mxu0
        %v4788 = vpop.f32.mrb[0].mxu0
        %v4789 = vpop.f32.mrb[0].mxu0
        %4790 = vdwg.mxu0
        %v4791 = vpack.c.b16 %v4723, %v4723
        %4792 = vrot.lane.b32.xlu0 %v4791, 64
        %v4793 = vpop.permute.xlu0 %4792
        %v4795 = vsel %vm1061, %v4725, 0
        %v4798 = vsel %vm1061, %v4793, 0
        %4800 = vmatprep.subr.bf16.mxu0 0
        %4801 = vmatpush1.bf16.xpose.msra.mxu0 %v4798
        %4802 = vmatprep.subr.bf16.mxu0 0
        %4803 = vmatpush1.bf16.xpose.msra.mxu0 0
        %4804 = vmatprep.subr.bf16.mxu0 0
        %4805 = vmatpush1.bf16.xpose.msra.mxu0 0
        %4806 = vmatprep.subr.bf16.mxu0 0
        %4807 = vmatpush1.bf16.xpose.msra.mxu0 0
        %4808 = vmatprep.subr.bf16.mxu0 0
        %4809 = vmatpush1.bf16.xpose.msra.mxu0 0
        %4810 = vmatprep.subr.bf16.mxu0 0
        %4811 = vmatpush1.bf16.xpose.msra.mxu0 0
        %4812 = vmatprep.subr.bf16.mxu0 0
        %4813 = vmatpush1.bf16.xpose.msra.mxu0 0
        %4814 = vmatprep.subr.bf16.mxu0 0
        %4815 = vmatpush1.bf16.xpose.msra.mxu0 0
        %4816 = vmatprep.subr.bf16.mxu0 0
        %4817 = vmatpush1.bf16.xpose.msra.mxu0 0
        %4818 = vmatprep.subr.bf16.mxu0 0
        %4819 = vmatpush1.bf16.xpose.msra.mxu0 0
        %4820 = vmatprep.subr.bf16.mxu0 0
        %4821 = vmatpush1.bf16.xpose.msra.mxu0 0
        %4822 = vmatprep.subr.bf16.mxu0 0
        %4823 = vmatpush1.bf16.xpose.msra.mxu0 0
        %4824 = vmatprep.subr.bf16.mxu0 0
        %4825 = vmatpush1.bf16.xpose.msra.mxu0 0
        %4826 = vmatprep.subr.bf16.mxu0 0
        %4827 = vmatpush1.bf16.xpose.msra.mxu0 0
        %4828 = vmatprep.subr.bf16.mxu0 0
        %4829 = vmatpush1.bf16.xpose.msra.mxu0 0
        %4830 = vmatprep.subr.bf16.mxu0 0
        %4831 = vmatpush1.bf16.xpose.msra.mxu0 0
        %4832 = vmatprep.mubr.bf16.mxu0 0
        %4833 = vmatmul.mubr.bf16.gmra.mrb[0].mxu0 %v4795
        %v4834 = vpop.f32.mrb[0].mxu0
        %v4835 = vadd.f32 0.0, %v4834
        %v4836 = vpop.f32.mrb[0].mxu0
        %v4837 = vpop.f32.mrb[0].mxu0
        %v4838 = vpop.f32.mrb[0].mxu0
        %4839 = vdwg.mxu0
        %v4840 = vmul.f32 %v4786, 0.125
        %v4841 = vmul.f32 %v4835, 0.125
        %v4842 = vsel %vm1041, %v4840, -1e+30
        %v4843 = vsel %vm1041, %v4841, -1e+30
        %v4844 = vsel %vm1799, %v4842, -inf
        %4845 = vmax.xlane.f32.xlu0 %v4844
        %v4846 = vpop.xlane.xlu0 %4845
        %v4847 = vsel %vm1799, %v4843, -inf
        %4848 = vmax.xlane.f32.xlu0 %v4847
        %v4849 = vpop.xlane.xlu0 %4848
        %v4850 = vsub.f32 %v4842, %v4846
        %v4851 = vsub.f32 %v4843, %v4849
        %v4852 = vmul.f32 %v4850, 1.442695
        %v4853 = vpow.pop %v4852
        %v4854 = vmul.f32 %v4851, 1.442695
        %v4855 = vpow.pop %v4854
        %v4856 = vsel %vm1799, %v4853, 0.0
        %4857 = vadd.xlane.f32.xlu0 %v4856
        %v4858 = vpop.xlane.xlu0 %4857
        %v4859 = vsel %vm1799, %v4855, 0.0
        %4860 = vadd.xlane.f32.xlu0 %v4859
        %v4861 = vpop.xlane.xlu0 %4860
        %v4862 = vrcp.pop %v4858
        %v4863 = vrcp.pop %v4861
        %v4864 = vmul.f32 %v4853, %v4862
        %v4865 = vmul.f32 %v4855, %v4863
        %v4866 = vpack.c.bf16 %v4864, %v4864
        %v4867 = vpack.c.bf16 %v4865, %v4865
        %v4869 = vsel %vm1799, %v4866, 0
        %v4872 = vsel %vm1827, %v4740, 0
        %4874 = vmatprep.subr.bf16.mxu0 0
        %4875 = vmatpush1.bf16.msra.mxu0 %v4872
        %4876 = vmatprep.subr.bf16.mxu0 0
        %4877 = vmatpush1.bf16.msra.mxu0 0
        %4878 = vmatprep.subr.bf16.mxu0 0
        %4879 = vmatpush1.bf16.msra.mxu0 0
        %4880 = vmatprep.subr.bf16.mxu0 0
        %4881 = vmatpush1.bf16.msra.mxu0 0
        %4882 = vmatprep.subr.bf16.mxu0 0
        %4883 = vmatpush1.bf16.msra.mxu0 0
        %4884 = vmatprep.subr.bf16.mxu0 0
        %4885 = vmatpush1.bf16.msra.mxu0 0
        %4886 = vmatprep.subr.bf16.mxu0 0
        %4887 = vmatpush1.bf16.msra.mxu0 0
        %4888 = vmatprep.subr.bf16.mxu0 0
        %4889 = vmatpush1.bf16.msra.mxu0 0
        %4890 = vmatprep.subr.bf16.mxu0 0
        %4891 = vmatpush1.bf16.msra.mxu0 0
        %4892 = vmatprep.subr.bf16.mxu0 0
        %4893 = vmatpush1.bf16.msra.mxu0 0
        %4894 = vmatprep.subr.bf16.mxu0 0
        %4895 = vmatpush1.bf16.msra.mxu0 0
        %4896 = vmatprep.subr.bf16.mxu0 0
        %4897 = vmatpush1.bf16.msra.mxu0 0
        %4898 = vmatprep.subr.bf16.mxu0 0
        %4899 = vmatpush1.bf16.msra.mxu0 0
        %4900 = vmatprep.subr.bf16.mxu0 0
        %4901 = vmatpush1.bf16.msra.mxu0 0
        %4902 = vmatprep.subr.bf16.mxu0 0
        %4903 = vmatpush1.bf16.msra.mxu0 0
        %4904 = vmatprep.subr.bf16.mxu0 0
        %4905 = vmatpush1.bf16.msra.mxu0 0
        %4906 = vmatprep.mubr.bf16.mxu0 0
        %4907 = vmatmul.mubr.bf16.gmra.mrb[0].mxu0 %v4869
        %v4908 = vpop.f32.mrb[0].mxu0
        %v4909 = vadd.f32 0.0, %v4908
        %v4910 = vpop.f32.mrb[0].mxu0
        %v4911 = vpop.f32.mrb[0].mxu0
        %v4912 = vpop.f32.mrb[0].mxu0
        %4913 = vdwg.mxu0
        %v4915 = vsel %vm1799, %v4867, 0
        %v4918 = vsel %vm1827, %v4741, 0
        %4920 = vmatprep.subr.bf16.mxu0 0
        %4921 = vmatpush1.bf16.msra.mxu0 %v4918
        %4922 = vmatprep.subr.bf16.mxu0 0
        %4923 = vmatpush1.bf16.msra.mxu0 0
        %4924 = vmatprep.subr.bf16.mxu0 0
        %4925 = vmatpush1.bf16.msra.mxu0 0
        %4926 = vmatprep.subr.bf16.mxu0 0
        %4927 = vmatpush1.bf16.msra.mxu0 0
        %4928 = vmatprep.subr.bf16.mxu0 0
        %4929 = vmatpush1.bf16.msra.mxu0 0
        %4930 = vmatprep.subr.bf16.mxu0 0
        %4931 = vmatpush1.bf16.msra.mxu0 0
        %4932 = vmatprep.subr.bf16.mxu0 0
        %4933 = vmatpush1.bf16.msra.mxu0 0
        %4934 = vmatprep.subr.bf16.mxu0 0
        %4935 = vmatpush1.bf16.msra.mxu0 0
        %4936 = vmatprep.subr.bf16.mxu0 0
        %4937 = vmatpush1.bf16.msra.mxu0 0
        %4938 = vmatprep.subr.bf16.mxu0 0
        %4939 = vmatpush1.bf16.msra.mxu0 0
        %4940 = vmatprep.subr.bf16.mxu0 0
        %4941 = vmatpush1.bf16.msra.mxu0 0
        %4942 = vmatprep.subr.bf16.mxu0 0
        %4943 = vmatpush1.bf16.msra.mxu0 0
        %4944 = vmatprep.subr.bf16.mxu0 0
        %4945 = vmatpush1.bf16.msra.mxu0 0
        %4946 = vmatprep.subr.bf16.mxu0 0
        %4947 = vmatpush1.bf16.msra.mxu0 0
        %4948 = vmatprep.subr.bf16.mxu0 0
        %4949 = vmatpush1.bf16.msra.mxu0 0
        %4950 = vmatprep.subr.bf16.mxu0 0
        %4951 = vmatpush1.bf16.msra.mxu0 0
        %4952 = vmatprep.mubr.bf16.mxu0 0
        %4953 = vmatmul.mubr.bf16.gmra.mrb[0].mxu0 %v4915
        %v4954 = vpop.f32.mrb[0].mxu0
        %v4955 = vadd.f32 0.0, %v4954
        %v4956 = vpop.f32.mrb[0].mxu0
        %v4957 = vpop.f32.mrb[0].mxu0
        %v4958 = vpop.f32.mrb[0].mxu0
        %4959 = vdwg.mxu0
        %v4960 = vrot.slane %v4730, 4
        %v4961 = vpack.c.b16 %v4720, %v4720
        %4962 = vrot.lane.b32.xlu0 %v4961, 64
        %v4963 = vpop.permute.xlu0 %4962
        %v4965 = vsel %vm1061, %v4963, 0
        %v4968 = vsel %vm1061, %v4960, 0
        %4970 = vmatprep.subr.bf16.mxu0 0
        %4971 = vmatpush1.bf16.xpose.msra.mxu0 %v4968
        %4972 = vmatprep.subr.bf16.mxu0 0
        %4973 = vmatpush1.bf16.xpose.msra.mxu0 0
        %4974 = vmatprep.subr.bf16.mxu0 0
        %4975 = vmatpush1.bf16.xpose.msra.mxu0 0
        %4976 = vmatprep.subr.bf16.mxu0 0
        %4977 = vmatpush1.bf16.xpose.msra.mxu0 0
        %4978 = vmatprep.subr.bf16.mxu0 0
        %4979 = vmatpush1.bf16.xpose.msra.mxu0 0
        %4980 = vmatprep.subr.bf16.mxu0 0
        %4981 = vmatpush1.bf16.xpose.msra.mxu0 0
        %4982 = vmatprep.subr.bf16.mxu0 0
        %4983 = vmatpush1.bf16.xpose.msra.mxu0 0
        %4984 = vmatprep.subr.bf16.mxu0 0
        %4985 = vmatpush1.bf16.xpose.msra.mxu0 0
        %4986 = vmatprep.subr.bf16.mxu0 0
        %4987 = vmatpush1.bf16.xpose.msra.mxu0 0
        %4988 = vmatprep.subr.bf16.mxu0 0
        %4989 = vmatpush1.bf16.xpose.msra.mxu0 0
        %4990 = vmatprep.subr.bf16.mxu0 0
        %4991 = vmatpush1.bf16.xpose.msra.mxu0 0
        %4992 = vmatprep.subr.bf16.mxu0 0
        %4993 = vmatpush1.bf16.xpose.msra.mxu0 0
        %4994 = vmatprep.subr.bf16.mxu0 0
        %4995 = vmatpush1.bf16.xpose.msra.mxu0 0
        %4996 = vmatprep.subr.bf16.mxu0 0
        %4997 = vmatpush1.bf16.xpose.msra.mxu0 0
        %4998 = vmatprep.subr.bf16.mxu0 0
        %4999 = vmatpush1.bf16.xpose.msra.mxu0 0
        %5000 = vmatprep.subr.bf16.mxu0 0
        %5001 = vmatpush1.bf16.xpose.msra.mxu0 0
        %5002 = vmatprep.mubr.bf16.mxu0 0
        %5003 = vmatmul.mubr.bf16.gmra.mrb[0].mxu0 %v4965
        %v5004 = vpop.f32.mrb[0].mxu0
        %v5005 = vadd.f32 0.0, %v5004
        %v5006 = vpop.f32.mrb[0].mxu0
        %v5007 = vpop.f32.mrb[0].mxu0
        %v5008 = vpop.f32.mrb[0].mxu0
        %5009 = vdwg.mxu0
        %v5010 = vrot.slane %v4731, 4
        %v5011 = vpack.c.b16 %v4722, %v4722
        %5012 = vrot.lane.b32.xlu0 %v5011, 64
        %v5013 = vpop.permute.xlu0 %5012
        %v5015 = vsel %vm1061, %v5013, 0
        %v5018 = vsel %vm1061, %v5010, 0
        %5020 = vmatprep.subr.bf16.mxu0 0
        %5021 = vmatpush1.bf16.xpose.msra.mxu0 %v5018
        %5022 = vmatprep.subr.bf16.mxu0 0
        %5023 = vmatpush1.bf16.xpose.msra.mxu0 0
        %5024 = vmatprep.subr.bf16.mxu0 0
        %5025 = vmatpush1.bf16.xpose.msra.mxu0 0
        %5026 = vmatprep.subr.bf16.mxu0 0
        %5027 = vmatpush1.bf16.xpose.msra.mxu0 0
        %5028 = vmatprep.subr.bf16.mxu0 0
        %5029 = vmatpush1.bf16.xpose.msra.mxu0 0
        %5030 = vmatprep.subr.bf16.mxu0 0
        %5031 = vmatpush1.bf16.xpose.msra.mxu0 0
        %5032 = vmatprep.subr.bf16.mxu0 0
        %5033 = vmatpush1.bf16.xpose.msra.mxu0 0
        %5034 = vmatprep.subr.bf16.mxu0 0
        %5035 = vmatpush1.bf16.xpose.msra.mxu0 0
        %5036 = vmatprep.subr.bf16.mxu0 0
        %5037 = vmatpush1.bf16.xpose.msra.mxu0 0
        %5038 = vmatprep.subr.bf16.mxu0 0
        %5039 = vmatpush1.bf16.xpose.msra.mxu0 0
        %5040 = vmatprep.subr.bf16.mxu0 0
        %5041 = vmatpush1.bf16.xpose.msra.mxu0 0
        %5042 = vmatprep.subr.bf16.mxu0 0
        %5043 = vmatpush1.bf16.xpose.msra.mxu0 0
        %5044 = vmatprep.subr.bf16.mxu0 0
        %5045 = vmatpush1.bf16.xpose.msra.mxu0 0
        %5046 = vmatprep.subr.bf16.mxu0 0
        %5047 = vmatpush1.bf16.xpose.msra.mxu0 0
        %5048 = vmatprep.subr.bf16.mxu0 0
        %5049 = vmatpush1.bf16.xpose.msra.mxu0 0
        %5050 = vmatprep.subr.bf16.mxu0 0
        %5051 = vmatpush1.bf16.xpose.msra.mxu0 0
        %5052 = vmatprep.mubr.bf16.mxu0 0
        %5053 = vmatmul.mubr.bf16.gmra.mrb[0].mxu0 %v5015
        %v5054 = vpop.f32.mrb[0].mxu0
        %v5055 = vadd.f32 0.0, %v5054
        %v5056 = vpop.f32.mrb[0].mxu0
        %v5057 = vpop.f32.mrb[0].mxu0
        %v5058 = vpop.f32.mrb[0].mxu0
        %5059 = vdwg.mxu0
        %v5060 = vmul.f32 %v5005, 0.125
        %v5061 = vmul.f32 %v5055, 0.125
        %v5062 = vsel %vm1041, %v5060, -1e+30
        %v5063 = vsel %vm1041, %v5061, -1e+30
        %v5064 = vsel %vm1799, %v5062, -inf
        %5065 = vmax.xlane.f32.xlu0 %v5064
        %v5066 = vpop.xlane.xlu0 %5065
        %v5067 = vsel %vm1799, %v5063, -inf
        %5068 = vmax.xlane.f32.xlu0 %v5067
        %v5069 = vpop.xlane.xlu0 %5068
        %v5070 = vsub.f32 %v5062, %v5066
        %v5071 = vsub.f32 %v5063, %v5069
        %v5072 = vmul.f32 %v5070, 1.442695
        %v5073 = vpow.pop %v5072
        %v5074 = vmul.f32 %v5071, 1.442695
        %v5075 = vpow.pop %v5074
        %v5076 = vsel %vm1799, %v5073, 0.0
        %5077 = vadd.xlane.f32.xlu0 %v5076
        %v5078 = vpop.xlane.xlu0 %5077
        %v5079 = vsel %vm1799, %v5075, 0.0
        %5080 = vadd.xlane.f32.xlu0 %v5079
        %v5081 = vpop.xlane.xlu0 %5080
        %v5082 = vrcp.pop %v5078
        %v5083 = vrcp.pop %v5081
        %v5084 = vmul.f32 %v5073, %v5082
        %v5085 = vmul.f32 %v5075, %v5083
        %v5086 = vpack.c.bf16 %v5084, %v5084
        %v5087 = vpack.c.bf16 %v5085, %v5085
        %v5088 = vpack.c.b16 %v4736, %v4736
        %5089 = vrot.lane.b32.xlu0 %v5088, 64
        %v5090 = vpop.permute.xlu0 %5089
        %v5092 = vsel %vm1799, %v5086, 0
        %v5095 = vsel %vm1827, %v5090, 0
        %5097 = vmatprep.subr.bf16.mxu0 0
        %5098 = vmatpush1.bf16.msra.mxu0 %v5095
        %5099 = vmatprep.subr.bf16.mxu0 0
        %5100 = vmatpush1.bf16.msra.mxu0 0
        %5101 = vmatprep.subr.bf16.mxu0 0
        %5102 = vmatpush1.bf16.msra.mxu0 0
        %5103 = vmatprep.subr.bf16.mxu0 0
        %5104 = vmatpush1.bf16.msra.mxu0 0
        %5105 = vmatprep.subr.bf16.mxu0 0
        %5106 = vmatpush1.bf16.msra.mxu0 0
        %5107 = vmatprep.subr.bf16.mxu0 0
        %5108 = vmatpush1.bf16.msra.mxu0 0
        %5109 = vmatprep.subr.bf16.mxu0 0
        %5110 = vmatpush1.bf16.msra.mxu0 0
        %5111 = vmatprep.subr.bf16.mxu0 0
        %5112 = vmatpush1.bf16.msra.mxu0 0
        %5113 = vmatprep.subr.bf16.mxu0 0
        %5114 = vmatpush1.bf16.msra.mxu0 0
        %5115 = vmatprep.subr.bf16.mxu0 0
        %5116 = vmatpush1.bf16.msra.mxu0 0
        %5117 = vmatprep.subr.bf16.mxu0 0
        %5118 = vmatpush1.bf16.msra.mxu0 0
        %5119 = vmatprep.subr.bf16.mxu0 0
        %5120 = vmatpush1.bf16.msra.mxu0 0
        %5121 = vmatprep.subr.bf16.mxu0 0
        %5122 = vmatpush1.bf16.msra.mxu0 0
        %5123 = vmatprep.subr.bf16.mxu0 0
        %5124 = vmatpush1.bf16.msra.mxu0 0
        %5125 = vmatprep.subr.bf16.mxu0 0
        %5126 = vmatpush1.bf16.msra.mxu0 0
        %5127 = vmatprep.subr.bf16.mxu0 0
        %5128 = vmatpush1.bf16.msra.mxu0 0
        %5129 = vmatprep.mubr.bf16.mxu0 0
        %5130 = vmatmul.mubr.bf16.gmra.mrb[0].mxu0 %v5092
        %v5131 = vpop.f32.mrb[0].mxu0
        %v5132 = vadd.f32 0.0, %v5131
        %v5133 = vpop.f32.mrb[0].mxu0
        %v5134 = vpop.f32.mrb[0].mxu0
        %v5135 = vpop.f32.mrb[0].mxu0
        %5136 = vdwg.mxu0
        %v5137 = vpack.c.b16 %v4738, %v4738
        %5138 = vrot.lane.b32.xlu0 %v5137, 64
        %v5139 = vpop.permute.xlu0 %5138
        %v5141 = vsel %vm1799, %v5087, 0
        %v5144 = vsel %vm1827, %v5139, 0
        %5146 = vmatprep.subr.bf16.mxu0 0
        %5147 = vmatpush1.bf16.msra.mxu0 %v5144
        %5148 = vmatprep.subr.bf16.mxu0 0
        %5149 = vmatpush1.bf16.msra.mxu0 0
        %5150 = vmatprep.subr.bf16.mxu0 0
        %5151 = vmatpush1.bf16.msra.mxu0 0
        %5152 = vmatprep.subr.bf16.mxu0 0
        %5153 = vmatpush1.bf16.msra.mxu0 0
        %5154 = vmatprep.subr.bf16.mxu0 0
        %5155 = vmatpush1.bf16.msra.mxu0 0
        %5156 = vmatprep.subr.bf16.mxu0 0
        %5157 = vmatpush1.bf16.msra.mxu0 0
        %5158 = vmatprep.subr.bf16.mxu0 0
        %5159 = vmatpush1.bf16.msra.mxu0 0
        %5160 = vmatprep.subr.bf16.mxu0 0
        %5161 = vmatpush1.bf16.msra.mxu0 0
        %5162 = vmatprep.subr.bf16.mxu0 0
        %5163 = vmatpush1.bf16.msra.mxu0 0
        %5164 = vmatprep.subr.bf16.mxu0 0
        %5165 = vmatpush1.bf16.msra.mxu0 0
        %5166 = vmatprep.subr.bf16.mxu0 0
        %5167 = vmatpush1.bf16.msra.mxu0 0
        %5168 = vmatprep.subr.bf16.mxu0 0
        %5169 = vmatpush1.bf16.msra.mxu0 0
        %5170 = vmatprep.subr.bf16.mxu0 0
        %5171 = vmatpush1.bf16.msra.mxu0 0
        %5172 = vmatprep.subr.bf16.mxu0 0
        %5173 = vmatpush1.bf16.msra.mxu0 0
        %5174 = vmatprep.subr.bf16.mxu0 0
        %5175 = vmatpush1.bf16.msra.mxu0 0
        %5176 = vmatprep.subr.bf16.mxu0 0
        %5177 = vmatpush1.bf16.msra.mxu0 0
        %5178 = vmatprep.mubr.bf16.mxu0 0
        %5179 = vmatmul.mubr.bf16.gmra.mrb[0].mxu0 %v5141
        %v5180 = vpop.f32.mrb[0].mxu0
        %v5181 = vadd.f32 0.0, %v5180
        %v5182 = vpop.f32.mrb[0].mxu0
        %v5183 = vpop.f32.mrb[0].mxu0
        %v5184 = vpop.f32.mrb[0].mxu0
        %5185 = vdwg.mxu0
        %v5186 = vrot.slane %v4724, 4
        %5187 = vrot.lane.b32.xlu0 %v4730, 64
        %v5188 = vpop.permute.xlu0 %5187
        %v5189 = vrot.slane %v5188, 4
        %v5191 = vsel %vm1061, %v5186, 0
        %v5194 = vsel %vm1061, %v5189, 0
        %5196 = vmatprep.subr.bf16.mxu0 0
        %5197 = vmatpush1.bf16.xpose.msra.mxu0 %v5194
        %5198 = vmatprep.subr.bf16.mxu0 0
        %5199 = vmatpush1.bf16.xpose.msra.mxu0 0
        %5200 = vmatprep.subr.bf16.mxu0 0
        %5201 = vmatpush1.bf16.xpose.msra.mxu0 0
        %5202 = vmatprep.subr.bf16.mxu0 0
        %5203 = vmatpush1.bf16.xpose.msra.mxu0 0
        %5204 = vmatprep.subr.bf16.mxu0 0
        %5205 = vmatpush1.bf16.xpose.msra.mxu0 0
        %5206 = vmatprep.subr.bf16.mxu0 0
        %5207 = vmatpush1.bf16.xpose.msra.mxu0 0
        %5208 = vmatprep.subr.bf16.mxu0 0
        %5209 = vmatpush1.bf16.xpose.msra.mxu0 0
        %5210 = vmatprep.subr.bf16.mxu0 0
        %5211 = vmatpush1.bf16.xpose.msra.mxu0 0
        %5212 = vmatprep.subr.bf16.mxu0 0
        %5213 = vmatpush1.bf16.xpose.msra.mxu0 0
        %5214 = vmatprep.subr.bf16.mxu0 0
        %5215 = vmatpush1.bf16.xpose.msra.mxu0 0
        %5216 = vmatprep.subr.bf16.mxu0 0
        %5217 = vmatpush1.bf16.xpose.msra.mxu0 0
        %5218 = vmatprep.subr.bf16.mxu0 0
        %5219 = vmatpush1.bf16.xpose.msra.mxu0 0
        %5220 = vmatprep.subr.bf16.mxu0 0
        %5221 = vmatpush1.bf16.xpose.msra.mxu0 0
        %5222 = vmatprep.subr.bf16.mxu0 0
        %5223 = vmatpush1.bf16.xpose.msra.mxu0 0
        %5224 = vmatprep.subr.bf16.mxu0 0
        %5225 = vmatpush1.bf16.xpose.msra.mxu0 0
        %5226 = vmatprep.subr.bf16.mxu0 0
        %5227 = vmatpush1.bf16.xpose.msra.mxu0 0
        %5228 = vmatprep.mubr.bf16.mxu0 0
        %5229 = vmatmul.mubr.bf16.gmra.mrb[0].mxu0 %v5191
        %v5230 = vpop.f32.mrb[0].mxu0
        %v5231 = vadd.f32 0.0, %v5230
        %v5232 = vpop.f32.mrb[0].mxu0
        %v5233 = vpop.f32.mrb[0].mxu0
        %v5234 = vpop.f32.mrb[0].mxu0
        %5235 = vdwg.mxu0
        %v5236 = vrot.slane %v4725, 4
        %5237 = vrot.lane.b32.xlu0 %v4731, 64
        %v5238 = vpop.permute.xlu0 %5237
        %v5239 = vrot.slane %v5238, 4
        %v5241 = vsel %vm1061, %v5236, 0
        %v5244 = vsel %vm1061, %v5239, 0
        %5246 = vmatprep.subr.bf16.mxu0 0
        %5247 = vmatpush1.bf16.xpose.msra.mxu0 %v5244
        %5248 = vmatprep.subr.bf16.mxu0 0
        %5249 = vmatpush1.bf16.xpose.msra.mxu0 0
        %5250 = vmatprep.subr.bf16.mxu0 0
        %5251 = vmatpush1.bf16.xpose.msra.mxu0 0
        %5252 = vmatprep.subr.bf16.mxu0 0
        %5253 = vmatpush1.bf16.xpose.msra.mxu0 0
        %5254 = vmatprep.subr.bf16.mxu0 0
        %5255 = vmatpush1.bf16.xpose.msra.mxu0 0
        %5256 = vmatprep.subr.bf16.mxu0 0
        %5257 = vmatpush1.bf16.xpose.msra.mxu0 0
        %5258 = vmatprep.subr.bf16.mxu0 0
        %5259 = vmatpush1.bf16.xpose.msra.mxu0 0
        %5260 = vmatprep.subr.bf16.mxu0 0
        %5261 = vmatpush1.bf16.xpose.msra.mxu0 0
        %5262 = vmatprep.subr.bf16.mxu0 0
        %5263 = vmatpush1.bf16.xpose.msra.mxu0 0
        %5264 = vmatprep.subr.bf16.mxu0 0
        %5265 = vmatpush1.bf16.xpose.msra.mxu0 0
        %5266 = vmatprep.subr.bf16.mxu0 0
        %5267 = vmatpush1.bf16.xpose.msra.mxu0 0
        %5268 = vmatprep.subr.bf16.mxu0 0
        %5269 = vmatpush1.bf16.xpose.msra.mxu0 0
        %5270 = vmatprep.subr.bf16.mxu0 0
        %5271 = vmatpush1.bf16.xpose.msra.mxu0 0
        %5272 = vmatprep.subr.bf16.mxu0 0
        %5273 = vmatpush1.bf16.xpose.msra.mxu0 0
        %5274 = vmatprep.subr.bf16.mxu0 0
        %5275 = vmatpush1.bf16.xpose.msra.mxu0 0
        %5276 = vmatprep.subr.bf16.mxu0 0
        %5277 = vmatpush1.bf16.xpose.msra.mxu0 0
        %5278 = vmatprep.mubr.bf16.mxu0 0
        %5279 = vmatmul.mubr.bf16.gmra.mrb[0].mxu0 %v5241
        %v5280 = vpop.f32.mrb[0].mxu0
        %v5281 = vadd.f32 0.0, %v5280
        %v5282 = vpop.f32.mrb[0].mxu0
        %v5283 = vpop.f32.mrb[0].mxu0
        %v5284 = vpop.f32.mrb[0].mxu0
        %5285 = vdwg.mxu0
        %v5286 = vmul.f32 %v5231, 0.125
        %v5287 = vmul.f32 %v5281, 0.125
        %v5288 = vsel %vm1041, %v5286, -1e+30
        %v5289 = vsel %vm1041, %v5287, -1e+30
        %v5290 = vsel %vm1799, %v5288, -inf
        %5291 = vmax.xlane.f32.xlu0 %v5290
        %v5292 = vpop.xlane.xlu0 %5291
        %v5293 = vsel %vm1799, %v5289, -inf
        %5294 = vmax.xlane.f32.xlu0 %v5293
        %v5295 = vpop.xlane.xlu0 %5294
        %v5296 = vsub.f32 %v5288, %v5292
        %v5297 = vsub.f32 %v5289, %v5295
        %v5298 = vmul.f32 %v5296, 1.442695
        %v5299 = vpow.pop %v5298
        %v5300 = vmul.f32 %v5297, 1.442695
        %v5301 = vpow.pop %v5300
        %v5302 = vsel %vm1799, %v5299, 0.0
        %5303 = vadd.xlane.f32.xlu0 %v5302
        %v5304 = vpop.xlane.xlu0 %5303
        %v5305 = vsel %vm1799, %v5301, 0.0
        %5306 = vadd.xlane.f32.xlu0 %v5305
        %v5307 = vpop.xlane.xlu0 %5306
        %v5308 = vrcp.pop %v5304
        %v5309 = vrcp.pop %v5307
        %v5310 = vmul.f32 %v5299, %v5308
        %v5311 = vmul.f32 %v5301, %v5309
        %v5312 = vpack.c.bf16 %v5310, %v5310
        %v5313 = vpack.c.bf16 %v5311, %v5311
        %v5314 = vrot.slane %v4740, 4
        %v5316 = vsel %vm1799, %v5312, 0
        %v5319 = vsel %vm1827, %v5314, 0
        %5321 = vmatprep.subr.bf16.mxu0 0
        %5322 = vmatpush1.bf16.msra.mxu0 %v5319
        %5323 = vmatprep.subr.bf16.mxu0 0
        %5324 = vmatpush1.bf16.msra.mxu0 0
        %5325 = vmatprep.subr.bf16.mxu0 0
        %5326 = vmatpush1.bf16.msra.mxu0 0
        %5327 = vmatprep.subr.bf16.mxu0 0
        %5328 = vmatpush1.bf16.msra.mxu0 0
        %5329 = vmatprep.subr.bf16.mxu0 0
        %5330 = vmatpush1.bf16.msra.mxu0 0
        %5331 = vmatprep.subr.bf16.mxu0 0
        %5332 = vmatpush1.bf16.msra.mxu0 0
        %5333 = vmatprep.subr.bf16.mxu0 0
        %5334 = vmatpush1.bf16.msra.mxu0 0
        %5335 = vmatprep.subr.bf16.mxu0 0
        %5336 = vmatpush1.bf16.msra.mxu0 0
        %5337 = vmatprep.subr.bf16.mxu0 0
        %5338 = vmatpush1.bf16.msra.mxu0 0
        %5339 = vmatprep.subr.bf16.mxu0 0
        %5340 = vmatpush1.bf16.msra.mxu0 0
        %5341 = vmatprep.subr.bf16.mxu0 0
        %5342 = vmatpush1.bf16.msra.mxu0 0
        %5343 = vmatprep.subr.bf16.mxu0 0
        %5344 = vmatpush1.bf16.msra.mxu0 0
        %5345 = vmatprep.subr.bf16.mxu0 0
        %5346 = vmatpush1.bf16.msra.mxu0 0
        %5347 = vmatprep.subr.bf16.mxu0 0
        %5348 = vmatpush1.bf16.msra.mxu0 0
        %5349 = vmatprep.subr.bf16.mxu0 0
        %5350 = vmatpush1.bf16.msra.mxu0 0
        %5351 = vmatprep.subr.bf16.mxu0 0
        %5352 = vmatpush1.bf16.msra.mxu0 0
        %5353 = vmatprep.mubr.bf16.mxu0 0
        %5354 = vmatmul.mubr.bf16.gmra.mrb[0].mxu0 %v5316
        %v5355 = vpop.f32.mrb[0].mxu0
        %v5356 = vadd.f32 0.0, %v5355
        %v5357 = vpop.f32.mrb[0].mxu0
        %v5358 = vpop.f32.mrb[0].mxu0
        %v5359 = vpop.f32.mrb[0].mxu0
        %5360 = vdwg.mxu0
        %v5361 = vrot.slane %v4741, 4
        %v5363 = vsel %vm1799, %v5313, 0
        %v5366 = vsel %vm1827, %v5361, 0
        %5368 = vmatprep.subr.bf16.mxu0 0
        %5369 = vmatpush1.bf16.msra.mxu0 %v5366
        %5370 = vmatprep.subr.bf16.mxu0 0
        %5371 = vmatpush1.bf16.msra.mxu0 0
        %5372 = vmatprep.subr.bf16.mxu0 0
        %5373 = vmatpush1.bf16.msra.mxu0 0
        %5374 = vmatprep.subr.bf16.mxu0 0
        %5375 = vmatpush1.bf16.msra.mxu0 0
        %5376 = vmatprep.subr.bf16.mxu0 0
        %5377 = vmatpush1.bf16.msra.mxu0 0
        %5378 = vmatprep.subr.bf16.mxu0 0
        %5379 = vmatpush1.bf16.msra.mxu0 0
        %5380 = vmatprep.subr.bf16.mxu0 0
        %5381 = vmatpush1.bf16.msra.mxu0 0
        %5382 = vmatprep.subr.bf16.mxu0 0
        %5383 = vmatpush1.bf16.msra.mxu0 0
        %5384 = vmatprep.subr.bf16.mxu0 0
        %5385 = vmatpush1.bf16.msra.mxu0 0
        %5386 = vmatprep.subr.bf16.mxu0 0
        %5387 = vmatpush1.bf16.msra.mxu0 0
        %5388 = vmatprep.subr.bf16.mxu0 0
        %5389 = vmatpush1.bf16.msra.mxu0 0
        %5390 = vmatprep.subr.bf16.mxu0 0
        %5391 = vmatpush1.bf16.msra.mxu0 0
        %5392 = vmatprep.subr.bf16.mxu0 0
        %5393 = vmatpush1.bf16.msra.mxu0 0
        %5394 = vmatprep.subr.bf16.mxu0 0
        %5395 = vmatpush1.bf16.msra.mxu0 0
        %5396 = vmatprep.subr.bf16.mxu0 0
        %5397 = vmatpush1.bf16.msra.mxu0 0
        %5398 = vmatprep.subr.bf16.mxu0 0
        %5399 = vmatpush1.bf16.msra.mxu0 0
        %5400 = vmatprep.mubr.bf16.mxu0 0
        %5401 = vmatmul.mubr.bf16.gmra.mrb[0].mxu0 %v5363
        %v5402 = vpop.f32.mrb[0].mxu0
        %v5403 = vadd.f32 0.0, %v5402
        %v5404 = vpop.f32.mrb[0].mxu0
        %v5405 = vpop.f32.mrb[0].mxu0
        %v5406 = vpop.f32.mrb[0].mxu0
        %5407 = vdwg.mxu0
        %5410 = vrot.lane.b32.xlu0 %v5132, 64
        %v5411 = vpop.permute.xlu0 %5410
        %5412 = vrot.lane.b32.xlu0 %v5181, 64
        %v5413 = vpop.permute.xlu0 %5412
        %v5416 = vsel %vm1061, %v4909, %v5411
        %v5417 = vsel %vm1061, %v4955, %v5413
        %v5418 = vpack.c.bf16 %v5417, %v5416
        %v5419 = vpack.c.bf16 %v5403, %v5356
        %s5420 = scalar_lea.vmem %s536, 192
        %v5421 = vld [vmem:[%s5420] sm:$0xff]
        %v5422 = vld [vmem:[%s5420 + $0x8] sm:$0xff]
        %v5423 = vld [vmem:[%s5420 + $0x10] sm:$0xff]
        %v5424 = vld [vmem:[%s5420 + $0x18] sm:$0xff]
        %v5425 = vld [vmem:[%s5420 + $0x20] sm:$0xff]
        %v5426 = vld [vmem:[%s5420 + $0x28] sm:$0xff]
        %v5427 = vld [vmem:[%s5420 + $0x30] sm:$0xff]
        %v5428 = vld [vmem:[%s5420 + $0x38] sm:$0xff]
        %v5429 = vld [vmem:[%s5420 + $0x40] sm:$0xff]
        %v5430 = vld [vmem:[%s5420 + $0x48] sm:$0xff]
        %v5431 = vld [vmem:[%s5420 + $0x50] sm:$0xff]
        %v5432 = vld [vmem:[%s5420 + $0x58] sm:$0xff]
        %v5433 = vld [vmem:[%s5420 + $0x60] sm:$0xff]
        %v5434 = vld [vmem:[%s5420 + $0x68] sm:$0xff]
        %v5435 = vld [vmem:[%s5420 + $0x70] sm:$0xff]
        %v5436 = vld [vmem:[%s5420 + $0x78] sm:$0xff]
        %v5437 = vld [vmem:[%s5420 + $0x80] sm:$0xff]
        %v5438 = vld [vmem:[%s5420 + $0x88] sm:$0xff]
        %v5439 = vld [vmem:[%s5420 + $0x90] sm:$0xff]
        %v5440 = vld [vmem:[%s5420 + $0x98] sm:$0xff]
        %v5441 = vld [vmem:[%s5420 + $0xa0] sm:$0xff]
        %v5442 = vld [vmem:[%s5420 + $0xa8] sm:$0xff]
        %v5443 = vld [vmem:[%s5420 + $0xb0] sm:$0xff]
        %v5444 = vld [vmem:[%s5420 + $0xb8] sm:$0xff]
        %v5469 = vunpack.c.l.b16 %v5421
        %v5470 = vunpack.c.h.b16 %v5421
        %v5471 = vunpack.c.l.b16 %v5422
        %v5472 = vunpack.c.h.b16 %v5422
        %v5473 = vunpack.c.l.b16 %v5423
        %v5474 = vunpack.c.h.b16 %v5423
        %v5475 = vunpack.c.l.b16 %v5424
        %v5476 = vunpack.c.h.b16 %v5424
        %v5477 = vunpack.c.l.b16 %v5425
        %v5478 = vunpack.c.h.b16 %v5425
        %v5479 = vunpack.c.l.b16 %v5426
        %v5480 = vunpack.c.h.b16 %v5426
        %v5481 = vunpack.c.l.b16 %v5427
        %v5482 = vunpack.c.h.b16 %v5427
        %v5483 = vunpack.c.l.b16 %v5428
        %v5484 = vunpack.c.h.b16 %v5428
        %v5485 = vunpack.c.l.b16 %v5429
        %v5486 = vunpack.c.h.b16 %v5429
        %v5487 = vunpack.c.l.b16 %v5430
        %v5488 = vunpack.c.h.b16 %v5430
        %v5489 = vunpack.c.l.b16 %v5431
        %v5490 = vunpack.c.h.b16 %v5431
        %v5491 = vunpack.c.l.b16 %v5432
        %v5492 = vunpack.c.h.b16 %v5432
        %v5493 = vunpack.c.l.b16 %v5433
        %v5494 = vunpack.c.h.b16 %v5433
        %v5495 = vunpack.c.l.b16 %v5434
        %v5496 = vunpack.c.h.b16 %v5434
        %v5497 = vunpack.c.l.b16 %v5435
        %v5498 = vunpack.c.h.b16 %v5435
        %v5499 = vunpack.c.l.b16 %v5436
        %v5500 = vunpack.c.h.b16 %v5436
        %v5501 = vunpack.c.l.b16 %v5437
        %v5502 = vunpack.c.h.b16 %v5437
        %v5503 = vunpack.c.l.b16 %v5438
        %v5504 = vunpack.c.h.b16 %v5438
        %v5505 = vunpack.c.l.b16 %v5439
        %v5506 = vunpack.c.h.b16 %v5439
        %v5507 = vunpack.c.l.b16 %v5440
        %v5508 = vunpack.c.h.b16 %v5440
        %v5509 = vunpack.c.l.b16 %v5441
        %v5510 = vunpack.c.h.b16 %v5441
        %v5511 = vunpack.c.l.b16 %v5442
        %v5512 = vunpack.c.h.b16 %v5442
        %v5513 = vunpack.c.l.b16 %v5443
        %v5514 = vunpack.c.h.b16 %v5443
        %v5515 = vunpack.c.l.b16 %v5444
        %v5516 = vunpack.c.h.b16 %v5444
        %v5517 = vpack.c.b16 %v5471, %v5469
        %v5518 = vpack.c.b16 %v5472, %v5470
        %v5519 = vpack.c.b16 %v5475, %v5473
        %v5520 = vpack.c.b16 %v5476, %v5474
        %v5521 = vpack.c.b16 %v5479, %v5477
        %v5522 = vpack.c.b16 %v5480, %v5478
        %v5523 = vpack.c.b16 %v5483, %v5481
        %v5524 = vpack.c.b16 %v5484, %v5482
        %v5525 = vpack.c.b16 %v5487, %v5485
        %v5526 = vpack.c.b16 %v5488, %v5486
        %v5527 = vpack.c.b16 %v5491, %v5489
        %v5528 = vpack.c.b16 %v5492, %v5490
        %v5529 = vpack.c.b16 %v5495, %v5493
        %v5530 = vpack.c.b16 %v5496, %v5494
        %v5531 = vpack.c.b16 %v5499, %v5497
        %v5532 = vpack.c.b16 %v5500, %v5498
        %v5533 = vpack.c.b16 %v5503, %v5501
        %v5534 = vpack.c.b16 %v5504, %v5502
        %v5535 = vpack.c.b16 %v5507, %v5505
        %v5536 = vpack.c.b16 %v5508, %v5506
        %v5537 = vpack.c.b16 %v5511, %v5509
        %v5538 = vpack.c.b16 %v5512, %v5510
        %v5539 = vpack.c.b16 %v5515, %v5513
        %v5540 = vpack.c.b16 %v5516, %v5514
        %v5566 = vsel %vm1061, %v5419, 0
        %5568 = vmatprep.subr.bf16.mxu0 %v5518
        %5569 = vmatpush1.bf16.msra.mxu0 %v5517
        %5570 = vmatprep.subr.bf16.mxu0 %v5520
        %5571 = vmatpush1.bf16.msra.mxu0 %v5519
        %5572 = vmatprep.subr.bf16.mxu0 %v5522
        %5573 = vmatpush1.bf16.msra.mxu0 %v5521
        %5574 = vmatprep.subr.bf16.mxu0 %v5524
        %5575 = vmatpush1.bf16.msra.mxu0 %v5523
        %5576 = vmatprep.subr.bf16.mxu0 %v5526
        %5577 = vmatpush1.bf16.msra.mxu0 %v5525
        %5578 = vmatprep.subr.bf16.mxu0 %v5528
        %5579 = vmatpush1.bf16.msra.mxu0 %v5527
        %5580 = vmatprep.subr.bf16.mxu0 %v5530
        %5581 = vmatpush1.bf16.msra.mxu0 %v5529
        %5582 = vmatprep.subr.bf16.mxu0 %v5532
        %5583 = vmatpush1.bf16.msra.mxu0 %v5531
        %5584 = vmatprep.subr.bf16.mxu0 %v5534
        %5585 = vmatpush1.bf16.msra.mxu0 %v5533
        %5586 = vmatprep.subr.bf16.mxu0 %v5536
        %5587 = vmatpush1.bf16.msra.mxu0 %v5535
        %5588 = vmatprep.subr.bf16.mxu0 %v5538
        %5589 = vmatpush1.bf16.msra.mxu0 %v5537
        %5590 = vmatprep.subr.bf16.mxu0 %v5540
        %5591 = vmatpush1.bf16.msra.mxu0 %v5539
        %5592 = vmatprep.subr.bf16.mxu0 0
        %5593 = vmatpush1.bf16.msra.mxu0 0
        %5594 = vmatprep.subr.bf16.mxu0 0
        %5595 = vmatpush1.bf16.msra.mxu0 0
        %5596 = vmatprep.subr.bf16.mxu0 0
        %5597 = vmatpush1.bf16.msra.mxu0 0
        %5598 = vmatprep.subr.bf16.mxu0 0
        %5599 = vmatpush1.bf16.msra.mxu0 0
        %5600 = vmatprep.mubr.bf16.mxu0 %v5566
        %5601 = vmatmul.mubr.bf16.gmra.mrb[0].mxu0 %v5418
        %v5602 = vpop.f32.mrb[0].mxu0
        %v5603 = vadd.f32 0.0, %v5602
        %v5604 = vpop.f32.mrb[0].mxu0
        %v5605 = vadd.f32 0.0, %v5604
        %v5606 = vpop.f32.mrb[0].mxu0
        %v5607 = vadd.f32 0.0, %v5606
        %v5608 = vpop.f32.mrb[0].mxu0
        %v5609 = vadd.f32 0.0, %v5608
        %5610 = vdwg.mxu0
        %v5611 = vadd.f32 %v4083, %v5603
        %v5612 = vadd.f32 %v4084, %v5605
        %v5613 = vadd.f32 %v4085, %v5607
        %v5614 = vadd.f32 %v4086, %v5609
        %v5616 = vlaneseq
        %v5617 = vshrl.u32 %v5616, 7
        %v5618 = vsub.s32 0, %v5617
        %v5619 = vrot.slane %v4096, %v5618
        %v5620 = vlaneseq
        %v5621 = vshrl.u32 %v5620, 7
        %v5622 = vsub.s32 1, %v5621
        %v5623 = vrot.slane %v4096, %v5622
        %v5626 = vadd.f32 %v5611, %v5619
        %v5627 = vadd.f32 %v5612, %v5623
        %v5628 = vadd.f32 %v5613, %v5619
        %v5629 = vadd.f32 %v5614, %v5623
        %v5630 = vsel %vm1061, %v5627, 0.0
        %v5631 = vadd.f32 %v5626, %v5630
        %5632 = vadd.xlane.f32.xlu0 %v5631
        %v5633 = vpop.xlane.xlu0 %5632
        %v5634 = vsel %vm1061, %v5629, 0.0
        %v5635 = vadd.f32 %v5628, %v5634
        %5636 = vadd.xlane.f32.xlu0 %v5635
        %v5637 = vpop.xlane.xlu0 %5636
        %v5638 = vmul.f32 %v5633, %v1070
        %v5639 = vmul.f32 %v5637, %v1070
        %v5640 = vsub.f32 %v5626, %v5638
        %v5641 = vsub.f32 %v5627, %v5638
        %v5642 = vsub.f32 %v5628, %v5639
        %v5643 = vsub.f32 %v5629, %v5639
        %v5644 = vmul.f32 %v5640, %v5640
        %v5645 = vmul.f32 %v5641, %v5641
        %v5646 = vmul.f32 %v5642, %v5642
        %v5647 = vmul.f32 %v5643, %v5643
        %v5648 = vsel %vm1061, %v5645, 0.0
        %v5649 = vadd.f32 %v5644, %v5648
        %5650 = vadd.xlane.f32.xlu0 %v5649
        %v5651 = vpop.xlane.xlu0 %5650
        %v5652 = vsel %vm1061, %v5647, 0.0
        %v5653 = vadd.f32 %v5646, %v5652
        %5654 = vadd.xlane.f32.xlu0 %v5653
        %v5655 = vpop.xlane.xlu0 %5654
        %v5656 = vmul.f32 %v5651, %v1070
        %v5657 = vmul.f32 %v5655, %v1070
        %v5658 = vadd.f32 %v5656, 1e-06
        %v5659 = vadd.f32 %v5657, 1e-06
        %v5660 = vrsqrt.pop %v5658
        %v5661 = vrsqrt.pop %v5659
        %v5662 = vmul.f32 %v5640, %v5660
        %v5663 = vmul.f32 %v5641, %v5660
        %v5664 = vmul.f32 %v5642, %v5661
        %v5665 = vmul.f32 %v5643, %v5661
        %v5667 = vlaneseq
        %v5668 = vshrl.u32 %v5667, 7
        %v5669 = vsub.s32 0, %v5668
        %v5670 = vrot.slane %v4098, %v5669
        %v5671 = vlaneseq
        %v5672 = vshrl.u32 %v5671, 7
        %v5673 = vsub.s32 1, %v5672
        %v5674 = vrot.slane %v4098, %v5673
        %v5677 = vmul.f32 %v5662, %v5670
        %v5678 = vmul.f32 %v5663, %v5674
        %v5679 = vmul.f32 %v5664, %v5670
        %v5680 = vmul.f32 %v5665, %v5674
        %v5682 = vlaneseq
        %v5683 = vshrl.u32 %v5682, 7
        %v5684 = vsub.s32 0, %v5683
        %v5685 = vrot.slane %v4100, %v5684
        %v5686 = vlaneseq
        %v5687 = vshrl.u32 %v5686, 7
        %v5688 = vsub.s32 1, %v5687
        %v5689 = vrot.slane %v4100, %v5688
        %v5692 = vadd.f32 %v5677, %v5685
        %v5693 = vadd.f32 %v5678, %v5689
        %v5694 = vadd.f32 %v5679, %v5685
        %v5695 = vadd.f32 %v5680, %v5689
        %v5696 = vpack.c.bf16 %v5694, %v5692
        %v5697 = vpack.c.bf16 %v5695, %v5693
        %s5698 = scalar_lea.vmem %s543, 576
        %v5699 = vld [vmem:[%s5698] sm:$0xff]
        %v5700 = vld [vmem:[%s5698 + $0x8] sm:$0xff]
        %v5701 = vld [vmem:[%s5698 + $0x10] sm:$0xff]
        %v5702 = vld [vmem:[%s5698 + $0x18] sm:$0xff]
        %v5703 = vld [vmem:[%s5698 + $0x20] sm:$0xff]
        %v5704 = vld [vmem:[%s5698 + $0x28] sm:$0xff]
        %v5705 = vld [vmem:[%s5698 + $0x30] sm:$0xff]
        %v5706 = vld [vmem:[%s5698 + $0x38] sm:$0xff]
        %v5707 = vld [vmem:[%s5698 + $0x40] sm:$0xff]
        %v5708 = vld [vmem:[%s5698 + $0x48] sm:$0xff]
        %v5709 = vld [vmem:[%s5698 + $0x50] sm:$0xff]
        %v5710 = vld [vmem:[%s5698 + $0x58] sm:$0xff]
        %v5711 = vld [vmem:[%s5698 + $0x60] sm:$0xff]
        %v5712 = vld [vmem:[%s5698 + $0x68] sm:$0xff]
        %v5713 = vld [vmem:[%s5698 + $0x70] sm:$0xff]
        %v5714 = vld [vmem:[%s5698 + $0x78] sm:$0xff]
        %v5715 = vld [vmem:[%s5698 + $0x80] sm:$0xff]
        %v5716 = vld [vmem:[%s5698 + $0x88] sm:$0xff]
        %v5717 = vld [vmem:[%s5698 + $0x90] sm:$0xff]
        %v5718 = vld [vmem:[%s5698 + $0x98] sm:$0xff]
        %v5719 = vld [vmem:[%s5698 + $0xa0] sm:$0xff]
        %v5720 = vld [vmem:[%s5698 + $0xa8] sm:$0xff]
        %v5721 = vld [vmem:[%s5698 + $0xb0] sm:$0xff]
        %v5722 = vld [vmem:[%s5698 + $0xb8] sm:$0xff]
        %v5723 = vld [vmem:[%s5698 + $0xc0] sm:$0xff]
        %v5724 = vld [vmem:[%s5698 + $0xc8] sm:$0xff]
        %v5725 = vld [vmem:[%s5698 + $0xd0] sm:$0xff]
        %v5726 = vld [vmem:[%s5698 + $0xd8] sm:$0xff]
        %v5727 = vld [vmem:[%s5698 + $0xe0] sm:$0xff]
        %v5728 = vld [vmem:[%s5698 + $0xe8] sm:$0xff]
        %v5729 = vld [vmem:[%s5698 + $0xf0] sm:$0xff]
        %v5730 = vld [vmem:[%s5698 + $0xf8] sm:$0xff]
        %v5731 = vld [vmem:[%s5698 + $0x100] sm:$0xff]
        %v5732 = vld [vmem:[%s5698 + $0x108] sm:$0xff]
        %v5733 = vld [vmem:[%s5698 + $0x110] sm:$0xff]
        %v5734 = vld [vmem:[%s5698 + $0x118] sm:$0xff]
        %v5735 = vld [vmem:[%s5698 + $0x120] sm:$0xff]
        %v5736 = vld [vmem:[%s5698 + $0x128] sm:$0xff]
        %v5737 = vld [vmem:[%s5698 + $0x130] sm:$0xff]
        %v5738 = vld [vmem:[%s5698 + $0x138] sm:$0xff]
        %v5739 = vld [vmem:[%s5698 + $0x140] sm:$0xff]
        %v5740 = vld [vmem:[%s5698 + $0x148] sm:$0xff]
        %v5741 = vld [vmem:[%s5698 + $0x150] sm:$0xff]
        %v5742 = vld [vmem:[%s5698 + $0x158] sm:$0xff]
        %v5743 = vld [vmem:[%s5698 + $0x160] sm:$0xff]
        %v5744 = vld [vmem:[%s5698 + $0x168] sm:$0xff]
        %v5745 = vld [vmem:[%s5698 + $0x170] sm:$0xff]
        %v5746 = vld [vmem:[%s5698 + $0x178] sm:$0xff]
        %v5747 = vld [vmem:[%s5698 + $0x180] sm:$0xff]
        %v5748 = vld [vmem:[%s5698 + $0x188] sm:$0xff]
        %v5749 = vld [vmem:[%s5698 + $0x190] sm:$0xff]
        %v5750 = vld [vmem:[%s5698 + $0x198] sm:$0xff]
        %v5751 = vld [vmem:[%s5698 + $0x1a0] sm:$0xff]
        %v5752 = vld [vmem:[%s5698 + $0x1a8] sm:$0xff]
        %v5753 = vld [vmem:[%s5698 + $0x1b0] sm:$0xff]
        %v5754 = vld [vmem:[%s5698 + $0x1b8] sm:$0xff]
        %v5755 = vld [vmem:[%s5698 + $0x1c0] sm:$0xff]
        %v5756 = vld [vmem:[%s5698 + $0x1c8] sm:$0xff]
        %v5757 = vld [vmem:[%s5698 + $0x1d0] sm:$0xff]
        %v5758 = vld [vmem:[%s5698 + $0x1d8] sm:$0xff]
        %v5759 = vld [vmem:[%s5698 + $0x1e0] sm:$0xff]
        %v5760 = vld [vmem:[%s5698 + $0x1e8] sm:$0xff]
        %v5761 = vld [vmem:[%s5698 + $0x1f0] sm:$0xff]
        %v5762 = vld [vmem:[%s5698 + $0x1f8] sm:$0xff]
        %v5763 = vld [vmem:[%s5698 + $0x200] sm:$0xff]
        %v5764 = vld [vmem:[%s5698 + $0x208] sm:$0xff]
        %v5765 = vld [vmem:[%s5698 + $0x210] sm:$0xff]
        %v5766 = vld [vmem:[%s5698 + $0x218] sm:$0xff]
        %v5767 = vld [vmem:[%s5698 + $0x220] sm:$0xff]
        %v5768 = vld [vmem:[%s5698 + $0x228] sm:$0xff]
        %v5769 = vld [vmem:[%s5698 + $0x230] sm:$0xff]
        %v5770 = vld [vmem:[%s5698 + $0x238] sm:$0xff]
        %v5772 = vlaneseq
        %v5773 = vshrl.u32 %v5772, 7
        %v5774 = vsub.s32 0, %v5773
        %v5775 = vrot.slane %v4104, %v5774
        %v5776 = vlaneseq
        %v5777 = vshrl.u32 %v5776, 7
        %v5778 = vsub.s32 1, %v5777
        %v5779 = vrot.slane %v4104, %v5778
        %v5780 = vlaneseq
        %v5781 = vshrl.u32 %v5780, 7
        %v5782 = vsub.s32 2, %v5781
        %v5783 = vrot.slane %v4104, %v5782
        %v5784 = vlaneseq
        %v5785 = vshrl.u32 %v5784, 7
        %v5786 = vsub.s32 3, %v5785
        %v5787 = vrot.slane %v4104, %v5786
        %v5788 = vlaneseq
        %v5789 = vshrl.u32 %v5788, 7
        %v5790 = vsub.s32 4, %v5789
        %v5791 = vrot.slane %v4104, %v5790
        %v5792 = vlaneseq
        %v5793 = vshrl.u32 %v5792, 7
        %v5794 = vsub.s32 5, %v5793
        %v5795 = vrot.slane %v4104, %v5794
        %v5874 = vunpack.c.l.b16 %v5699
        %v5875 = vunpack.c.h.b16 %v5699
        %v5876 = vunpack.c.l.b16 %v5700
        %v5877 = vunpack.c.h.b16 %v5700
        %v5878 = vunpack.c.l.b16 %v5701
        %v5879 = vunpack.c.h.b16 %v5701
        %v5880 = vunpack.c.l.b16 %v5702
        %v5881 = vunpack.c.h.b16 %v5702
        %v5882 = vunpack.c.l.b16 %v5703
        %v5883 = vunpack.c.h.b16 %v5703
        %v5884 = vunpack.c.l.b16 %v5704
        %v5885 = vunpack.c.h.b16 %v5704
        %v5886 = vunpack.c.l.b16 %v5705
        %v5887 = vunpack.c.h.b16 %v5705
        %v5888 = vunpack.c.l.b16 %v5706
        %v5889 = vunpack.c.h.b16 %v5706
        %v5890 = vunpack.c.l.b16 %v5707
        %v5891 = vunpack.c.h.b16 %v5707
        %v5892 = vunpack.c.l.b16 %v5708
        %v5893 = vunpack.c.h.b16 %v5708
        %v5894 = vunpack.c.l.b16 %v5709
        %v5895 = vunpack.c.h.b16 %v5709
        %v5896 = vunpack.c.l.b16 %v5710
        %v5897 = vunpack.c.h.b16 %v5710
        %v5898 = vunpack.c.l.b16 %v5711
        %v5899 = vunpack.c.h.b16 %v5711
        %v5900 = vunpack.c.l.b16 %v5712
        %v5901 = vunpack.c.h.b16 %v5712
        %v5902 = vunpack.c.l.b16 %v5713
        %v5903 = vunpack.c.h.b16 %v5713
        %v5904 = vunpack.c.l.b16 %v5714
        %v5905 = vunpack.c.h.b16 %v5714
        %v5906 = vunpack.c.l.b16 %v5715
        %v5907 = vunpack.c.h.b16 %v5715
        %v5908 = vunpack.c.l.b16 %v5716
        %v5909 = vunpack.c.h.b16 %v5716
        %v5910 = vunpack.c.l.b16 %v5717
        %v5911 = vunpack.c.h.b16 %v5717
        %v5912 = vunpack.c.l.b16 %v5718
        %v5913 = vunpack.c.h.b16 %v5718
        %v5914 = vunpack.c.l.b16 %v5719
        %v5915 = vunpack.c.h.b16 %v5719
        %v5916 = vunpack.c.l.b16 %v5720
        %v5917 = vunpack.c.h.b16 %v5720
        %v5918 = vunpack.c.l.b16 %v5721
        %v5919 = vunpack.c.h.b16 %v5721
        %v5920 = vunpack.c.l.b16 %v5722
        %v5921 = vunpack.c.h.b16 %v5722
        %v5922 = vunpack.c.l.b16 %v5723
        %v5923 = vunpack.c.h.b16 %v5723
        %v5924 = vunpack.c.l.b16 %v5724
        %v5925 = vunpack.c.h.b16 %v5724
        %v5926 = vunpack.c.l.b16 %v5725
        %v5927 = vunpack.c.h.b16 %v5725
        %v5928 = vunpack.c.l.b16 %v5726
        %v5929 = vunpack.c.h.b16 %v5726
        %v5930 = vunpack.c.l.b16 %v5727
        %v5931 = vunpack.c.h.b16 %v5727
        %v5932 = vunpack.c.l.b16 %v5728
        %v5933 = vunpack.c.h.b16 %v5728
        %v5934 = vunpack.c.l.b16 %v5729
        %v5935 = vunpack.c.h.b16 %v5729
        %v5936 = vunpack.c.l.b16 %v5730
        %v5937 = vunpack.c.h.b16 %v5730
        %v5938 = vunpack.c.l.b16 %v5731
        %v5939 = vunpack.c.h.b16 %v5731
        %v5940 = vunpack.c.l.b16 %v5732
        %v5941 = vunpack.c.h.b16 %v5732
        %v5942 = vunpack.c.l.b16 %v5733
        %v5943 = vunpack.c.h.b16 %v5733
        %v5944 = vunpack.c.l.b16 %v5734
        %v5945 = vunpack.c.h.b16 %v5734
        %v5946 = vunpack.c.l.b16 %v5735
        %v5947 = vunpack.c.h.b16 %v5735
        %v5948 = vunpack.c.l.b16 %v5736
        %v5949 = vunpack.c.h.b16 %v5736
        %v5950 = vunpack.c.l.b16 %v5737
        %v5951 = vunpack.c.h.b16 %v5737
        %v5952 = vunpack.c.l.b16 %v5738
        %v5953 = vunpack.c.h.b16 %v5738
        %v5954 = vunpack.c.l.b16 %v5739
        %v5955 = vunpack.c.h.b16 %v5739
        %v5956 = vunpack.c.l.b16 %v5740
        %v5957 = vunpack.c.h.b16 %v5740
        %v5958 = vunpack.c.l.b16 %v5741
        %v5959 = vunpack.c.h.b16 %v5741
        %v5960 = vunpack.c.l.b16 %v5742
        %v5961 = vunpack.c.h.b16 %v5742
        %v5962 = vunpack.c.l.b16 %v5743
        %v5963 = vunpack.c.h.b16 %v5743
        %v5964 = vunpack.c.l.b16 %v5744
        %v5965 = vunpack.c.h.b16 %v5744
        %v5966 = vunpack.c.l.b16 %v5745
        %v5967 = vunpack.c.h.b16 %v5745
        %v5968 = vunpack.c.l.b16 %v5746
        %v5969 = vunpack.c.h.b16 %v5746
        %v5970 = vunpack.c.l.b16 %v5747
        %v5971 = vunpack.c.h.b16 %v5747
        %v5972 = vunpack.c.l.b16 %v5748
        %v5973 = vunpack.c.h.b16 %v5748
        %v5974 = vunpack.c.l.b16 %v5749
        %v5975 = vunpack.c.h.b16 %v5749
        %v5976 = vunpack.c.l.b16 %v5750
        %v5977 = vunpack.c.h.b16 %v5750
        %v5978 = vunpack.c.l.b16 %v5751
        %v5979 = vunpack.c.h.b16 %v5751
        %v5980 = vunpack.c.l.b16 %v5752
        %v5981 = vunpack.c.h.b16 %v5752
        %v5982 = vunpack.c.l.b16 %v5753
        %v5983 = vunpack.c.h.b16 %v5753
        %v5984 = vunpack.c.l.b16 %v5754
        %v5985 = vunpack.c.h.b16 %v5754
        %v5986 = vunpack.c.l.b16 %v5755
        %v5987 = vunpack.c.h.b16 %v5755
        %v5988 = vunpack.c.l.b16 %v5756
        %v5989 = vunpack.c.h.b16 %v5756
        %v5990 = vunpack.c.l.b16 %v5757
        %v5991 = vunpack.c.h.b16 %v5757
        %v5992 = vunpack.c.l.b16 %v5758
        %v5993 = vunpack.c.h.b16 %v5758
        %v5994 = vunpack.c.l.b16 %v5759
        %v5995 = vunpack.c.h.b16 %v5759
        %v5996 = vunpack.c.l.b16 %v5760
        %v5997 = vunpack.c.h.b16 %v5760
        %v5998 = vunpack.c.l.b16 %v5761
        %v5999 = vunpack.c.h.b16 %v5761
        %v6000 = vunpack.c.l.b16 %v5762
        %v6001 = vunpack.c.h.b16 %v5762
        %v6002 = vunpack.c.l.b16 %v5763
        %v6003 = vunpack.c.h.b16 %v5763
        %v6004 = vunpack.c.l.b16 %v5764
        %v6005 = vunpack.c.h.b16 %v5764
        %v6006 = vunpack.c.l.b16 %v5765
        %v6007 = vunpack.c.h.b16 %v5765
        %v6008 = vunpack.c.l.b16 %v5766
        %v6009 = vunpack.c.h.b16 %v5766
        %v6010 = vunpack.c.l.b16 %v5767
        %v6011 = vunpack.c.h.b16 %v5767
        %v6012 = vunpack.c.l.b16 %v5768
        %v6013 = vunpack.c.h.b16 %v5768
        %v6014 = vunpack.c.l.b16 %v5769
        %v6015 = vunpack.c.h.b16 %v5769
        %v6016 = vunpack.c.l.b16 %v5770
        %v6017 = vunpack.c.h.b16 %v5770
        %v6018 = vpack.c.b16 %v5880, %v5874
        %v6019 = vpack.c.b16 %v5881, %v5875
        %v6020 = vpack.c.b16 %v5882, %v5876
        %v6021 = vpack.c.b16 %v5883, %v5877
        %v6022 = vpack.c.b16 %v5884, %v5878
        %v6023 = vpack.c.b16 %v5885, %v5879
        %v6024 = vpack.c.b16 %v5892, %v5886
        %v6025 = vpack.c.b16 %v5893, %v5887
        %v6026 = vpack.c.b16 %v5894, %v5888
        %v6027 = vpack.c.b16 %v5895, %v5889
        %v6028 = vpack.c.b16 %v5896, %v5890
        %v6029 = vpack.c.b16 %v5897, %v5891
        %v6030 = vpack.c.b16 %v5904, %v5898
        %v6031 = vpack.c.b16 %v5905, %v5899
        %v6032 = vpack.c.b16 %v5906, %v5900
        %v6033 = vpack.c.b16 %v5907, %v5901
        %v6034 = vpack.c.b16 %v5908, %v5902
        %v6035 = vpack.c.b16 %v5909, %v5903
        %v6036 = vpack.c.b16 %v5916, %v5910
        %v6037 = vpack.c.b16 %v5917, %v5911
        %v6038 = vpack.c.b16 %v5918, %v5912
        %v6039 = vpack.c.b16 %v5919, %v5913
        %v6040 = vpack.c.b16 %v5920, %v5914
        %v6041 = vpack.c.b16 %v5921, %v5915
        %v6042 = vpack.c.b16 %v5928, %v5922
        %v6043 = vpack.c.b16 %v5929, %v5923
        %v6044 = vpack.c.b16 %v5930, %v5924
        %v6045 = vpack.c.b16 %v5931, %v5925
        %v6046 = vpack.c.b16 %v5932, %v5926
        %v6047 = vpack.c.b16 %v5933, %v5927
        %v6048 = vpack.c.b16 %v5940, %v5934
        %v6049 = vpack.c.b16 %v5941, %v5935
        %v6050 = vpack.c.b16 %v5942, %v5936
        %v6051 = vpack.c.b16 %v5943, %v5937
        %v6052 = vpack.c.b16 %v5944, %v5938
        %v6053 = vpack.c.b16 %v5945, %v5939
        %v6054 = vpack.c.b16 %v5952, %v5946
        %v6055 = vpack.c.b16 %v5953, %v5947
        %v6056 = vpack.c.b16 %v5954, %v5948
        %v6057 = vpack.c.b16 %v5955, %v5949
        %v6058 = vpack.c.b16 %v5956, %v5950
        %v6059 = vpack.c.b16 %v5957, %v5951
        %v6060 = vpack.c.b16 %v5964, %v5958
        %v6061 = vpack.c.b16 %v5965, %v5959
        %v6062 = vpack.c.b16 %v5966, %v5960
        %v6063 = vpack.c.b16 %v5967, %v5961
        %v6064 = vpack.c.b16 %v5968, %v5962
        %v6065 = vpack.c.b16 %v5969, %v5963
        %v6066 = vpack.c.b16 %v5976, %v5970
        %v6067 = vpack.c.b16 %v5977, %v5971
        %v6068 = vpack.c.b16 %v5978, %v5972
        %v6069 = vpack.c.b16 %v5979, %v5973
        %v6070 = vpack.c.b16 %v5980, %v5974
        %v6071 = vpack.c.b16 %v5981, %v5975
        %v6072 = vpack.c.b16 %v5988, %v5982
        %v6073 = vpack.c.b16 %v5989, %v5983
        %v6074 = vpack.c.b16 %v5990, %v5984
        %v6075 = vpack.c.b16 %v5991, %v5985
        %v6076 = vpack.c.b16 %v5992, %v5986
        %v6077 = vpack.c.b16 %v5993, %v5987
        %v6078 = vpack.c.b16 %v6000, %v5994
        %v6079 = vpack.c.b16 %v6001, %v5995
        %v6080 = vpack.c.b16 %v6002, %v5996
        %v6081 = vpack.c.b16 %v6003, %v5997
        %v6082 = vpack.c.b16 %v6004, %v5998
        %v6083 = vpack.c.b16 %v6005, %v5999
        %v6084 = vpack.c.b16 %v6012, %v6006
        %v6085 = vpack.c.b16 %v6013, %v6007
        %v6086 = vpack.c.b16 %v6014, %v6008
        %v6087 = vpack.c.b16 %v6015, %v6009
        %v6088 = vpack.c.b16 %v6016, %v6010
        %v6089 = vpack.c.b16 %v6017, %v6011
        %v6163 = vsel %vm1061, %v5697, 0
        %6165 = vmatprep.subr.bf16.mxu0 %v6019
        %6166 = vmatpush1.bf16.msra.mxu0 %v6018
        %6167 = vmatprep.subr.bf16.mxu0 %v6025
        %6168 = vmatpush1.bf16.msra.mxu0 %v6024
        %6169 = vmatprep.subr.bf16.mxu0 %v6031
        %6170 = vmatpush1.bf16.msra.mxu0 %v6030
        %6171 = vmatprep.subr.bf16.mxu0 %v6037
        %6172 = vmatpush1.bf16.msra.mxu0 %v6036
        %6173 = vmatprep.subr.bf16.mxu0 %v6043
        %6174 = vmatpush1.bf16.msra.mxu0 %v6042
        %6175 = vmatprep.subr.bf16.mxu0 %v6049
        %6176 = vmatpush1.bf16.msra.mxu0 %v6048
        %6177 = vmatprep.subr.bf16.mxu0 %v6055
        %6178 = vmatpush1.bf16.msra.mxu0 %v6054
        %6179 = vmatprep.subr.bf16.mxu0 %v6061
        %6180 = vmatpush1.bf16.msra.mxu0 %v6060
        %6181 = vmatprep.subr.bf16.mxu0 %v6067
        %6182 = vmatpush1.bf16.msra.mxu0 %v6066
        %6183 = vmatprep.subr.bf16.mxu0 %v6073
        %6184 = vmatpush1.bf16.msra.mxu0 %v6072
        %6185 = vmatprep.subr.bf16.mxu0 %v6079
        %6186 = vmatpush1.bf16.msra.mxu0 %v6078
        %6187 = vmatprep.subr.bf16.mxu0 %v6085
        %6188 = vmatpush1.bf16.msra.mxu0 %v6084
        %6189 = vmatprep.subr.bf16.mxu0 0
        %6190 = vmatpush1.bf16.msra.mxu0 0
        %6191 = vmatprep.subr.bf16.mxu0 0
        %6192 = vmatpush1.bf16.msra.mxu0 0
        %6193 = vmatprep.subr.bf16.mxu0 0
        %6194 = vmatpush1.bf16.msra.mxu0 0
        %6195 = vmatprep.subr.bf16.mxu0 0
        %6196 = vmatpush1.bf16.msra.mxu0 0
        %6197 = vmatprep.mubr.bf16.mxu0 %v6163
        %6198 = vmatmul.mubr.bf16.gmra.mrb[0].mxu0 %v5696
        %v6199 = vpop.f32.mrb[0].mxu0
        %v6200 = vadd.f32 %v5775, %v6199
        %v6201 = vpop.f32.mrb[0].mxu0
        %v6202 = vadd.f32 %v5779, %v6201
        %v6203 = vpop.f32.mrb[0].mxu0
        %v6204 = vadd.f32 %v5775, %v6203
        %v6205 = vpop.f32.mrb[0].mxu0
        %v6206 = vadd.f32 %v5779, %v6205
        %6207 = vdwg.mxu0
        %6208 = vmatprep.subr.bf16.mxu0 %v6021
        %6209 = vmatpush1.bf16.msra.mxu0 %v6020
        %6210 = vmatprep.subr.bf16.mxu0 %v6027
        %6211 = vmatpush1.bf16.msra.mxu0 %v6026
        %6212 = vmatprep.subr.bf16.mxu0 %v6033
        %6213 = vmatpush1.bf16.msra.mxu0 %v6032
        %6214 = vmatprep.subr.bf16.mxu0 %v6039
        %6215 = vmatpush1.bf16.msra.mxu0 %v6038
        %6216 = vmatprep.subr.bf16.mxu0 %v6045
        %6217 = vmatpush1.bf16.msra.mxu0 %v6044
        %6218 = vmatprep.subr.bf16.mxu0 %v6051
        %6219 = vmatpush1.bf16.msra.mxu0 %v6050
        %6220 = vmatprep.subr.bf16.mxu0 %v6057
        %6221 = vmatpush1.bf16.msra.mxu0 %v6056
        %6222 = vmatprep.subr.bf16.mxu0 %v6063
        %6223 = vmatpush1.bf16.msra.mxu0 %v6062
        %6224 = vmatprep.subr.bf16.mxu0 %v6069
        %6225 = vmatpush1.bf16.msra.mxu0 %v6068
        %6226 = vmatprep.subr.bf16.mxu0 %v6075
        %6227 = vmatpush1.bf16.msra.mxu0 %v6074
        %6228 = vmatprep.subr.bf16.mxu0 %v6081
        %6229 = vmatpush1.bf16.msra.mxu0 %v6080
        %6230 = vmatprep.subr.bf16.mxu0 %v6087
        %6231 = vmatpush1.bf16.msra.mxu0 %v6086
        %6232 = vmatprep.subr.bf16.mxu0 0
        %6233 = vmatpush1.bf16.msra.mxu0 0
        %6234 = vmatprep.subr.bf16.mxu0 0
        %6235 = vmatpush1.bf16.msra.mxu0 0
        %6236 = vmatprep.subr.bf16.mxu0 0
        %6237 = vmatpush1.bf16.msra.mxu0 0
        %6238 = vmatprep.subr.bf16.mxu0 0
        %6239 = vmatpush1.bf16.msra.mxu0 0
        %6240 = vmatprep.mubr.bf16.mxu0 %v6163
        %6241 = vmatmul.mubr.bf16.gmra.mrb[0].mxu0 %v5696
        %v6242 = vpop.f32.mrb[0].mxu0
        %v6243 = vadd.f32 %v5783, %v6242
        %v6244 = vpop.f32.mrb[0].mxu0
        %v6245 = vadd.f32 %v5787, %v6244
        %v6246 = vpop.f32.mrb[0].mxu0
        %v6247 = vadd.f32 %v5783, %v6246
        %v6248 = vpop.f32.mrb[0].mxu0
        %v6249 = vadd.f32 %v5787, %v6248
        %6250 = vdwg.mxu0
        %6251 = vmatprep.subr.bf16.mxu0 %v6023
        %6252 = vmatpush1.bf16.msra.mxu0 %v6022
        %6253 = vmatprep.subr.bf16.mxu0 %v6029
        %6254 = vmatpush1.bf16.msra.mxu0 %v6028
        %6255 = vmatprep.subr.bf16.mxu0 %v6035
        %6256 = vmatpush1.bf16.msra.mxu0 %v6034
        %6257 = vmatprep.subr.bf16.mxu0 %v6041
        %6258 = vmatpush1.bf16.msra.mxu0 %v6040
        %6259 = vmatprep.subr.bf16.mxu0 %v6047
        %6260 = vmatpush1.bf16.msra.mxu0 %v6046
        %6261 = vmatprep.subr.bf16.mxu0 %v6053
        %6262 = vmatpush1.bf16.msra.mxu0 %v6052
        %6263 = vmatprep.subr.bf16.mxu0 %v6059
        %6264 = vmatpush1.bf16.msra.mxu0 %v6058
        %6265 = vmatprep.subr.bf16.mxu0 %v6065
        %6266 = vmatpush1.bf16.msra.mxu0 %v6064
        %6267 = vmatprep.subr.bf16.mxu0 %v6071
        %6268 = vmatpush1.bf16.msra.mxu0 %v6070
        %6269 = vmatprep.subr.bf16.mxu0 %v6077
        %6270 = vmatpush1.bf16.msra.mxu0 %v6076
        %6271 = vmatprep.subr.bf16.mxu0 %v6083
        %6272 = vmatpush1.bf16.msra.mxu0 %v6082
        %6273 = vmatprep.subr.bf16.mxu0 %v6089
        %6274 = vmatpush1.bf16.msra.mxu0 %v6088
        %6275 = vmatprep.subr.bf16.mxu0 0
        %6276 = vmatpush1.bf16.msra.mxu0 0
        %6277 = vmatprep.subr.bf16.mxu0 0
        %6278 = vmatpush1.bf16.msra.mxu0 0
        %6279 = vmatprep.subr.bf16.mxu0 0
        %6280 = vmatpush1.bf16.msra.mxu0 0
        %6281 = vmatprep.subr.bf16.mxu0 0
        %6282 = vmatpush1.bf16.msra.mxu0 0
        %6283 = vmatprep.mubr.bf16.mxu0 %v6163
        %6284 = vmatmul.mubr.bf16.gmra.mrb[0].mxu0 %v5696
        %v6285 = vpop.f32.mrb[0].mxu0
        %v6286 = vadd.f32 %v5791, %v6285
        %v6287 = vpop.f32.mrb[0].mxu0
        %v6288 = vadd.f32 %v5795, %v6287
        %v6289 = vpop.f32.mrb[0].mxu0
        %v6290 = vadd.f32 %v5791, %v6289
        %v6291 = vpop.f32.mrb[0].mxu0
        %v6292 = vadd.f32 %v5795, %v6291
        %6293 = vdwg.mxu0
        %v6294 = vmul.f32 %v6200, %v6200
        %v6295 = vmul.f32 %v6202, %v6202
        %v6296 = vmul.f32 %v6243, %v6243
        %v6297 = vmul.f32 %v6245, %v6245
        %v6298 = vmul.f32 %v6286, %v6286
        %v6299 = vmul.f32 %v6288, %v6288
        %v6300 = vmul.f32 %v6204, %v6204
        %v6301 = vmul.f32 %v6206, %v6206
        %v6302 = vmul.f32 %v6247, %v6247
        %v6303 = vmul.f32 %v6249, %v6249
        %v6304 = vmul.f32 %v6290, %v6290
        %v6305 = vmul.f32 %v6292, %v6292
        %v6306 = vmul.f32 %v6200, %v6294
        %v6307 = vmul.f32 %v6202, %v6295
        %v6308 = vmul.f32 %v6243, %v6296
        %v6309 = vmul.f32 %v6245, %v6297
        %v6310 = vmul.f32 %v6286, %v6298
        %v6311 = vmul.f32 %v6288, %v6299
        %v6312 = vmul.f32 %v6204, %v6300
        %v6313 = vmul.f32 %v6206, %v6301
        %v6314 = vmul.f32 %v6247, %v6302
        %v6315 = vmul.f32 %v6249, %v6303
        %v6316 = vmul.f32 %v6290, %v6304
        %v6317 = vmul.f32 %v6292, %v6305
        %v6318 = vmul.f32 %v6306, 0.044715
        %v6319 = vmul.f32 %v6307, 0.044715
        %v6320 = vmul.f32 %v6308, 0.044715
        %v6321 = vmul.f32 %v6309, 0.044715
        %v6322 = vmul.f32 %v6310, 0.044715
        %v6323 = vmul.f32 %v6311, 0.044715
        %v6324 = vmul.f32 %v6312, 0.044715
        %v6325 = vmul.f32 %v6313, 0.044715
        %v6326 = vmul.f32 %v6314, 0.044715
        %v6327 = vmul.f32 %v6315, 0.044715
        %v6328 = vmul.f32 %v6316, 0.044715
        %v6329 = vmul.f32 %v6317, 0.044715
        %v6330 = vadd.f32 %v6200, %v6318
        %v6331 = vadd.f32 %v6202, %v6319
        %v6332 = vadd.f32 %v6243, %v6320
        %v6333 = vadd.f32 %v6245, %v6321
        %v6334 = vadd.f32 %v6286, %v6322
        %v6335 = vadd.f32 %v6288, %v6323
        %v6336 = vadd.f32 %v6204, %v6324
        %v6337 = vadd.f32 %v6206, %v6325
        %v6338 = vadd.f32 %v6247, %v6326
        %v6339 = vadd.f32 %v6249, %v6327
        %v6340 = vadd.f32 %v6290, %v6328
        %v6341 = vadd.f32 %v6292, %v6329
        %v6342 = vmul.f32 %v6330, 0.7978846
        %v6343 = vmul.f32 %v6331, 0.7978846
        %v6344 = vmul.f32 %v6332, 0.7978846
        %v6345 = vmul.f32 %v6333, 0.7978846
        %v6346 = vmul.f32 %v6334, 0.7978846
        %v6347 = vmul.f32 %v6335, 0.7978846
        %v6348 = vmul.f32 %v6336, 0.7978846
        %v6349 = vmul.f32 %v6337, 0.7978846
        %v6350 = vmul.f32 %v6338, 0.7978846
        %v6351 = vmul.f32 %v6339, 0.7978846
        %v6352 = vmul.f32 %v6340, 0.7978846
        %v6353 = vmul.f32 %v6341, 0.7978846
        %v6354 = vtanh.pop %v6342
        %v6355 = vtanh.pop %v6343
        %v6356 = vtanh.pop %v6344
        %v6357 = vtanh.pop %v6345
        %v6358 = vtanh.pop %v6346
        %v6359 = vtanh.pop %v6347
        %v6360 = vtanh.pop %v6348
        %v6361 = vtanh.pop %v6349
        %v6362 = vtanh.pop %v6350
        %v6363 = vtanh.pop %v6351
        %v6364 = vtanh.pop %v6352
        %v6365 = vtanh.pop %v6353
        %v6366 = vadd.f32 %v6354, 1.0
        %v6367 = vadd.f32 %v6355, 1.0
        %v6368 = vadd.f32 %v6356, 1.0
        %v6369 = vadd.f32 %v6357, 1.0
        %v6370 = vadd.f32 %v6358, 1.0
        %v6371 = vadd.f32 %v6359, 1.0
        %v6372 = vadd.f32 %v6360, 1.0
        %v6373 = vadd.f32 %v6361, 1.0
        %v6374 = vadd.f32 %v6362, 1.0
        %v6375 = vadd.f32 %v6363, 1.0
        %v6376 = vadd.f32 %v6364, 1.0
        %v6377 = vadd.f32 %v6365, 1.0
        %v6378 = vmul.f32 %v6366, 0.5
        %v6379 = vmul.f32 %v6367, 0.5
        %v6380 = vmul.f32 %v6368, 0.5
        %v6381 = vmul.f32 %v6369, 0.5
        %v6382 = vmul.f32 %v6370, 0.5
        %v6383 = vmul.f32 %v6371, 0.5
        %v6384 = vmul.f32 %v6372, 0.5
        %v6385 = vmul.f32 %v6373, 0.5
        %v6386 = vmul.f32 %v6374, 0.5
        %v6387 = vmul.f32 %v6375, 0.5
        %v6388 = vmul.f32 %v6376, 0.5
        %v6389 = vmul.f32 %v6377, 0.5
        %v6390 = vmul.f32 %v6200, %v6378
        %v6391 = vmul.f32 %v6202, %v6379
        %v6392 = vmul.f32 %v6243, %v6380
        %v6393 = vmul.f32 %v6245, %v6381
        %v6394 = vmul.f32 %v6286, %v6382
        %v6395 = vmul.f32 %v6288, %v6383
        %v6396 = vmul.f32 %v6204, %v6384
        %v6397 = vmul.f32 %v6206, %v6385
        %v6398 = vmul.f32 %v6247, %v6386
        %v6399 = vmul.f32 %v6249, %v6387
        %v6400 = vmul.f32 %v6290, %v6388
        %v6401 = vmul.f32 %v6292, %v6389
        %v6402 = vpack.c.bf16 %v6396, %v6390
        %v6403 = vpack.c.bf16 %v6397, %v6391
        %v6404 = vpack.c.bf16 %v6398, %v6392
        %v6405 = vpack.c.bf16 %v6399, %v6393
        %v6406 = vpack.c.bf16 %v6400, %v6394
        %v6407 = vpack.c.bf16 %v6401, %v6395
        %s6408 = scalar_lea.vmem %s550, 768
        %v6409 = vld [vmem:[%s6408] sm:$0xff]
        %v6410 = vld [vmem:[%s6408 + $0x8] sm:$0xff]
        %v6411 = vld [vmem:[%s6408 + $0x10] sm:$0xff]
        %v6412 = vld [vmem:[%s6408 + $0x18] sm:$0xff]
        %v6413 = vld [vmem:[%s6408 + $0x20] sm:$0xff]
        %v6414 = vld [vmem:[%s6408 + $0x28] sm:$0xff]
        %v6415 = vld [vmem:[%s6408 + $0x30] sm:$0xff]
        %v6416 = vld [vmem:[%s6408 + $0x38] sm:$0xff]
        %v6417 = vld [vmem:[%s6408 + $0x40] sm:$0xff]
        %v6418 = vld [vmem:[%s6408 + $0x48] sm:$0xff]
        %v6419 = vld [vmem:[%s6408 + $0x50] sm:$0xff]
        %v6420 = vld [vmem:[%s6408 + $0x58] sm:$0xff]
        %v6421 = vld [vmem:[%s6408 + $0x60] sm:$0xff]
        %v6422 = vld [vmem:[%s6408 + $0x68] sm:$0xff]
        %v6423 = vld [vmem:[%s6408 + $0x70] sm:$0xff]
        %v6424 = vld [vmem:[%s6408 + $0x78] sm:$0xff]
        %v6425 = vld [vmem:[%s6408 + $0x80] sm:$0xff]
        %v6426 = vld [vmem:[%s6408 + $0x88] sm:$0xff]
        %v6427 = vld [vmem:[%s6408 + $0x90] sm:$0xff]
        %v6428 = vld [vmem:[%s6408 + $0x98] sm:$0xff]
        %v6429 = vld [vmem:[%s6408 + $0xa0] sm:$0xff]
        %v6430 = vld [vmem:[%s6408 + $0xa8] sm:$0xff]
        %v6431 = vld [vmem:[%s6408 + $0xb0] sm:$0xff]
        %v6432 = vld [vmem:[%s6408 + $0xb8] sm:$0xff]
        %v6433 = vld [vmem:[%s6408 + $0xc0] sm:$0xff]
        %v6434 = vld [vmem:[%s6408 + $0xc8] sm:$0xff]
        %v6435 = vld [vmem:[%s6408 + $0xd0] sm:$0xff]
        %v6436 = vld [vmem:[%s6408 + $0xd8] sm:$0xff]
        %v6437 = vld [vmem:[%s6408 + $0xe0] sm:$0xff]
        %v6438 = vld [vmem:[%s6408 + $0xe8] sm:$0xff]
        %v6439 = vld [vmem:[%s6408 + $0xf0] sm:$0xff]
        %v6440 = vld [vmem:[%s6408 + $0xf8] sm:$0xff]
        %v6441 = vld [vmem:[%s6408 + $0x100] sm:$0xff]
        %v6442 = vld [vmem:[%s6408 + $0x108] sm:$0xff]
        %v6443 = vld [vmem:[%s6408 + $0x110] sm:$0xff]
        %v6444 = vld [vmem:[%s6408 + $0x118] sm:$0xff]
        %v6445 = vld [vmem:[%s6408 + $0x120] sm:$0xff]
        %v6446 = vld [vmem:[%s6408 + $0x128] sm:$0xff]
        %v6447 = vld [vmem:[%s6408 + $0x130] sm:$0xff]
        %v6448 = vld [vmem:[%s6408 + $0x138] sm:$0xff]
        %v6449 = vld [vmem:[%s6408 + $0x140] sm:$0xff]
        %v6450 = vld [vmem:[%s6408 + $0x148] sm:$0xff]
        %v6451 = vld [vmem:[%s6408 + $0x150] sm:$0xff]
        %v6452 = vld [vmem:[%s6408 + $0x158] sm:$0xff]
        %v6453 = vld [vmem:[%s6408 + $0x160] sm:$0xff]
        %v6454 = vld [vmem:[%s6408 + $0x168] sm:$0xff]
        %v6455 = vld [vmem:[%s6408 + $0x170] sm:$0xff]
        %v6456 = vld [vmem:[%s6408 + $0x178] sm:$0xff]
        %v6457 = vld [vmem:[%s6408 + $0x180] sm:$0xff]
        %v6458 = vld [vmem:[%s6408 + $0x188] sm:$0xff]
        %v6459 = vld [vmem:[%s6408 + $0x190] sm:$0xff]
        %v6460 = vld [vmem:[%s6408 + $0x198] sm:$0xff]
        %v6461 = vld [vmem:[%s6408 + $0x1a0] sm:$0xff]
        %v6462 = vld [vmem:[%s6408 + $0x1a8] sm:$0xff]
        %v6463 = vld [vmem:[%s6408 + $0x1b0] sm:$0xff]
        %v6464 = vld [vmem:[%s6408 + $0x1b8] sm:$0xff]
        %v6465 = vld [vmem:[%s6408 + $0x1c0] sm:$0xff]
        %v6466 = vld [vmem:[%s6408 + $0x1c8] sm:$0xff]
        %v6467 = vld [vmem:[%s6408 + $0x1d0] sm:$0xff]
        %v6468 = vld [vmem:[%s6408 + $0x1d8] sm:$0xff]
        %v6469 = vld [vmem:[%s6408 + $0x1e0] sm:$0xff]
        %v6470 = vld [vmem:[%s6408 + $0x1e8] sm:$0xff]
        %v6471 = vld [vmem:[%s6408 + $0x1f0] sm:$0xff]
        %v6472 = vld [vmem:[%s6408 + $0x1f8] sm:$0xff]
        %v6473 = vld [vmem:[%s6408 + $0x200] sm:$0xff]
        %v6474 = vld [vmem:[%s6408 + $0x208] sm:$0xff]
        %v6475 = vld [vmem:[%s6408 + $0x210] sm:$0xff]
        %v6476 = vld [vmem:[%s6408 + $0x218] sm:$0xff]
        %v6477 = vld [vmem:[%s6408 + $0x220] sm:$0xff]
        %v6478 = vld [vmem:[%s6408 + $0x228] sm:$0xff]
        %v6479 = vld [vmem:[%s6408 + $0x230] sm:$0xff]
        %v6480 = vld [vmem:[%s6408 + $0x238] sm:$0xff]
        %v6481 = vld [vmem:[%s6408 + $0x240] sm:$0xff]
        %v6482 = vld [vmem:[%s6408 + $0x248] sm:$0xff]
        %v6483 = vld [vmem:[%s6408 + $0x250] sm:$0xff]
        %v6484 = vld [vmem:[%s6408 + $0x258] sm:$0xff]
        %v6485 = vld [vmem:[%s6408 + $0x260] sm:$0xff]
        %v6486 = vld [vmem:[%s6408 + $0x268] sm:$0xff]
        %v6487 = vld [vmem:[%s6408 + $0x270] sm:$0xff]
        %v6488 = vld [vmem:[%s6408 + $0x278] sm:$0xff]
        %v6489 = vld [vmem:[%s6408 + $0x280] sm:$0xff]
        %v6490 = vld [vmem:[%s6408 + $0x288] sm:$0xff]
        %v6491 = vld [vmem:[%s6408 + $0x290] sm:$0xff]
        %v6492 = vld [vmem:[%s6408 + $0x298] sm:$0xff]
        %v6493 = vld [vmem:[%s6408 + $0x2a0] sm:$0xff]
        %v6494 = vld [vmem:[%s6408 + $0x2a8] sm:$0xff]
        %v6495 = vld [vmem:[%s6408 + $0x2b0] sm:$0xff]
        %v6496 = vld [vmem:[%s6408 + $0x2b8] sm:$0xff]
        %v6497 = vld [vmem:[%s6408 + $0x2c0] sm:$0xff]
        %v6498 = vld [vmem:[%s6408 + $0x2c8] sm:$0xff]
        %v6499 = vld [vmem:[%s6408 + $0x2d0] sm:$0xff]
        %v6500 = vld [vmem:[%s6408 + $0x2d8] sm:$0xff]
        %v6501 = vld [vmem:[%s6408 + $0x2e0] sm:$0xff]
        %v6502 = vld [vmem:[%s6408 + $0x2e8] sm:$0xff]
        %v6503 = vld [vmem:[%s6408 + $0x2f0] sm:$0xff]
        %v6504 = vld [vmem:[%s6408 + $0x2f8] sm:$0xff]
        %v6601 = vunpack.c.l.b16 %v6409
        %v6602 = vunpack.c.h.b16 %v6409
        %v6603 = vunpack.c.l.b16 %v6410
        %v6604 = vunpack.c.h.b16 %v6410
        %v6605 = vunpack.c.l.b16 %v6411
        %v6606 = vunpack.c.h.b16 %v6411
        %v6607 = vunpack.c.l.b16 %v6412
        %v6608 = vunpack.c.h.b16 %v6412
        %v6609 = vunpack.c.l.b16 %v6413
        %v6610 = vunpack.c.h.b16 %v6413
        %v6611 = vunpack.c.l.b16 %v6414
        %v6612 = vunpack.c.h.b16 %v6414
        %v6613 = vunpack.c.l.b16 %v6415
        %v6614 = vunpack.c.h.b16 %v6415
        %v6615 = vunpack.c.l.b16 %v6416
        %v6616 = vunpack.c.h.b16 %v6416
        %v6617 = vunpack.c.l.b16 %v6417
        %v6618 = vunpack.c.h.b16 %v6417
        %v6619 = vunpack.c.l.b16 %v6418
        %v6620 = vunpack.c.h.b16 %v6418
        %v6621 = vunpack.c.l.b16 %v6419
        %v6622 = vunpack.c.h.b16 %v6419
        %v6623 = vunpack.c.l.b16 %v6420
        %v6624 = vunpack.c.h.b16 %v6420
        %v6625 = vunpack.c.l.b16 %v6421
        %v6626 = vunpack.c.h.b16 %v6421
        %v6627 = vunpack.c.l.b16 %v6422
        %v6628 = vunpack.c.h.b16 %v6422
        %v6629 = vunpack.c.l.b16 %v6423
        %v6630 = vunpack.c.h.b16 %v6423
        %v6631 = vunpack.c.l.b16 %v6424
        %v6632 = vunpack.c.h.b16 %v6424
        %v6633 = vunpack.c.l.b16 %v6425
        %v6634 = vunpack.c.h.b16 %v6425
        %v6635 = vunpack.c.l.b16 %v6426
        %v6636 = vunpack.c.h.b16 %v6426
        %v6637 = vunpack.c.l.b16 %v6427
        %v6638 = vunpack.c.h.b16 %v6427
        %v6639 = vunpack.c.l.b16 %v6428
        %v6640 = vunpack.c.h.b16 %v6428
        %v6641 = vunpack.c.l.b16 %v6429
        %v6642 = vunpack.c.h.b16 %v6429
        %v6643 = vunpack.c.l.b16 %v6430
        %v6644 = vunpack.c.h.b16 %v6430
        %v6645 = vunpack.c.l.b16 %v6431
        %v6646 = vunpack.c.h.b16 %v6431
        %v6647 = vunpack.c.l.b16 %v6432
        %v6648 = vunpack.c.h.b16 %v6432
        %v6649 = vunpack.c.l.b16 %v6433
        %v6650 = vunpack.c.h.b16 %v6433
        %v6651 = vunpack.c.l.b16 %v6434
        %v6652 = vunpack.c.h.b16 %v6434
        %v6653 = vunpack.c.l.b16 %v6435
        %v6654 = vunpack.c.h.b16 %v6435
        %v6655 = vunpack.c.l.b16 %v6436
        %v6656 = vunpack.c.h.b16 %v6436
        %v6657 = vunpack.c.l.b16 %v6437
        %v6658 = vunpack.c.h.b16 %v6437
        %v6659 = vunpack.c.l.b16 %v6438
        %v6660 = vunpack.c.h.b16 %v6438
        %v6661 = vunpack.c.l.b16 %v6439
        %v6662 = vunpack.c.h.b16 %v6439
        %v6663 = vunpack.c.l.b16 %v6440
        %v6664 = vunpack.c.h.b16 %v6440
        %v6665 = vunpack.c.l.b16 %v6441
        %v6666 = vunpack.c.h.b16 %v6441
        %v6667 = vunpack.c.l.b16 %v6442
        %v6668 = vunpack.c.h.b16 %v6442
        %v6669 = vunpack.c.l.b16 %v6443
        %v6670 = vunpack.c.h.b16 %v6443
        %v6671 = vunpack.c.l.b16 %v6444
        %v6672 = vunpack.c.h.b16 %v6444
        %v6673 = vunpack.c.l.b16 %v6445
        %v6674 = vunpack.c.h.b16 %v6445
        %v6675 = vunpack.c.l.b16 %v6446
        %v6676 = vunpack.c.h.b16 %v6446
        %v6677 = vunpack.c.l.b16 %v6447
        %v6678 = vunpack.c.h.b16 %v6447
        %v6679 = vunpack.c.l.b16 %v6448
        %v6680 = vunpack.c.h.b16 %v6448
        %v6681 = vunpack.c.l.b16 %v6449
        %v6682 = vunpack.c.h.b16 %v6449
        %v6683 = vunpack.c.l.b16 %v6450
        %v6684 = vunpack.c.h.b16 %v6450
        %v6685 = vunpack.c.l.b16 %v6451
        %v6686 = vunpack.c.h.b16 %v6451
        %v6687 = vunpack.c.l.b16 %v6452
        %v6688 = vunpack.c.h.b16 %v6452
        %v6689 = vunpack.c.l.b16 %v6453
        %v6690 = vunpack.c.h.b16 %v6453
        %v6691 = vunpack.c.l.b16 %v6454
        %v6692 = vunpack.c.h.b16 %v6454
        %v6693 = vunpack.c.l.b16 %v6455
        %v6694 = vunpack.c.h.b16 %v6455
        %v6695 = vunpack.c.l.b16 %v6456
        %v6696 = vunpack.c.h.b16 %v6456
        %v6697 = vunpack.c.l.b16 %v6457
        %v6698 = vunpack.c.h.b16 %v6457
        %v6699 = vunpack.c.l.b16 %v6458
        %v6700 = vunpack.c.h.b16 %v6458
        %v6701 = vunpack.c.l.b16 %v6459
        %v6702 = vunpack.c.h.b16 %v6459
        %v6703 = vunpack.c.l.b16 %v6460
        %v6704 = vunpack.c.h.b16 %v6460
        %v6705 = vunpack.c.l.b16 %v6461
        %v6706 = vunpack.c.h.b16 %v6461
        %v6707 = vunpack.c.l.b16 %v6462
        %v6708 = vunpack.c.h.b16 %v6462
        %v6709 = vunpack.c.l.b16 %v6463
        %v6710 = vunpack.c.h.b16 %v6463
        %v6711 = vunpack.c.l.b16 %v6464
        %v6712 = vunpack.c.h.b16 %v6464
        %v6713 = vunpack.c.l.b16 %v6465
        %v6714 = vunpack.c.h.b16 %v6465
        %v6715 = vunpack.c.l.b16 %v6466
        %v6716 = vunpack.c.h.b16 %v6466
        %v6717 = vunpack.c.l.b16 %v6467
        %v6718 = vunpack.c.h.b16 %v6467
        %v6719 = vunpack.c.l.b16 %v6468
        %v6720 = vunpack.c.h.b16 %v6468
        %v6721 = vunpack.c.l.b16 %v6469
        %v6722 = vunpack.c.h.b16 %v6469
        %v6723 = vunpack.c.l.b16 %v6470
        %v6724 = vunpack.c.h.b16 %v6470
        %v6725 = vunpack.c.l.b16 %v6471
        %v6726 = vunpack.c.h.b16 %v6471
        %v6727 = vunpack.c.l.b16 %v6472
        %v6728 = vunpack.c.h.b16 %v6472
        %v6729 = vunpack.c.l.b16 %v6473
        %v6730 = vunpack.c.h.b16 %v6473
        %v6731 = vunpack.c.l.b16 %v6474
        %v6732 = vunpack.c.h.b16 %v6474
        %v6733 = vunpack.c.l.b16 %v6475
        %v6734 = vunpack.c.h.b16 %v6475
        %v6735 = vunpack.c.l.b16 %v6476
        %v6736 = vunpack.c.h.b16 %v6476
        %v6737 = vunpack.c.l.b16 %v6477
        %v6738 = vunpack.c.h.b16 %v6477
        %v6739 = vunpack.c.l.b16 %v6478
        %v6740 = vunpack.c.h.b16 %v6478
        %v6741 = vunpack.c.l.b16 %v6479
        %v6742 = vunpack.c.h.b16 %v6479
        %v6743 = vunpack.c.l.b16 %v6480
        %v6744 = vunpack.c.h.b16 %v6480
        %v6745 = vunpack.c.l.b16 %v6481
        %v6746 = vunpack.c.h.b16 %v6481
        %v6747 = vunpack.c.l.b16 %v6482
        %v6748 = vunpack.c.h.b16 %v6482
        %v6749 = vunpack.c.l.b16 %v6483
        %v6750 = vunpack.c.h.b16 %v6483
        %v6751 = vunpack.c.l.b16 %v6484
        %v6752 = vunpack.c.h.b16 %v6484
        %v6753 = vunpack.c.l.b16 %v6485
        %v6754 = vunpack.c.h.b16 %v6485
        %v6755 = vunpack.c.l.b16 %v6486
        %v6756 = vunpack.c.h.b16 %v6486
        %v6757 = vunpack.c.l.b16 %v6487
        %v6758 = vunpack.c.h.b16 %v6487
        %v6759 = vunpack.c.l.b16 %v6488
        %v6760 = vunpack.c.h.b16 %v6488
        %v6761 = vunpack.c.l.b16 %v6489
        %v6762 = vunpack.c.h.b16 %v6489
        %v6763 = vunpack.c.l.b16 %v6490
        %v6764 = vunpack.c.h.b16 %v6490
        %v6765 = vunpack.c.l.b16 %v6491
        %v6766 = vunpack.c.h.b16 %v6491
        %v6767 = vunpack.c.l.b16 %v6492
        %v6768 = vunpack.c.h.b16 %v6492
        %v6769 = vunpack.c.l.b16 %v6493
        %v6770 = vunpack.c.h.b16 %v6493
        %v6771 = vunpack.c.l.b16 %v6494
        %v6772 = vunpack.c.h.b16 %v6494
        %v6773 = vunpack.c.l.b16 %v6495
        %v6774 = vunpack.c.h.b16 %v6495
        %v6775 = vunpack.c.l.b16 %v6496
        %v6776 = vunpack.c.h.b16 %v6496
        %v6777 = vunpack.c.l.b16 %v6497
        %v6778 = vunpack.c.h.b16 %v6497
        %v6779 = vunpack.c.l.b16 %v6498
        %v6780 = vunpack.c.h.b16 %v6498
        %v6781 = vunpack.c.l.b16 %v6499
        %v6782 = vunpack.c.h.b16 %v6499
        %v6783 = vunpack.c.l.b16 %v6500
        %v6784 = vunpack.c.h.b16 %v6500
        %v6785 = vunpack.c.l.b16 %v6501
        %v6786 = vunpack.c.h.b16 %v6501
        %v6787 = vunpack.c.l.b16 %v6502
        %v6788 = vunpack.c.h.b16 %v6502
        %v6789 = vunpack.c.l.b16 %v6503
        %v6790 = vunpack.c.h.b16 %v6503
        %v6791 = vunpack.c.l.b16 %v6504
        %v6792 = vunpack.c.h.b16 %v6504
        %v6793 = vpack.c.b16 %v6603, %v6601
        %v6794 = vpack.c.b16 %v6604, %v6602
        %v6795 = vpack.c.b16 %v6607, %v6605
        %v6796 = vpack.c.b16 %v6608, %v6606
        %v6797 = vpack.c.b16 %v6611, %v6609
        %v6798 = vpack.c.b16 %v6612, %v6610
        %v6799 = vpack.c.b16 %v6615, %v6613
        %v6800 = vpack.c.b16 %v6616, %v6614
        %v6801 = vpack.c.b16 %v6619, %v6617
        %v6802 = vpack.c.b16 %v6620, %v6618
        %v6803 = vpack.c.b16 %v6623, %v6621
        %v6804 = vpack.c.b16 %v6624, %v6622
        %v6805 = vpack.c.b16 %v6627, %v6625
        %v6806 = vpack.c.b16 %v6628, %v6626
        %v6807 = vpack.c.b16 %v6631, %v6629
        %v6808 = vpack.c.b16 %v6632, %v6630
        %v6809 = vpack.c.b16 %v6635, %v6633
        %v6810 = vpack.c.b16 %v6636, %v6634
        %v6811 = vpack.c.b16 %v6639, %v6637
        %v6812 = vpack.c.b16 %v6640, %v6638
        %v6813 = vpack.c.b16 %v6643, %v6641
        %v6814 = vpack.c.b16 %v6644, %v6642
        %v6815 = vpack.c.b16 %v6647, %v6645
        %v6816 = vpack.c.b16 %v6648, %v6646
        %v6817 = vpack.c.b16 %v6651, %v6649
        %v6818 = vpack.c.b16 %v6652, %v6650
        %v6819 = vpack.c.b16 %v6655, %v6653
        %v6820 = vpack.c.b16 %v6656, %v6654
        %v6821 = vpack.c.b16 %v6659, %v6657
        %v6822 = vpack.c.b16 %v6660, %v6658
        %v6823 = vpack.c.b16 %v6663, %v6661
        %v6824 = vpack.c.b16 %v6664, %v6662
        %v6825 = vpack.c.b16 %v6667, %v6665
        %v6826 = vpack.c.b16 %v6668, %v6666
        %v6827 = vpack.c.b16 %v6671, %v6669
        %v6828 = vpack.c.b16 %v6672, %v6670
        %v6829 = vpack.c.b16 %v6675, %v6673
        %v6830 = vpack.c.b16 %v6676, %v6674
        %v6831 = vpack.c.b16 %v6679, %v6677
        %v6832 = vpack.c.b16 %v6680, %v6678
        %v6833 = vpack.c.b16 %v6683, %v6681
        %v6834 = vpack.c.b16 %v6684, %v6682
        %v6835 = vpack.c.b16 %v6687, %v6685
        %v6836 = vpack.c.b16 %v6688, %v6686
        %v6837 = vpack.c.b16 %v6691, %v6689
        %v6838 = vpack.c.b16 %v6692, %v6690
        %v6839 = vpack.c.b16 %v6695, %v6693
        %v6840 = vpack.c.b16 %v6696, %v6694
        %v6841 = vpack.c.b16 %v6699, %v6697
        %v6842 = vpack.c.b16 %v6700, %v6698
        %v6843 = vpack.c.b16 %v6703, %v6701
        %v6844 = vpack.c.b16 %v6704, %v6702
        %v6845 = vpack.c.b16 %v6707, %v6705
        %v6846 = vpack.c.b16 %v6708, %v6706
        %v6847 = vpack.c.b16 %v6711, %v6709
        %v6848 = vpack.c.b16 %v6712, %v6710
        %v6849 = vpack.c.b16 %v6715, %v6713
        %v6850 = vpack.c.b16 %v6716, %v6714
        %v6851 = vpack.c.b16 %v6719, %v6717
        %v6852 = vpack.c.b16 %v6720, %v6718
        %v6853 = vpack.c.b16 %v6723, %v6721
        %v6854 = vpack.c.b16 %v6724, %v6722
        %v6855 = vpack.c.b16 %v6727, %v6725
        %v6856 = vpack.c.b16 %v6728, %v6726
        %v6857 = vpack.c.b16 %v6731, %v6729
        %v6858 = vpack.c.b16 %v6732, %v6730
        %v6859 = vpack.c.b16 %v6735, %v6733
        %v6860 = vpack.c.b16 %v6736, %v6734
        %v6861 = vpack.c.b16 %v6739, %v6737
        %v6862 = vpack.c.b16 %v6740, %v6738
        %v6863 = vpack.c.b16 %v6743, %v6741
        %v6864 = vpack.c.b16 %v6744, %v6742
        %v6865 = vpack.c.b16 %v6747, %v6745
        %v6866 = vpack.c.b16 %v6748, %v6746
        %v6867 = vpack.c.b16 %v6751, %v6749
        %v6868 = vpack.c.b16 %v6752, %v6750
        %v6869 = vpack.c.b16 %v6755, %v6753
        %v6870 = vpack.c.b16 %v6756, %v6754
        %v6871 = vpack.c.b16 %v6759, %v6757
        %v6872 = vpack.c.b16 %v6760, %v6758
        %v6873 = vpack.c.b16 %v6763, %v6761
        %v6874 = vpack.c.b16 %v6764, %v6762
        %v6875 = vpack.c.b16 %v6767, %v6765
        %v6876 = vpack.c.b16 %v6768, %v6766
        %v6877 = vpack.c.b16 %v6771, %v6769
        %v6878 = vpack.c.b16 %v6772, %v6770
        %v6879 = vpack.c.b16 %v6775, %v6773
        %v6880 = vpack.c.b16 %v6776, %v6774
        %v6881 = vpack.c.b16 %v6779, %v6777
        %v6882 = vpack.c.b16 %v6780, %v6778
        %v6883 = vpack.c.b16 %v6783, %v6781
        %v6884 = vpack.c.b16 %v6784, %v6782
        %v6885 = vpack.c.b16 %v6787, %v6785
        %v6886 = vpack.c.b16 %v6788, %v6786
        %v6887 = vpack.c.b16 %v6791, %v6789
        %v6888 = vpack.c.b16 %v6792, %v6790
        %6985 = vmatprep.subr.bf16.mxu0 %v6794
        %6986 = vmatpush1.bf16.msra.mxu0 %v6793
        %6987 = vmatprep.subr.bf16.mxu0 %v6796
        %6988 = vmatpush1.bf16.msra.mxu0 %v6795
        %6989 = vmatprep.subr.bf16.mxu0 %v6798
        %6990 = vmatpush1.bf16.msra.mxu0 %v6797
        %6991 = vmatprep.subr.bf16.mxu0 %v6800
        %6992 = vmatpush1.bf16.msra.mxu0 %v6799
        %6993 = vmatprep.subr.bf16.mxu0 %v6802
        %6994 = vmatpush1.bf16.msra.mxu0 %v6801
        %6995 = vmatprep.subr.bf16.mxu0 %v6804
        %6996 = vmatpush1.bf16.msra.mxu0 %v6803
        %6997 = vmatprep.subr.bf16.mxu0 %v6806
        %6998 = vmatpush1.bf16.msra.mxu0 %v6805
        %6999 = vmatprep.subr.bf16.mxu0 %v6808
        %7000 = vmatpush1.bf16.msra.mxu0 %v6807
        %7001 = vmatprep.subr.bf16.mxu0 %v6810
        %7002 = vmatpush1.bf16.msra.mxu0 %v6809
        %7003 = vmatprep.subr.bf16.mxu0 %v6812
        %7004 = vmatpush1.bf16.msra.mxu0 %v6811
        %7005 = vmatprep.subr.bf16.mxu0 %v6814
        %7006 = vmatpush1.bf16.msra.mxu0 %v6813
        %7007 = vmatprep.subr.bf16.mxu0 %v6816
        %7008 = vmatpush1.bf16.msra.mxu0 %v6815
        %7009 = vmatprep.subr.bf16.mxu0 %v6818
        %7010 = vmatpush1.bf16.msra.mxu0 %v6817
        %7011 = vmatprep.subr.bf16.mxu0 %v6820
        %7012 = vmatpush1.bf16.msra.mxu0 %v6819
        %7013 = vmatprep.subr.bf16.mxu0 %v6822
        %7014 = vmatpush1.bf16.msra.mxu0 %v6821
        %7015 = vmatprep.subr.bf16.mxu0 %v6824
        %7016 = vmatpush1.bf16.msra.mxu0 %v6823
        %7017 = vmatprep.mubr.bf16.mxu0 %v6403
        %7018 = vmatmul.mubr.bf16.gmra.mrb[0].mxu0 %v6402
        %v7019 = vpop.f32.mrb[0].mxu0
        %v7020 = vadd.f32 0.0, %v7019
        %v7021 = vpop.f32.mrb[0].mxu0
        %v7022 = vadd.f32 0.0, %v7021
        %v7023 = vpop.f32.mrb[0].mxu0
        %v7024 = vadd.f32 0.0, %v7023
        %v7025 = vpop.f32.mrb[0].mxu0
        %v7026 = vadd.f32 0.0, %v7025
        %7027 = vdwg.mxu0
        %7028 = vmatprep.subr.bf16.mxu0 %v6826
        %7029 = vmatpush1.bf16.msra.mxu0 %v6825
        %7030 = vmatprep.subr.bf16.mxu0 %v6828
        %7031 = vmatpush1.bf16.msra.mxu0 %v6827
        %7032 = vmatprep.subr.bf16.mxu0 %v6830
        %7033 = vmatpush1.bf16.msra.mxu0 %v6829
        %7034 = vmatprep.subr.bf16.mxu0 %v6832
        %7035 = vmatpush1.bf16.msra.mxu0 %v6831
        %7036 = vmatprep.subr.bf16.mxu0 %v6834
        %7037 = vmatpush1.bf16.msra.mxu0 %v6833
        %7038 = vmatprep.subr.bf16.mxu0 %v6836
        %7039 = vmatpush1.bf16.msra.mxu0 %v6835
        %7040 = vmatprep.subr.bf16.mxu0 %v6838
        %7041 = vmatpush1.bf16.msra.mxu0 %v6837
        %7042 = vmatprep.subr.bf16.mxu0 %v6840
        %7043 = vmatpush1.bf16.msra.mxu0 %v6839
        %7044 = vmatprep.subr.bf16.mxu0 %v6842
        %7045 = vmatpush1.bf16.msra.mxu0 %v6841
        %7046 = vmatprep.subr.bf16.mxu0 %v6844
        %7047 = vmatpush1.bf16.msra.mxu0 %v6843
        %7048 = vmatprep.subr.bf16.mxu0 %v6846
        %7049 = vmatpush1.bf16.msra.mxu0 %v6845
        %7050 = vmatprep.subr.bf16.mxu0 %v6848
        %7051 = vmatpush1.bf16.msra.mxu0 %v6847
        %7052 = vmatprep.subr.bf16.mxu0 %v6850
        %7053 = vmatpush1.bf16.msra.mxu0 %v6849
        %7054 = vmatprep.subr.bf16.mxu0 %v6852
        %7055 = vmatpush1.bf16.msra.mxu0 %v6851
        %7056 = vmatprep.subr.bf16.mxu0 %v6854
        %7057 = vmatpush1.bf16.msra.mxu0 %v6853
        %7058 = vmatprep.subr.bf16.mxu0 %v6856
        %7059 = vmatpush1.bf16.msra.mxu0 %v6855
        %7060 = vmatprep.mubr.bf16.mxu0 %v6405
        %7061 = vmatmul.mubr.bf16.gmra.mrb[0].mxu0 %v6404
        %v7062 = vpop.f32.mrb[0].mxu0
        %v7063 = vadd.f32 %v7020, %v7062
        %v7064 = vpop.f32.mrb[0].mxu0
        %v7065 = vadd.f32 %v7022, %v7064
        %v7066 = vpop.f32.mrb[0].mxu0
        %v7067 = vadd.f32 %v7024, %v7066
        %v7068 = vpop.f32.mrb[0].mxu0
        %v7069 = vadd.f32 %v7026, %v7068
        %7070 = vdwg.mxu0
        %7071 = vmatprep.subr.bf16.mxu0 %v6858
        %7072 = vmatpush1.bf16.msra.mxu0 %v6857
        %7073 = vmatprep.subr.bf16.mxu0 %v6860
        %7074 = vmatpush1.bf16.msra.mxu0 %v6859
        %7075 = vmatprep.subr.bf16.mxu0 %v6862
        %7076 = vmatpush1.bf16.msra.mxu0 %v6861
        %7077 = vmatprep.subr.bf16.mxu0 %v6864
        %7078 = vmatpush1.bf16.msra.mxu0 %v6863
        %7079 = vmatprep.subr.bf16.mxu0 %v6866
        %7080 = vmatpush1.bf16.msra.mxu0 %v6865
        %7081 = vmatprep.subr.bf16.mxu0 %v6868
        %7082 = vmatpush1.bf16.msra.mxu0 %v6867
        %7083 = vmatprep.subr.bf16.mxu0 %v6870
        %7084 = vmatpush1.bf16.msra.mxu0 %v6869
        %7085 = vmatprep.subr.bf16.mxu0 %v6872
        %7086 = vmatpush1.bf16.msra.mxu0 %v6871
        %7087 = vmatprep.subr.bf16.mxu0 %v6874
        %7088 = vmatpush1.bf16.msra.mxu0 %v6873
        %7089 = vmatprep.subr.bf16.mxu0 %v6876
        %7090 = vmatpush1.bf16.msra.mxu0 %v6875
        %7091 = vmatprep.subr.bf16.mxu0 %v6878
        %7092 = vmatpush1.bf16.msra.mxu0 %v6877
        %7093 = vmatprep.subr.bf16.mxu0 %v6880
        %7094 = vmatpush1.bf16.msra.mxu0 %v6879
        %7095 = vmatprep.subr.bf16.mxu0 %v6882
        %7096 = vmatpush1.bf16.msra.mxu0 %v6881
        %7097 = vmatprep.subr.bf16.mxu0 %v6884
        %7098 = vmatpush1.bf16.msra.mxu0 %v6883
        %7099 = vmatprep.subr.bf16.mxu0 %v6886
        %7100 = vmatpush1.bf16.msra.mxu0 %v6885
        %7101 = vmatprep.subr.bf16.mxu0 %v6888
        %7102 = vmatpush1.bf16.msra.mxu0 %v6887
        %7103 = vmatprep.mubr.bf16.mxu0 %v6407
        %7104 = vmatmul.mubr.bf16.gmra.mrb[0].mxu0 %v6406
        %v7105 = vpop.f32.mrb[0].mxu0
        %v7106 = vadd.f32 %v7063, %v7105
        %v7107 = vpop.f32.mrb[0].mxu0
        %v7108 = vadd.f32 %v7065, %v7107
        %v7109 = vpop.f32.mrb[0].mxu0
        %v7110 = vadd.f32 %v7067, %v7109
        %v7111 = vpop.f32.mrb[0].mxu0
        %v7112 = vadd.f32 %v7069, %v7111
        %7113 = vdwg.mxu0
        %v7114 = vadd.f32 %v5626, %v7106
        %v7115 = vadd.f32 %v5627, %v7108
        %v7116 = vadd.f32 %v5628, %v7110
        %v7117 = vadd.f32 %v5629, %v7112
        %v7119 = vlaneseq
        %v7120 = vshrl.u32 %v7119, 7
        %v7121 = vsub.s32 0, %v7120
        %v7122 = vrot.slane %v4106, %v7121
        %v7123 = vlaneseq
        %v7124 = vshrl.u32 %v7123, 7
        %v7125 = vsub.s32 1, %v7124
        %v7126 = vrot.slane %v4106, %v7125
        %v7129 = vadd.f32 %v7114, %v7122
        %v7130 = vadd.f32 %v7115, %v7126
        %v7131 = vadd.f32 %v7116, %v7122
        %v7132 = vadd.f32 %v7117, %v7126
        %s7133 = scalar_lea.vmem %s557, 96
        %v7134 = vld [vmem:[%s7133] ss:$8 sm:$0x3]
        %s7135 = scalar_lea.vmem %s7133, 1
        %v7136 = vld [vmem:[%s7135] ss:$8 sm:$0x3]
        %s7137 = scalar_lea.vmem %s7133, 2
        %v7138 = vld [vmem:[%s7137] ss:$8 sm:$0xf]
        %v7139 = vld [vmem:[%s7137] ss:$8 sm:$0x10]
        %v7140 = vor.u32 %v7138, %v7139
        %s7141 = scalar_lea.vmem %s7133, 3
        %v7142 = vld [vmem:[%s7141] ss:$8 sm:$0x3]
        %s7143 = scalar_lea.vmem %s7133, 4
        %v7144 = vld [vmem:[%s7143] ss:$8 sm:$0x3]
        %s7145 = scalar_lea.vmem %s7133, 5
        %v7146 = vld [vmem:[%s7145] ss:$8 sm:$0x3]
        %s7147 = scalar_lea.vmem %s7133, 6
        %v7148 = vld [vmem:[%s7147] ss:$8 sm:$0xf]
        %v7149 = vld [vmem:[%s7147] ss:$8 sm:$0x30]
        %v7150 = vor.u32 %v7148, %v7149
        %s7151 = scalar_lea.vmem %s7133, 7
        %v7152 = vld [vmem:[%s7151] ss:$8 sm:$0x3]
        %v7153 = vsel %vm1061, %v7130, 0.0
        %v7154 = vadd.f32 %v7129, %v7153
        %7155 = vadd.xlane.f32.xlu0 %v7154
        %v7156 = vpop.xlane.xlu0 %7155
        %v7157 = vsel %vm1061, %v7132, 0.0
        %v7158 = vadd.f32 %v7131, %v7157
        %7159 = vadd.xlane.f32.xlu0 %v7158
        %v7160 = vpop.xlane.xlu0 %7159
        %v7161 = vmul.f32 %v7156, %v1070
        %v7162 = vmul.f32 %v7160, %v1070
        %v7163 = vsub.f32 %v7129, %v7161
        %v7164 = vsub.f32 %v7130, %v7161
        %v7165 = vsub.f32 %v7131, %v7162
        %v7166 = vsub.f32 %v7132, %v7162
        %v7167 = vmul.f32 %v7163, %v7163
        %v7168 = vmul.f32 %v7164, %v7164
        %v7169 = vmul.f32 %v7165, %v7165
        %v7170 = vmul.f32 %v7166, %v7166
        %v7171 = vsel %vm1061, %v7168, 0.0
        %v7172 = vadd.f32 %v7167, %v7171
        %7173 = vadd.xlane.f32.xlu0 %v7172
        %v7174 = vpop.xlane.xlu0 %7173
        %v7175 = vsel %vm1061, %v7170, 0.0
        %v7176 = vadd.f32 %v7169, %v7175
        %7177 = vadd.xlane.f32.xlu0 %v7176
        %v7178 = vpop.xlane.xlu0 %7177
        %v7179 = vmul.f32 %v7174, %v1070
        %v7180 = vmul.f32 %v7178, %v1070
        %v7181 = vadd.f32 %v7179, 1e-06
        %v7182 = vadd.f32 %v7180, 1e-06
        %v7183 = vrsqrt.pop %v7181
        %v7184 = vrsqrt.pop %v7182
        %v7185 = vmul.f32 %v7163, %v7183
        %v7186 = vmul.f32 %v7164, %v7183
        %v7187 = vmul.f32 %v7165, %v7184
        %v7188 = vmul.f32 %v7166, %v7184
        %v7190 = vlaneseq
        %v7191 = vshrl.u32 %v7190, 7
        %v7192 = vsub.s32 0, %v7191
        %v7193 = vrot.slane %v7134, %v7192
        %v7194 = vlaneseq
        %v7195 = vshrl.u32 %v7194, 7
        %v7196 = vsub.s32 1, %v7195
        %v7197 = vrot.slane %v7134, %v7196
        %v7200 = vmul.f32 %v7185, %v7193
        %v7201 = vmul.f32 %v7186, %v7197
        %v7202 = vmul.f32 %v7187, %v7193
        %v7203 = vmul.f32 %v7188, %v7197
        %v7205 = vlaneseq
        %v7206 = vshrl.u32 %v7205, 7
        %v7207 = vsub.s32 0, %v7206
        %v7208 = vrot.slane %v7136, %v7207
        %v7209 = vlaneseq
        %v7210 = vshrl.u32 %v7209, 7
        %v7211 = vsub.s32 1, %v7210
        %v7212 = vrot.slane %v7136, %v7211
        %v7215 = vadd.f32 %v7200, %v7208
        %v7216 = vadd.f32 %v7201, %v7212
        %v7217 = vadd.f32 %v7202, %v7208
        %v7218 = vadd.f32 %v7203, %v7212
        %v7219 = vpack.c.bf16 %v7217, %v7215
        %v7220 = vpack.c.bf16 %v7218, %v7216
        %s7221 = scalar_lea.vmem %s529, 960
        %v7222 = vld [vmem:[%s7221] sm:$0xff]
        %v7223 = vld [vmem:[%s7221 + $0x8] sm:$0xff]
        %v7224 = vld [vmem:[%s7221 + $0x10] sm:$0xf]
        %v7225 = vld [vmem:[%s7221 + $0x14] sm:$0xff]
        %v7226 = vld [vmem:[%s7221 + $0x1c] sm:$0xff]
        %v7227 = vld [vmem:[%s7221 + $0x24] sm:$0xf]
        %v7228 = vld [vmem:[%s7221 + $0x28] sm:$0xff]
        %v7229 = vld [vmem:[%s7221 + $0x30] sm:$0xff]
        %v7230 = vld [vmem:[%s7221 + $0x38] sm:$0xf]
        %v7231 = vld [vmem:[%s7221 + $0x3c] sm:$0xff]
        %v7232 = vld [vmem:[%s7221 + $0x44] sm:$0xff]
        %v7233 = vld [vmem:[%s7221 + $0x4c] sm:$0xf]
        %v7234 = vld [vmem:[%s7221 + $0x50] sm:$0xff]
        %v7235 = vld [vmem:[%s7221 + $0x58] sm:$0xff]
        %v7236 = vld [vmem:[%s7221 + $0x60] sm:$0xf]
        %v7237 = vld [vmem:[%s7221 + $0x64] sm:$0xff]
        %v7238 = vld [vmem:[%s7221 + $0x6c] sm:$0xff]
        %v7239 = vld [vmem:[%s7221 + $0x74] sm:$0xf]
        %v7240 = vld [vmem:[%s7221 + $0x78] sm:$0xff]
        %v7241 = vld [vmem:[%s7221 + $0x80] sm:$0xff]
        %v7242 = vld [vmem:[%s7221 + $0x88] sm:$0xf]
        %v7243 = vld [vmem:[%s7221 + $0x8c] sm:$0xff]
        %v7244 = vld [vmem:[%s7221 + $0x94] sm:$0xff]
        %v7245 = vld [vmem:[%s7221 + $0x9c] sm:$0xf]
        %v7246 = vld [vmem:[%s7221 + $0xa0] sm:$0xff]
        %v7247 = vld [vmem:[%s7221 + $0xa8] sm:$0xff]
        %v7248 = vld [vmem:[%s7221 + $0xb0] sm:$0xf]
        %v7249 = vld [vmem:[%s7221 + $0xb4] sm:$0xff]
        %v7250 = vld [vmem:[%s7221 + $0xbc] sm:$0xff]
        %v7251 = vld [vmem:[%s7221 + $0xc4] sm:$0xf]
        %v7252 = vld [vmem:[%s7221 + $0xc8] sm:$0xff]
        %v7253 = vld [vmem:[%s7221 + $0xd0] sm:$0xff]
        %v7254 = vld [vmem:[%s7221 + $0xd8] sm:$0xf]
        %v7255 = vld [vmem:[%s7221 + $0xdc] sm:$0xff]
        %v7256 = vld [vmem:[%s7221 + $0xe4] sm:$0xff]
        %v7257 = vld [vmem:[%s7221 + $0xec] sm:$0xf]
        %v7258 = vld [vmem:[%s7221 + $0xf0] sm:$0xff]
        %v7259 = vld [vmem:[%s7221 + $0xf8] sm:$0xff]
        %v7260 = vld [vmem:[%s7221 + $0x100] sm:$0xf]
        %v7261 = vld [vmem:[%s7221 + $0x104] sm:$0xff]
        %v7262 = vld [vmem:[%s7221 + $0x10c] sm:$0xff]
        %v7263 = vld [vmem:[%s7221 + $0x114] sm:$0xf]
        %v7264 = vld [vmem:[%s7221 + $0x118] sm:$0xff]
        %v7265 = vld [vmem:[%s7221 + $0x120] sm:$0xff]
        %v7266 = vld [vmem:[%s7221 + $0x128] sm:$0xf]
        %v7267 = vld [vmem:[%s7221 + $0x12c] sm:$0xff]
        %v7268 = vld [vmem:[%s7221 + $0x134] sm:$0xff]
        %v7269 = vld [vmem:[%s7221 + $0x13c] sm:$0xf]
        %v7270 = vld [vmem:[%s7221 + $0x140] sm:$0xff]
        %v7271 = vld [vmem:[%s7221 + $0x148] sm:$0xff]
        %v7272 = vld [vmem:[%s7221 + $0x150] sm:$0xf]
        %v7273 = vld [vmem:[%s7221 + $0x154] sm:$0xff]
        %v7274 = vld [vmem:[%s7221 + $0x15c] sm:$0xff]
        %v7275 = vld [vmem:[%s7221 + $0x164] sm:$0xf]
        %v7276 = vld [vmem:[%s7221 + $0x168] sm:$0xff]
        %v7277 = vld [vmem:[%s7221 + $0x170] sm:$0xff]
        %v7278 = vld [vmem:[%s7221 + $0x178] sm:$0xf]
        %v7279 = vld [vmem:[%s7221 + $0x17c] sm:$0xff]
        %v7280 = vld [vmem:[%s7221 + $0x184] sm:$0xff]
        %v7281 = vld [vmem:[%s7221 + $0x18c] sm:$0xf]
        %v7282 = vld [vmem:[%s7221 + $0x190] sm:$0xff]
        %v7283 = vld [vmem:[%s7221 + $0x198] sm:$0xff]
        %v7284 = vld [vmem:[%s7221 + $0x1a0] sm:$0xf]
        %v7285 = vld [vmem:[%s7221 + $0x1a4] sm:$0xff]
        %v7286 = vld [vmem:[%s7221 + $0x1ac] sm:$0xff]
        %v7287 = vld [vmem:[%s7221 + $0x1b4] sm:$0xf]
        %v7288 = vld [vmem:[%s7221 + $0x1b8] sm:$0xff]
        %v7289 = vld [vmem:[%s7221 + $0x1c0] sm:$0xff]
        %v7290 = vld [vmem:[%s7221 + $0x1c8] sm:$0xf]
        %v7291 = vld [vmem:[%s7221 + $0x1cc] sm:$0xff]
        %v7292 = vld [vmem:[%s7221 + $0x1d4] sm:$0xff]
        %v7293 = vld [vmem:[%s7221 + $0x1dc] sm:$0xf]
        %v7295 = vlaneseq
        %v7296 = vshrl.u32 %v7295, 7
        %v7297 = vsub.s32 0, %v7296
        %v7298 = vrot.slane %v7140, %v7297
        %v7299 = vlaneseq
        %v7300 = vshrl.u32 %v7299, 7
        %v7301 = vsub.s32 1, %v7300
        %v7302 = vrot.slane %v7140, %v7301
        %v7303 = vlaneseq
        %v7304 = vshrl.u32 %v7303, 7
        %v7305 = vsub.s32 2, %v7304
        %v7306 = vrot.slane %v7140, %v7305
        %v7307 = vlaneseq
        %v7308 = vshrl.u32 %v7307, 7
        %v7309 = vsub.s32 3, %v7308
        %v7310 = vrot.slane %v7140, %v7309
        %v7311 = vlaneseq
        %v7312 = vshrl.u32 %v7311, 7
        %v7313 = vsub.s32 4, %v7312
        %v7314 = vrot.slane %v7140, %v7313
        %v7392 = vunpack.c.l.b16 %v7222
        %v7393 = vunpack.c.h.b16 %v7222
        %v7394 = vunpack.c.l.b16 %v7223
        %v7395 = vunpack.c.h.b16 %v7223
        %v7396 = vunpack.c.l.b16 %v7224
        %v7397 = vunpack.c.l.b16 %v7225
        %v7398 = vunpack.c.h.b16 %v7225
        %v7399 = vunpack.c.l.b16 %v7226
        %v7400 = vunpack.c.h.b16 %v7226
        %v7401 = vunpack.c.l.b16 %v7227
        %v7402 = vunpack.c.l.b16 %v7228
        %v7403 = vunpack.c.h.b16 %v7228
        %v7404 = vunpack.c.l.b16 %v7229
        %v7405 = vunpack.c.h.b16 %v7229
        %v7406 = vunpack.c.l.b16 %v7230
        %v7407 = vunpack.c.l.b16 %v7231
        %v7408 = vunpack.c.h.b16 %v7231
        %v7409 = vunpack.c.l.b16 %v7232
        %v7410 = vunpack.c.h.b16 %v7232
        %v7411 = vunpack.c.l.b16 %v7233
        %v7412 = vunpack.c.l.b16 %v7234
        %v7413 = vunpack.c.h.b16 %v7234
        %v7414 = vunpack.c.l.b16 %v7235
        %v7415 = vunpack.c.h.b16 %v7235
        %v7416 = vunpack.c.l.b16 %v7236
        %v7417 = vunpack.c.l.b16 %v7237
        %v7418 = vunpack.c.h.b16 %v7237
        %v7419 = vunpack.c.l.b16 %v7238
        %v7420 = vunpack.c.h.b16 %v7238
        %v7421 = vunpack.c.l.b16 %v7239
        %v7422 = vunpack.c.l.b16 %v7240
        %v7423 = vunpack.c.h.b16 %v7240
        %v7424 = vunpack.c.l.b16 %v7241
        %v7425 = vunpack.c.h.b16 %v7241
        %v7426 = vunpack.c.l.b16 %v7242
        %v7427 = vunpack.c.l.b16 %v7243
        %v7428 = vunpack.c.h.b16 %v7243
        %v7429 = vunpack.c.l.b16 %v7244
        %v7430 = vunpack.c.h.b16 %v7244
        %v7431 = vunpack.c.l.b16 %v7245
        %v7432 = vunpack.c.l.b16 %v7246
        %v7433 = vunpack.c.h.b16 %v7246
        %v7434 = vunpack.c.l.b16 %v7247
        %v7435 = vunpack.c.h.b16 %v7247
        %v7436 = vunpack.c.l.b16 %v7248
        %v7437 = vunpack.c.l.b16 %v7249
        %v7438 = vunpack.c.h.b16 %v7249
        %v7439 = vunpack.c.l.b16 %v7250
        %v7440 = vunpack.c.h.b16 %v7250
        %v7441 = vunpack.c.l.b16 %v7251
        %v7442 = vunpack.c.l.b16 %v7252
        %v7443 = vunpack.c.h.b16 %v7252
        %v7444 = vunpack.c.l.b16 %v7253
        %v7445 = vunpack.c.h.b16 %v7253
        %v7446 = vunpack.c.l.b16 %v7254
        %v7447 = vunpack.c.l.b16 %v7255
        %v7448 = vunpack.c.h.b16 %v7255
        %v7449 = vunpack.c.l.b16 %v7256
        %v7450 = vunpack.c.h.b16 %v7256
        %v7451 = vunpack.c.l.b16 %v7257
        %v7452 = vunpack.c.l.b16 %v7258
        %v7453 = vunpack.c.h.b16 %v7258
        %v7454 = vunpack.c.l.b16 %v7259
        %v7455 = vunpack.c.h.b16 %v7259
        %v7456 = vunpack.c.l.b16 %v7260
        %v7457 = vunpack.c.l.b16 %v7261
        %v7458 = vunpack.c.h.b16 %v7261
        %v7459 = vunpack.c.l.b16 %v7262
        %v7460 = vunpack.c.h.b16 %v7262
        %v7461 = vunpack.c.l.b16 %v7263
        %v7462 = vunpack.c.l.b16 %v7264
        %v7463 = vunpack.c.h.b16 %v7264
        %v7464 = vunpack.c.l.b16 %v7265
        %v7465 = vunpack.c.h.b16 %v7265
        %v7466 = vunpack.c.l.b16 %v7266
        %v7467 = vunpack.c.l.b16 %v7267
        %v7468 = vunpack.c.h.b16 %v7267
        %v7469 = vunpack.c.l.b16 %v7268
        %v7470 = vunpack.c.h.b16 %v7268
        %v7471 = vunpack.c.l.b16 %v7269
        %v7472 = vunpack.c.l.b16 %v7270
        %v7473 = vunpack.c.h.b16 %v7270
        %v7474 = vunpack.c.l.b16 %v7271
        %v7475 = vunpack.c.h.b16 %v7271
        %v7476 = vunpack.c.l.b16 %v7272
        %v7477 = vunpack.c.l.b16 %v7273
        %v7478 = vunpack.c.h.b16 %v7273
        %v7479 = vunpack.c.l.b16 %v7274
        %v7480 = vunpack.c.h.b16 %v7274
        %v7481 = vunpack.c.l.b16 %v7275
        %v7482 = vunpack.c.l.b16 %v7276
        %v7483 = vunpack.c.h.b16 %v7276
        %v7484 = vunpack.c.l.b16 %v7277
        %v7485 = vunpack.c.h.b16 %v7277
        %v7486 = vunpack.c.l.b16 %v7278
        %v7487 = vunpack.c.l.b16 %v7279
        %v7488 = vunpack.c.h.b16 %v7279
        %v7489 = vunpack.c.l.b16 %v7280
        %v7490 = vunpack.c.h.b16 %v7280
        %v7491 = vunpack.c.l.b16 %v7281
        %v7492 = vunpack.c.l.b16 %v7282
        %v7493 = vunpack.c.h.b16 %v7282
        %v7494 = vunpack.c.l.b16 %v7283
        %v7495 = vunpack.c.h.b16 %v7283
        %v7496 = vunpack.c.l.b16 %v7284
        %v7497 = vunpack.c.l.b16 %v7285
        %v7498 = vunpack.c.h.b16 %v7285
        %v7499 = vunpack.c.l.b16 %v7286
        %v7500 = vunpack.c.h.b16 %v7286
        %v7501 = vunpack.c.l.b16 %v7287
        %v7502 = vunpack.c.l.b16 %v7288
        %v7503 = vunpack.c.h.b16 %v7288
        %v7504 = vunpack.c.l.b16 %v7289
        %v7505 = vunpack.c.h.b16 %v7289
        %v7506 = vunpack.c.l.b16 %v7290
        %v7507 = vunpack.c.l.b16 %v7291
        %v7508 = vunpack.c.h.b16 %v7291
        %v7509 = vunpack.c.l.b16 %v7292
        %v7510 = vunpack.c.h.b16 %v7292
        %v7511 = vunpack.c.l.b16 %v7293
        %v7512 = vpack.c.b16 %v7397, %v7392
        %v7513 = vpack.c.b16 %v7398, %v7393
        %v7514 = vpack.c.b16 %v7399, %v7394
        %v7515 = vpack.c.b16 %v7400, %v7395
        %v7516 = vpack.c.b16 %v7401, %v7396
        %v7517 = vpack.c.b16 %v7407, %v7402
        %v7518 = vpack.c.b16 %v7408, %v7403
        %v7519 = vpack.c.b16 %v7409, %v7404
        %v7520 = vpack.c.b16 %v7410, %v7405
        %v7521 = vpack.c.b16 %v7411, %v7406
        %v7522 = vpack.c.b16 %v7417, %v7412
        %v7523 = vpack.c.b16 %v7418, %v7413
        %v7524 = vpack.c.b16 %v7419, %v7414
        %v7525 = vpack.c.b16 %v7420, %v7415
        %v7526 = vpack.c.b16 %v7421, %v7416
        %v7527 = vpack.c.b16 %v7427, %v7422
        %v7528 = vpack.c.b16 %v7428, %v7423
        %v7529 = vpack.c.b16 %v7429, %v7424
        %v7530 = vpack.c.b16 %v7430, %v7425
        %v7531 = vpack.c.b16 %v7431, %v7426
        %v7532 = vpack.c.b16 %v7437, %v7432
        %v7533 = vpack.c.b16 %v7438, %v7433
        %v7534 = vpack.c.b16 %v7439, %v7434
        %v7535 = vpack.c.b16 %v7440, %v7435
        %v7536 = vpack.c.b16 %v7441, %v7436
        %v7537 = vpack.c.b16 %v7447, %v7442
        %v7538 = vpack.c.b16 %v7448, %v7443
        %v7539 = vpack.c.b16 %v7449, %v7444
        %v7540 = vpack.c.b16 %v7450, %v7445
        %v7541 = vpack.c.b16 %v7451, %v7446
        %v7542 = vpack.c.b16 %v7457, %v7452
        %v7543 = vpack.c.b16 %v7458, %v7453
        %v7544 = vpack.c.b16 %v7459, %v7454
        %v7545 = vpack.c.b16 %v7460, %v7455
        %v7546 = vpack.c.b16 %v7461, %v7456
        %v7547 = vpack.c.b16 %v7467, %v7462
        %v7548 = vpack.c.b16 %v7468, %v7463
        %v7549 = vpack.c.b16 %v7469, %v7464
        %v7550 = vpack.c.b16 %v7470, %v7465
        %v7551 = vpack.c.b16 %v7471, %v7466
        %v7552 = vpack.c.b16 %v7477, %v7472
        %v7553 = vpack.c.b16 %v7478, %v7473
        %v7554 = vpack.c.b16 %v7479, %v7474
        %v7555 = vpack.c.b16 %v7480, %v7475
        %v7556 = vpack.c.b16 %v7481, %v7476
        %v7557 = vpack.c.b16 %v7487, %v7482
        %v7558 = vpack.c.b16 %v7488, %v7483
        %v7559 = vpack.c.b16 %v7489, %v7484
        %v7560 = vpack.c.b16 %v7490, %v7485
        %v7561 = vpack.c.b16 %v7491, %v7486
        %v7562 = vpack.c.b16 %v7497, %v7492
        %v7563 = vpack.c.b16 %v7498, %v7493
        %v7564 = vpack.c.b16 %v7499, %v7494
        %v7565 = vpack.c.b16 %v7500, %v7495
        %v7566 = vpack.c.b16 %v7501, %v7496
        %v7567 = vpack.c.b16 %v7507, %v7502
        %v7568 = vpack.c.b16 %v7508, %v7503
        %v7569 = vpack.c.b16 %v7509, %v7504
        %v7570 = vpack.c.b16 %v7510, %v7505
        %v7571 = vpack.c.b16 %v7511, %v7506
        %v7633 = vsel %vm1061, %v7220, 0
        %7635 = vmatprep.subr.bf16.mxu0 %v7513
        %7636 = vmatpush1.bf16.msra.mxu0 %v7512
        %7637 = vmatprep.subr.bf16.mxu0 %v7518
        %7638 = vmatpush1.bf16.msra.mxu0 %v7517
        %7639 = vmatprep.subr.bf16.mxu0 %v7523
        %7640 = vmatpush1.bf16.msra.mxu0 %v7522
        %7641 = vmatprep.subr.bf16.mxu0 %v7528
        %7642 = vmatpush1.bf16.msra.mxu0 %v7527
        %7643 = vmatprep.subr.bf16.mxu0 %v7533
        %7644 = vmatpush1.bf16.msra.mxu0 %v7532
        %7645 = vmatprep.subr.bf16.mxu0 %v7538
        %7646 = vmatpush1.bf16.msra.mxu0 %v7537
        %7647 = vmatprep.subr.bf16.mxu0 %v7543
        %7648 = vmatpush1.bf16.msra.mxu0 %v7542
        %7649 = vmatprep.subr.bf16.mxu0 %v7548
        %7650 = vmatpush1.bf16.msra.mxu0 %v7547
        %7651 = vmatprep.subr.bf16.mxu0 %v7553
        %7652 = vmatpush1.bf16.msra.mxu0 %v7552
        %7653 = vmatprep.subr.bf16.mxu0 %v7558
        %7654 = vmatpush1.bf16.msra.mxu0 %v7557
        %7655 = vmatprep.subr.bf16.mxu0 %v7563
        %7656 = vmatpush1.bf16.msra.mxu0 %v7562
        %7657 = vmatprep.subr.bf16.mxu0 %v7568
        %7658 = vmatpush1.bf16.msra.mxu0 %v7567
        %7659 = vmatprep.subr.bf16.mxu0 0
        %7660 = vmatpush1.bf16.msra.mxu0 0
        %7661 = vmatprep.subr.bf16.mxu0 0
        %7662 = vmatpush1.bf16.msra.mxu0 0
        %7663 = vmatprep.subr.bf16.mxu0 0
        %7664 = vmatpush1.bf16.msra.mxu0 0
        %7665 = vmatprep.subr.bf16.mxu0 0
        %7666 = vmatpush1.bf16.msra.mxu0 0
        %7667 = vmatprep.mubr.bf16.mxu0 %v7633
        %7668 = vmatmul.mubr.bf16.gmra.mrb[0].mxu0 %v7219
        %v7669 = vpop.f32.mrb[0].mxu0
        %v7670 = vadd.f32 %v7298, %v7669
        %v7671 = vpop.f32.mrb[0].mxu0
        %v7672 = vadd.f32 %v7302, %v7671
        %v7673 = vpop.f32.mrb[0].mxu0
        %v7674 = vadd.f32 %v7298, %v7673
        %v7675 = vpop.f32.mrb[0].mxu0
        %v7676 = vadd.f32 %v7302, %v7675
        %7677 = vdwg.mxu0
        %7678 = vmatprep.subr.bf16.mxu0 %v7515
        %7679 = vmatpush1.bf16.msra.mxu0 %v7514
        %7680 = vmatprep.subr.bf16.mxu0 %v7520
        %7681 = vmatpush1.bf16.msra.mxu0 %v7519
        %7682 = vmatprep.subr.bf16.mxu0 %v7525
        %7683 = vmatpush1.bf16.msra.mxu0 %v7524
        %7684 = vmatprep.subr.bf16.mxu0 %v7530
        %7685 = vmatpush1.bf16.msra.mxu0 %v7529
        %7686 = vmatprep.subr.bf16.mxu0 %v7535
        %7687 = vmatpush1.bf16.msra.mxu0 %v7534
        %7688 = vmatprep.subr.bf16.mxu0 %v7540
        %7689 = vmatpush1.bf16.msra.mxu0 %v7539
        %7690 = vmatprep.subr.bf16.mxu0 %v7545
        %7691 = vmatpush1.bf16.msra.mxu0 %v7544
        %7692 = vmatprep.subr.bf16.mxu0 %v7550
        %7693 = vmatpush1.bf16.msra.mxu0 %v7549
        %7694 = vmatprep.subr.bf16.mxu0 %v7555
        %7695 = vmatpush1.bf16.msra.mxu0 %v7554
        %7696 = vmatprep.subr.bf16.mxu0 %v7560
        %7697 = vmatpush1.bf16.msra.mxu0 %v7559
        %7698 = vmatprep.subr.bf16.mxu0 %v7565
        %7699 = vmatpush1.bf16.msra.mxu0 %v7564
        %7700 = vmatprep.subr.bf16.mxu0 %v7570
        %7701 = vmatpush1.bf16.msra.mxu0 %v7569
        %7702 = vmatprep.subr.bf16.mxu0 0
        %7703 = vmatpush1.bf16.msra.mxu0 0
        %7704 = vmatprep.subr.bf16.mxu0 0
        %7705 = vmatpush1.bf16.msra.mxu0 0
        %7706 = vmatprep.subr.bf16.mxu0 0
        %7707 = vmatpush1.bf16.msra.mxu0 0
        %7708 = vmatprep.subr.bf16.mxu0 0
        %7709 = vmatpush1.bf16.msra.mxu0 0
        %7710 = vmatprep.mubr.bf16.mxu0 %v7633
        %7711 = vmatmul.mubr.bf16.gmra.mrb[0].mxu0 %v7219
        %v7712 = vpop.f32.mrb[0].mxu0
        %v7713 = vadd.f32 %v7306, %v7712
        %v7714 = vpop.f32.mrb[0].mxu0
        %v7715 = vadd.f32 %v7310, %v7714
        %v7716 = vpop.f32.mrb[0].mxu0
        %v7717 = vadd.f32 %v7306, %v7716
        %v7718 = vpop.f32.mrb[0].mxu0
        %v7719 = vadd.f32 %v7310, %v7718
        %7720 = vdwg.mxu0
        %7721 = vmatprep.subr.bf16.mxu0 0
        %7722 = vmatpush1.bf16.msra.mxu0 %v7516
        %7723 = vmatprep.subr.bf16.mxu0 0
        %7724 = vmatpush1.bf16.msra.mxu0 %v7521
        %7725 = vmatprep.subr.bf16.mxu0 0
        %7726 = vmatpush1.bf16.msra.mxu0 %v7526
        %7727 = vmatprep.subr.bf16.mxu0 0
        %7728 = vmatpush1.bf16.msra.mxu0 %v7531
        %7729 = vmatprep.subr.bf16.mxu0 0
        %7730 = vmatpush1.bf16.msra.mxu0 %v7536
        %7731 = vmatprep.subr.bf16.mxu0 0
        %7732 = vmatpush1.bf16.msra.mxu0 %v7541
        %7733 = vmatprep.subr.bf16.mxu0 0
        %7734 = vmatpush1.bf16.msra.mxu0 %v7546
        %7735 = vmatprep.subr.bf16.mxu0 0
        %7736 = vmatpush1.bf16.msra.mxu0 %v7551
        %7737 = vmatprep.subr.bf16.mxu0 0
        %7738 = vmatpush1.bf16.msra.mxu0 %v7556
        %7739 = vmatprep.subr.bf16.mxu0 0
        %7740 = vmatpush1.bf16.msra.mxu0 %v7561
        %7741 = vmatprep.subr.bf16.mxu0 0
        %7742 = vmatpush1.bf16.msra.mxu0 %v7566
        %7743 = vmatprep.subr.bf16.mxu0 0
        %7744 = vmatpush1.bf16.msra.mxu0 %v7571
        %7745 = vmatprep.subr.bf16.mxu0 0
        %7746 = vmatpush1.bf16.msra.mxu0 0
        %7747 = vmatprep.subr.bf16.mxu0 0
        %7748 = vmatpush1.bf16.msra.mxu0 0
        %7749 = vmatprep.subr.bf16.mxu0 0
        %7750 = vmatpush1.bf16.msra.mxu0 0
        %7751 = vmatprep.subr.bf16.mxu0 0
        %7752 = vmatpush1.bf16.msra.mxu0 0
        %7753 = vmatprep.mubr.bf16.mxu0 %v7633
        %7754 = vmatmul.mubr.bf16.gmra.mrb[0].mxu0 %v7219
        %v7755 = vpop.f32.mrb[0].mxu0
        %v7756 = vadd.f32 %v7314, %v7755
        %v7757 = vpop.f32.mrb[0].mxu0
        %v7758 = vpop.f32.mrb[0].mxu0
        %v7759 = vadd.f32 %v7314, %v7758
        %v7760 = vpop.f32.mrb[0].mxu0
        %7761 = vdwg.mxu0
        %v7762 = vpack.c.bf16 %v7674, %v7670
        %v7763 = vpack.c.bf16 %v7676, %v7672
        %v7766 = vunpack.c.l.b16 %v7762
        %v7767 = vunpack.c.l.b16 %v7763
        %v7768 = vunpack.c.h.b16 %v7762
        %v7769 = vunpack.c.h.b16 %v7763
        %v7770 = vpack.c.b16 %v7767, %v7766
        %v7771 = vpack.c.b16 %v7769, %v7768
        %v7772 = vpack.c.bf16 %v7717, %v7713
        %v7774 = vunpack.c.l.b16 %v7772
        %v7775 = vunpack.c.h.b16 %v7772
        %v7776 = vpack.c.b16 %v7774, %v7767
        %v7777 = vpack.c.b16 %v7775, %v7769
        %v7778 = vpack.c.bf16 %v7719, %v7715
        %v7779 = vpack.c.bf16 %v7759, %v7756
        %v7782 = vunpack.c.l.b16 %v7778
        %v7783 = vunpack.c.l.b16 %v7779
        %v7784 = vunpack.c.h.b16 %v7778
        %v7785 = vunpack.c.h.b16 %v7779
        %v7786 = vpack.c.b16 %v7783, %v7782
        %v7787 = vpack.c.b16 %v7785, %v7784
        %v7788 = vpack.c.b16 %v7767, %v7767
        %7789 = vrot.lane.b32.xlu0 %v7788, 64
        %v7790 = vpop.permute.xlu0 %7789
        %v7792 = vsel %vm1061, %v7770, 0
        %v7795 = vsel %vm1061, %v7790, 0
        %7797 = vmatprep.subr.bf16.mxu0 0
        %7798 = vmatpush1.bf16.xpose.msra.mxu0 %v7795
        %7799 = vmatprep.subr.bf16.mxu0 0
        %7800 = vmatpush1.bf16.xpose.msra.mxu0 0
        %7801 = vmatprep.subr.bf16.mxu0 0
        %7802 = vmatpush1.bf16.xpose.msra.mxu0 0
        %7803 = vmatprep.subr.bf16.mxu0 0
        %7804 = vmatpush1.bf16.xpose.msra.mxu0 0
        %7805 = vmatprep.subr.bf16.mxu0 0
        %7806 = vmatpush1.bf16.xpose.msra.mxu0 0
        %7807 = vmatprep.subr.bf16.mxu0 0
        %7808 = vmatpush1.bf16.xpose.msra.mxu0 0
        %7809 = vmatprep.subr.bf16.mxu0 0
        %7810 = vmatpush1.bf16.xpose.msra.mxu0 0
        %7811 = vmatprep.subr.bf16.mxu0 0
        %7812 = vmatpush1.bf16.xpose.msra.mxu0 0
        %7813 = vmatprep.subr.bf16.mxu0 0
        %7814 = vmatpush1.bf16.xpose.msra.mxu0 0
        %7815 = vmatprep.subr.bf16.mxu0 0
        %7816 = vmatpush1.bf16.xpose.msra.mxu0 0
        %7817 = vmatprep.subr.bf16.mxu0 0
        %7818 = vmatpush1.bf16.xpose.msra.mxu0 0
        %7819 = vmatprep.subr.bf16.mxu0 0
        %7820 = vmatpush1.bf16.xpose.msra.mxu0 0
        %7821 = vmatprep.subr.bf16.mxu0 0
        %7822 = vmatpush1.bf16.xpose.msra.mxu0 0
        %7823 = vmatprep.subr.bf16.mxu0 0
        %7824 = vmatpush1.bf16.xpose.msra.mxu0 0
        %7825 = vmatprep.subr.bf16.mxu0 0
        %7826 = vmatpush1.bf16.xpose.msra.mxu0 0
        %7827 = vmatprep.subr.bf16.mxu0 0
        %7828 = vmatpush1.bf16.xpose.msra.mxu0 0
        %7829 = vmatprep.mubr.bf16.mxu0 0
        %7830 = vmatmul.mubr.bf16.gmra.mrb[0].mxu0 %v7792
        %v7831 = vpop.f32.mrb[0].mxu0
        %v7832 = vadd.f32 0.0, %v7831
        %v7833 = vpop.f32.mrb[0].mxu0
        %v7834 = vpop.f32.mrb[0].mxu0
        %v7835 = vpop.f32.mrb[0].mxu0
        %7836 = vdwg.mxu0
        %v7837 = vpack.c.b16 %v7769, %v7769
        %7838 = vrot.lane.b32.xlu0 %v7837, 64
        %v7839 = vpop.permute.xlu0 %7838
        %v7841 = vsel %vm1061, %v7771, 0
        %v7844 = vsel %vm1061, %v7839, 0
        %7846 = vmatprep.subr.bf16.mxu0 0
        %7847 = vmatpush1.bf16.xpose.msra.mxu0 %v7844
        %7848 = vmatprep.subr.bf16.mxu0 0
        %7849 = vmatpush1.bf16.xpose.msra.mxu0 0
        %7850 = vmatprep.subr.bf16.mxu0 0
        %7851 = vmatpush1.bf16.xpose.msra.mxu0 0
        %7852 = vmatprep.subr.bf16.mxu0 0
        %7853 = vmatpush1.bf16.xpose.msra.mxu0 0
        %7854 = vmatprep.subr.bf16.mxu0 0
        %7855 = vmatpush1.bf16.xpose.msra.mxu0 0
        %7856 = vmatprep.subr.bf16.mxu0 0
        %7857 = vmatpush1.bf16.xpose.msra.mxu0 0
        %7858 = vmatprep.subr.bf16.mxu0 0
        %7859 = vmatpush1.bf16.xpose.msra.mxu0 0
        %7860 = vmatprep.subr.bf16.mxu0 0
        %7861 = vmatpush1.bf16.xpose.msra.mxu0 0
        %7862 = vmatprep.subr.bf16.mxu0 0
        %7863 = vmatpush1.bf16.xpose.msra.mxu0 0
        %7864 = vmatprep.subr.bf16.mxu0 0
        %7865 = vmatpush1.bf16.xpose.msra.mxu0 0
        %7866 = vmatprep.subr.bf16.mxu0 0
        %7867 = vmatpush1.bf16.xpose.msra.mxu0 0
        %7868 = vmatprep.subr.bf16.mxu0 0
        %7869 = vmatpush1.bf16.xpose.msra.mxu0 0
        %7870 = vmatprep.subr.bf16.mxu0 0
        %7871 = vmatpush1.bf16.xpose.msra.mxu0 0
        %7872 = vmatprep.subr.bf16.mxu0 0
        %7873 = vmatpush1.bf16.xpose.msra.mxu0 0
        %7874 = vmatprep.subr.bf16.mxu0 0
        %7875 = vmatpush1.bf16.xpose.msra.mxu0 0
        %7876 = vmatprep.subr.bf16.mxu0 0
        %7877 = vmatpush1.bf16.xpose.msra.mxu0 0
        %7878 = vmatprep.mubr.bf16.mxu0 0
        %7879 = vmatmul.mubr.bf16.gmra.mrb[0].mxu0 %v7841
        %v7880 = vpop.f32.mrb[0].mxu0
        %v7881 = vadd.f32 0.0, %v7880
        %v7882 = vpop.f32.mrb[0].mxu0
        %v7883 = vpop.f32.mrb[0].mxu0
        %v7884 = vpop.f32.mrb[0].mxu0
        %7885 = vdwg.mxu0
        %v7886 = vmul.f32 %v7832, 0.125
        %v7887 = vmul.f32 %v7881, 0.125
        %v7888 = vsel %vm1041, %v7886, -1e+30
        %v7889 = vsel %vm1041, %v7887, -1e+30
        %v7890 = vsel %vm1799, %v7888, -inf
        %7891 = vmax.xlane.f32.xlu0 %v7890
        %v7892 = vpop.xlane.xlu0 %7891
        %v7893 = vsel %vm1799, %v7889, -inf
        %7894 = vmax.xlane.f32.xlu0 %v7893
        %v7895 = vpop.xlane.xlu0 %7894
        %v7896 = vsub.f32 %v7888, %v7892
        %v7897 = vsub.f32 %v7889, %v7895
        %v7898 = vmul.f32 %v7896, 1.442695
        %v7899 = vpow.pop %v7898
        %v7900 = vmul.f32 %v7897, 1.442695
        %v7901 = vpow.pop %v7900
        %v7902 = vsel %vm1799, %v7899, 0.0
        %7903 = vadd.xlane.f32.xlu0 %v7902
        %v7904 = vpop.xlane.xlu0 %7903
        %v7905 = vsel %vm1799, %v7901, 0.0
        %7906 = vadd.xlane.f32.xlu0 %v7905
        %v7907 = vpop.xlane.xlu0 %7906
        %v7908 = vrcp.pop %v7904
        %v7909 = vrcp.pop %v7907
        %v7910 = vmul.f32 %v7899, %v7908
        %v7911 = vmul.f32 %v7901, %v7909
        %v7912 = vpack.c.bf16 %v7910, %v7910
        %v7913 = vpack.c.bf16 %v7911, %v7911
        %v7915 = vsel %vm1799, %v7912, 0
        %v7918 = vsel %vm1827, %v7786, 0
        %7920 = vmatprep.subr.bf16.mxu0 0
        %7921 = vmatpush1.bf16.msra.mxu0 %v7918
        %7922 = vmatprep.subr.bf16.mxu0 0
        %7923 = vmatpush1.bf16.msra.mxu0 0
        %7924 = vmatprep.subr.bf16.mxu0 0
        %7925 = vmatpush1.bf16.msra.mxu0 0
        %7926 = vmatprep.subr.bf16.mxu0 0
        %7927 = vmatpush1.bf16.msra.mxu0 0
        %7928 = vmatprep.subr.bf16.mxu0 0
        %7929 = vmatpush1.bf16.msra.mxu0 0
        %7930 = vmatprep.subr.bf16.mxu0 0
        %7931 = vmatpush1.bf16.msra.mxu0 0
        %7932 = vmatprep.subr.bf16.mxu0 0
        %7933 = vmatpush1.bf16.msra.mxu0 0
        %7934 = vmatprep.subr.bf16.mxu0 0
        %7935 = vmatpush1.bf16.msra.mxu0 0
        %7936 = vmatprep.subr.bf16.mxu0 0
        %7937 = vmatpush1.bf16.msra.mxu0 0
        %7938 = vmatprep.subr.bf16.mxu0 0
        %7939 = vmatpush1.bf16.msra.mxu0 0
        %7940 = vmatprep.subr.bf16.mxu0 0
        %7941 = vmatpush1.bf16.msra.mxu0 0
        %7942 = vmatprep.subr.bf16.mxu0 0
        %7943 = vmatpush1.bf16.msra.mxu0 0
        %7944 = vmatprep.subr.bf16.mxu0 0
        %7945 = vmatpush1.bf16.msra.mxu0 0
        %7946 = vmatprep.subr.bf16.mxu0 0
        %7947 = vmatpush1.bf16.msra.mxu0 0
        %7948 = vmatprep.subr.bf16.mxu0 0
        %7949 = vmatpush1.bf16.msra.mxu0 0
        %7950 = vmatprep.subr.bf16.mxu0 0
        %7951 = vmatpush1.bf16.msra.mxu0 0
        %7952 = vmatprep.mubr.bf16.mxu0 0
        %7953 = vmatmul.mubr.bf16.gmra.mrb[0].mxu0 %v7915
        %v7954 = vpop.f32.mrb[0].mxu0
        %v7955 = vadd.f32 0.0, %v7954
        %v7956 = vpop.f32.mrb[0].mxu0
        %v7957 = vpop.f32.mrb[0].mxu0
        %v7958 = vpop.f32.mrb[0].mxu0
        %7959 = vdwg.mxu0
        %v7961 = vsel %vm1799, %v7913, 0
        %v7964 = vsel %vm1827, %v7787, 0
        %7966 = vmatprep.subr.bf16.mxu0 0
        %7967 = vmatpush1.bf16.msra.mxu0 %v7964
        %7968 = vmatprep.subr.bf16.mxu0 0
        %7969 = vmatpush1.bf16.msra.mxu0 0
        %7970 = vmatprep.subr.bf16.mxu0 0
        %7971 = vmatpush1.bf16.msra.mxu0 0
        %7972 = vmatprep.subr.bf16.mxu0 0
        %7973 = vmatpush1.bf16.msra.mxu0 0
        %7974 = vmatprep.subr.bf16.mxu0 0
        %7975 = vmatpush1.bf16.msra.mxu0 0
        %7976 = vmatprep.subr.bf16.mxu0 0
        %7977 = vmatpush1.bf16.msra.mxu0 0
        %7978 = vmatprep.subr.bf16.mxu0 0
        %7979 = vmatpush1.bf16.msra.mxu0 0
        %7980 = vmatprep.subr.bf16.mxu0 0
        %7981 = vmatpush1.bf16.msra.mxu0 0
        %7982 = vmatprep.subr.bf16.mxu0 0
        %7983 = vmatpush1.bf16.msra.mxu0 0
        %7984 = vmatprep.subr.bf16.mxu0 0
        %7985 = vmatpush1.bf16.msra.mxu0 0
        %7986 = vmatprep.subr.bf16.mxu0 0
        %7987 = vmatpush1.bf16.msra.mxu0 0
        %7988 = vmatprep.subr.bf16.mxu0 0
        %7989 = vmatpush1.bf16.msra.mxu0 0
        %7990 = vmatprep.subr.bf16.mxu0 0
        %7991 = vmatpush1.bf16.msra.mxu0 0
        %7992 = vmatprep.subr.bf16.mxu0 0
        %7993 = vmatpush1.bf16.msra.mxu0 0
        %7994 = vmatprep.subr.bf16.mxu0 0
        %7995 = vmatpush1.bf16.msra.mxu0 0
        %7996 = vmatprep.subr.bf16.mxu0 0
        %7997 = vmatpush1.bf16.msra.mxu0 0
        %7998 = vmatprep.mubr.bf16.mxu0 0
        %7999 = vmatmul.mubr.bf16.gmra.mrb[0].mxu0 %v7961
        %v8000 = vpop.f32.mrb[0].mxu0
        %v8001 = vadd.f32 0.0, %v8000
        %v8002 = vpop.f32.mrb[0].mxu0
        %v8003 = vpop.f32.mrb[0].mxu0
        %v8004 = vpop.f32.mrb[0].mxu0
        %8005 = vdwg.mxu0
        %v8006 = vrot.slane %v7776, 4
        %v8007 = vpack.c.b16 %v7766, %v7766
        %8008 = vrot.lane.b32.xlu0 %v8007, 64
        %v8009 = vpop.permute.xlu0 %8008
        %v8011 = vsel %vm1061, %v8009, 0
        %v8014 = vsel %vm1061, %v8006, 0
        %8016 = vmatprep.subr.bf16.mxu0 0
        %8017 = vmatpush1.bf16.xpose.msra.mxu0 %v8014
        %8018 = vmatprep.subr.bf16.mxu0 0
        %8019 = vmatpush1.bf16.xpose.msra.mxu0 0
        %8020 = vmatprep.subr.bf16.mxu0 0
        %8021 = vmatpush1.bf16.xpose.msra.mxu0 0
        %8022 = vmatprep.subr.bf16.mxu0 0
        %8023 = vmatpush1.bf16.xpose.msra.mxu0 0
        %8024 = vmatprep.subr.bf16.mxu0 0
        %8025 = vmatpush1.bf16.xpose.msra.mxu0 0
        %8026 = vmatprep.subr.bf16.mxu0 0
        %8027 = vmatpush1.bf16.xpose.msra.mxu0 0
        %8028 = vmatprep.subr.bf16.mxu0 0
        %8029 = vmatpush1.bf16.xpose.msra.mxu0 0
        %8030 = vmatprep.subr.bf16.mxu0 0
        %8031 = vmatpush1.bf16.xpose.msra.mxu0 0
        %8032 = vmatprep.subr.bf16.mxu0 0
        %8033 = vmatpush1.bf16.xpose.msra.mxu0 0
        %8034 = vmatprep.subr.bf16.mxu0 0
        %8035 = vmatpush1.bf16.xpose.msra.mxu0 0
        %8036 = vmatprep.subr.bf16.mxu0 0
        %8037 = vmatpush1.bf16.xpose.msra.mxu0 0
        %8038 = vmatprep.subr.bf16.mxu0 0
        %8039 = vmatpush1.bf16.xpose.msra.mxu0 0
        %8040 = vmatprep.subr.bf16.mxu0 0
        %8041 = vmatpush1.bf16.xpose.msra.mxu0 0
        %8042 = vmatprep.subr.bf16.mxu0 0
        %8043 = vmatpush1.bf16.xpose.msra.mxu0 0
        %8044 = vmatprep.subr.bf16.mxu0 0
        %8045 = vmatpush1.bf16.xpose.msra.mxu0 0
        %8046 = vmatprep.subr.bf16.mxu0 0
        %8047 = vmatpush1.bf16.xpose.msra.mxu0 0
        %8048 = vmatprep.mubr.bf16.mxu0 0
        %8049 = vmatmul.mubr.bf16.gmra.mrb[0].mxu0 %v8011
        %v8050 = vpop.f32.mrb[0].mxu0
        %v8051 = vadd.f32 0.0, %v8050
        %v8052 = vpop.f32.mrb[0].mxu0
        %v8053 = vpop.f32.mrb[0].mxu0
        %v8054 = vpop.f32.mrb[0].mxu0
        %8055 = vdwg.mxu0
        %v8056 = vrot.slane %v7777, 4
        %v8057 = vpack.c.b16 %v7768, %v7768
        %8058 = vrot.lane.b32.xlu0 %v8057, 64
        %v8059 = vpop.permute.xlu0 %8058
        %v8061 = vsel %vm1061, %v8059, 0
        %v8064 = vsel %vm1061, %v8056, 0
        %8066 = vmatprep.subr.bf16.mxu0 0
        %8067 = vmatpush1.bf16.xpose.msra.mxu0 %v8064
        %8068 = vmatprep.subr.bf16.mxu0 0
        %8069 = vmatpush1.bf16.xpose.msra.mxu0 0
        %8070 = vmatprep.subr.bf16.mxu0 0
        %8071 = vmatpush1.bf16.xpose.msra.mxu0 0
        %8072 = vmatprep.subr.bf16.mxu0 0
        %8073 = vmatpush1.bf16.xpose.msra.mxu0 0
        %8074 = vmatprep.subr.bf16.mxu0 0
        %8075 = vmatpush1.bf16.xpose.msra.mxu0 0
        %8076 = vmatprep.subr.bf16.mxu0 0
        %8077 = vmatpush1.bf16.xpose.msra.mxu0 0
        %8078 = vmatprep.subr.bf16.mxu0 0
        %8079 = vmatpush1.bf16.xpose.msra.mxu0 0
        %8080 = vmatprep.subr.bf16.mxu0 0
        %8081 = vmatpush1.bf16.xpose.msra.mxu0 0
        %8082 = vmatprep.subr.bf16.mxu0 0
        %8083 = vmatpush1.bf16.xpose.msra.mxu0 0
        %8084 = vmatprep.subr.bf16.mxu0 0
        %8085 = vmatpush1.bf16.xpose.msra.mxu0 0
        %8086 = vmatprep.subr.bf16.mxu0 0
        %8087 = vmatpush1.bf16.xpose.msra.mxu0 0
        %8088 = vmatprep.subr.bf16.mxu0 0
        %8089 = vmatpush1.bf16.xpose.msra.mxu0 0
        %8090 = vmatprep.subr.bf16.mxu0 0
        %8091 = vmatpush1.bf16.xpose.msra.mxu0 0
        %8092 = vmatprep.subr.bf16.mxu0 0
        %8093 = vmatpush1.bf16.xpose.msra.mxu0 0
        %8094 = vmatprep.subr.bf16.mxu0 0
        %8095 = vmatpush1.bf16.xpose.msra.mxu0 0
        %8096 = vmatprep.subr.bf16.mxu0 0
        %8097 = vmatpush1.bf16.xpose.msra.mxu0 0
        %8098 = vmatprep.mubr.bf16.mxu0 0
        %8099 = vmatmul.mubr.bf16.gmra.mrb[0].mxu0 %v8061
        %v8100 = vpop.f32.mrb[0].mxu0
        %v8101 = vadd.f32 0.0, %v8100
        %v8102 = vpop.f32.mrb[0].mxu0
        %v8103 = vpop.f32.mrb[0].mxu0
        %v8104 = vpop.f32.mrb[0].mxu0
        %8105 = vdwg.mxu0
        %v8106 = vmul.f32 %v8051, 0.125
        %v8107 = vmul.f32 %v8101, 0.125
        %v8108 = vsel %vm1041, %v8106, -1e+30
        %v8109 = vsel %vm1041, %v8107, -1e+30
        %v8110 = vsel %vm1799, %v8108, -inf
        %8111 = vmax.xlane.f32.xlu0 %v8110
        %v8112 = vpop.xlane.xlu0 %8111
        %v8113 = vsel %vm1799, %v8109, -inf
        %8114 = vmax.xlane.f32.xlu0 %v8113
        %v8115 = vpop.xlane.xlu0 %8114
        %v8116 = vsub.f32 %v8108, %v8112
        %v8117 = vsub.f32 %v8109, %v8115
        %v8118 = vmul.f32 %v8116, 1.442695
        %v8119 = vpow.pop %v8118
        %v8120 = vmul.f32 %v8117, 1.442695
        %v8121 = vpow.pop %v8120
        %v8122 = vsel %vm1799, %v8119, 0.0
        %8123 = vadd.xlane.f32.xlu0 %v8122
        %v8124 = vpop.xlane.xlu0 %8123
        %v8125 = vsel %vm1799, %v8121, 0.0
        %8126 = vadd.xlane.f32.xlu0 %v8125
        %v8127 = vpop.xlane.xlu0 %8126
        %v8128 = vrcp.pop %v8124
        %v8129 = vrcp.pop %v8127
        %v8130 = vmul.f32 %v8119, %v8128
        %v8131 = vmul.f32 %v8121, %v8129
        %v8132 = vpack.c.bf16 %v8130, %v8130
        %v8133 = vpack.c.bf16 %v8131, %v8131
        %v8134 = vpack.c.b16 %v7782, %v7782
        %8135 = vrot.lane.b32.xlu0 %v8134, 64
        %v8136 = vpop.permute.xlu0 %8135
        %v8138 = vsel %vm1799, %v8132, 0
        %v8141 = vsel %vm1827, %v8136, 0
        %8143 = vmatprep.subr.bf16.mxu0 0
        %8144 = vmatpush1.bf16.msra.mxu0 %v8141
        %8145 = vmatprep.subr.bf16.mxu0 0
        %8146 = vmatpush1.bf16.msra.mxu0 0
        %8147 = vmatprep.subr.bf16.mxu0 0
        %8148 = vmatpush1.bf16.msra.mxu0 0
        %8149 = vmatprep.subr.bf16.mxu0 0
        %8150 = vmatpush1.bf16.msra.mxu0 0
        %8151 = vmatprep.subr.bf16.mxu0 0
        %8152 = vmatpush1.bf16.msra.mxu0 0
        %8153 = vmatprep.subr.bf16.mxu0 0
        %8154 = vmatpush1.bf16.msra.mxu0 0
        %8155 = vmatprep.subr.bf16.mxu0 0
        %8156 = vmatpush1.bf16.msra.mxu0 0
        %8157 = vmatprep.subr.bf16.mxu0 0
        %8158 = vmatpush1.bf16.msra.mxu0 0
        %8159 = vmatprep.subr.bf16.mxu0 0
        %8160 = vmatpush1.bf16.msra.mxu0 0
        %8161 = vmatprep.subr.bf16.mxu0 0
        %8162 = vmatpush1.bf16.msra.mxu0 0
        %8163 = vmatprep.subr.bf16.mxu0 0
        %8164 = vmatpush1.bf16.msra.mxu0 0
        %8165 = vmatprep.subr.bf16.mxu0 0
        %8166 = vmatpush1.bf16.msra.mxu0 0
        %8167 = vmatprep.subr.bf16.mxu0 0
        %8168 = vmatpush1.bf16.msra.mxu0 0
        %8169 = vmatprep.subr.bf16.mxu0 0
        %8170 = vmatpush1.bf16.msra.mxu0 0
        %8171 = vmatprep.subr.bf16.mxu0 0
        %8172 = vmatpush1.bf16.msra.mxu0 0
        %8173 = vmatprep.subr.bf16.mxu0 0
        %8174 = vmatpush1.bf16.msra.mxu0 0
        %8175 = vmatprep.mubr.bf16.mxu0 0
        %8176 = vmatmul.mubr.bf16.gmra.mrb[0].mxu0 %v8138
        %v8177 = vpop.f32.mrb[0].mxu0
        %v8178 = vadd.f32 0.0, %v8177
        %v8179 = vpop.f32.mrb[0].mxu0
        %v8180 = vpop.f32.mrb[0].mxu0
        %v8181 = vpop.f32.mrb[0].mxu0
        %8182 = vdwg.mxu0
        %v8183 = vpack.c.b16 %v7784, %v7784
        %8184 = vrot.lane.b32.xlu0 %v8183, 64
        %v8185 = vpop.permute.xlu0 %8184
        %v8187 = vsel %vm1799, %v8133, 0
        %v8190 = vsel %vm1827, %v8185, 0
        %8192 = vmatprep.subr.bf16.mxu0 0
        %8193 = vmatpush1.bf16.msra.mxu0 %v8190
        %8194 = vmatprep.subr.bf16.mxu0 0
        %8195 = vmatpush1.bf16.msra.mxu0 0
        %8196 = vmatprep.subr.bf16.mxu0 0
        %8197 = vmatpush1.bf16.msra.mxu0 0
        %8198 = vmatprep.subr.bf16.mxu0 0
        %8199 = vmatpush1.bf16.msra.mxu0 0
        %8200 = vmatprep.subr.bf16.mxu0 0
        %8201 = vmatpush1.bf16.msra.mxu0 0
        %8202 = vmatprep.subr.bf16.mxu0 0
        %8203 = vmatpush1.bf16.msra.mxu0 0
        %8204 = vmatprep.subr.bf16.mxu0 0
        %8205 = vmatpush1.bf16.msra.mxu0 0
        %8206 = vmatprep.subr.bf16.mxu0 0
        %8207 = vmatpush1.bf16.msra.mxu0 0
        %8208 = vmatprep.subr.bf16.mxu0 0
        %8209 = vmatpush1.bf16.msra.mxu0 0
        %8210 = vmatprep.subr.bf16.mxu0 0
        %8211 = vmatpush1.bf16.msra.mxu0 0
        %8212 = vmatprep.subr.bf16.mxu0 0
        %8213 = vmatpush1.bf16.msra.mxu0 0
        %8214 = vmatprep.subr.bf16.mxu0 0
        %8215 = vmatpush1.bf16.msra.mxu0 0
        %8216 = vmatprep.subr.bf16.mxu0 0
        %8217 = vmatpush1.bf16.msra.mxu0 0
        %8218 = vmatprep.subr.bf16.mxu0 0
        %8219 = vmatpush1.bf16.msra.mxu0 0
        %8220 = vmatprep.subr.bf16.mxu0 0
        %8221 = vmatpush1.bf16.msra.mxu0 0
        %8222 = vmatprep.subr.bf16.mxu0 0
        %8223 = vmatpush1.bf16.msra.mxu0 0
        %8224 = vmatprep.mubr.bf16.mxu0 0
        %8225 = vmatmul.mubr.bf16.gmra.mrb[0].mxu0 %v8187
        %v8226 = vpop.f32.mrb[0].mxu0
        %v8227 = vadd.f32 0.0, %v8226
        %v8228 = vpop.f32.mrb[0].mxu0
        %v8229 = vpop.f32.mrb[0].mxu0
        %v8230 = vpop.f32.mrb[0].mxu0
        %8231 = vdwg.mxu0
        %v8232 = vrot.slane %v7770, 4
        %8233 = vrot.lane.b32.xlu0 %v7776, 64
        %v8234 = vpop.permute.xlu0 %8233
        %v8235 = vrot.slane %v8234, 4
        %v8237 = vsel %vm1061, %v8232, 0
        %v8240 = vsel %vm1061, %v8235, 0
        %8242 = vmatprep.subr.bf16.mxu0 0
        %8243 = vmatpush1.bf16.xpose.msra.mxu0 %v8240
        %8244 = vmatprep.subr.bf16.mxu0 0
        %8245 = vmatpush1.bf16.xpose.msra.mxu0 0
        %8246 = vmatprep.subr.bf16.mxu0 0
        %8247 = vmatpush1.bf16.xpose.msra.mxu0 0
        %8248 = vmatprep.subr.bf16.mxu0 0
        %8249 = vmatpush1.bf16.xpose.msra.mxu0 0
        %8250 = vmatprep.subr.bf16.mxu0 0
        %8251 = vmatpush1.bf16.xpose.msra.mxu0 0
        %8252 = vmatprep.subr.bf16.mxu0 0
        %8253 = vmatpush1.bf16.xpose.msra.mxu0 0
        %8254 = vmatprep.subr.bf16.mxu0 0
        %8255 = vmatpush1.bf16.xpose.msra.mxu0 0
        %8256 = vmatprep.subr.bf16.mxu0 0
        %8257 = vmatpush1.bf16.xpose.msra.mxu0 0
        %8258 = vmatprep.subr.bf16.mxu0 0
        %8259 = vmatpush1.bf16.xpose.msra.mxu0 0
        %8260 = vmatprep.subr.bf16.mxu0 0
        %8261 = vmatpush1.bf16.xpose.msra.mxu0 0
        %8262 = vmatprep.subr.bf16.mxu0 0
        %8263 = vmatpush1.bf16.xpose.msra.mxu0 0
        %8264 = vmatprep.subr.bf16.mxu0 0
        %8265 = vmatpush1.bf16.xpose.msra.mxu0 0
        %8266 = vmatprep.subr.bf16.mxu0 0
        %8267 = vmatpush1.bf16.xpose.msra.mxu0 0
        %8268 = vmatprep.subr.bf16.mxu0 0
        %8269 = vmatpush1.bf16.xpose.msra.mxu0 0
        %8270 = vmatprep.subr.bf16.mxu0 0
        %8271 = vmatpush1.bf16.xpose.msra.mxu0 0
        %8272 = vmatprep.subr.bf16.mxu0 0
        %8273 = vmatpush1.bf16.xpose.msra.mxu0 0
        %8274 = vmatprep.mubr.bf16.mxu0 0
        %8275 = vmatmul.mubr.bf16.gmra.mrb[0].mxu0 %v8237
        %v8276 = vpop.f32.mrb[0].mxu0
        %v8277 = vadd.f32 0.0, %v8276
        %v8278 = vpop.f32.mrb[0].mxu0
        %v8279 = vpop.f32.mrb[0].mxu0
        %v8280 = vpop.f32.mrb[0].mxu0
        %8281 = vdwg.mxu0
        %v8282 = vrot.slane %v7771, 4
        %8283 = vrot.lane.b32.xlu0 %v7777, 64
        %v8284 = vpop.permute.xlu0 %8283
        %v8285 = vrot.slane %v8284, 4
        %v8287 = vsel %vm1061, %v8282, 0
        %v8290 = vsel %vm1061, %v8285, 0
        %8292 = vmatprep.subr.bf16.mxu0 0
        %8293 = vmatpush1.bf16.xpose.msra.mxu0 %v8290
        %8294 = vmatprep.subr.bf16.mxu0 0
        %8295 = vmatpush1.bf16.xpose.msra.mxu0 0
        %8296 = vmatprep.subr.bf16.mxu0 0
        %8297 = vmatpush1.bf16.xpose.msra.mxu0 0
        %8298 = vmatprep.subr.bf16.mxu0 0
        %8299 = vmatpush1.bf16.xpose.msra.mxu0 0
        %8300 = vmatprep.subr.bf16.mxu0 0
        %8301 = vmatpush1.bf16.xpose.msra.mxu0 0
        %8302 = vmatprep.subr.bf16.mxu0 0
        %8303 = vmatpush1.bf16.xpose.msra.mxu0 0
        %8304 = vmatprep.subr.bf16.mxu0 0
        %8305 = vmatpush1.bf16.xpose.msra.mxu0 0
        %8306 = vmatprep.subr.bf16.mxu0 0
        %8307 = vmatpush1.bf16.xpose.msra.mxu0 0
        %8308 = vmatprep.subr.bf16.mxu0 0
        %8309 = vmatpush1.bf16.xpose.msra.mxu0 0
        %8310 = vmatprep.subr.bf16.mxu0 0
        %8311 = vmatpush1.bf16.xpose.msra.mxu0 0
        %8312 = vmatprep.subr.bf16.mxu0 0
        %8313 = vmatpush1.bf16.xpose.msra.mxu0 0
        %8314 = vmatprep.subr.bf16.mxu0 0
        %8315 = vmatpush1.bf16.xpose.msra.mxu0 0
        %8316 = vmatprep.subr.bf16.mxu0 0
        %8317 = vmatpush1.bf16.xpose.msra.mxu0 0
        %8318 = vmatprep.subr.bf16.mxu0 0
        %8319 = vmatpush1.bf16.xpose.msra.mxu0 0
        %8320 = vmatprep.subr.bf16.mxu0 0
        %8321 = vmatpush1.bf16.xpose.msra.mxu0 0
        %8322 = vmatprep.subr.bf16.mxu0 0
        %8323 = vmatpush1.bf16.xpose.msra.mxu0 0
        %8324 = vmatprep.mubr.bf16.mxu0 0
        %8325 = vmatmul.mubr.bf16.gmra.mrb[0].mxu0 %v8287
        %v8326 = vpop.f32.mrb[0].mxu0
        %v8327 = vadd.f32 0.0, %v8326
        %v8328 = vpop.f32.mrb[0].mxu0
        %v8329 = vpop.f32.mrb[0].mxu0
        %v8330 = vpop.f32.mrb[0].mxu0
        %8331 = vdwg.mxu0
        %v8332 = vmul.f32 %v8277, 0.125
        %v8333 = vmul.f32 %v8327, 0.125
        %v8334 = vsel %vm1041, %v8332, -1e+30
        %v8335 = vsel %vm1041, %v8333, -1e+30
        %v8336 = vsel %vm1799, %v8334, -inf
        %8337 = vmax.xlane.f32.xlu0 %v8336
        %v8338 = vpop.xlane.xlu0 %8337
        %v8339 = vsel %vm1799, %v8335, -inf
        %8340 = vmax.xlane.f32.xlu0 %v8339
        %v8341 = vpop.xlane.xlu0 %8340
        %v8342 = vsub.f32 %v8334, %v8338
        %v8343 = vsub.f32 %v8335, %v8341
        %v8344 = vmul.f32 %v8342, 1.442695
        %v8345 = vpow.pop %v8344
        %v8346 = vmul.f32 %v8343, 1.442695
        %v8347 = vpow.pop %v8346
        %v8348 = vsel %vm1799, %v8345, 0.0
        %8349 = vadd.xlane.f32.xlu0 %v8348
        %v8350 = vpop.xlane.xlu0 %8349
        %v8351 = vsel %vm1799, %v8347, 0.0
        %8352 = vadd.xlane.f32.xlu0 %v8351
        %v8353 = vpop.xlane.xlu0 %8352
        %v8354 = vrcp.pop %v8350
        %v8355 = vrcp.pop %v8353
        %v8356 = vmul.f32 %v8345, %v8354
        %v8357 = vmul.f32 %v8347, %v8355
        %v8358 = vpack.c.bf16 %v8356, %v8356
        %v8359 = vpack.c.bf16 %v8357, %v8357
        %v8360 = vrot.slane %v7786, 4
        %v8362 = vsel %vm1799, %v8358, 0
        %v8365 = vsel %vm1827, %v8360, 0
        %8367 = vmatprep.subr.bf16.mxu0 0
        %8368 = vmatpush1.bf16.msra.mxu0 %v8365
        %8369 = vmatprep.subr.bf16.mxu0 0
        %8370 = vmatpush1.bf16.msra.mxu0 0
        %8371 = vmatprep.subr.bf16.mxu0 0
        %8372 = vmatpush1.bf16.msra.mxu0 0
        %8373 = vmatprep.subr.bf16.mxu0 0
        %8374 = vmatpush1.bf16.msra.mxu0 0
        %8375 = vmatprep.subr.bf16.mxu0 0
        %8376 = vmatpush1.bf16.msra.mxu0 0
        %8377 = vmatprep.subr.bf16.mxu0 0
        %8378 = vmatpush1.bf16.msra.mxu0 0
        %8379 = vmatprep.subr.bf16.mxu0 0
        %8380 = vmatpush1.bf16.msra.mxu0 0
        %8381 = vmatprep.subr.bf16.mxu0 0
        %8382 = vmatpush1.bf16.msra.mxu0 0
        %8383 = vmatprep.subr.bf16.mxu0 0
        %8384 = vmatpush1.bf16.msra.mxu0 0
        %8385 = vmatprep.subr.bf16.mxu0 0
        %8386 = vmatpush1.bf16.msra.mxu0 0
        %8387 = vmatprep.subr.bf16.mxu0 0
        %8388 = vmatpush1.bf16.msra.mxu0 0
        %8389 = vmatprep.subr.bf16.mxu0 0
        %8390 = vmatpush1.bf16.msra.mxu0 0
        %8391 = vmatprep.subr.bf16.mxu0 0
        %8392 = vmatpush1.bf16.msra.mxu0 0
        %8393 = vmatprep.subr.bf16.mxu0 0
        %8394 = vmatpush1.bf16.msra.mxu0 0
        %8395 = vmatprep.subr.bf16.mxu0 0
        %8396 = vmatpush1.bf16.msra.mxu0 0
        %8397 = vmatprep.subr.bf16.mxu0 0
        %8398 = vmatpush1.bf16.msra.mxu0 0
        %8399 = vmatprep.mubr.bf16.mxu0 0
        %8400 = vmatmul.mubr.bf16.gmra.mrb[0].mxu0 %v8362
        %v8401 = vpop.f32.mrb[0].mxu0
        %v8402 = vadd.f32 0.0, %v8401
        %v8403 = vpop.f32.mrb[0].mxu0
        %v8404 = vpop.f32.mrb[0].mxu0
        %v8405 = vpop.f32.mrb[0].mxu0
        %8406 = vdwg.mxu0
        %v8407 = vrot.slane %v7787, 4
        %v8409 = vsel %vm1799, %v8359, 0
        %v8412 = vsel %vm1827, %v8407, 0
        %8414 = vmatprep.subr.bf16.mxu0 0
        %8415 = vmatpush1.bf16.msra.mxu0 %v8412
        %8416 = vmatprep.subr.bf16.mxu0 0
        %8417 = vmatpush1.bf16.msra.mxu0 0
        %8418 = vmatprep.subr.bf16.mxu0 0
        %8419 = vmatpush1.bf16.msra.mxu0 0
        %8420 = vmatprep.subr.bf16.mxu0 0
        %8421 = vmatpush1.bf16.msra.mxu0 0
        %8422 = vmatprep.subr.bf16.mxu0 0
        %8423 = vmatpush1.bf16.msra.mxu0 0
        %8424 = vmatprep.subr.bf16.mxu0 0
        %8425 = vmatpush1.bf16.msra.mxu0 0
        %8426 = vmatprep.subr.bf16.mxu0 0
        %8427 = vmatpush1.bf16.msra.mxu0 0
        %8428 = vmatprep.subr.bf16.mxu0 0
        %8429 = vmatpush1.bf16.msra.mxu0 0
        %8430 = vmatprep.subr.bf16.mxu0 0
        %8431 = vmatpush1.bf16.msra.mxu0 0
        %8432 = vmatprep.subr.bf16.mxu0 0
        %8433 = vmatpush1.bf16.msra.mxu0 0
        %8434 = vmatprep.subr.bf16.mxu0 0
        %8435 = vmatpush1.bf16.msra.mxu0 0
        %8436 = vmatprep.subr.bf16.mxu0 0
        %8437 = vmatpush1.bf16.msra.mxu0 0
        %8438 = vmatprep.subr.bf16.mxu0 0
        %8439 = vmatpush1.bf16.msra.mxu0 0
        %8440 = vmatprep.subr.bf16.mxu0 0
        %8441 = vmatpush1.bf16.msra.mxu0 0
        %8442 = vmatprep.subr.bf16.mxu0 0
        %8443 = vmatpush1.bf16.msra.mxu0 0
        %8444 = vmatprep.subr.bf16.mxu0 0
        %8445 = vmatpush1.bf16.msra.mxu0 0
        %8446 = vmatprep.mubr.bf16.mxu0 0
        %8447 = vmatmul.mubr.bf16.gmra.mrb[0].mxu0 %v8409
        %v8448 = vpop.f32.mrb[0].mxu0
        %v8449 = vadd.f32 0.0, %v8448
        %v8450 = vpop.f32.mrb[0].mxu0
        %v8451 = vpop.f32.mrb[0].mxu0
        %v8452 = vpop.f32.mrb[0].mxu0
        %8453 = vdwg.mxu0
        %8456 = vrot.lane.b32.xlu0 %v8178, 64
        %v8457 = vpop.permute.xlu0 %8456
        %8458 = vrot.lane.b32.xlu0 %v8227, 64
        %v8459 = vpop.permute.xlu0 %8458
        %v8462 = vsel %vm1061, %v7955, %v8457
        %v8463 = vsel %vm1061, %v8001, %v8459
        %v8464 = vpack.c.bf16 %v8463, %v8462
        %v8465 = vpack.c.bf16 %v8449, %v8402
        %s8466 = scalar_lea.vmem %s536, 384
        %v8467 = vld [vmem:[%s8466] sm:$0xff]
        %v8468 = vld [vmem:[%s8466 + $0x8] sm:$0xff]
        %v8469 = vld [vmem:[%s8466 + $0x10] sm:$0xff]
        %v8470 = vld [vmem:[%s8466 + $0x18] sm:$0xff]
        %v8471 = vld [vmem:[%s8466 + $0x20] sm:$0xff]
        %v8472 = vld [vmem:[%s8466 + $0x28] sm:$0xff]
        %v8473 = vld [vmem:[%s8466 + $0x30] sm:$0xff]
        %v8474 = vld [vmem:[%s8466 + $0x38] sm:$0xff]
        %v8475 = vld [vmem:[%s8466 + $0x40] sm:$0xff]
        %v8476 = vld [vmem:[%s8466 + $0x48] sm:$0xff]
        %v8477 = vld [vmem:[%s8466 + $0x50] sm:$0xff]
        %v8478 = vld [vmem:[%s8466 + $0x58] sm:$0xff]
        %v8479 = vld [vmem:[%s8466 + $0x60] sm:$0xff]
        %v8480 = vld [vmem:[%s8466 + $0x68] sm:$0xff]
        %v8481 = vld [vmem:[%s8466 + $0x70] sm:$0xff]
        %v8482 = vld [vmem:[%s8466 + $0x78] sm:$0xff]
        %v8483 = vld [vmem:[%s8466 + $0x80] sm:$0xff]
        %v8484 = vld [vmem:[%s8466 + $0x88] sm:$0xff]
        %v8485 = vld [vmem:[%s8466 + $0x90] sm:$0xff]
        %v8486 = vld [vmem:[%s8466 + $0x98] sm:$0xff]
        %v8487 = vld [vmem:[%s8466 + $0xa0] sm:$0xff]
        %v8488 = vld [vmem:[%s8466 + $0xa8] sm:$0xff]
        %v8489 = vld [vmem:[%s8466 + $0xb0] sm:$0xff]
        %v8490 = vld [vmem:[%s8466 + $0xb8] sm:$0xff]
        %v8515 = vunpack.c.l.b16 %v8467
        %v8516 = vunpack.c.h.b16 %v8467
        %v8517 = vunpack.c.l.b16 %v8468
        %v8518 = vunpack.c.h.b16 %v8468
        %v8519 = vunpack.c.l.b16 %v8469
        %v8520 = vunpack.c.h.b16 %v8469
        %v8521 = vunpack.c.l.b16 %v8470
        %v8522 = vunpack.c.h.b16 %v8470
        %v8523 = vunpack.c.l.b16 %v8471
        %v8524 = vunpack.c.h.b16 %v8471
        %v8525 = vunpack.c.l.b16 %v8472
        %v8526 = vunpack.c.h.b16 %v8472
        %v8527 = vunpack.c.l.b16 %v8473
        %v8528 = vunpack.c.h.b16 %v8473
        %v8529 = vunpack.c.l.b16 %v8474
        %v8530 = vunpack.c.h.b16 %v8474
        %v8531 = vunpack.c.l.b16 %v8475
        %v8532 = vunpack.c.h.b16 %v8475
        %v8533 = vunpack.c.l.b16 %v8476
        %v8534 = vunpack.c.h.b16 %v8476
        %v8535 = vunpack.c.l.b16 %v8477
        %v8536 = vunpack.c.h.b16 %v8477
        %v8537 = vunpack.c.l.b16 %v8478
        %v8538 = vunpack.c.h.b16 %v8478
        %v8539 = vunpack.c.l.b16 %v8479
        %v8540 = vunpack.c.h.b16 %v8479
        %v8541 = vunpack.c.l.b16 %v8480
        %v8542 = vunpack.c.h.b16 %v8480
        %v8543 = vunpack.c.l.b16 %v8481
        %v8544 = vunpack.c.h.b16 %v8481
        %v8545 = vunpack.c.l.b16 %v8482
        %v8546 = vunpack.c.h.b16 %v8482
        %v8547 = vunpack.c.l.b16 %v8483
        %v8548 = vunpack.c.h.b16 %v8483
        %v8549 = vunpack.c.l.b16 %v8484
        %v8550 = vunpack.c.h.b16 %v8484
        %v8551 = vunpack.c.l.b16 %v8485
        %v8552 = vunpack.c.h.b16 %v8485
        %v8553 = vunpack.c.l.b16 %v8486
        %v8554 = vunpack.c.h.b16 %v8486
        %v8555 = vunpack.c.l.b16 %v8487
        %v8556 = vunpack.c.h.b16 %v8487
        %v8557 = vunpack.c.l.b16 %v8488
        %v8558 = vunpack.c.h.b16 %v8488
        %v8559 = vunpack.c.l.b16 %v8489
        %v8560 = vunpack.c.h.b16 %v8489
        %v8561 = vunpack.c.l.b16 %v8490
        %v8562 = vunpack.c.h.b16 %v8490
        %v8563 = vpack.c.b16 %v8517, %v8515
        %v8564 = vpack.c.b16 %v8518, %v8516
        %v8565 = vpack.c.b16 %v8521, %v8519
        %v8566 = vpack.c.b16 %v8522, %v8520
        %v8567 = vpack.c.b16 %v8525, %v8523
        %v8568 = vpack.c.b16 %v8526, %v8524
        %v8569 = vpack.c.b16 %v8529, %v8527
        %v8570 = vpack.c.b16 %v8530, %v8528
        %v8571 = vpack.c.b16 %v8533, %v8531
        %v8572 = vpack.c.b16 %v8534, %v8532
        %v8573 = vpack.c.b16 %v8537, %v8535
        %v8574 = vpack.c.b16 %v8538, %v8536
        %v8575 = vpack.c.b16 %v8541, %v8539
        %v8576 = vpack.c.b16 %v8542, %v8540
        %v8577 = vpack.c.b16 %v8545, %v8543
        %v8578 = vpack.c.b16 %v8546, %v8544
        %v8579 = vpack.c.b16 %v8549, %v8547
        %v8580 = vpack.c.b16 %v8550, %v8548
        %v8581 = vpack.c.b16 %v8553, %v8551
        %v8582 = vpack.c.b16 %v8554, %v8552
        %v8583 = vpack.c.b16 %v8557, %v8555
        %v8584 = vpack.c.b16 %v8558, %v8556
        %v8585 = vpack.c.b16 %v8561, %v8559
        %v8586 = vpack.c.b16 %v8562, %v8560
        %v8612 = vsel %vm1061, %v8465, 0
        %8614 = vmatprep.subr.bf16.mxu0 %v8564
        %8615 = vmatpush1.bf16.msra.mxu0 %v8563
        %8616 = vmatprep.subr.bf16.mxu0 %v8566
        %8617 = vmatpush1.bf16.msra.mxu0 %v8565
        %8618 = vmatprep.subr.bf16.mxu0 %v8568
        %8619 = vmatpush1.bf16.msra.mxu0 %v8567
        %8620 = vmatprep.subr.bf16.mxu0 %v8570
        %8621 = vmatpush1.bf16.msra.mxu0 %v8569
        %8622 = vmatprep.subr.bf16.mxu0 %v8572
        %8623 = vmatpush1.bf16.msra.mxu0 %v8571
        %8624 = vmatprep.subr.bf16.mxu0 %v8574
        %8625 = vmatpush1.bf16.msra.mxu0 %v8573
        %8626 = vmatprep.subr.bf16.mxu0 %v8576
        %8627 = vmatpush1.bf16.msra.mxu0 %v8575
        %8628 = vmatprep.subr.bf16.mxu0 %v8578
        %8629 = vmatpush1.bf16.msra.mxu0 %v8577
        %8630 = vmatprep.subr.bf16.mxu0 %v8580
        %8631 = vmatpush1.bf16.msra.mxu0 %v8579
        %8632 = vmatprep.subr.bf16.mxu0 %v8582
        %8633 = vmatpush1.bf16.msra.mxu0 %v8581
        %8634 = vmatprep.subr.bf16.mxu0 %v8584
        %8635 = vmatpush1.bf16.msra.mxu0 %v8583
        %8636 = vmatprep.subr.bf16.mxu0 %v8586
        %8637 = vmatpush1.bf16.msra.mxu0 %v8585
        %8638 = vmatprep.subr.bf16.mxu0 0
        %8639 = vmatpush1.bf16.msra.mxu0 0
        %8640 = vmatprep.subr.bf16.mxu0 0
        %8641 = vmatpush1.bf16.msra.mxu0 0
        %8642 = vmatprep.subr.bf16.mxu0 0
        %8643 = vmatpush1.bf16.msra.mxu0 0
        %8644 = vmatprep.subr.bf16.mxu0 0
        %8645 = vmatpush1.bf16.msra.mxu0 0
        %8646 = vmatprep.mubr.bf16.mxu0 %v8612
        %8647 = vmatmul.mubr.bf16.gmra.mrb[0].mxu0 %v8464
        %v8648 = vpop.f32.mrb[0].mxu0
        %v8649 = vadd.f32 0.0, %v8648
        %v8650 = vpop.f32.mrb[0].mxu0
        %v8651 = vadd.f32 0.0, %v8650
        %v8652 = vpop.f32.mrb[0].mxu0
        %v8653 = vadd.f32 0.0, %v8652
        %v8654 = vpop.f32.mrb[0].mxu0
        %v8655 = vadd.f32 0.0, %v8654
        %8656 = vdwg.mxu0
        %v8657 = vadd.f32 %v7129, %v8649
        %v8658 = vadd.f32 %v7130, %v8651
        %v8659 = vadd.f32 %v7131, %v8653
        %v8660 = vadd.f32 %v7132, %v8655
        %v8662 = vlaneseq
        %v8663 = vshrl.u32 %v8662, 7
        %v8664 = vsub.s32 0, %v8663
        %v8665 = vrot.slane %v7142, %v8664
        %v8666 = vlaneseq
        %v8667 = vshrl.u32 %v8666, 7
        %v8668 = vsub.s32 1, %v8667
        %v8669 = vrot.slane %v7142, %v8668
        %v8672 = vadd.f32 %v8657, %v8665
        %v8673 = vadd.f32 %v8658, %v8669
        %v8674 = vadd.f32 %v8659, %v8665
        %v8675 = vadd.f32 %v8660, %v8669
        %v8676 = vsel %vm1061, %v8673, 0.0
        %v8677 = vadd.f32 %v8672, %v8676
        %8678 = vadd.xlane.f32.xlu0 %v8677
        %v8679 = vpop.xlane.xlu0 %8678
        %v8680 = vsel %vm1061, %v8675, 0.0
        %v8681 = vadd.f32 %v8674, %v8680
        %8682 = vadd.xlane.f32.xlu0 %v8681
        %v8683 = vpop.xlane.xlu0 %8682
        %v8684 = vmul.f32 %v8679, %v1070
        %v8685 = vmul.f32 %v8683, %v1070
        %v8686 = vsub.f32 %v8672, %v8684
        %v8687 = vsub.f32 %v8673, %v8684
        %v8688 = vsub.f32 %v8674, %v8685
        %v8689 = vsub.f32 %v8675, %v8685
        %v8690 = vmul.f32 %v8686, %v8686
        %v8691 = vmul.f32 %v8687, %v8687
        %v8692 = vmul.f32 %v8688, %v8688
        %v8693 = vmul.f32 %v8689, %v8689
        %v8694 = vsel %vm1061, %v8691, 0.0
        %v8695 = vadd.f32 %v8690, %v8694
        %8696 = vadd.xlane.f32.xlu0 %v8695
        %v8697 = vpop.xlane.xlu0 %8696
        %v8698 = vsel %vm1061, %v8693, 0.0
        %v8699 = vadd.f32 %v8692, %v8698
        %8700 = vadd.xlane.f32.xlu0 %v8699
        %v8701 = vpop.xlane.xlu0 %8700
        %v8702 = vmul.f32 %v8697, %v1070
        %v8703 = vmul.f32 %v8701, %v1070
        %v8704 = vadd.f32 %v8702, 1e-06
        %v8705 = vadd.f32 %v8703, 1e-06
        %v8706 = vrsqrt.pop %v8704
        %v8707 = vrsqrt.pop %v8705
        %v8708 = vmul.f32 %v8686, %v8706
        %v8709 = vmul.f32 %v8687, %v8706
        %v8710 = vmul.f32 %v8688, %v8707
        %v8711 = vmul.f32 %v8689, %v8707
        %v8713 = vlaneseq
        %v8714 = vshrl.u32 %v8713, 7
        %v8715 = vsub.s32 0, %v8714
        %v8716 = vrot.slane %v7144, %v8715
        %v8717 = vlaneseq
        %v8718 = vshrl.u32 %v8717, 7
        %v8719 = vsub.s32 1, %v8718
        %v8720 = vrot.slane %v7144, %v8719
        %v8723 = vmul.f32 %v8708, %v8716
        %v8724 = vmul.f32 %v8709, %v8720
        %v8725 = vmul.f32 %v8710, %v8716
        %v8726 = vmul.f32 %v8711, %v8720
        %v8728 = vlaneseq
        %v8729 = vshrl.u32 %v8728, 7
        %v8730 = vsub.s32 0, %v8729
        %v8731 = vrot.slane %v7146, %v8730
        %v8732 = vlaneseq
        %v8733 = vshrl.u32 %v8732, 7
        %v8734 = vsub.s32 1, %v8733
        %v8735 = vrot.slane %v7146, %v8734
        %v8738 = vadd.f32 %v8723, %v8731
        %v8739 = vadd.f32 %v8724, %v8735
        %v8740 = vadd.f32 %v8725, %v8731
        %v8741 = vadd.f32 %v8726, %v8735
        %v8742 = vpack.c.bf16 %v8740, %v8738
        %v8743 = vpack.c.bf16 %v8741, %v8739
        %s8744 = scalar_lea.vmem %s543, 1152
        %v8745 = vld [vmem:[%s8744] sm:$0xff]
        %v8746 = vld [vmem:[%s8744 + $0x8] sm:$0xff]
        %v8747 = vld [vmem:[%s8744 + $0x10] sm:$0xff]
        %v8748 = vld [vmem:[%s8744 + $0x18] sm:$0xff]
        %v8749 = vld [vmem:[%s8744 + $0x20] sm:$0xff]
        %v8750 = vld [vmem:[%s8744 + $0x28] sm:$0xff]
        %v8751 = vld [vmem:[%s8744 + $0x30] sm:$0xff]
        %v8752 = vld [vmem:[%s8744 + $0x38] sm:$0xff]
        %v8753 = vld [vmem:[%s8744 + $0x40] sm:$0xff]
        %v8754 = vld [vmem:[%s8744 + $0x48] sm:$0xff]
        %v8755 = vld [vmem:[%s8744 + $0x50] sm:$0xff]
        %v8756 = vld [vmem:[%s8744 + $0x58] sm:$0xff]
        %v8757 = vld [vmem:[%s8744 + $0x60] sm:$0xff]
        %v8758 = vld [vmem:[%s8744 + $0x68] sm:$0xff]
        %v8759 = vld [vmem:[%s8744 + $0x70] sm:$0xff]
        %v8760 = vld [vmem:[%s8744 + $0x78] sm:$0xff]
        %v8761 = vld [vmem:[%s8744 + $0x80] sm:$0xff]
        %v8762 = vld [vmem:[%s8744 + $0x88] sm:$0xff]
        %v8763 = vld [vmem:[%s8744 + $0x90] sm:$0xff]
        %v8764 = vld [vmem:[%s8744 + $0x98] sm:$0xff]
        %v8765 = vld [vmem:[%s8744 + $0xa0] sm:$0xff]
        %v8766 = vld [vmem:[%s8744 + $0xa8] sm:$0xff]
        %v8767 = vld [vmem:[%s8744 + $0xb0] sm:$0xff]
        %v8768 = vld [vmem:[%s8744 + $0xb8] sm:$0xff]
        %v8769 = vld [vmem:[%s8744 + $0xc0] sm:$0xff]
        %v8770 = vld [vmem:[%s8744 + $0xc8] sm:$0xff]
        %v8771 = vld [vmem:[%s8744 + $0xd0] sm:$0xff]
        %v8772 = vld [vmem:[%s8744 + $0xd8] sm:$0xff]
        %v8773 = vld [vmem:[%s8744 + $0xe0] sm:$0xff]
        %v8774 = vld [vmem:[%s8744 + $0xe8] sm:$0xff]
        %v8775 = vld [vmem:[%s8744 + $0xf0] sm:$0xff]
        %v8776 = vld [vmem:[%s8744 + $0xf8] sm:$0xff]
        %v8777 = vld [vmem:[%s8744 + $0x100] sm:$0xff]
        %v8778 = vld [vmem:[%s8744 + $0x108] sm:$0xff]
        %v8779 = vld [vmem:[%s8744 + $0x110] sm:$0xff]
        %v8780 = vld [vmem:[%s8744 + $0x118] sm:$0xff]
        %v8781 = vld [vmem:[%s8744 + $0x120] sm:$0xff]
        %v8782 = vld [vmem:[%s8744 + $0x128] sm:$0xff]
        %v8783 = vld [vmem:[%s8744 + $0x130] sm:$0xff]
        %v8784 = vld [vmem:[%s8744 + $0x138] sm:$0xff]
        %v8785 = vld [vmem:[%s8744 + $0x140] sm:$0xff]
        %v8786 = vld [vmem:[%s8744 + $0x148] sm:$0xff]
        %v8787 = vld [vmem:[%s8744 + $0x150] sm:$0xff]
        %v8788 = vld [vmem:[%s8744 + $0x158] sm:$0xff]
        %v8789 = vld [vmem:[%s8744 + $0x160] sm:$0xff]
        %v8790 = vld [vmem:[%s8744 + $0x168] sm:$0xff]
        %v8791 = vld [vmem:[%s8744 + $0x170] sm:$0xff]
        %v8792 = vld [vmem:[%s8744 + $0x178] sm:$0xff]
        %v8793 = vld [vmem:[%s8744 + $0x180] sm:$0xff]
        %v8794 = vld [vmem:[%s8744 + $0x188] sm:$0xff]
        %v8795 = vld [vmem:[%s8744 + $0x190] sm:$0xff]
        %v8796 = vld [vmem:[%s8744 + $0x198] sm:$0xff]
        %v8797 = vld [vmem:[%s8744 + $0x1a0] sm:$0xff]
        %v8798 = vld [vmem:[%s8744 + $0x1a8] sm:$0xff]
        %v8799 = vld [vmem:[%s8744 + $0x1b0] sm:$0xff]
        %v8800 = vld [vmem:[%s8744 + $0x1b8] sm:$0xff]
        %v8801 = vld [vmem:[%s8744 + $0x1c0] sm:$0xff]
        %v8802 = vld [vmem:[%s8744 + $0x1c8] sm:$0xff]
        %v8803 = vld [vmem:[%s8744 + $0x1d0] sm:$0xff]
        %v8804 = vld [vmem:[%s8744 + $0x1d8] sm:$0xff]
        %v8805 = vld [vmem:[%s8744 + $0x1e0] sm:$0xff]
        %v8806 = vld [vmem:[%s8744 + $0x1e8] sm:$0xff]
        %v8807 = vld [vmem:[%s8744 + $0x1f0] sm:$0xff]
        %v8808 = vld [vmem:[%s8744 + $0x1f8] sm:$0xff]
        %v8809 = vld [vmem:[%s8744 + $0x200] sm:$0xff]
        %v8810 = vld [vmem:[%s8744 + $0x208] sm:$0xff]
        %v8811 = vld [vmem:[%s8744 + $0x210] sm:$0xff]
        %v8812 = vld [vmem:[%s8744 + $0x218] sm:$0xff]
        %v8813 = vld [vmem:[%s8744 + $0x220] sm:$0xff]
        %v8814 = vld [vmem:[%s8744 + $0x228] sm:$0xff]
        %v8815 = vld [vmem:[%s8744 + $0x230] sm:$0xff]
        %v8816 = vld [vmem:[%s8744 + $0x238] sm:$0xff]
        %v8818 = vlaneseq
        %v8819 = vshrl.u32 %v8818, 7
        %v8820 = vsub.s32 0, %v8819
        %v8821 = vrot.slane %v7150, %v8820
        %v8822 = vlaneseq
        %v8823 = vshrl.u32 %v8822, 7
        %v8824 = vsub.s32 1, %v8823
        %v8825 = vrot.slane %v7150, %v8824
        %v8826 = vlaneseq
        %v8827 = vshrl.u32 %v8826, 7
        %v8828 = vsub.s32 2, %v8827
        %v8829 = vrot.slane %v7150, %v8828
        %v8830 = vlaneseq
        %v8831 = vshrl.u32 %v8830, 7
        %v8832 = vsub.s32 3, %v8831
        %v8833 = vrot.slane %v7150, %v8832
        %v8834 = vlaneseq
        %v8835 = vshrl.u32 %v8834, 7
        %v8836 = vsub.s32 4, %v8835
        %v8837 = vrot.slane %v7150, %v8836
        %v8838 = vlaneseq
        %v8839 = vshrl.u32 %v8838, 7
        %v8840 = vsub.s32 5, %v8839
        %v8841 = vrot.slane %v7150, %v8840
        %v8920 = vunpack.c.l.b16 %v8745
        %v8921 = vunpack.c.h.b16 %v8745
        %v8922 = vunpack.c.l.b16 %v8746
        %v8923 = vunpack.c.h.b16 %v8746
        %v8924 = vunpack.c.l.b16 %v8747
        %v8925 = vunpack.c.h.b16 %v8747
        %v8926 = vunpack.c.l.b16 %v8748
        %v8927 = vunpack.c.h.b16 %v8748
        %v8928 = vunpack.c.l.b16 %v8749
        %v8929 = vunpack.c.h.b16 %v8749
        %v8930 = vunpack.c.l.b16 %v8750
        %v8931 = vunpack.c.h.b16 %v8750
        %v8932 = vunpack.c.l.b16 %v8751
        %v8933 = vunpack.c.h.b16 %v8751
        %v8934 = vunpack.c.l.b16 %v8752
        %v8935 = vunpack.c.h.b16 %v8752
        %v8936 = vunpack.c.l.b16 %v8753
        %v8937 = vunpack.c.h.b16 %v8753
        %v8938 = vunpack.c.l.b16 %v8754
        %v8939 = vunpack.c.h.b16 %v8754
        %v8940 = vunpack.c.l.b16 %v8755
        %v8941 = vunpack.c.h.b16 %v8755
        %v8942 = vunpack.c.l.b16 %v8756
        %v8943 = vunpack.c.h.b16 %v8756
        %v8944 = vunpack.c.l.b16 %v8757
        %v8945 = vunpack.c.h.b16 %v8757
        %v8946 = vunpack.c.l.b16 %v8758
        %v8947 = vunpack.c.h.b16 %v8758
        %v8948 = vunpack.c.l.b16 %v8759
        %v8949 = vunpack.c.h.b16 %v8759
        %v8950 = vunpack.c.l.b16 %v8760
        %v8951 = vunpack.c.h.b16 %v8760
        %v8952 = vunpack.c.l.b16 %v8761
        %v8953 = vunpack.c.h.b16 %v8761
        %v8954 = vunpack.c.l.b16 %v8762
        %v8955 = vunpack.c.h.b16 %v8762
        %v8956 = vunpack.c.l.b16 %v8763
        %v8957 = vunpack.c.h.b16 %v8763
        %v8958 = vunpack.c.l.b16 %v8764
        %v8959 = vunpack.c.h.b16 %v8764
        %v8960 = vunpack.c.l.b16 %v8765
        %v8961 = vunpack.c.h.b16 %v8765
        %v8962 = vunpack.c.l.b16 %v8766
        %v8963 = vunpack.c.h.b16 %v8766
        %v8964 = vunpack.c.l.b16 %v8767
        %v8965 = vunpack.c.h.b16 %v8767
        %v8966 = vunpack.c.l.b16 %v8768
        %v8967 = vunpack.c.h.b16 %v8768
        %v8968 = vunpack.c.l.b16 %v8769
        %v8969 = vunpack.c.h.b16 %v8769
        %v8970 = vunpack.c.l.b16 %v8770
        %v8971 = vunpack.c.h.b16 %v8770
        %v8972 = vunpack.c.l.b16 %v8771
        %v8973 = vunpack.c.h.b16 %v8771
        %v8974 = vunpack.c.l.b16 %v8772
        %v8975 = vunpack.c.h.b16 %v8772
        %v8976 = vunpack.c.l.b16 %v8773
        %v8977 = vunpack.c.h.b16 %v8773
        %v8978 = vunpack.c.l.b16 %v8774
        %v8979 = vunpack.c.h.b16 %v8774
        %v8980 = vunpack.c.l.b16 %v8775
        %v8981 = vunpack.c.h.b16 %v8775
        %v8982 = vunpack.c.l.b16 %v8776
        %v8983 = vunpack.c.h.b16 %v8776
        %v8984 = vunpack.c.l.b16 %v8777
        %v8985 = vunpack.c.h.b16 %v8777
        %v8986 = vunpack.c.l.b16 %v8778
        %v8987 = vunpack.c.h.b16 %v8778
        %v8988 = vunpack.c.l.b16 %v8779
        %v8989 = vunpack.c.h.b16 %v8779
        %v8990 = vunpack.c.l.b16 %v8780
        %v8991 = vunpack.c.h.b16 %v8780
        %v8992 = vunpack.c.l.b16 %v8781
        %v8993 = vunpack.c.h.b16 %v8781
        %v8994 = vunpack.c.l.b16 %v8782
        %v8995 = vunpack.c.h.b16 %v8782
        %v8996 = vunpack.c.l.b16 %v8783
        %v8997 = vunpack.c.h.b16 %v8783
        %v8998 = vunpack.c.l.b16 %v8784
        %v8999 = vunpack.c.h.b16 %v8784
        %v9000 = vunpack.c.l.b16 %v8785
        %v9001 = vunpack.c.h.b16 %v8785
        %v9002 = vunpack.c.l.b16 %v8786
        %v9003 = vunpack.c.h.b16 %v8786
        %v9004 = vunpack.c.l.b16 %v8787
        %v9005 = vunpack.c.h.b16 %v8787
        %v9006 = vunpack.c.l.b16 %v8788
        %v9007 = vunpack.c.h.b16 %v8788
        %v9008 = vunpack.c.l.b16 %v8789
        %v9009 = vunpack.c.h.b16 %v8789
        %v9010 = vunpack.c.l.b16 %v8790
        %v9011 = vunpack.c.h.b16 %v8790
        %v9012 = vunpack.c.l.b16 %v8791
        %v9013 = vunpack.c.h.b16 %v8791
        %v9014 = vunpack.c.l.b16 %v8792
        %v9015 = vunpack.c.h.b16 %v8792
        %v9016 = vunpack.c.l.b16 %v8793
        %v9017 = vunpack.c.h.b16 %v8793
        %v9018 = vunpack.c.l.b16 %v8794
        %v9019 = vunpack.c.h.b16 %v8794
        %v9020 = vunpack.c.l.b16 %v8795
        %v9021 = vunpack.c.h.b16 %v8795
        %v9022 = vunpack.c.l.b16 %v8796
        %v9023 = vunpack.c.h.b16 %v8796
        %v9024 = vunpack.c.l.b16 %v8797
        %v9025 = vunpack.c.h.b16 %v8797
        %v9026 = vunpack.c.l.b16 %v8798
        %v9027 = vunpack.c.h.b16 %v8798
        %v9028 = vunpack.c.l.b16 %v8799
        %v9029 = vunpack.c.h.b16 %v8799
        %v9030 = vunpack.c.l.b16 %v8800
        %v9031 = vunpack.c.h.b16 %v8800
        %v9032 = vunpack.c.l.b16 %v8801
        %v9033 = vunpack.c.h.b16 %v8801
        %v9034 = vunpack.c.l.b16 %v8802
        %v9035 = vunpack.c.h.b16 %v8802
        %v9036 = vunpack.c.l.b16 %v8803
        %v9037 = vunpack.c.h.b16 %v8803
        %v9038 = vunpack.c.l.b16 %v8804
        %v9039 = vunpack.c.h.b16 %v8804
        %v9040 = vunpack.c.l.b16 %v8805
        %v9041 = vunpack.c.h.b16 %v8805
        %v9042 = vunpack.c.l.b16 %v8806
        %v9043 = vunpack.c.h.b16 %v8806
        %v9044 = vunpack.c.l.b16 %v8807
        %v9045 = vunpack.c.h.b16 %v8807
        %v9046 = vunpack.c.l.b16 %v8808
        %v9047 = vunpack.c.h.b16 %v8808
        %v9048 = vunpack.c.l.b16 %v8809
        %v9049 = vunpack.c.h.b16 %v8809
        %v9050 = vunpack.c.l.b16 %v8810
        %v9051 = vunpack.c.h.b16 %v8810
        %v9052 = vunpack.c.l.b16 %v8811
        %v9053 = vunpack.c.h.b16 %v8811
        %v9054 = vunpack.c.l.b16 %v8812
        %v9055 = vunpack.c.h.b16 %v8812
        %v9056 = vunpack.c.l.b16 %v8813
        %v9057 = vunpack.c.h.b16 %v8813
        %v9058 = vunpack.c.l.b16 %v8814
        %v9059 = vunpack.c.h.b16 %v8814
        %v9060 = vunpack.c.l.b16 %v8815
        %v9061 = vunpack.c.h.b16 %v8815
        %v9062 = vunpack.c.l.b16 %v8816
        %v9063 = vunpack.c.h.b16 %v8816
        %v9064 = vpack.c.b16 %v8926, %v8920
        %v9065 = vpack.c.b16 %v8927, %v8921
        %v9066 = vpack.c.b16 %v8928, %v8922
        %v9067 = vpack.c.b16 %v8929, %v8923
        %v9068 = vpack.c.b16 %v8930, %v8924
        %v9069 = vpack.c.b16 %v8931, %v8925
        %v9070 = vpack.c.b16 %v8938, %v8932
        %v9071 = vpack.c.b16 %v8939, %v8933
        %v9072 = vpack.c.b16 %v8940, %v8934
        %v9073 = vpack.c.b16 %v8941, %v8935
        %v9074 = vpack.c.b16 %v8942, %v8936
        %v9075 = vpack.c.b16 %v8943, %v8937
        %v9076 = vpack.c.b16 %v8950, %v8944
        %v9077 = vpack.c.b16 %v8951, %v8945
        %v9078 = vpack.c.b16 %v8952, %v8946
        %v9079 = vpack.c.b16 %v8953, %v8947
        %v9080 = vpack.c.b16 %v8954, %v8948
        %v9081 = vpack.c.b16 %v8955, %v8949
        %v9082 = vpack.c.b16 %v8962, %v8956
        %v9083 = vpack.c.b16 %v8963, %v8957
        %v9084 = vpack.c.b16 %v8964, %v8958
        %v9085 = vpack.c.b16 %v8965, %v8959
        %v9086 = vpack.c.b16 %v8966, %v8960
        %v9087 = vpack.c.b16 %v8967, %v8961
        %v9088 = vpack.c.b16 %v8974, %v8968
        %v9089 = vpack.c.b16 %v8975, %v8969
        %v9090 = vpack.c.b16 %v8976, %v8970
        %v9091 = vpack.c.b16 %v8977, %v8971
        %v9092 = vpack.c.b16 %v8978, %v8972
        %v9093 = vpack.c.b16 %v8979, %v8973
        %v9094 = vpack.c.b16 %v8986, %v8980
        %v9095 = vpack.c.b16 %v8987, %v8981
        %v9096 = vpack.c.b16 %v8988, %v8982
        %v9097 = vpack.c.b16 %v8989, %v8983
        %v9098 = vpack.c.b16 %v8990, %v8984
        %v9099 = vpack.c.b16 %v8991, %v8985
        %v9100 = vpack.c.b16 %v8998, %v8992
        %v9101 = vpack.c.b16 %v8999, %v8993
        %v9102 = vpack.c.b16 %v9000, %v8994
        %v9103 = vpack.c.b16 %v9001, %v8995
        %v9104 = vpack.c.b16 %v9002, %v8996
        %v9105 = vpack.c.b16 %v9003, %v8997
        %v9106 = vpack.c.b16 %v9010, %v9004
        %v9107 = vpack.c.b16 %v9011, %v9005
        %v9108 = vpack.c.b16 %v9012, %v9006
        %v9109 = vpack.c.b16 %v9013, %v9007
        %v9110 = vpack.c.b16 %v9014, %v9008
        %v9111 = vpack.c.b16 %v9015, %v9009
        %v9112 = vpack.c.b16 %v9022, %v9016
        %v9113 = vpack.c.b16 %v9023, %v9017
        %v9114 = vpack.c.b16 %v9024, %v9018
        %v9115 = vpack.c.b16 %v9025, %v9019
        %v9116 = vpack.c.b16 %v9026, %v9020
        %v9117 = vpack.c.b16 %v9027, %v9021
        %v9118 = vpack.c.b16 %v9034, %v9028
        %v9119 = vpack.c.b16 %v9035, %v9029
        %v9120 = vpack.c.b16 %v9036, %v9030
        %v9121 = vpack.c.b16 %v9037, %v9031
        %v9122 = vpack.c.b16 %v9038, %v9032
        %v9123 = vpack.c.b16 %v9039, %v9033
        %v9124 = vpack.c.b16 %v9046, %v9040
        %v9125 = vpack.c.b16 %v9047, %v9041
        %v9126 = vpack.c.b16 %v9048, %v9042
        %v9127 = vpack.c.b16 %v9049, %v9043
        %v9128 = vpack.c.b16 %v9050, %v9044
        %v9129 = vpack.c.b16 %v9051, %v9045
        %v9130 = vpack.c.b16 %v9058, %v9052
        %v9131 = vpack.c.b16 %v9059, %v9053
        %v9132 = vpack.c.b16 %v9060, %v9054
        %v9133 = vpack.c.b16 %v9061, %v9055
        %v9134 = vpack.c.b16 %v9062, %v9056
        %v9135 = vpack.c.b16 %v9063, %v9057
        %v9209 = vsel %vm1061, %v8743, 0
        %9211 = vmatprep.subr.bf16.mxu0 %v9065
        %9212 = vmatpush1.bf16.msra.mxu0 %v9064
        %9213 = vmatprep.subr.bf16.mxu0 %v9071
        %9214 = vmatpush1.bf16.msra.mxu0 %v9070
        %9215 = vmatprep.subr.bf16.mxu0 %v9077
        %9216 = vmatpush1.bf16.msra.mxu0 %v9076
        %9217 = vmatprep.subr.bf16.mxu0 %v9083
        %9218 = vmatpush1.bf16.msra.mxu0 %v9082
        %9219 = vmatprep.subr.bf16.mxu0 %v9089
        %9220 = vmatpush1.bf16.msra.mxu0 %v9088
        %9221 = vmatprep.subr.bf16.mxu0 %v9095
        %9222 = vmatpush1.bf16.msra.mxu0 %v9094
        %9223 = vmatprep.subr.bf16.mxu0 %v9101
        %9224 = vmatpush1.bf16.msra.mxu0 %v9100
        %9225 = vmatprep.subr.bf16.mxu0 %v9107
        %9226 = vmatpush1.bf16.msra.mxu0 %v9106
        %9227 = vmatprep.subr.bf16.mxu0 %v9113
        %9228 = vmatpush1.bf16.msra.mxu0 %v9112
        %9229 = vmatprep.subr.bf16.mxu0 %v9119
        %9230 = vmatpush1.bf16.msra.mxu0 %v9118
        %9231 = vmatprep.subr.bf16.mxu0 %v9125
        %9232 = vmatpush1.bf16.msra.mxu0 %v9124
        %9233 = vmatprep.subr.bf16.mxu0 %v9131
        %9234 = vmatpush1.bf16.msra.mxu0 %v9130
        %9235 = vmatprep.subr.bf16.mxu0 0
        %9236 = vmatpush1.bf16.msra.mxu0 0
        %9237 = vmatprep.subr.bf16.mxu0 0
        %9238 = vmatpush1.bf16.msra.mxu0 0
        %9239 = vmatprep.subr.bf16.mxu0 0
        %9240 = vmatpush1.bf16.msra.mxu0 0
        %9241 = vmatprep.subr.bf16.mxu0 0
        %9242 = vmatpush1.bf16.msra.mxu0 0
        %9243 = vmatprep.mubr.bf16.mxu0 %v9209
        %9244 = vmatmul.mubr.bf16.gmra.mrb[0].mxu0 %v8742
        %v9245 = vpop.f32.mrb[0].mxu0
        %v9246 = vadd.f32 %v8821, %v9245
        %v9247 = vpop.f32.mrb[0].mxu0
        %v9248 = vadd.f32 %v8825, %v9247
        %v9249 = vpop.f32.mrb[0].mxu0
        %v9250 = vadd.f32 %v8821, %v9249
        %v9251 = vpop.f32.mrb[0].mxu0
        %v9252 = vadd.f32 %v8825, %v9251
        %9253 = vdwg.mxu0
        %9254 = vmatprep.subr.bf16.mxu0 %v9067
        %9255 = vmatpush1.bf16.msra.mxu0 %v9066
        %9256 = vmatprep.subr.bf16.mxu0 %v9073
        %9257 = vmatpush1.bf16.msra.mxu0 %v9072
        %9258 = vmatprep.subr.bf16.mxu0 %v9079
        %9259 = vmatpush1.bf16.msra.mxu0 %v9078
        %9260 = vmatprep.subr.bf16.mxu0 %v9085
        %9261 = vmatpush1.bf16.msra.mxu0 %v9084
        %9262 = vmatprep.subr.bf16.mxu0 %v9091
        %9263 = vmatpush1.bf16.msra.mxu0 %v9090
        %9264 = vmatprep.subr.bf16.mxu0 %v9097
        %9265 = vmatpush1.bf16.msra.mxu0 %v9096
        %9266 = vmatprep.subr.bf16.mxu0 %v9103
        %9267 = vmatpush1.bf16.msra.mxu0 %v9102
        %9268 = vmatprep.subr.bf16.mxu0 %v9109
        %9269 = vmatpush1.bf16.msra.mxu0 %v9108
        %9270 = vmatprep.subr.bf16.mxu0 %v9115
        %9271 = vmatpush1.bf16.msra.mxu0 %v9114
        %9272 = vmatprep.subr.bf16.mxu0 %v9121
        %9273 = vmatpush1.bf16.msra.mxu0 %v9120
        %9274 = vmatprep.subr.bf16.mxu0 %v9127
        %9275 = vmatpush1.bf16.msra.mxu0 %v9126
        %9276 = vmatprep.subr.bf16.mxu0 %v9133
        %9277 = vmatpush1.bf16.msra.mxu0 %v9132
        %9278 = vmatprep.subr.bf16.mxu0 0
        %9279 = vmatpush1.bf16.msra.mxu0 0
        %9280 = vmatprep.subr.bf16.mxu0 0
        %9281 = vmatpush1.bf16.msra.mxu0 0
        %9282 = vmatprep.subr.bf16.mxu0 0
        %9283 = vmatpush1.bf16.msra.mxu0 0
        %9284 = vmatprep.subr.bf16.mxu0 0
        %9285 = vmatpush1.bf16.msra.mxu0 0
        %9286 = vmatprep.mubr.bf16.mxu0 %v9209
        %9287 = vmatmul.mubr.bf16.gmra.mrb[0].mxu0 %v8742
        %v9288 = vpop.f32.mrb[0].mxu0
        %v9289 = vadd.f32 %v8829, %v9288
        %v9290 = vpop.f32.mrb[0].mxu0
        %v9291 = vadd.f32 %v8833, %v9290
        %v9292 = vpop.f32.mrb[0].mxu0
        %v9293 = vadd.f32 %v8829, %v9292
        %v9294 = vpop.f32.mrb[0].mxu0
        %v9295 = vadd.f32 %v8833, %v9294
        %9296 = vdwg.mxu0
        %9297 = vmatprep.subr.bf16.mxu0 %v9069
        %9298 = vmatpush1.bf16.msra.mxu0 %v9068
        %9299 = vmatprep.subr.bf16.mxu0 %v9075
        %9300 = vmatpush1.bf16.msra.mxu0 %v9074
        %9301 = vmatprep.subr.bf16.mxu0 %v9081
        %9302 = vmatpush1.bf16.msra.mxu0 %v9080
        %9303 = vmatprep.subr.bf16.mxu0 %v9087
        %9304 = vmatpush1.bf16.msra.mxu0 %v9086
        %9305 = vmatprep.subr.bf16.mxu0 %v9093
        %9306 = vmatpush1.bf16.msra.mxu0 %v9092
        %9307 = vmatprep.subr.bf16.mxu0 %v9099
        %9308 = vmatpush1.bf16.msra.mxu0 %v9098
        %9309 = vmatprep.subr.bf16.mxu0 %v9105
        %9310 = vmatpush1.bf16.msra.mxu0 %v9104
        %9311 = vmatprep.subr.bf16.mxu0 %v9111
        %9312 = vmatpush1.bf16.msra.mxu0 %v9110
        %9313 = vmatprep.subr.bf16.mxu0 %v9117
        %9314 = vmatpush1.bf16.msra.mxu0 %v9116
        %9315 = vmatprep.subr.bf16.mxu0 %v9123
        %9316 = vmatpush1.bf16.msra.mxu0 %v9122
        %9317 = vmatprep.subr.bf16.mxu0 %v9129
        %9318 = vmatpush1.bf16.msra.mxu0 %v9128
        %9319 = vmatprep.subr.bf16.mxu0 %v9135
        %9320 = vmatpush1.bf16.msra.mxu0 %v9134
        %9321 = vmatprep.subr.bf16.mxu0 0
        %9322 = vmatpush1.bf16.msra.mxu0 0
        %9323 = vmatprep.subr.bf16.mxu0 0
        %9324 = vmatpush1.bf16.msra.mxu0 0
        %9325 = vmatprep.subr.bf16.mxu0 0
        %9326 = vmatpush1.bf16.msra.mxu0 0
        %9327 = vmatprep.subr.bf16.mxu0 0
        %9328 = vmatpush1.bf16.msra.mxu0 0
        %9329 = vmatprep.mubr.bf16.mxu0 %v9209
        %9330 = vmatmul.mubr.bf16.gmra.mrb[0].mxu0 %v8742
        %v9331 = vpop.f32.mrb[0].mxu0
        %v9332 = vadd.f32 %v8837, %v9331
        %v9333 = vpop.f32.mrb[0].mxu0
        %v9334 = vadd.f32 %v8841, %v9333
        %v9335 = vpop.f32.mrb[0].mxu0
        %v9336 = vadd.f32 %v8837, %v9335
        %v9337 = vpop.f32.mrb[0].mxu0
        %v9338 = vadd.f32 %v8841, %v9337
        %9339 = vdwg.mxu0
        %v9340 = vmul.f32 %v9246, %v9246
        %v9341 = vmul.f32 %v9248, %v9248
        %v9342 = vmul.f32 %v9289, %v9289
        %v9343 = vmul.f32 %v9291, %v9291
        %v9344 = vmul.f32 %v9332, %v9332
        %v9345 = vmul.f32 %v9334, %v9334
        %v9346 = vmul.f32 %v9250, %v9250
        %v9347 = vmul.f32 %v9252, %v9252
        %v9348 = vmul.f32 %v9293, %v9293
        %v9349 = vmul.f32 %v9295, %v9295
        %v9350 = vmul.f32 %v9336, %v9336
        %v9351 = vmul.f32 %v9338, %v9338
        %v9352 = vmul.f32 %v9246, %v9340
        %v9353 = vmul.f32 %v9248, %v9341
        %v9354 = vmul.f32 %v9289, %v9342
        %v9355 = vmul.f32 %v9291, %v9343
        %v9356 = vmul.f32 %v9332, %v9344
        %v9357 = vmul.f32 %v9334, %v9345
        %v9358 = vmul.f32 %v9250, %v9346
        %v9359 = vmul.f32 %v9252, %v9347
        %v9360 = vmul.f32 %v9293, %v9348
        %v9361 = vmul.f32 %v9295, %v9349
        %v9362 = vmul.f32 %v9336, %v9350
        %v9363 = vmul.f32 %v9338, %v9351
        %v9364 = vmul.f32 %v9352, 0.044715
        %v9365 = vmul.f32 %v9353, 0.044715
        %v9366 = vmul.f32 %v9354, 0.044715
        %v9367 = vmul.f32 %v9355, 0.044715
        %v9368 = vmul.f32 %v9356, 0.044715
        %v9369 = vmul.f32 %v9357, 0.044715
        %v9370 = vmul.f32 %v9358, 0.044715
        %v9371 = vmul.f32 %v9359, 0.044715
        %v9372 = vmul.f32 %v9360, 0.044715
        %v9373 = vmul.f32 %v9361, 0.044715
        %v9374 = vmul.f32 %v9362, 0.044715
        %v9375 = vmul.f32 %v9363, 0.044715
        %v9376 = vadd.f32 %v9246, %v9364
        %v9377 = vadd.f32 %v9248, %v9365
        %v9378 = vadd.f32 %v9289, %v9366
        %v9379 = vadd.f32 %v9291, %v9367
        %v9380 = vadd.f32 %v9332, %v9368
        %v9381 = vadd.f32 %v9334, %v9369
        %v9382 = vadd.f32 %v9250, %v9370
        %v9383 = vadd.f32 %v9252, %v9371
        %v9384 = vadd.f32 %v9293, %v9372
        %v9385 = vadd.f32 %v9295, %v9373
        %v9386 = vadd.f32 %v9336, %v9374
        %v9387 = vadd.f32 %v9338, %v9375
        %v9388 = vmul.f32 %v9376, 0.7978846
        %v9389 = vmul.f32 %v9377, 0.7978846
        %v9390 = vmul.f32 %v9378, 0.7978846
        %v9391 = vmul.f32 %v9379, 0.7978846
        %v9392 = vmul.f32 %v9380, 0.7978846
        %v9393 = vmul.f32 %v9381, 0.7978846
        %v9394 = vmul.f32 %v9382, 0.7978846
        %v9395 = vmul.f32 %v9383, 0.7978846
        %v9396 = vmul.f32 %v9384, 0.7978846
        %v9397 = vmul.f32 %v9385, 0.7978846
        %v9398 = vmul.f32 %v9386, 0.7978846
        %v9399 = vmul.f32 %v9387, 0.7978846
        %v9400 = vtanh.pop %v9388
        %v9401 = vtanh.pop %v9389
        %v9402 = vtanh.pop %v9390
        %v9403 = vtanh.pop %v9391
        %v9404 = vtanh.pop %v9392
        %v9405 = vtanh.pop %v9393
        %v9406 = vtanh.pop %v9394
        %v9407 = vtanh.pop %v9395
        %v9408 = vtanh.pop %v9396
        %v9409 = vtanh.pop %v9397
        %v9410 = vtanh.pop %v9398
        %v9411 = vtanh.pop %v9399
        %v9412 = vadd.f32 %v9400, 1.0
        %v9413 = vadd.f32 %v9401, 1.0
        %v9414 = vadd.f32 %v9402, 1.0
        %v9415 = vadd.f32 %v9403, 1.0
        %v9416 = vadd.f32 %v9404, 1.0
        %v9417 = vadd.f32 %v9405, 1.0
        %v9418 = vadd.f32 %v9406, 1.0
        %v9419 = vadd.f32 %v9407, 1.0
        %v9420 = vadd.f32 %v9408, 1.0
        %v9421 = vadd.f32 %v9409, 1.0
        %v9422 = vadd.f32 %v9410, 1.0
        %v9423 = vadd.f32 %v9411, 1.0
        %v9424 = vmul.f32 %v9412, 0.5
        %v9425 = vmul.f32 %v9413, 0.5
        %v9426 = vmul.f32 %v9414, 0.5
        %v9427 = vmul.f32 %v9415, 0.5
        %v9428 = vmul.f32 %v9416, 0.5
        %v9429 = vmul.f32 %v9417, 0.5
        %v9430 = vmul.f32 %v9418, 0.5
        %v9431 = vmul.f32 %v9419, 0.5
        %v9432 = vmul.f32 %v9420, 0.5
        %v9433 = vmul.f32 %v9421, 0.5
        %v9434 = vmul.f32 %v9422, 0.5
        %v9435 = vmul.f32 %v9423, 0.5
        %v9436 = vmul.f32 %v9246, %v9424
        %v9437 = vmul.f32 %v9248, %v9425
        %v9438 = vmul.f32 %v9289, %v9426
        %v9439 = vmul.f32 %v9291, %v9427
        %v9440 = vmul.f32 %v9332, %v9428
        %v9441 = vmul.f32 %v9334, %v9429
        %v9442 = vmul.f32 %v9250, %v9430
        %v9443 = vmul.f32 %v9252, %v9431
        %v9444 = vmul.f32 %v9293, %v9432
        %v9445 = vmul.f32 %v9295, %v9433
        %v9446 = vmul.f32 %v9336, %v9434
        %v9447 = vmul.f32 %v9338, %v9435
        %v9448 = vpack.c.bf16 %v9442, %v9436
        %v9449 = vpack.c.bf16 %v9443, %v9437
        %v9450 = vpack.c.bf16 %v9444, %v9438
        %v9451 = vpack.c.bf16 %v9445, %v9439
        %v9452 = vpack.c.bf16 %v9446, %v9440
        %v9453 = vpack.c.bf16 %v9447, %v9441
        %s9454 = scalar_lea.vmem %s550, 1536
        %v9455 = vld [vmem:[%s9454] sm:$0xff]
        %v9456 = vld [vmem:[%s9454 + $0x8] sm:$0xff]
        %v9457 = vld [vmem:[%s9454 + $0x10] sm:$0xff]
        %v9458 = vld [vmem:[%s9454 + $0x18] sm:$0xff]
        %v9459 = vld [vmem:[%s9454 + $0x20] sm:$0xff]
        %v9460 = vld [vmem:[%s9454 + $0x28] sm:$0xff]
        %v9461 = vld [vmem:[%s9454 + $0x30] sm:$0xff]
        %v9462 = vld [vmem:[%s9454 + $0x38] sm:$0xff]
        %v9463 = vld [vmem:[%s9454 + $0x40] sm:$0xff]
        %v9464 = vld [vmem:[%s9454 + $0x48] sm:$0xff]
        %v9465 = vld [vmem:[%s9454 + $0x50] sm:$0xff]
        %v9466 = vld [vmem:[%s9454 + $0x58] sm:$0xff]
        %v9467 = vld [vmem:[%s9454 + $0x60] sm:$0xff]
        %v9468 = vld [vmem:[%s9454 + $0x68] sm:$0xff]
        %v9469 = vld [vmem:[%s9454 + $0x70] sm:$0xff]
        %v9470 = vld [vmem:[%s9454 + $0x78] sm:$0xff]
        %v9471 = vld [vmem:[%s9454 + $0x80] sm:$0xff]
        %v9472 = vld [vmem:[%s9454 + $0x88] sm:$0xff]
        %v9473 = vld [vmem:[%s9454 + $0x90] sm:$0xff]
        %v9474 = vld [vmem:[%s9454 + $0x98] sm:$0xff]
        %v9475 = vld [vmem:[%s9454 + $0xa0] sm:$0xff]
        %v9476 = vld [vmem:[%s9454 + $0xa8] sm:$0xff]
        %v9477 = vld [vmem:[%s9454 + $0xb0] sm:$0xff]
        %v9478 = vld [vmem:[%s9454 + $0xb8] sm:$0xff]
        %v9479 = vld [vmem:[%s9454 + $0xc0] sm:$0xff]
        %v9480 = vld [vmem:[%s9454 + $0xc8] sm:$0xff]
        %v9481 = vld [vmem:[%s9454 + $0xd0] sm:$0xff]
        %v9482 = vld [vmem:[%s9454 + $0xd8] sm:$0xff]
        %v9483 = vld [vmem:[%s9454 + $0xe0] sm:$0xff]
        %v9484 = vld [vmem:[%s9454 + $0xe8] sm:$0xff]
        %v9485 = vld [vmem:[%s9454 + $0xf0] sm:$0xff]
        %v9486 = vld [vmem:[%s9454 + $0xf8] sm:$0xff]
        %v9487 = vld [vmem:[%s9454 + $0x100] sm:$0xff]
        %v9488 = vld [vmem:[%s9454 + $0x108] sm:$0xff]
        %v9489 = vld [vmem:[%s9454 + $0x110] sm:$0xff]
        %v9490 = vld [vmem:[%s9454 + $0x118] sm:$0xff]
        %v9491 = vld [vmem:[%s9454 + $0x120] sm:$0xff]
        %v9492 = vld [vmem:[%s9454 + $0x128] sm:$0xff]
        %v9493 = vld [vmem:[%s9454 + $0x130] sm:$0xff]
        %v9494 = vld [vmem:[%s9454 + $0x138] sm:$0xff]
        %v9495 = vld [vmem:[%s9454 + $0x140] sm:$0xff]
        %v9496 = vld [vmem:[%s9454 + $0x148] sm:$0xff]
        %v9497 = vld [vmem:[%s9454 + $0x150] sm:$0xff]
        %v9498 = vld [vmem:[%s9454 + $0x158] sm:$0xff]
        %v9499 = vld [vmem:[%s9454 + $0x160] sm:$0xff]
        %v9500 = vld [vmem:[%s9454 + $0x168] sm:$0xff]
        %v9501 = vld [vmem:[%s9454 + $0x170] sm:$0xff]
        %v9502 = vld [vmem:[%s9454 + $0x178] sm:$0xff]
        %v9503 = vld [vmem:[%s9454 + $0x180] sm:$0xff]
        %v9504 = vld [vmem:[%s9454 + $0x188] sm:$0xff]
        %v9505 = vld [vmem:[%s9454 + $0x190] sm:$0xff]
        %v9506 = vld [vmem:[%s9454 + $0x198] sm:$0xff]
        %v9507 = vld [vmem:[%s9454 + $0x1a0] sm:$0xff]
        %v9508 = vld [vmem:[%s9454 + $0x1a8] sm:$0xff]
        %v9509 = vld [vmem:[%s9454 + $0x1b0] sm:$0xff]
        %v9510 = vld [vmem:[%s9454 + $0x1b8] sm:$0xff]
        %v9511 = vld [vmem:[%s9454 + $0x1c0] sm:$0xff]
        %v9512 = vld [vmem:[%s9454 + $0x1c8] sm:$0xff]
        %v9513 = vld [vmem:[%s9454 + $0x1d0] sm:$0xff]
        %v9514 = vld [vmem:[%s9454 + $0x1d8] sm:$0xff]
        %v9515 = vld [vmem:[%s9454 + $0x1e0] sm:$0xff]
        %v9516 = vld [vmem:[%s9454 + $0x1e8] sm:$0xff]
        %v9517 = vld [vmem:[%s9454 + $0x1f0] sm:$0xff]
        %v9518 = vld [vmem:[%s9454 + $0x1f8] sm:$0xff]
        %v9519 = vld [vmem:[%s9454 + $0x200] sm:$0xff]
        %v9520 = vld [vmem:[%s9454 + $0x208] sm:$0xff]
        %v9521 = vld [vmem:[%s9454 + $0x210] sm:$0xff]
        %v9522 = vld [vmem:[%s9454 + $0x218] sm:$0xff]
        %v9523 = vld [vmem:[%s9454 + $0x220] sm:$0xff]
        %v9524 = vld [vmem:[%s9454 + $0x228] sm:$0xff]
        %v9525 = vld [vmem:[%s9454 + $0x230] sm:$0xff]
        %v9526 = vld [vmem:[%s9454 + $0x238] sm:$0xff]
        %v9527 = vld [vmem:[%s9454 + $0x240] sm:$0xff]
        %v9528 = vld [vmem:[%s9454 + $0x248] sm:$0xff]
        %v9529 = vld [vmem:[%s9454 + $0x250] sm:$0xff]
        %v9530 = vld [vmem:[%s9454 + $0x258] sm:$0xff]
        %v9531 = vld [vmem:[%s9454 + $0x260] sm:$0xff]
        %v9532 = vld [vmem:[%s9454 + $0x268] sm:$0xff]
        %v9533 = vld [vmem:[%s9454 + $0x270] sm:$0xff]
        %v9534 = vld [vmem:[%s9454 + $0x278] sm:$0xff]
        %v9535 = vld [vmem:[%s9454 + $0x280] sm:$0xff]
        %v9536 = vld [vmem:[%s9454 + $0x288] sm:$0xff]
        %v9537 = vld [vmem:[%s9454 + $0x290] sm:$0xff]
        %v9538 = vld [vmem:[%s9454 + $0x298] sm:$0xff]
        %v9539 = vld [vmem:[%s9454 + $0x2a0] sm:$0xff]
        %v9540 = vld [vmem:[%s9454 + $0x2a8] sm:$0xff]
        %v9541 = vld [vmem:[%s9454 + $0x2b0] sm:$0xff]
        %v9542 = vld [vmem:[%s9454 + $0x2b8] sm:$0xff]
        %v9543 = vld [vmem:[%s9454 + $0x2c0] sm:$0xff]
        %v9544 = vld [vmem:[%s9454 + $0x2c8] sm:$0xff]
        %v9545 = vld [vmem:[%s9454 + $0x2d0] sm:$0xff]
        %v9546 = vld [vmem:[%s9454 + $0x2d8] sm:$0xff]
        %v9547 = vld [vmem:[%s9454 + $0x2e0] sm:$0xff]
        %v9548 = vld [vmem:[%s9454 + $0x2e8] sm:$0xff]
        %v9549 = vld [vmem:[%s9454 + $0x2f0] sm:$0xff]
        %v9550 = vld [vmem:[%s9454 + $0x2f8] sm:$0xff]
        %v9647 = vunpack.c.l.b16 %v9455
        %v9648 = vunpack.c.h.b16 %v9455
        %v9649 = vunpack.c.l.b16 %v9456
        %v9650 = vunpack.c.h.b16 %v9456
        %v9651 = vunpack.c.l.b16 %v9457
        %v9652 = vunpack.c.h.b16 %v9457
        %v9653 = vunpack.c.l.b16 %v9458
        %v9654 = vunpack.c.h.b16 %v9458
        %v9655 = vunpack.c.l.b16 %v9459
        %v9656 = vunpack.c.h.b16 %v9459
        %v9657 = vunpack.c.l.b16 %v9460
        %v9658 = vunpack.c.h.b16 %v9460
        %v9659 = vunpack.c.l.b16 %v9461
        %v9660 = vunpack.c.h.b16 %v9461
        %v9661 = vunpack.c.l.b16 %v9462
        %v9662 = vunpack.c.h.b16 %v9462
        %v9663 = vunpack.c.l.b16 %v9463
        %v9664 = vunpack.c.h.b16 %v9463
        %v9665 = vunpack.c.l.b16 %v9464
        %v9666 = vunpack.c.h.b16 %v9464
        %v9667 = vunpack.c.l.b16 %v9465
        %v9668 = vunpack.c.h.b16 %v9465
        %v9669 = vunpack.c.l.b16 %v9466
        %v9670 = vunpack.c.h.b16 %v9466
        %v9671 = vunpack.c.l.b16 %v9467
        %v9672 = vunpack.c.h.b16 %v9467
        %v9673 = vunpack.c.l.b16 %v9468
        %v9674 = vunpack.c.h.b16 %v9468
        %v9675 = vunpack.c.l.b16 %v9469
        %v9676 = vunpack.c.h.b16 %v9469
        %v9677 = vunpack.c.l.b16 %v9470
        %v9678 = vunpack.c.h.b16 %v9470
        %v9679 = vunpack.c.l.b16 %v9471
        %v9680 = vunpack.c.h.b16 %v9471
        %v9681 = vunpack.c.l.b16 %v9472
        %v9682 = vunpack.c.h.b16 %v9472
        %v9683 = vunpack.c.l.b16 %v9473
        %v9684 = vunpack.c.h.b16 %v9473
        %v9685 = vunpack.c.l.b16 %v9474
        %v9686 = vunpack.c.h.b16 %v9474
        %v9687 = vunpack.c.l.b16 %v9475
        %v9688 = vunpack.c.h.b16 %v9475
        %v9689 = vunpack.c.l.b16 %v9476
        %v9690 = vunpack.c.h.b16 %v9476
        %v9691 = vunpack.c.l.b16 %v9477
        %v9692 = vunpack.c.h.b16 %v9477
        %v9693 = vunpack.c.l.b16 %v9478
        %v9694 = vunpack.c.h.b16 %v9478
        %v9695 = vunpack.c.l.b16 %v9479
        %v9696 = vunpack.c.h.b16 %v9479
        %v9697 = vunpack.c.l.b16 %v9480
        %v9698 = vunpack.c.h.b16 %v9480
        %v9699 = vunpack.c.l.b16 %v9481
        %v9700 = vunpack.c.h.b16 %v9481
        %v9701 = vunpack.c.l.b16 %v9482
        %v9702 = vunpack.c.h.b16 %v9482
        %v9703 = vunpack.c.l.b16 %v9483
        %v9704 = vunpack.c.h.b16 %v9483
        %v9705 = vunpack.c.l.b16 %v9484
        %v9706 = vunpack.c.h.b16 %v9484
        %v9707 = vunpack.c.l.b16 %v9485
        %v9708 = vunpack.c.h.b16 %v9485
        %v9709 = vunpack.c.l.b16 %v9486
        %v9710 = vunpack.c.h.b16 %v9486
        %v9711 = vunpack.c.l.b16 %v9487
        %v9712 = vunpack.c.h.b16 %v9487
        %v9713 = vunpack.c.l.b16 %v9488
        %v9714 = vunpack.c.h.b16 %v9488
        %v9715 = vunpack.c.l.b16 %v9489
        %v9716 = vunpack.c.h.b16 %v9489
        %v9717 = vunpack.c.l.b16 %v9490
        %v9718 = vunpack.c.h.b16 %v9490
        %v9719 = vunpack.c.l.b16 %v9491
        %v9720 = vunpack.c.h.b16 %v9491
        %v9721 = vunpack.c.l.b16 %v9492
        %v9722 = vunpack.c.h.b16 %v9492
        %v9723 = vunpack.c.l.b16 %v9493
        %v9724 = vunpack.c.h.b16 %v9493
        %v9725 = vunpack.c.l.b16 %v9494
        %v9726 = vunpack.c.h.b16 %v9494
        %v9727 = vunpack.c.l.b16 %v9495
        %v9728 = vunpack.c.h.b16 %v9495
        %v9729 = vunpack.c.l.b16 %v9496
        %v9730 = vunpack.c.h.b16 %v9496
        %v9731 = vunpack.c.l.b16 %v9497
        %v9732 = vunpack.c.h.b16 %v9497
        %v9733 = vunpack.c.l.b16 %v9498
        %v9734 = vunpack.c.h.b16 %v9498
        %v9735 = vunpack.c.l.b16 %v9499
        %v9736 = vunpack.c.h.b16 %v9499
        %v9737 = vunpack.c.l.b16 %v9500
        %v9738 = vunpack.c.h.b16 %v9500
        %v9739 = vunpack.c.l.b16 %v9501
        %v9740 = vunpack.c.h.b16 %v9501
        %v9741 = vunpack.c.l.b16 %v9502
        %v9742 = vunpack.c.h.b16 %v9502
        %v9743 = vunpack.c.l.b16 %v9503
        %v9744 = vunpack.c.h.b16 %v9503
        %v9745 = vunpack.c.l.b16 %v9504
        %v9746 = vunpack.c.h.b16 %v9504
        %v9747 = vunpack.c.l.b16 %v9505
        %v9748 = vunpack.c.h.b16 %v9505
        %v9749 = vunpack.c.l.b16 %v9506
        %v9750 = vunpack.c.h.b16 %v9506
        %v9751 = vunpack.c.l.b16 %v9507
        %v9752 = vunpack.c.h.b16 %v9507
        %v9753 = vunpack.c.l.b16 %v9508
        %v9754 = vunpack.c.h.b16 %v9508
        %v9755 = vunpack.c.l.b16 %v9509
        %v9756 = vunpack.c.h.b16 %v9509
        %v9757 = vunpack.c.l.b16 %v9510
        %v9758 = vunpack.c.h.b16 %v9510
        %v9759 = vunpack.c.l.b16 %v9511
        %v9760 = vunpack.c.h.b16 %v9511
        %v9761 = vunpack.c.l.b16 %v9512
        %v9762 = vunpack.c.h.b16 %v9512
        %v9763 = vunpack.c.l.b16 %v9513
        %v9764 = vunpack.c.h.b16 %v9513
        %v9765 = vunpack.c.l.b16 %v9514
        %v9766 = vunpack.c.h.b16 %v9514
        %v9767 = vunpack.c.l.b16 %v9515
        %v9768 = vunpack.c.h.b16 %v9515
        %v9769 = vunpack.c.l.b16 %v9516
        %v9770 = vunpack.c.h.b16 %v9516
        %v9771 = vunpack.c.l.b16 %v9517
        %v9772 = vunpack.c.h.b16 %v9517
        %v9773 = vunpack.c.l.b16 %v9518
        %v9774 = vunpack.c.h.b16 %v9518
        %v9775 = vunpack.c.l.b16 %v9519
        %v9776 = vunpack.c.h.b16 %v9519
        %v9777 = vunpack.c.l.b16 %v9520
        %v9778 = vunpack.c.h.b16 %v9520
        %v9779 = vunpack.c.l.b16 %v9521
        %v9780 = vunpack.c.h.b16 %v9521
        %v9781 = vunpack.c.l.b16 %v9522
        %v9782 = vunpack.c.h.b16 %v9522
        %v9783 = vunpack.c.l.b16 %v9523
        %v9784 = vunpack.c.h.b16 %v9523
        %v9785 = vunpack.c.l.b16 %v9524
        %v9786 = vunpack.c.h.b16 %v9524
        %v9787 = vunpack.c.l.b16 %v9525
        %v9788 = vunpack.c.h.b16 %v9525
        %v9789 = vunpack.c.l.b16 %v9526
        %v9790 = vunpack.c.h.b16 %v9526
        %v9791 = vunpack.c.l.b16 %v9527
        %v9792 = vunpack.c.h.b16 %v9527
        %v9793 = vunpack.c.l.b16 %v9528
        %v9794 = vunpack.c.h.b16 %v9528
        %v9795 = vunpack.c.l.b16 %v9529
        %v9796 = vunpack.c.h.b16 %v9529
        %v9797 = vunpack.c.l.b16 %v9530
        %v9798 = vunpack.c.h.b16 %v9530
        %v9799 = vunpack.c.l.b16 %v9531
        %v9800 = vunpack.c.h.b16 %v9531
        %v9801 = vunpack.c.l.b16 %v9532
        %v9802 = vunpack.c.h.b16 %v9532
        %v9803 = vunpack.c.l.b16 %v9533
        %v9804 = vunpack.c.h.b16 %v9533
        %v9805 = vunpack.c.l.b16 %v9534
        %v9806 = vunpack.c.h.b16 %v9534
        %v9807 = vunpack.c.l.b16 %v9535
        %v9808 = vunpack.c.h.b16 %v9535
        %v9809 = vunpack.c.l.b16 %v9536
        %v9810 = vunpack.c.h.b16 %v9536
        %v9811 = vunpack.c.l.b16 %v9537
        %v9812 = vunpack.c.h.b16 %v9537
        %v9813 = vunpack.c.l.b16 %v9538
        %v9814 = vunpack.c.h.b16 %v9538
        %v9815 = vunpack.c.l.b16 %v9539
        %v9816 = vunpack.c.h.b16 %v9539
        %v9817 = vunpack.c.l.b16 %v9540
        %v9818 = vunpack.c.h.b16 %v9540
        %v9819 = vunpack.c.l.b16 %v9541
        %v9820 = vunpack.c.h.b16 %v9541
        %v9821 = vunpack.c.l.b16 %v9542
        %v9822 = vunpack.c.h.b16 %v9542
        %v9823 = vunpack.c.l.b16 %v9543
        %v9824 = vunpack.c.h.b16 %v9543
        %v9825 = vunpack.c.l.b16 %v9544
        %v9826 = vunpack.c.h.b16 %v9544
        %v9827 = vunpack.c.l.b16 %v9545
        %v9828 = vunpack.c.h.b16 %v9545
        %v9829 = vunpack.c.l.b16 %v9546
        %v9830 = vunpack.c.h.b16 %v9546
        %v9831 = vunpack.c.l.b16 %v9547
        %v9832 = vunpack.c.h.b16 %v9547
        %v9833 = vunpack.c.l.b16 %v9548
        %v9834 = vunpack.c.h.b16 %v9548
        %v9835 = vunpack.c.l.b16 %v9549
        %v9836 = vunpack.c.h.b16 %v9549
        %v9837 = vunpack.c.l.b16 %v9550
        %v9838 = vunpack.c.h.b16 %v9550
        %v9839 = vpack.c.b16 %v9649, %v9647
        %v9840 = vpack.c.b16 %v9650, %v9648
        %v9841 = vpack.c.b16 %v9653, %v9651
        %v9842 = vpack.c.b16 %v9654, %v9652
        %v9843 = vpack.c.b16 %v9657, %v9655
        %v9844 = vpack.c.b16 %v9658, %v9656
        %v9845 = vpack.c.b16 %v9661, %v9659
        %v9846 = vpack.c.b16 %v9662, %v9660
        %v9847 = vpack.c.b16 %v9665, %v9663
        %v9848 = vpack.c.b16 %v9666, %v9664
        %v9849 = vpack.c.b16 %v9669, %v9667
        %v9850 = vpack.c.b16 %v9670, %v9668
        %v9851 = vpack.c.b16 %v9673, %v9671
        %v9852 = vpack.c.b16 %v9674, %v9672
        %v9853 = vpack.c.b16 %v9677, %v9675
        %v9854 = vpack.c.b16 %v9678, %v9676
        %v9855 = vpack.c.b16 %v9681, %v9679
        %v9856 = vpack.c.b16 %v9682, %v9680
        %v9857 = vpack.c.b16 %v9685, %v9683
        %v9858 = vpack.c.b16 %v9686, %v9684
        %v9859 = vpack.c.b16 %v9689, %v9687
        %v9860 = vpack.c.b16 %v9690, %v9688
        %v9861 = vpack.c.b16 %v9693, %v9691
        %v9862 = vpack.c.b16 %v9694, %v9692
        %v9863 = vpack.c.b16 %v9697, %v9695
        %v9864 = vpack.c.b16 %v9698, %v9696
        %v9865 = vpack.c.b16 %v9701, %v9699
        %v9866 = vpack.c.b16 %v9702, %v9700
        %v9867 = vpack.c.b16 %v9705, %v9703
        %v9868 = vpack.c.b16 %v9706, %v9704
        %v9869 = vpack.c.b16 %v9709, %v9707
        %v9870 = vpack.c.b16 %v9710, %v9708
        %v9871 = vpack.c.b16 %v9713, %v9711
        %v9872 = vpack.c.b16 %v9714, %v9712
        %v9873 = vpack.c.b16 %v9717, %v9715
        %v9874 = vpack.c.b16 %v9718, %v9716
        %v9875 = vpack.c.b16 %v9721, %v9719
        %v9876 = vpack.c.b16 %v9722, %v9720
        %v9877 = vpack.c.b16 %v9725, %v9723
        %v9878 = vpack.c.b16 %v9726, %v9724
        %v9879 = vpack.c.b16 %v9729, %v9727
        %v9880 = vpack.c.b16 %v9730, %v9728
        %v9881 = vpack.c.b16 %v9733, %v9731
        %v9882 = vpack.c.b16 %v9734, %v9732
        %v9883 = vpack.c.b16 %v9737, %v9735
        %v9884 = vpack.c.b16 %v9738, %v9736
        %v9885 = vpack.c.b16 %v9741, %v9739
        %v9886 = vpack.c.b16 %v9742, %v9740
        %v9887 = vpack.c.b16 %v9745, %v9743
        %v9888 = vpack.c.b16 %v9746, %v9744
        %v9889 = vpack.c.b16 %v9749, %v9747
        %v9890 = vpack.c.b16 %v9750, %v9748
        %v9891 = vpack.c.b16 %v9753, %v9751
        %v9892 = vpack.c.b16 %v9754, %v9752
        %v9893 = vpack.c.b16 %v9757, %v9755
        %v9894 = vpack.c.b16 %v9758, %v9756
        %v9895 = vpack.c.b16 %v9761, %v9759
        %v9896 = vpack.c.b16 %v9762, %v9760
        %v9897 = vpack.c.b16 %v9765, %v9763
        %v9898 = vpack.c.b16 %v9766, %v9764
        %v9899 = vpack.c.b16 %v9769, %v9767
        %v9900 = vpack.c.b16 %v9770, %v9768
        %v9901 = vpack.c.b16 %v9773, %v9771
        %v9902 = vpack.c.b16 %v9774, %v9772
        %v9903 = vpack.c.b16 %v9777, %v9775
        %v9904 = vpack.c.b16 %v9778, %v9776
        %v9905 = vpack.c.b16 %v9781, %v9779
        %v9906 = vpack.c.b16 %v9782, %v9780
        %v9907 = vpack.c.b16 %v9785, %v9783
        %v9908 = vpack.c.b16 %v9786, %v9784
        %v9909 = vpack.c.b16 %v9789, %v9787
        %v9910 = vpack.c.b16 %v9790, %v9788
        %v9911 = vpack.c.b16 %v9793, %v9791
        %v9912 = vpack.c.b16 %v9794, %v9792
        %v9913 = vpack.c.b16 %v9797, %v9795
        %v9914 = vpack.c.b16 %v9798, %v9796
        %v9915 = vpack.c.b16 %v9801, %v9799
        %v9916 = vpack.c.b16 %v9802, %v9800
        %v9917 = vpack.c.b16 %v9805, %v9803
        %v9918 = vpack.c.b16 %v9806, %v9804
        %v9919 = vpack.c.b16 %v9809, %v9807
        %v9920 = vpack.c.b16 %v9810, %v9808
        %v9921 = vpack.c.b16 %v9813, %v9811
        %v9922 = vpack.c.b16 %v9814, %v9812
        %v9923 = vpack.c.b16 %v9817, %v9815
        %v9924 = vpack.c.b16 %v9818, %v9816
        %v9925 = vpack.c.b16 %v9821, %v9819
        %v9926 = vpack.c.b16 %v9822, %v9820
        %v9927 = vpack.c.b16 %v9825, %v9823
        %v9928 = vpack.c.b16 %v9826, %v9824
        %v9929 = vpack.c.b16 %v9829, %v9827
        %v9930 = vpack.c.b16 %v9830, %v9828
        %v9931 = vpack.c.b16 %v9833, %v9831
        %v9932 = vpack.c.b16 %v9834, %v9832
        %v9933 = vpack.c.b16 %v9837, %v9835
        %v9934 = vpack.c.b16 %v9838, %v9836
        %10031 = vmatprep.subr.bf16.mxu0 %v9840
        %10032 = vmatpush1.bf16.msra.mxu0 %v9839
        %10033 = vmatprep.subr.bf16.mxu0 %v9842
        %10034 = vmatpush1.bf16.msra.mxu0 %v9841
        %10035 = vmatprep.subr.bf16.mxu0 %v9844
        %10036 = vmatpush1.bf16.msra.mxu0 %v9843
        %10037 = vmatprep.subr.bf16.mxu0 %v9846
        %10038 = vmatpush1.bf16.msra.mxu0 %v9845
        %10039 = vmatprep.subr.bf16.mxu0 %v9848
        %10040 = vmatpush1.bf16.msra.mxu0 %v9847
        %10041 = vmatprep.subr.bf16.mxu0 %v9850
        %10042 = vmatpush1.bf16.msra.mxu0 %v9849
        %10043 = vmatprep.subr.bf16.mxu0 %v9852
        %10044 = vmatpush1.bf16.msra.mxu0 %v9851
        %10045 = vmatprep.subr.bf16.mxu0 %v9854
        %10046 = vmatpush1.bf16.msra.mxu0 %v9853
        %10047 = vmatprep.subr.bf16.mxu0 %v9856
        %10048 = vmatpush1.bf16.msra.mxu0 %v9855
        %10049 = vmatprep.subr.bf16.mxu0 %v9858
        %10050 = vmatpush1.bf16.msra.mxu0 %v9857
        %10051 = vmatprep.subr.bf16.mxu0 %v9860
        %10052 = vmatpush1.bf16.msra.mxu0 %v9859
        %10053 = vmatprep.subr.bf16.mxu0 %v9862
        %10054 = vmatpush1.bf16.msra.mxu0 %v9861
        %10055 = vmatprep.subr.bf16.mxu0 %v9864
        %10056 = vmatpush1.bf16.msra.mxu0 %v9863
        %10057 = vmatprep.subr.bf16.mxu0 %v9866
        %10058 = vmatpush1.bf16.msra.mxu0 %v9865
        %10059 = vmatprep.subr.bf16.mxu0 %v9868
        %10060 = vmatpush1.bf16.msra.mxu0 %v9867
        %10061 = vmatprep.subr.bf16.mxu0 %v9870
        %10062 = vmatpush1.bf16.msra.mxu0 %v9869
        %10063 = vmatprep.mubr.bf16.mxu0 %v9449
        %10064 = vmatmul.mubr.bf16.gmra.mrb[0].mxu0 %v9448
        %v10065 = vpop.f32.mrb[0].mxu0
        %v10066 = vadd.f32 0.0, %v10065
        %v10067 = vpop.f32.mrb[0].mxu0
        %v10068 = vadd.f32 0.0, %v10067
        %v10069 = vpop.f32.mrb[0].mxu0
        %v10070 = vadd.f32 0.0, %v10069
        %v10071 = vpop.f32.mrb[0].mxu0
        %v10072 = vadd.f32 0.0, %v10071
        %10073 = vdwg.mxu0
        %10074 = vmatprep.subr.bf16.mxu0 %v9872
        %10075 = vmatpush1.bf16.msra.mxu0 %v9871
        %10076 = vmatprep.subr.bf16.mxu0 %v9874
        %10077 = vmatpush1.bf16.msra.mxu0 %v9873
        %10078 = vmatprep.subr.bf16.mxu0 %v9876
        %10079 = vmatpush1.bf16.msra.mxu0 %v9875
        %10080 = vmatprep.subr.bf16.mxu0 %v9878
        %10081 = vmatpush1.bf16.msra.mxu0 %v9877
        %10082 = vmatprep.subr.bf16.mxu0 %v9880
        %10083 = vmatpush1.bf16.msra.mxu0 %v9879
        %10084 = vmatprep.subr.bf16.mxu0 %v9882
        %10085 = vmatpush1.bf16.msra.mxu0 %v9881
        %10086 = vmatprep.subr.bf16.mxu0 %v9884
        %10087 = vmatpush1.bf16.msra.mxu0 %v9883
        %10088 = vmatprep.subr.bf16.mxu0 %v9886
        %10089 = vmatpush1.bf16.msra.mxu0 %v9885
        %10090 = vmatprep.subr.bf16.mxu0 %v9888
        %10091 = vmatpush1.bf16.msra.mxu0 %v9887
        %10092 = vmatprep.subr.bf16.mxu0 %v9890
        %10093 = vmatpush1.bf16.msra.mxu0 %v9889
        %10094 = vmatprep.subr.bf16.mxu0 %v9892
        %10095 = vmatpush1.bf16.msra.mxu0 %v9891
        %10096 = vmatprep.subr.bf16.mxu0 %v9894
        %10097 = vmatpush1.bf16.msra.mxu0 %v9893
        %10098 = vmatprep.subr.bf16.mxu0 %v9896
        %10099 = vmatpush1.bf16.msra.mxu0 %v9895
        %10100 = vmatprep.subr.bf16.mxu0 %v9898
        %10101 = vmatpush1.bf16.msra.mxu0 %v9897
        %10102 = vmatprep.subr.bf16.mxu0 %v9900
        %10103 = vmatpush1.bf16.msra.mxu0 %v9899
        %10104 = vmatprep.subr.bf16.mxu0 %v9902
        %10105 = vmatpush1.bf16.msra.mxu0 %v9901
        %10106 = vmatprep.mubr.bf16.mxu0 %v9451
        %10107 = vmatmul.mubr.bf16.gmra.mrb[0].mxu0 %v9450
        %v10108 = vpop.f32.mrb[0].mxu0
        %v10109 = vadd.f32 %v10066, %v10108
        %v10110 = vpop.f32.mrb[0].mxu0
        %v10111 = vadd.f32 %v10068, %v10110
        %v10112 = vpop.f32.mrb[0].mxu0
        %v10113 = vadd.f32 %v10070, %v10112
        %v10114 = vpop.f32.mrb[0].mxu0
        %v10115 = vadd.f32 %v10072, %v10114
        %10116 = vdwg.mxu0
        %10117 = vmatprep.subr.bf16.mxu0 %v9904
        %10118 = vmatpush1.bf16.msra.mxu0 %v9903
        %10119 = vmatprep.subr.bf16.mxu0 %v9906
        %10120 = vmatpush1.bf16.msra.mxu0 %v9905
        %10121 = vmatprep.subr.bf16.mxu0 %v9908
        %10122 = vmatpush1.bf16.msra.mxu0 %v9907
        %10123 = vmatprep.subr.bf16.mxu0 %v9910
        %10124 = vmatpush1.bf16.msra.mxu0 %v9909
        %10125 = vmatprep.subr.bf16.mxu0 %v9912
        %10126 = vmatpush1.bf16.msra.mxu0 %v9911
        %10127 = vmatprep.subr.bf16.mxu0 %v9914
        %10128 = vmatpush1.bf16.msra.mxu0 %v9913
        %10129 = vmatprep.subr.bf16.mxu0 %v9916
        %10130 = vmatpush1.bf16.msra.mxu0 %v9915
        %10131 = vmatprep.subr.bf16.mxu0 %v9918
        %10132 = vmatpush1.bf16.msra.mxu0 %v9917
        %10133 = vmatprep.subr.bf16.mxu0 %v9920
        %10134 = vmatpush1.bf16.msra.mxu0 %v9919
        %10135 = vmatprep.subr.bf16.mxu0 %v9922
        %10136 = vmatpush1.bf16.msra.mxu0 %v9921
        %10137 = vmatprep.subr.bf16.mxu0 %v9924
        %10138 = vmatpush1.bf16.msra.mxu0 %v9923
        %10139 = vmatprep.subr.bf16.mxu0 %v9926
        %10140 = vmatpush1.bf16.msra.mxu0 %v9925
        %10141 = vmatprep.subr.bf16.mxu0 %v9928
        %10142 = vmatpush1.bf16.msra.mxu0 %v9927
        %10143 = vmatprep.subr.bf16.mxu0 %v9930
        %10144 = vmatpush1.bf16.msra.mxu0 %v9929
        %10145 = vmatprep.subr.bf16.mxu0 %v9932
        %10146 = vmatpush1.bf16.msra.mxu0 %v9931
        %10147 = vmatprep.subr.bf16.mxu0 %v9934
        %10148 = vmatpush1.bf16.msra.mxu0 %v9933
        %10149 = vmatprep.mubr.bf16.mxu0 %v9453
        %10150 = vmatmul.mubr.bf16.gmra.mrb[0].mxu0 %v9452
        %v10151 = vpop.f32.mrb[0].mxu0
        %v10152 = vadd.f32 %v10109, %v10151
        %v10153 = vpop.f32.mrb[0].mxu0
        %v10154 = vadd.f32 %v10111, %v10153
        %v10155 = vpop.f32.mrb[0].mxu0
        %v10156 = vadd.f32 %v10113, %v10155
        %v10157 = vpop.f32.mrb[0].mxu0
        %v10158 = vadd.f32 %v10115, %v10157
        %10159 = vdwg.mxu0
        %v10160 = vadd.f32 %v8672, %v10152
        %v10161 = vadd.f32 %v8673, %v10154
        %v10162 = vadd.f32 %v8674, %v10156
        %v10163 = vadd.f32 %v8675, %v10158
        %v10165 = vlaneseq
        %v10166 = vshrl.u32 %v10165, 7
        %v10167 = vsub.s32 0, %v10166
        %v10168 = vrot.slane %v7152, %v10167
        %v10169 = vlaneseq
        %v10170 = vshrl.u32 %v10169, 7
        %v10171 = vsub.s32 1, %v10170
        %v10172 = vrot.slane %v7152, %v10171
        %v10175 = vadd.f32 %v10160, %v10168
        %v10176 = vadd.f32 %v10161, %v10172
        %v10177 = vadd.f32 %v10162, %v10168
        %v10178 = vadd.f32 %v10163, %v10172
        %10179 = vst [vmem:[#allocation2] sm:$0xff] %v10175
        %10180 = vst.msk [vmem:[#allocation2 + $0x8] sm:$0xff] %vm1061, %v10176
        %10181 = vst [vmem:[#allocation2 + $0x10] sm:$0xff] %v10177
        %10182 = vst.msk [vmem:[#allocation2 + $0x18] sm:$0xff] %vm1061, %v10178
        %p10183 = scmp.eq.s32.totalorder %s26, 3
        // Predicated region
        $region81: #{vit_forward.1} parent=75 // pred_check
          %p10184 = pneg %p10183
        $region82: #{vit_forward.1} parent=75 // pred_check_branch
          %10186 = sbr.rel (%p10184) target = $region84
        $region83: #{vit_forward.1} parent=75 // pred_region
          %v10187 = vld [vmem:[%s10] sm:$0x3]
          %v10188 = vld [vmem:[%s11] sm:$0x3]
          %v10193 = vrot.slane %v10177, 7
          %vm10194 = vcmask 1041409
          %v10195 = vsel %vm10194, %v10193, %v10175
          %v10196 = vrot.slane %v10178, 7
          %v10197 = vsel %vm10194, %v10196, %v10176
          %vm10200 = vcmask 1041408
          %v10201 = vsel %vm10200, %v10195, 0.0
          %vm10202 = vcmask 517120
          %v10203 = vsel %vm10202, %v10197, 0.0
          %v10204 = vadd.f32 %v10201, %v10203
          %10205 = vadd.xlane.f32.xlu0 %v10204
          %v10206 = vpop.xlane.xlu0 %10205
          %v10207 = vmul.f32 %v10206, %v1070
          %v10209 = vrot.slane %v10207, 1
          %v10212 = vsub.f32 %v10175, %v10207
          %v10213 = vsub.f32 %v10176, %v10207
          %v10214 = vsub.f32 %v10177, %v10209
          %v10215 = vsub.f32 %v10178, %v10209
          %v10216 = vmul.f32 %v10212, %v10212
          %v10217 = vmul.f32 %v10213, %v10213
          %v10218 = vmul.f32 %v10214, %v10214
          %v10219 = vmul.f32 %v10215, %v10215
          %v10224 = vrot.slane %v10218, 7
          %v10225 = vsel %vm10194, %v10224, %v10216
          %v10226 = vrot.slane %v10219, 7
          %v10227 = vsel %vm10194, %v10226, %v10217
          %v10230 = vsel %vm10200, %v10225, 0.0
          %v10231 = vsel %vm10202, %v10227, 0.0
          %v10232 = vadd.f32 %v10230, %v10231
          %10233 = vadd.xlane.f32.xlu0 %v10232
          %v10234 = vpop.xlane.xlu0 %10233
          %v10235 = vmul.f32 %v10234, %v1070
          %v10236 = vadd.f32 %v10235, 1e-06
          %v10237 = vrsqrt.pop %v10236
          %v10239 = vrot.slane %v10237, 1
          %v10242 = vmul.f32 %v10212, %v10237
          %v10243 = vmul.f32 %v10213, %v10237
          %v10244 = vmul.f32 %v10214, %v10239
          %v10245 = vmul.f32 %v10215, %v10239
          %v10247 = vlaneseq
          %v10248 = vshrl.u32 %v10247, 7
          %v10249 = vsub.s32 0, %v10248
          %v10250 = vrot.slane %v10187, %v10249
          %v10251 = vlaneseq
          %v10252 = vshrl.u32 %v10251, 7
          %v10253 = vsub.s32 1, %v10252
          %v10254 = vrot.slane %v10187, %v10253
          %v10257 = vmul.f32 %v10242, %v10250
          %v10258 = vmul.f32 %v10243, %v10254
          %v10259 = vmul.f32 %v10244, %v10250
          %v10260 = vmul.f32 %v10245, %v10254
          %v10262 = vlaneseq
          %v10263 = vshrl.u32 %v10262, 7
          %v10264 = vsub.s32 0, %v10263
          %v10265 = vrot.slane %v10188, %v10264
          %v10266 = vlaneseq
          %v10267 = vshrl.u32 %v10266, 7
          %v10268 = vsub.s32 1, %v10267
          %v10269 = vrot.slane %v10188, %v10268
          %v10272 = vadd.f32 %v10257, %v10265
          %v10273 = vadd.f32 %v10258, %v10269
          %v10274 = vadd.f32 %v10259, %v10265
          %v10275 = vadd.f32 %v10260, %v10269
          %v10276 = vld [vmem:[%s12] sm:$0xff]
          %v10277 = vld [vmem:[%s12 + $0x8] sm:$0xff]
          %v10278 = vld [vmem:[%s12 + $0x10] sm:$0xff]
          %v10279 = vld [vmem:[%s12 + $0x18] sm:$0xff]
          %v10280 = vld [vmem:[%s12 + $0x20] sm:$0xff]
          %v10281 = vld [vmem:[%s12 + $0x28] sm:$0xff]
          %v10282 = vld [vmem:[%s12 + $0x30] sm:$0xff]
          %v10283 = vld [vmem:[%s12 + $0x38] sm:$0xff]
          %v10284 = vld [vmem:[%s12 + $0x40] sm:$0xff]
          %v10285 = vld [vmem:[%s12 + $0x48] sm:$0xff]
          %v10286 = vld [vmem:[%s12 + $0x50] sm:$0xff]
          %v10287 = vld [vmem:[%s12 + $0x58] sm:$0xff]
          %v10288 = vld [vmem:[%s12 + $0x60] sm:$0xff]
          %v10289 = vld [vmem:[%s12 + $0x68] sm:$0xff]
          %v10290 = vld [vmem:[%s12 + $0x70] sm:$0xff]
          %v10291 = vld [vmem:[%s12 + $0x78] sm:$0xff]
          %v10292 = vld [vmem:[%s12 + $0x80] sm:$0xff]
          %v10293 = vld [vmem:[%s12 + $0x88] sm:$0xff]
          %v10294 = vld [vmem:[%s12 + $0x90] sm:$0xff]
          %v10295 = vld [vmem:[%s12 + $0x98] sm:$0xff]
          %v10296 = vld [vmem:[%s12 + $0xa0] sm:$0xff]
          %v10297 = vld [vmem:[%s12 + $0xa8] sm:$0xff]
          %v10298 = vld [vmem:[%s12 + $0xb0] sm:$0xff]
          %v10299 = vld [vmem:[%s12 + $0xb8] sm:$0xff]
          %v10300 = vld [vmem:[%s13] sm:$0x1]
          %v10302 = vlaneseq
          %v10303 = vshrl.u32 %v10302, 7
          %v10304 = vsub.s32 0, %v10303
          %v10305 = vrot.slane %v10300, %v10304
          %v10311 = vrot.slane %v10274, 7
          %v10312 = vsel %vm10194, %v10311, %v10272
          %v10313 = vrot.slane %v10275, 7
          %v10314 = vsel %vm10194, %v10313, %v10273
          %v10316 = vsel %vm1061, %v10314, 0
          %10318 = vmatprep.subr.mxu0 0.0
          %10319 = vmatpush1.msra.mxu0 %v10276
          %10320 = vmatprep.subr.mxu0 0.0
          %10321 = vmatpush1.msra.mxu0 %v10277
          %10322 = vmatprep.subr.mxu0 0.0
          %10323 = vmatpush1.msra.mxu0 %v10278
          %10324 = vmatprep.subr.mxu0 0.0
          %10325 = vmatpush1.msra.mxu0 %v10279
          %10326 = vmatprep.subr.mxu0 0.0
          %10327 = vmatpush1.msra.mxu0 %v10280
          %10328 = vmatprep.subr.mxu0 0.0
          %10329 = vmatpush1.msra.mxu0 %v10281
          %10330 = vmatprep.subr.mxu0 0.0
          %10331 = vmatpush1.msra.mxu0 %v10282
          %10332 = vmatprep.subr.mxu0 0.0
          %10333 = vmatpush1.msra.mxu0 %v10283
          %10334 = vmatprep.subr.mxu0 0.0
          %10335 = vmatpush1.msra.mxu0 %v10284
          %10336 = vmatprep.subr.mxu0 0.0
          %10337 = vmatpush1.msra.mxu0 %v10285
          %10338 = vmatprep.subr.mxu0 0.0
          %10339 = vmatpush1.msra.mxu0 %v10286
          %10340 = vmatprep.subr.mxu0 0.0
          %10341 = vmatpush1.msra.mxu0 %v10287
          %10342 = vmatprep.subr.mxu0 0.0
          %10343 = vmatpush1.msra.mxu0 %v10288
          %10344 = vmatprep.subr.mxu0 0.0
          %10345 = vmatpush1.msra.mxu0 %v10289
          %10346 = vmatprep.subr.mxu0 0.0
          %10347 = vmatpush1.msra.mxu0 %v10290
          %10348 = vmatprep.subr.mxu0 0.0
          %10349 = vmatpush1.msra.mxu0 %v10291
          %10350 = vmatprep.subr.mxu0 0.0
          %10351 = vmatpush1.msra.mxu0 %v10292
          %10352 = vmatprep.subr.mxu0 0.0
          %10353 = vmatpush1.msra.mxu0 %v10293
          %10354 = vmatprep.subr.mxu0 0.0
          %10355 = vmatpush1.msra.mxu0 %v10294
          %10356 = vmatprep.subr.mxu0 0.0
          %10357 = vmatpush1.msra.mxu0 %v10295
          %10358 = vmatprep.subr.mxu0 0.0
          %10359 = vmatpush1.msra.mxu0 %v10296
          %10360 = vmatprep.subr.mxu0 0.0
          %10361 = vmatpush1.msra.mxu0 %v10297
          %10362 = vmatprep.subr.mxu0 0.0
          %10363 = vmatpush1.msra.mxu0 %v10298
          %10364 = vmatprep.subr.mxu0 0.0
          %10365 = vmatpush1.msra.mxu0 %v10299
          %10366 = vmatprep.subr.mxu0 0.0
          %10367 = vmatpush1.msra.mxu0 0.0
          %10368 = vmatprep.subr.mxu0 0.0
          %10369 = vmatpush1.msra.mxu0 0.0
          %10370 = vmatprep.subr.mxu0 0.0
          %10371 = vmatpush1.msra.mxu0 0.0
          %10372 = vmatprep.subr.mxu0 0.0
          %10373 = vmatpush1.msra.mxu0 0.0
          %10374 = vmatprep.subr.mxu0 0.0
          %10375 = vmatpush1.msra.mxu0 0.0
          %10376 = vmatprep.subr.mxu0 0.0
          %10377 = vmatpush1.msra.mxu0 0.0
          %10378 = vmatprep.subr.mxu0 0.0
          %10379 = vmatpush1.msra.mxu0 0.0
          %10380 = vmatprep.subr.mxu0 0.0
          %10381 = vmatpush1.msra.mxu0 0.0
          %10382 = vmatprep.mubr.f32.mxu0 %v10316
          %10383 = vmatmul.mubr.f32.gmra.mrb[0].mxu0 %v10312
          %v10384 = vpop.f32.mrb[0].mxu0
          %v10385 = vadd.f32 %v10305, %v10384
          %v10386 = vpop.f32.mrb[0].mxu0
          %10387 = vdwg.mxu0
          %vm10388 = vcmask 33792
          %10389 = vst.msk [vmem:[#allocation3] sm:$0x3] %vm10388, %v10385
        $region84: #{vit_forward.1} parent=75 // pred_fallthru
          _
        // Predicated region
        $region85: #{vit_forward.1} parent=75 // pred_check
          %p10390 = pneg %p358
        $region86: #{vit_forward.1} parent=75 // pred_check_branch
          %10392 = sbr.rel (%p10390) target = $region88
        $region87: #{vit_forward.1} parent=75 // pred_region
          %s10394 = ssub.s32 32, 32
          %10395 = vsyncadd [#allocation4], %s10394
          %s10397 = sshll.u32 [#allocation3], 4
          %s10398 = int_to_ptr.vmem [resolvable:$true] %s10397
          %10400 = dma.vmem_to_hbm [thread:$0]  %s10398, 32, %s14, [#allocation4]
        $region88: #{vit_forward.1} parent=75 // pred_fallthru
          _
        // Predicated region
        $region89: #{vit_forward.1} parent=75 // pred_check
          %p10401 = pneg %p358
        $region90: #{vit_forward.1} parent=75 // pred_check_branch
          %10403 = sbr.rel (%p10401) target = $region92
        $region91: #{vit_forward.1} parent=75 // pred_region
          %10404 = dma.done [#allocation4], 32
        $region92: #{vit_forward.1} parent=75 // pred_fallthru
          _
      $region76: #{vit_forward.1} parent=5 // pred_fallthru
        _
      %p10405 = scmp.le.s32.totalorder 2, %s21
      // Predicated region
      $region93: #{vit_forward.1} parent=5 // pred_check
        %p10406 = pneg %p10405
      $region94: #{vit_forward.1} parent=5 // pred_check_branch
        %10408 = sbr.rel (%p10406) target = $region96
      $region95: #{vit_forward.1} parent=5 // pred_region
        %s10409 = ssub.s32 %s21, 2
      $region96: #{vit_forward.1} parent=5 // pred_fallthru
        _
    $region6: #{vit_forward.1} parent=1 // loop_footer
      %s25 = sadd.s32 1, %s21
    $region7: #{vit_forward.1} parent=1 // loop_footer_branch
      %20 = sbr.rel target = $region3
    $region8: #{vit_forward.1} parent=1 // loop_exit
      _
    %10410 = vsyncpa [#allocation4], 1
    %s10411 = scalar_lea.sflag [#allocation4], 1
    %10412 = vsyncpa %s10411, 1

</llo_original>
